<compile_context>
chip_gen: v5e
topology: v5e:2x2
jax: 0.10.0
libtpu: 0.0.40
codegen_flags: <defaults>
</compile_context>

<pallas_src>
import jax
import jax.numpy as jnp
from jax.experimental import pallas as pl
from jax.experimental.pallas import tpu as pltpu

LATENT = 64
IMG_SHAPE = (1, 28, 28)
IMG_DIM = 1 * 28 * 28            # 784
DIMS = [LATENT, 128, 256, 512, 700, 1024, IMG_DIM]

PAD_700 = 768                    # 700 -> 6*128
PAD_OUT = 896                    # 784 -> 7*128

SIDE_W = 1024                    # packed side-param row width (8*128)
SIDE_ROWS = 16                   # 12 used rows, padded to a full sublane tile


# ----------------------------- math helpers ------------------------------- #

def _leaky_relu(x):
    return jnp.where(x > 0, x, 0.2 * x)


def _batchnorm(x, gamma, beta):
    # Training-mode BatchNorm1d with eps=0 (nn.BatchNorm1d(out_feat, 0)),
    # biased variance over the batch.  Two-pass variance (safe against
    # catastrophic cancellation); fused affine afterwards.
    mean = jnp.mean(x, axis=0, keepdims=True)
    xc = x - mean
    var = jnp.mean(xc * xc, axis=0, keepdims=True)
    inv = jnp.where(var > 0, jax.lax.rsqrt(var), 0.0)   # guard padded / degenerate cols
    return xc * (gamma * inv) + beta


def _unpack_side(side):
    """Static slices of the packed (SIDE_ROWS, SIDE_W) f32 side-param array."""
    b1 = side[0:1, :128]
    g2, be2 = side[1:2, :256], side[2:3, :256]
    g3, be3 = side[3:4, :512], side[4:5, :512]
    g4, be4 = side[5:6, :PAD_700], side[6:7, :PAD_700]
    g5, be5 = side[7:8, :1024], side[8:9, :1024]
    b6 = side[9:10, :PAD_OUT]
    s5 = side[10:11, :1024]
    s6 = side[11:12, :PAD_OUT]
    return b1, g2, be2, g3, be3, g4, be4, g5, be5, b6, s5, s6


def _forward_body(z, w1, w2, w3, w4, w5q, w6q, side):
    """Exact kernel math; also callable from plain JAX (mimic reference)."""
    b1, g2, be2, g3, be3, g4, be4, g5, be5, b6, s5, s6 = _unpack_side(side)
    bf16, f32 = jnp.bfloat16, jnp.float32

    def mm(x, w):
        return jnp.dot(x.astype(bf16), w, preferred_element_type=f32)

    h = _leaky_relu(mm(z, w1) + b1)
    h = _leaky_relu(_batchnorm(mm(h, w2), g2, be2))
    h = _leaky_relu(_batchnorm(mm(h, w3), g3, be3))
    h = _leaky_relu(_batchnorm(mm(h, w4), g4, be4))          # padded to 768 lanes
    # Layers 5/6: int8 weights -> bf16 cast on VPU, per-output-channel scale
    # folded in post-matmul (tiny (B, N) multiply).
    x5 = mm(h, w5q.astype(bf16)) * s5
    h = _leaky_relu(_batchnorm(x5, g5, be5))
    x6 = mm(h, w6q.astype(bf16)) * s6 + b6
    return jnp.tanh(x6)                                       # (B, 896) lane-dense


# ------------------------------- kernel ----------------------------------- #

def _generator_kernel(z_ref, w1_ref, w2_ref, w3_ref, w4_ref, w5_ref, w6_ref,
                      side_ref, out_ref):
    out_ref[...] = _forward_body(
        z_ref[...], w1_ref[...], w2_ref[...], w3_ref[...], w4_ref[...],
        w5_ref[...], w6_ref[...], side_ref[...]).astype(out_ref.dtype)


def generator_wgan_forward(z, w1, w2, w3, w4, w5q, w6q, side):
    """z: (B, LATENT) f32 -> img: (B, 1, 28, 28) f32.

    Single grid point, full-array VMEM blocks (BN needs full-batch stats).
    Activations cost ~10 KB per batch row at peak, so B up to ~2048 stays
    under the 32 MiB VMEM cap on every generation (v7x has 64 MiB physical).
    """
    batch = z.shape[0]
    out = pl.pallas_call(
        _generator_kernel,
        out_shape=jax.ShapeDtypeStruct((batch, PAD_OUT), jnp.float32),
        in_specs=[pl.BlockSpec(memory_space=pltpu.MemorySpace.VMEM)] * 8,
        out_specs=pl.BlockSpec(memory_space=pltpu.MemorySpace.VMEM),
        compiler_params=pltpu.CompilerParams(vmem_limit_bytes=32 << 20),
    )(z, w1, w2, w3, w4, w5q, w6q, side)
    # Drop padded lanes, then NCHW reshape (matches img.view(B, 1, 28, 28)).
    # Negligible at small batch; at large batch the consumer could accept the
    # padded (B, 896) slab directly to skip this copy.
    return out[:, :IMG_DIM].reshape(batch, *IMG_SHAPE)


generator_wgan_forward = jax.jit(generator_wgan_forward)


# --------------------------- parameter handling ---------------------------- #

def init_params(key):
    """PyTorch-style uniform(-1/sqrt(fan_in), 1/sqrt(fan_in)) init, f32, unpadded."""
    params = []
    keys = jax.random.split(key, 2 * (len(DIMS) - 1))
    for li in range(len(DIMS) - 1):
        fan_in, fan_out = DIMS[li], DIMS[li + 1]
        bound = 1.0 / jnp.sqrt(jnp.float32(fan_in))
        w = jax.random.uniform(keys[2 * li], (fan_in, fan_out),
                               jnp.float32, -bound, bound)
        b = jax.random.uniform(keys[2 * li + 1], (1, fan_out),
                               jnp.float32, -bound, bound)
        layer = {"w": w, "b": b}
        if 1 <= li <= 4:  # hidden blocks 2..5 have BatchNorm
            layer["gamma"] = jnp.ones((1, fan_out), jnp.float32)
            layer["beta"] = jnp.zeros((1, fan_out), jnp.float32)
        params.append(layer)
    return params


def _pad_to(a, shape):
    return jnp.pad(a, [(0, t - s) for s, t in zip(a.shape, shape)])


def _quantize_per_col(w):
    """Symmetric per-output-channel int8 quantization. Returns (q_int8, scale)."""
    amax = jnp.max(jnp.abs(w), axis=0, keepdims=True)
    scale = jnp.where(amax > 0, amax / 127.0, 1.0).astype(jnp.float32)
    q = jnp.clip(jnp.round(w / scale), -127, 127).astype(jnp.int8)
    return q, scale


def _pack_side(rows):
    """Pack a list of (1, W_i) f32 rows into one (SIDE_ROWS, SIDE_W) array."""
    out = jnp.zeros((SIDE_ROWS, SIDE_W), jnp.float32)
    for i, r in enumerate(rows):
        out = out.at[i, :r.shape[1]].set(r[0].astype(jnp.float32))
    return out


def prepare_kernel_params(params):
    """Padded kernel params: bf16 w1..w4, int8 w5/w6 (+scales), packed side array.

    Biases of BN layers are omitted (BN mean subtraction cancels them exactly).
    """
    w1 = params[0]["w"].astype(jnp.bfloat16)
    b1 = params[0]["b"]

    pad_in = [128, 256, 512, PAD_700]
    pad_out = [256, 512, PAD_700, 1024]
    ws, gs, bes = [], [], []
    for k in range(4):
        li = k + 1
        ws.append(_pad_to(params[li]["w"], (pad_in[k], pad_out[k])))
        gs.append(_pad_to(params[li]["gamma"], (1, pad_out[k])))
        bes.append(_pad_to(params[li]["beta"], (1, pad_out[k])))
    w2, w3, w4, w5 = ws
    w6 = _pad_to(params[5]["w"], (1024, PAD_OUT))
    b6 = _pad_to(params[5]["b"], (1, PAD_OUT))

    w2 = w2.astype(jnp.bfloat16)
    w3 = w3.astype(jnp.bfloat16)
    w4 = w4.astype(jnp.bfloat16)
    w5q, s5 = _quantize_per_col(w5)          # (768, 1024) int8
    w6q, s6 = _quantize_per_col(w6)          # (1024, 896) int8

    side = _pack_side([b1, gs[0], bes[0], gs[1], bes[1], gs[2], bes[2],
                       gs[3], bes[3], b6, s5, s6])
    return (w1, w2, w3, w4, w5q, w6q, side)


# ------------------------------ references -------------------------------- #

def mimic_forward(z, kernel_params):
    """Plain-JAX replica of the exact kernel math (bf16 + int8-dequant path)."""
    out = _forward_body(z, *kernel_params)
    return out[:, :IMG_DIM].reshape(z.shape[0], *IMG_SHAPE)


def reference_forward(z, params):
    """Full-precision f32 reference with the original PyTorch semantics
    (biases included; training-mode BN, eps=0, biased variance)."""
    h = z
    for li, layer in enumerate(params):
        h = h @ layer["w"] + layer["b"]
        if "gamma" in layer:
            mean = jnp.mean(h, axis=0, keepdims=True)
            var = jnp.mean((h - mean) ** 2, axis=0, keepdims=True)
            h = layer["gamma"] * (h - mean) / jnp.sqrt(var) + layer["beta"]
        if li < len(params) - 1:
            h = jnp.where(h > 0, h, 0.2 * h)
        else:
            h = jnp.tanh(h)
    return h.reshape(z.shape[0], *IMG_SHAPE)


# --------------------------------- main ------------------------------------ #

if __name__ == "__main__":
    key = jax.random.PRNGKey(0)
    k_params, k_z = jax.random.split(key)

    params = init_params(k_params)
    kernel_params = prepare_kernel_params(params)

    batch = 16   # >=16 keeps v5e bf16 sublanes full; wrapper handles any B <= ~2048
    z = jax.random.normal(k_z, (batch, LATENT), jnp.float32)

    img = generator_wgan_forward(z, *kernel_params)
    img = jax.block_until_ready(img)

    assert img.shape == (batch, *IMG_SHAPE), img.shape
    assert img.dtype == jnp.float32

    # Tight check: kernel vs identical-precision JAX math (same bf16/int8 path).
    mimic = mimic_forward(z, kernel_params)
    assert jnp.allclose(img, mimic, rtol=1e-2, atol=1e-2), (
        float(jnp.max(jnp.abs(img - mimic))))

    # Loose check: kernel (bf16/int8 weights, bias-free BN path) vs f32
    # reference with full PyTorch semantics.
    ref = reference_forward(z, params)
    assert jnp.allclose(img, ref, rtol=5e-2, atol=5e-2), (
        float(jnp.max(jnp.abs(img - ref))))

    print("KERNEL_OK")
</pallas_src>

<mosaic_0001>
module attributes {stable_mosaic.version = 11 : i64} {
  func.func @_generator_kernel(%arg0: memref<16x64xf32, #tpu.memory_space<vmem>>, %arg1: memref<64x128xbf16, #tpu.memory_space<vmem>>, %arg2: memref<128x256xbf16, #tpu.memory_space<vmem>>, %arg3: memref<256x512xbf16, #tpu.memory_space<vmem>>, %arg4: memref<512x768xbf16, #tpu.memory_space<vmem>>, %arg5: memref<768x1024xi8, #tpu.memory_space<vmem>>, %arg6: memref<1024x896xi8, #tpu.memory_space<vmem>>, %arg7: memref<16x1024xf32, #tpu.memory_space<vmem>>, %arg8: memref<16x896xf32, #tpu.memory_space<vmem>>) attributes {dimension_semantics = [], scalar_prefetch = 0 : i64, scratch_operands = 0 : i64, tpu.core_type = #tpu.core_type<tc>} {
    %c0 = arith.constant 0 : index
    %c0_0 = arith.constant 0 : index
    %0 = vector.load %arg0[%c0, %c0_0] : memref<16x64xf32, #tpu.memory_space<vmem>>, vector<16x64xf32>
    %c0_1 = arith.constant 0 : index
    %c0_2 = arith.constant 0 : index
    %1 = vector.load %arg1[%c0_1, %c0_2] : memref<64x128xbf16, #tpu.memory_space<vmem>>, vector<64x128xbf16>
    %c0_3 = arith.constant 0 : index
    %c0_4 = arith.constant 0 : index
    %2 = vector.load %arg2[%c0_3, %c0_4] : memref<128x256xbf16, #tpu.memory_space<vmem>>, vector<128x256xbf16>
    %c0_5 = arith.constant 0 : index
    %c0_6 = arith.constant 0 : index
    %3 = vector.load %arg3[%c0_5, %c0_6] : memref<256x512xbf16, #tpu.memory_space<vmem>>, vector<256x512xbf16>
    %c0_7 = arith.constant 0 : index
    %c0_8 = arith.constant 0 : index
    %4 = vector.load %arg4[%c0_7, %c0_8] : memref<512x768xbf16, #tpu.memory_space<vmem>>, vector<512x768xbf16>
    %c0_9 = arith.constant 0 : index
    %c0_10 = arith.constant 0 : index
    %5 = vector.load %arg5[%c0_9, %c0_10] : memref<768x1024xi8, #tpu.memory_space<vmem>>, vector<768x1024xi8>
    %c0_11 = arith.constant 0 : index
    %c0_12 = arith.constant 0 : index
    %6 = vector.load %arg6[%c0_11, %c0_12] : memref<1024x896xi8, #tpu.memory_space<vmem>>, vector<1024x896xi8>
    %c0_13 = arith.constant 0 : index
    %c0_14 = arith.constant 0 : index
    %7 = vector.load %arg7[%c0_13, %c0_14] : memref<16x1024xf32, #tpu.memory_space<vmem>>, vector<16x1024xf32>
    %8 = vector.extract_strided_slice %7 {offsets = [0, 0], sizes = [1, 128], strides = [1, 1]} : vector<16x1024xf32> to vector<1x128xf32>
    %9 = vector.extract_strided_slice %7 {offsets = [1, 0], sizes = [1, 256], strides = [1, 1]} : vector<16x1024xf32> to vector<1x256xf32>
    %10 = vector.extract_strided_slice %7 {offsets = [2, 0], sizes = [1, 256], strides = [1, 1]} : vector<16x1024xf32> to vector<1x256xf32>
    %11 = vector.extract_strided_slice %7 {offsets = [3, 0], sizes = [1, 512], strides = [1, 1]} : vector<16x1024xf32> to vector<1x512xf32>
    %12 = vector.extract_strided_slice %7 {offsets = [4, 0], sizes = [1, 512], strides = [1, 1]} : vector<16x1024xf32> to vector<1x512xf32>
    %13 = vector.extract_strided_slice %7 {offsets = [5, 0], sizes = [1, 768], strides = [1, 1]} : vector<16x1024xf32> to vector<1x768xf32>
    %14 = vector.extract_strided_slice %7 {offsets = [6, 0], sizes = [1, 768], strides = [1, 1]} : vector<16x1024xf32> to vector<1x768xf32>
    %15 = vector.extract_strided_slice %7 {offsets = [7, 0], sizes = [1, 1024], strides = [1, 1]} : vector<16x1024xf32> to vector<1x1024xf32>
    %16 = vector.extract_strided_slice %7 {offsets = [8, 0], sizes = [1, 1024], strides = [1, 1]} : vector<16x1024xf32> to vector<1x1024xf32>
    %17 = vector.extract_strided_slice %7 {offsets = [9, 0], sizes = [1, 896], strides = [1, 1]} : vector<16x1024xf32> to vector<1x896xf32>
    %18 = vector.extract_strided_slice %7 {offsets = [10, 0], sizes = [1, 1024], strides = [1, 1]} : vector<16x1024xf32> to vector<1x1024xf32>
    %19 = vector.extract_strided_slice %7 {offsets = [11, 0], sizes = [1, 896], strides = [1, 1]} : vector<16x1024xf32> to vector<1x896xf32>
    %20 = arith.truncf %0 : vector<16x64xf32> to vector<16x64xbf16>
    %cst = arith.constant dense<0.000000e+00> : vector<16x128xf32>
    %21 = tpu.matmul %20, %1, %cst {dimension_numbers = #tpu.dot_dimension_numbers<[1], [0], [0], [1], [0, 0, 1, 1], [], []>} : vector<16x64xbf16>, vector<64x128xbf16>, vector<16x128xf32> -> vector<16x128xf32>
    %22 = vector.broadcast %8 : vector<1x128xf32> to vector<16x128xf32>
    %23 = arith.addf %21, %22 : vector<16x128xf32>
    %cst_15 = arith.constant 0.000000e+00 : f32
    %24 = vector.broadcast %cst_15 : f32 to vector<16x128xf32>
    %25 = arith.cmpf ogt, %23, %24 : vector<16x128xf32>
    %cst_16 = arith.constant 2.000000e-01 : f32
    %26 = vector.broadcast %cst_16 : f32 to vector<16x128xf32>
    %27 = arith.mulf %26, %23 : vector<16x128xf32>
    %28 = arith.select %25, %23, %27 : vector<16x128xi1>, vector<16x128xf32>
    %29 = arith.truncf %28 : vector<16x128xf32> to vector<16x128xbf16>
    %cst_17 = arith.constant dense<0.000000e+00> : vector<16x256xf32>
    %30 = tpu.matmul %29, %2, %cst_17 {dimension_numbers = #tpu.dot_dimension_numbers<[1], [0], [0], [1], [0, 0, 1, 1], [], []>} : vector<16x128xbf16>, vector<128x256xbf16>, vector<16x256xf32> -> vector<16x256xf32>
    %cst_18 = arith.constant dense<0.000000e+00> : vector<256xf32>
    %31 = vector.multi_reduction <add>, %30, %cst_18 [0] : vector<16x256xf32> to vector<256xf32>
    %32 = vector.shape_cast %31 : vector<256xf32> to vector<1x256xf32>
    %cst_19 = arith.constant 1.600000e+01 : f32
    %33 = vector.broadcast %cst_19 : f32 to vector<1x256xf32>
    %34 = arith.divf %32, %33 : vector<1x256xf32>
    %35 = vector.broadcast %34 : vector<1x256xf32> to vector<16x256xf32>
    %36 = arith.subf %30, %35 : vector<16x256xf32>
    %37 = arith.mulf %36, %36 : vector<16x256xf32>
    %cst_20 = arith.constant dense<0.000000e+00> : vector<256xf32>
    %38 = vector.multi_reduction <add>, %37, %cst_20 [0] : vector<16x256xf32> to vector<256xf32>
    %39 = vector.shape_cast %38 : vector<256xf32> to vector<1x256xf32>
    %cst_21 = arith.constant 1.600000e+01 : f32
    %40 = vector.broadcast %cst_21 : f32 to vector<1x256xf32>
    %41 = arith.divf %39, %40 : vector<1x256xf32>
    %cst_22 = arith.constant 0.000000e+00 : f32
    %42 = vector.broadcast %cst_22 : f32 to vector<1x256xf32>
    %43 = arith.cmpf ogt, %41, %42 : vector<1x256xf32>
    %44 = math.rsqrt %41 : vector<1x256xf32>
    %cst_23 = arith.constant 0.000000e+00 : f32
    %45 = vector.broadcast %cst_23 : f32 to vector<1x256xf32>
    %46 = arith.select %43, %44, %45 : vector<1x256xi1>, vector<1x256xf32>
    %47 = arith.mulf %9, %46 : vector<1x256xf32>
    %48 = vector.broadcast %47 : vector<1x256xf32> to vector<16x256xf32>
    %49 = arith.mulf %36, %48 : vector<16x256xf32>
    %50 = vector.broadcast %10 : vector<1x256xf32> to vector<16x256xf32>
    %51 = arith.addf %49, %50 : vector<16x256xf32>
    %cst_24 = arith.constant 0.000000e+00 : f32
    %52 = vector.broadcast %cst_24 : f32 to vector<16x256xf32>
    %53 = arith.cmpf ogt, %51, %52 : vector<16x256xf32>
    %cst_25 = arith.constant 2.000000e-01 : f32
    %54 = vector.broadcast %cst_25 : f32 to vector<16x256xf32>
    %55 = arith.mulf %54, %51 : vector<16x256xf32>
    %56 = arith.select %53, %51, %55 : vector<16x256xi1>, vector<16x256xf32>
    %57 = arith.truncf %56 : vector<16x256xf32> to vector<16x256xbf16>
    %cst_26 = arith.constant dense<0.000000e+00> : vector<16x512xf32>
    %58 = tpu.matmul %57, %3, %cst_26 {dimension_numbers = #tpu.dot_dimension_numbers<[1], [0], [0], [1], [0, 0, 1, 1], [], []>} : vector<16x256xbf16>, vector<256x512xbf16>, vector<16x512xf32> -> vector<16x512xf32>
    %cst_27 = arith.constant dense<0.000000e+00> : vector<512xf32>
    %59 = vector.multi_reduction <add>, %58, %cst_27 [0] : vector<16x512xf32> to vector<512xf32>
    %60 = vector.shape_cast %59 : vector<512xf32> to vector<1x512xf32>
    %cst_28 = arith.constant 1.600000e+01 : f32
    %61 = vector.broadcast %cst_28 : f32 to vector<1x512xf32>
    %62 = arith.divf %60, %61 : vector<1x512xf32>
    %63 = vector.broadcast %62 : vector<1x512xf32> to vector<16x512xf32>
    %64 = arith.subf %58, %63 : vector<16x512xf32>
    %65 = arith.mulf %64, %64 : vector<16x512xf32>
    %cst_29 = arith.constant dense<0.000000e+00> : vector<512xf32>
    %66 = vector.multi_reduction <add>, %65, %cst_29 [0] : vector<16x512xf32> to vector<512xf32>
    %67 = vector.shape_cast %66 : vector<512xf32> to vector<1x512xf32>
    %cst_30 = arith.constant 1.600000e+01 : f32
    %68 = vector.broadcast %cst_30 : f32 to vector<1x512xf32>
    %69 = arith.divf %67, %68 : vector<1x512xf32>
    %cst_31 = arith.constant 0.000000e+00 : f32
    %70 = vector.broadcast %cst_31 : f32 to vector<1x512xf32>
    %71 = arith.cmpf ogt, %69, %70 : vector<1x512xf32>
    %72 = math.rsqrt %69 : vector<1x512xf32>
    %cst_32 = arith.constant 0.000000e+00 : f32
    %73 = vector.broadcast %cst_32 : f32 to vector<1x512xf32>
    %74 = arith.select %71, %72, %73 : vector<1x512xi1>, vector<1x512xf32>
    %75 = arith.mulf %11, %74 : vector<1x512xf32>
    %76 = vector.broadcast %75 : vector<1x512xf32> to vector<16x512xf32>
    %77 = arith.mulf %64, %76 : vector<16x512xf32>
    %78 = vector.broadcast %12 : vector<1x512xf32> to vector<16x512xf32>
    %79 = arith.addf %77, %78 : vector<16x512xf32>
    %cst_33 = arith.constant 0.000000e+00 : f32
    %80 = vector.broadcast %cst_33 : f32 to vector<16x512xf32>
    %81 = arith.cmpf ogt, %79, %80 : vector<16x512xf32>
    %cst_34 = arith.constant 2.000000e-01 : f32
    %82 = vector.broadcast %cst_34 : f32 to vector<16x512xf32>
    %83 = arith.mulf %82, %79 : vector<16x512xf32>
    %84 = arith.select %81, %79, %83 : vector<16x512xi1>, vector<16x512xf32>
    %85 = arith.truncf %84 : vector<16x512xf32> to vector<16x512xbf16>
    %cst_35 = arith.constant dense<0.000000e+00> : vector<16x768xf32>
    %86 = tpu.matmul %85, %4, %cst_35 {dimension_numbers = #tpu.dot_dimension_numbers<[1], [0], [0], [1], [0, 0, 1, 1], [], []>} : vector<16x512xbf16>, vector<512x768xbf16>, vector<16x768xf32> -> vector<16x768xf32>
    %cst_36 = arith.constant dense<0.000000e+00> : vector<768xf32>
    %87 = vector.multi_reduction <add>, %86, %cst_36 [0] : vector<16x768xf32> to vector<768xf32>
    %88 = vector.shape_cast %87 : vector<768xf32> to vector<1x768xf32>
    %cst_37 = arith.constant 1.600000e+01 : f32
    %89 = vector.broadcast %cst_37 : f32 to vector<1x768xf32>
    %90 = arith.divf %88, %89 : vector<1x768xf32>
    %91 = vector.broadcast %90 : vector<1x768xf32> to vector<16x768xf32>
    %92 = arith.subf %86, %91 : vector<16x768xf32>
    %93 = arith.mulf %92, %92 : vector<16x768xf32>
    %cst_38 = arith.constant dense<0.000000e+00> : vector<768xf32>
    %94 = vector.multi_reduction <add>, %93, %cst_38 [0] : vector<16x768xf32> to vector<768xf32>
    %95 = vector.shape_cast %94 : vector<768xf32> to vector<1x768xf32>
    %cst_39 = arith.constant 1.600000e+01 : f32
    %96 = vector.broadcast %cst_39 : f32 to vector<1x768xf32>
    %97 = arith.divf %95, %96 : vector<1x768xf32>
    %cst_40 = arith.constant 0.000000e+00 : f32
    %98 = vector.broadcast %cst_40 : f32 to vector<1x768xf32>
    %99 = arith.cmpf ogt, %97, %98 : vector<1x768xf32>
    %100 = math.rsqrt %97 : vector<1x768xf32>
    %cst_41 = arith.constant 0.000000e+00 : f32
    %101 = vector.broadcast %cst_41 : f32 to vector<1x768xf32>
    %102 = arith.select %99, %100, %101 : vector<1x768xi1>, vector<1x768xf32>
    %103 = arith.mulf %13, %102 : vector<1x768xf32>
    %104 = vector.broadcast %103 : vector<1x768xf32> to vector<16x768xf32>
    %105 = arith.mulf %92, %104 : vector<16x768xf32>
    %106 = vector.broadcast %14 : vector<1x768xf32> to vector<16x768xf32>
    %107 = arith.addf %105, %106 : vector<16x768xf32>
    %cst_42 = arith.constant 0.000000e+00 : f32
    %108 = vector.broadcast %cst_42 : f32 to vector<16x768xf32>
    %109 = arith.cmpf ogt, %107, %108 : vector<16x768xf32>
    %cst_43 = arith.constant 2.000000e-01 : f32
    %110 = vector.broadcast %cst_43 : f32 to vector<16x768xf32>
    %111 = arith.mulf %110, %107 : vector<16x768xf32>
    %112 = arith.select %109, %107, %111 : vector<16x768xi1>, vector<16x768xf32>
    %113 = arith.sitofp %5 : vector<768x1024xi8> to vector<768x1024xbf16>
    %114 = arith.truncf %112 : vector<16x768xf32> to vector<16x768xbf16>
    %cst_44 = arith.constant dense<0.000000e+00> : vector<16x1024xf32>
    %115 = tpu.matmul %114, %113, %cst_44 {dimension_numbers = #tpu.dot_dimension_numbers<[1], [0], [0], [1], [0, 0, 1, 1], [], []>} : vector<16x768xbf16>, vector<768x1024xbf16>, vector<16x1024xf32> -> vector<16x1024xf32>
    %116 = vector.broadcast %18 : vector<1x1024xf32> to vector<16x1024xf32>
    %117 = arith.mulf %115, %116 : vector<16x1024xf32>
    %cst_45 = arith.constant dense<0.000000e+00> : vector<1024xf32>
    %118 = vector.multi_reduction <add>, %117, %cst_45 [0] : vector<16x1024xf32> to vector<1024xf32>
    %119 = vector.shape_cast %118 : vector<1024xf32> to vector<1x1024xf32>
    %cst_46 = arith.constant 1.600000e+01 : f32
    %120 = vector.broadcast %cst_46 : f32 to vector<1x1024xf32>
    %121 = arith.divf %119, %120 : vector<1x1024xf32>
    %122 = vector.broadcast %121 : vector<1x1024xf32> to vector<16x1024xf32>
    %123 = arith.subf %117, %122 : vector<16x1024xf32>
    %124 = arith.mulf %123, %123 : vector<16x1024xf32>
    %cst_47 = arith.constant dense<0.000000e+00> : vector<1024xf32>
    %125 = vector.multi_reduction <add>, %124, %cst_47 [0] : vector<16x1024xf32> to vector<1024xf32>
    %126 = vector.shape_cast %125 : vector<1024xf32> to vector<1x1024xf32>
    %cst_48 = arith.constant 1.600000e+01 : f32
    %127 = vector.broadcast %cst_48 : f32 to vector<1x1024xf32>
    %128 = arith.divf %126, %127 : vector<1x1024xf32>
    %cst_49 = arith.constant 0.000000e+00 : f32
    %129 = vector.broadcast %cst_49 : f32 to vector<1x1024xf32>
    %130 = arith.cmpf ogt, %128, %129 : vector<1x1024xf32>
    %131 = math.rsqrt %128 : vector<1x1024xf32>
    %cst_50 = arith.constant 0.000000e+00 : f32
    %132 = vector.broadcast %cst_50 : f32 to vector<1x1024xf32>
    %133 = arith.select %130, %131, %132 : vector<1x1024xi1>, vector<1x1024xf32>
    %134 = arith.mulf %15, %133 : vector<1x1024xf32>
    %135 = vector.broadcast %134 : vector<1x1024xf32> to vector<16x1024xf32>
    %136 = arith.mulf %123, %135 : vector<16x1024xf32>
    %137 = vector.broadcast %16 : vector<1x1024xf32> to vector<16x1024xf32>
    %138 = arith.addf %136, %137 : vector<16x1024xf32>
    %cst_51 = arith.constant 0.000000e+00 : f32
    %139 = vector.broadcast %cst_51 : f32 to vector<16x1024xf32>
    %140 = arith.cmpf ogt, %138, %139 : vector<16x1024xf32>
    %cst_52 = arith.constant 2.000000e-01 : f32
    %141 = vector.broadcast %cst_52 : f32 to vector<16x1024xf32>
    %142 = arith.mulf %141, %138 : vector<16x1024xf32>
    %143 = arith.select %140, %138, %142 : vector<16x1024xi1>, vector<16x1024xf32>
    %144 = arith.sitofp %6 : vector<1024x896xi8> to vector<1024x896xbf16>
    %145 = arith.truncf %143 : vector<16x1024xf32> to vector<16x1024xbf16>
    %cst_53 = arith.constant dense<0.000000e+00> : vector<16x896xf32>
    %146 = tpu.matmul %145, %144, %cst_53 {dimension_numbers = #tpu.dot_dimension_numbers<[1], [0], [0], [1], [0, 0, 1, 1], [], []>} : vector<16x1024xbf16>, vector<1024x896xbf16>, vector<16x896xf32> -> vector<16x896xf32>
    %147 = vector.broadcast %19 : vector<1x896xf32> to vector<16x896xf32>
    %148 = arith.mulf %146, %147 : vector<16x896xf32>
    %149 = vector.broadcast %17 : vector<1x896xf32> to vector<16x896xf32>
    %150 = arith.addf %148, %149 : vector<16x896xf32>
    %151 = math.tanh %150 : vector<16x896xf32>
    %c0_54 = arith.constant 0 : index
    %c0_55 = arith.constant 0 : index
    %152 = vector.load %arg8[%c0_54, %c0_55] : memref<16x896xf32, #tpu.memory_space<vmem>>, vector<16x896xf32>
    tpu.vector_store %arg8[%c0_54, %c0_55], %151 {strides = array<i32>} : memref<16x896xf32, #tpu.memory_space<vmem>>, vector<16x896xf32>,
    return
  }
}

</mosaic_0001>

<llo_original>
// kernel: generator_wgan_forward.1
$region0: #{generator_wgan_forward.1}
  #allocation0 [shape = 'u32[]', space=smem, size = 0x4, offset = 0x4, fixed_abs, tag = 'smem constant byte address 0x4 - core index']
  #allocation1 [shape = 'u32[72,128]{1,0:T(1,128)}', space=vmem, size = 0x9000, scoped, tag = 'internal scratch']
  %s0 = inlined_call_operand.hbm [shape: f32[16,64], index: 0, kind: input, shape index: {}]
  %s1 = inlined_call_operand.hbm [shape: bf16[64,128], index: 1, kind: input, shape index: {}]
  %s2 = inlined_call_operand.hbm [shape: bf16[128,256], index: 2, kind: input, shape index: {}]
  %s3 = inlined_call_operand.hbm [shape: bf16[256,512], index: 3, kind: input, shape index: {}]
  %s4 = inlined_call_operand.hbm [shape: bf16[512,768], index: 4, kind: input, shape index: {}]
  %s5 = inlined_call_operand.hbm [shape: s8[768,1024], index: 5, kind: input, shape index: {}]
  %s6 = inlined_call_operand.hbm [shape: s8[1024,896], index: 6, kind: input, shape index: {}]
  %s7 = inlined_call_operand.hbm [shape: f32[16,1024], index: 7, kind: input, shape index: {}]
  %s8 = inlined_call_operand.vmem [shape: f32[16,896], index: 8, kind: output, shape index: {}]
  %s9 = sld [smem:[#allocation0]]
  $region74: #{generator_wgan_forward.1} parent=0
    _
  %s11 = ssub.s32 1, %s9
  %s12 = scalar_select 0, %s11, %s9
  $region1: #{generator_wgan_forward.1} parent=0
    #allocation2 [shape = 'u8[8192]{0}', space=vmem, size = 0x2000, scoped, tag = 'input window, operand 0, single buffered']
    #allocation3 [shape = 's32[1]{0}', space=sflag, size = 0x4, scoped, tag = 'scoped memory for generator_wgan_forward.1']
    #allocation4 [shape = 'u8[16384]{0}', space=vmem, size = 0x4000, scoped, tag = 'input window, operand 1, single buffered']
    #allocation5 [shape = 's32[1]{0}', space=sflag, size = 0x4, scoped, tag = 'scoped memory for generator_wgan_forward.1']
    #allocation6 [shape = 'u8[65536]{0}', space=vmem, size = 0x10000, scoped, tag = 'input window, operand 2, single buffered']
    #allocation7 [shape = 'u8[262144]{0}', space=vmem, size = 0x40000, scoped, tag = 'input window, operand 3, single buffered']
    #allocation8 [shape = 's32[1]{0}', space=sflag, size = 0x4, scoped, tag = 'scoped memory for generator_wgan_forward.1']
    #allocation9 [shape = 'u8[786432]{0}', space=vmem, size = 0xc0000, scoped, tag = 'input window, operand 4, single buffered']
    #allocation10 [shape = 'u8[786432]{0}', space=vmem, size = 0xc0000, scoped, tag = 'input window, operand 5, single buffered']
    #allocation11 [shape = 's32[1]{0}', space=sflag, size = 0x4, scoped, tag = 'scoped memory for generator_wgan_forward.1']
    #allocation12 [shape = 'u8[917504]{0}', space=vmem, size = 0xe0000, scoped, tag = 'input window, operand 6, single buffered']
    #allocation13 [shape = 'u8[65536]{0}', space=vmem, size = 0x10000, scoped, tag = 'input window, operand 7, single buffered']
    #allocation14 [shape = 's32[1]{0}', space=sflag, size = 0x4, scoped, tag = 'scoped memory for generator_wgan_forward.1']
    %13 = vsyncpa [#allocation3], 0
    %14 = vsyncpa [#allocation5], 0
    %15 = vsyncpa [#allocation8], 0
    %16 = vsyncpa [#allocation11], 0
    %17 = vsyncpa [#allocation14], 0
    // Predicated region
    $region2: #{generator_wgan_forward.1} parent=1 // pred_check
      _
    $region3: #{generator_wgan_forward.1} parent=1 // pred_check_branch
      %19 = sbr.rel (0) target = $region5
    $region4: #{generator_wgan_forward.1} parent=1 // pred_region
      %21 = vsyncadd [#allocation3], 0
      %s22 = sshll.u32 %s0, 4
      %s23 = int_to_ptr.hbm [resolvable:$true] %s22
      %s24 = sshll.u32 [#allocation2], 4
      %s25 = int_to_ptr.vmem [resolvable:$true] %s24
      %30 = dma.hbm_to_vmem [thread:$0]  %s23, 256, %s25, [#allocation3], 128, 128, 8
    $region5: #{generator_wgan_forward.1} parent=1 // pred_fallthru
      _
    // Predicated region
    $region6: #{generator_wgan_forward.1} parent=1 // pred_check
      _
    $region7: #{generator_wgan_forward.1} parent=1 // pred_check_branch
      %32 = sbr.rel (0) target = $region9
    $region8: #{generator_wgan_forward.1} parent=1 // pred_region
      %34 = vsyncadd [#allocation5], 0
      %s35 = sshll.u32 %s1, 4
      %s36 = int_to_ptr.hbm [resolvable:$true] %s35
      %s37 = sshll.u32 [#allocation4], 4
      %s38 = int_to_ptr.vmem [resolvable:$true] %s37
      %43 = dma.hbm_to_vmem [thread:$0]  %s36, 512, %s38, [#allocation5], 64, 64, 4
    $region9: #{generator_wgan_forward.1} parent=1 // pred_fallthru
      _
    // Predicated region
    $region10: #{generator_wgan_forward.1} parent=1 // pred_check
      _
    $region11: #{generator_wgan_forward.1} parent=1 // pred_check_branch
      %45 = sbr.rel (0) target = $region13
    $region12: #{generator_wgan_forward.1} parent=1 // pred_region
      %47 = vsyncadd [#allocation5], 0
      %s48 = sshll.u32 %s2, 4
      %s49 = int_to_ptr.hbm [resolvable:$true] %s48
      %s50 = sshll.u32 [#allocation6], 4
      %s51 = int_to_ptr.vmem [resolvable:$true] %s50
      %56 = dma.hbm_to_vmem [thread:$0]  %s49, 2048, %s51, [#allocation5], 128, 128, 8
    $region13: #{generator_wgan_forward.1} parent=1 // pred_fallthru
      _
    // Predicated region
    $region14: #{generator_wgan_forward.1} parent=1 // pred_check
      _
    $region15: #{generator_wgan_forward.1} parent=1 // pred_check_branch
      %58 = sbr.rel (0) target = $region17
    $region16: #{generator_wgan_forward.1} parent=1 // pred_region
      %60 = vsyncadd [#allocation8], 0
      %s61 = sshll.u32 %s3, 4
      %s62 = int_to_ptr.hbm [resolvable:$true] %s61
      %s63 = sshll.u32 [#allocation7], 4
      %s64 = int_to_ptr.vmem [resolvable:$true] %s63
      %69 = dma.hbm_to_vmem [thread:$0]  %s62, 8192, %s64, [#allocation8], 256, 256, 16
    $region17: #{generator_wgan_forward.1} parent=1 // pred_fallthru
      _
    // Predicated region
    $region18: #{generator_wgan_forward.1} parent=1 // pred_check
      _
    $region19: #{generator_wgan_forward.1} parent=1 // pred_check_branch
      %71 = sbr.rel (0) target = $region21
    $region20: #{generator_wgan_forward.1} parent=1 // pred_region
      %73 = vsyncadd [#allocation8], 0
      %s74 = sshll.u32 %s4, 4
      %s75 = int_to_ptr.hbm [resolvable:$true] %s74
      %s76 = sshll.u32 [#allocation9], 4
      %s77 = int_to_ptr.vmem [resolvable:$true] %s76
      %82 = dma.hbm_to_vmem [thread:$0]  %s75, 24576, %s77, [#allocation8], 384, 384, 24
    $region21: #{generator_wgan_forward.1} parent=1 // pred_fallthru
      _
    // Predicated region
    $region22: #{generator_wgan_forward.1} parent=1 // pred_check
      _
    $region23: #{generator_wgan_forward.1} parent=1 // pred_check_branch
      %84 = sbr.rel (0) target = $region25
    $region24: #{generator_wgan_forward.1} parent=1 // pred_region
      %86 = vsyncadd [#allocation11], 0
      %s87 = sshll.u32 %s5, 4
      %s88 = int_to_ptr.hbm [resolvable:$true] %s87
      %s89 = sshll.u32 [#allocation10], 4
      %s90 = int_to_ptr.vmem [resolvable:$true] %s89
      %95 = dma.hbm_to_vmem [thread:$0]  %s88, 24576, %s90, [#allocation11], 1024, 1024, 64
    $region25: #{generator_wgan_forward.1} parent=1 // pred_fallthru
      _
    // Predicated region
    $region26: #{generator_wgan_forward.1} parent=1 // pred_check
      _
    $region27: #{generator_wgan_forward.1} parent=1 // pred_check_branch
      %97 = sbr.rel (0) target = $region29
    $region28: #{generator_wgan_forward.1} parent=1 // pred_region
      %99 = vsyncadd [#allocation11], 0
      %s100 = sshll.u32 %s6, 4
      %s101 = int_to_ptr.hbm [resolvable:$true] %s100
      %s102 = sshll.u32 [#allocation12], 4
      %s103 = int_to_ptr.vmem [resolvable:$true] %s102
      %108 = dma.hbm_to_vmem [thread:$0]  %s101, 28672, %s103, [#allocation11], 896, 896, 56
    $region29: #{generator_wgan_forward.1} parent=1 // pred_fallthru
      _
    // Predicated region
    $region30: #{generator_wgan_forward.1} parent=1 // pred_check
      _
    $region31: #{generator_wgan_forward.1} parent=1 // pred_check_branch
      %110 = sbr.rel (0) target = $region33
    $region32: #{generator_wgan_forward.1} parent=1 // pred_region
      %112 = vsyncadd [#allocation14], 0
      %s113 = sshll.u32 %s7, 4
      %s114 = int_to_ptr.hbm [resolvable:$true] %s113
      %s115 = sshll.u32 [#allocation13], 4
      %s116 = int_to_ptr.vmem [resolvable:$true] %s115
      %121 = dma.hbm_to_vmem [thread:$0]  %s114, 2048, %s116, [#allocation14], 1024, 1024, 64
    $region33: #{generator_wgan_forward.1} parent=1 // pred_fallthru
      _
    // Predicated region
    $region34: #{generator_wgan_forward.1} parent=1 // pred_check
      _
    $region35: #{generator_wgan_forward.1} parent=1 // pred_check_branch
      %123 = sbr.rel (0) target = $region37
    $region36: #{generator_wgan_forward.1} parent=1 // pred_region
      %125 = dma.done [#allocation3], 256
    $region37: #{generator_wgan_forward.1} parent=1 // pred_fallthru
      _
    // Predicated region
    $region38: #{generator_wgan_forward.1} parent=1 // pred_check
      _
    $region39: #{generator_wgan_forward.1} parent=1 // pred_check_branch
      %127 = sbr.rel (0) target = $region41
    $region40: #{generator_wgan_forward.1} parent=1 // pred_region
      %129 = dma.done [#allocation5], 512
    $region41: #{generator_wgan_forward.1} parent=1 // pred_fallthru
      _
    // Predicated region
    $region42: #{generator_wgan_forward.1} parent=1 // pred_check
      _
    $region43: #{generator_wgan_forward.1} parent=1 // pred_check_branch
      %131 = sbr.rel (0) target = $region45
    $region44: #{generator_wgan_forward.1} parent=1 // pred_region
      %133 = dma.done [#allocation5], 2048
    $region45: #{generator_wgan_forward.1} parent=1 // pred_fallthru
      _
    // Predicated region
    $region46: #{generator_wgan_forward.1} parent=1 // pred_check
      _
    $region47: #{generator_wgan_forward.1} parent=1 // pred_check_branch
      %135 = sbr.rel (0) target = $region49
    $region48: #{generator_wgan_forward.1} parent=1 // pred_region
      %137 = dma.done [#allocation8], 8192
    $region49: #{generator_wgan_forward.1} parent=1 // pred_fallthru
      _
    // Predicated region
    $region50: #{generator_wgan_forward.1} parent=1 // pred_check
      _
    $region51: #{generator_wgan_forward.1} parent=1 // pred_check_branch
      %139 = sbr.rel (0) target = $region53
    $region52: #{generator_wgan_forward.1} parent=1 // pred_region
      %141 = dma.done [#allocation8], 24576
    $region53: #{generator_wgan_forward.1} parent=1 // pred_fallthru
      _
    // Predicated region
    $region54: #{generator_wgan_forward.1} parent=1 // pred_check
      _
    $region55: #{generator_wgan_forward.1} parent=1 // pred_check_branch
      %143 = sbr.rel (0) target = $region57
    $region56: #{generator_wgan_forward.1} parent=1 // pred_region
      %145 = dma.done [#allocation11], 24576
    $region57: #{generator_wgan_forward.1} parent=1 // pred_fallthru
      _
    // Predicated region
    $region58: #{generator_wgan_forward.1} parent=1 // pred_check
      _
    $region59: #{generator_wgan_forward.1} parent=1 // pred_check_branch
      %147 = sbr.rel (0) target = $region61
    $region60: #{generator_wgan_forward.1} parent=1 // pred_region
      %149 = dma.done [#allocation11], 28672
    $region61: #{generator_wgan_forward.1} parent=1 // pred_fallthru
      _
    // Predicated region
    $region62: #{generator_wgan_forward.1} parent=1 // pred_check
      _
    $region63: #{generator_wgan_forward.1} parent=1 // pred_check_branch
      %151 = sbr.rel (0) target = $region65
    $region64: #{generator_wgan_forward.1} parent=1 // pred_region
      %153 = dma.done [#allocation14], 2048
    $region65: #{generator_wgan_forward.1} parent=1 // pred_fallthru
      _
    %v155 = vld [vmem:[#allocation2] sm:$0xff]
    %v156 = vld [vmem:[#allocation2 + $0x8] sm:$0xff]
    %v157 = vld [vmem:[#allocation4] sm:$0xf]
    %v158 = vld [vmem:[#allocation4 + $0x4] sm:$0xf]
    %v159 = vld [vmem:[#allocation4 + $0x8] sm:$0xf]
    %v160 = vld [vmem:[#allocation4 + $0xc] sm:$0xf]
    %v161 = vld [vmem:[#allocation4 + $0x10] sm:$0xf]
    %v162 = vld [vmem:[#allocation4 + $0x14] sm:$0xf]
    %v163 = vld [vmem:[#allocation4 + $0x18] sm:$0xf]
    %v164 = vld [vmem:[#allocation4 + $0x1c] sm:$0xf]
    %v165 = vld [vmem:[#allocation6] sm:$0xff]
    %v166 = vld [vmem:[#allocation6 + $0x8] sm:$0xff]
    %v167 = vld [vmem:[#allocation6 + $0x10] sm:$0xff]
    %v168 = vld [vmem:[#allocation6 + $0x18] sm:$0xff]
    %v169 = vld [vmem:[#allocation6 + $0x20] sm:$0xff]
    %v170 = vld [vmem:[#allocation6 + $0x28] sm:$0xff]
    %v171 = vld [vmem:[#allocation6 + $0x30] sm:$0xff]
    %v172 = vld [vmem:[#allocation6 + $0x38] sm:$0xff]
    %v173 = vld [vmem:[#allocation6 + $0x40] sm:$0xff]
    %v174 = vld [vmem:[#allocation6 + $0x48] sm:$0xff]
    %v175 = vld [vmem:[#allocation6 + $0x50] sm:$0xff]
    %v176 = vld [vmem:[#allocation6 + $0x58] sm:$0xff]
    %v177 = vld [vmem:[#allocation6 + $0x60] sm:$0xff]
    %v178 = vld [vmem:[#allocation6 + $0x68] sm:$0xff]
    %v179 = vld [vmem:[#allocation6 + $0x70] sm:$0xff]
    %v180 = vld [vmem:[#allocation6 + $0x78] sm:$0xff]
    %v181 = vld [vmem:[#allocation7] sm:$0xff]
    %v182 = vld [vmem:[#allocation7 + $0x8] sm:$0xff]
    %v183 = vld [vmem:[#allocation7 + $0x10] sm:$0xff]
    %v184 = vld [vmem:[#allocation7 + $0x18] sm:$0xff]
    %v185 = vld [vmem:[#allocation7 + $0x20] sm:$0xff]
    %v186 = vld [vmem:[#allocation7 + $0x28] sm:$0xff]
    %v187 = vld [vmem:[#allocation7 + $0x30] sm:$0xff]
    %v188 = vld [vmem:[#allocation7 + $0x38] sm:$0xff]
    %v189 = vld [vmem:[#allocation7 + $0x40] sm:$0xff]
    %v190 = vld [vmem:[#allocation7 + $0x48] sm:$0xff]
    %v191 = vld [vmem:[#allocation7 + $0x50] sm:$0xff]
    %v192 = vld [vmem:[#allocation7 + $0x58] sm:$0xff]
    %v193 = vld [vmem:[#allocation7 + $0x60] sm:$0xff]
    %v194 = vld [vmem:[#allocation7 + $0x68] sm:$0xff]
    %v195 = vld [vmem:[#allocation7 + $0x70] sm:$0xff]
    %v196 = vld [vmem:[#allocation7 + $0x78] sm:$0xff]
    %v197 = vld [vmem:[#allocation7 + $0x80] sm:$0xff]
    %v198 = vld [vmem:[#allocation7 + $0x88] sm:$0xff]
    %v199 = vld [vmem:[#allocation7 + $0x90] sm:$0xff]
    %v200 = vld [vmem:[#allocation7 + $0x98] sm:$0xff]
    %v201 = vld [vmem:[#allocation7 + $0xa0] sm:$0xff]
    %v202 = vld [vmem:[#allocation7 + $0xa8] sm:$0xff]
    %v203 = vld [vmem:[#allocation7 + $0xb0] sm:$0xff]
    %v204 = vld [vmem:[#allocation7 + $0xb8] sm:$0xff]
    %v205 = vld [vmem:[#allocation7 + $0xc0] sm:$0xff]
    %v206 = vld [vmem:[#allocation7 + $0xc8] sm:$0xff]
    %v207 = vld [vmem:[#allocation7 + $0xd0] sm:$0xff]
    %v208 = vld [vmem:[#allocation7 + $0xd8] sm:$0xff]
    %v209 = vld [vmem:[#allocation7 + $0xe0] sm:$0xff]
    %v210 = vld [vmem:[#allocation7 + $0xe8] sm:$0xff]
    %v211 = vld [vmem:[#allocation7 + $0xf0] sm:$0xff]
    %v212 = vld [vmem:[#allocation7 + $0xf8] sm:$0xff]
    %v213 = vld [vmem:[#allocation7 + $0x100] sm:$0xff]
    %v214 = vld [vmem:[#allocation7 + $0x108] sm:$0xff]
    %v215 = vld [vmem:[#allocation7 + $0x110] sm:$0xff]
    %v216 = vld [vmem:[#allocation7 + $0x118] sm:$0xff]
    %v217 = vld [vmem:[#allocation7 + $0x120] sm:$0xff]
    %v218 = vld [vmem:[#allocation7 + $0x128] sm:$0xff]
    %v219 = vld [vmem:[#allocation7 + $0x130] sm:$0xff]
    %v220 = vld [vmem:[#allocation7 + $0x138] sm:$0xff]
    %v221 = vld [vmem:[#allocation7 + $0x140] sm:$0xff]
    %v222 = vld [vmem:[#allocation7 + $0x148] sm:$0xff]
    %v223 = vld [vmem:[#allocation7 + $0x150] sm:$0xff]
    %v224 = vld [vmem:[#allocation7 + $0x158] sm:$0xff]
    %v225 = vld [vmem:[#allocation7 + $0x160] sm:$0xff]
    %v226 = vld [vmem:[#allocation7 + $0x168] sm:$0xff]
    %v227 = vld [vmem:[#allocation7 + $0x170] sm:$0xff]
    %v228 = vld [vmem:[#allocation7 + $0x178] sm:$0xff]
    %v229 = vld [vmem:[#allocation7 + $0x180] sm:$0xff]
    %v230 = vld [vmem:[#allocation7 + $0x188] sm:$0xff]
    %v231 = vld [vmem:[#allocation7 + $0x190] sm:$0xff]
    %v232 = vld [vmem:[#allocation7 + $0x198] sm:$0xff]
    %v233 = vld [vmem:[#allocation7 + $0x1a0] sm:$0xff]
    %v234 = vld [vmem:[#allocation7 + $0x1a8] sm:$0xff]
    %v235 = vld [vmem:[#allocation7 + $0x1b0] sm:$0xff]
    %v236 = vld [vmem:[#allocation7 + $0x1b8] sm:$0xff]
    %v237 = vld [vmem:[#allocation7 + $0x1c0] sm:$0xff]
    %v238 = vld [vmem:[#allocation7 + $0x1c8] sm:$0xff]
    %v239 = vld [vmem:[#allocation7 + $0x1d0] sm:$0xff]
    %v240 = vld [vmem:[#allocation7 + $0x1d8] sm:$0xff]
    %v241 = vld [vmem:[#allocation7 + $0x1e0] sm:$0xff]
    %v242 = vld [vmem:[#allocation7 + $0x1e8] sm:$0xff]
    %v243 = vld [vmem:[#allocation7 + $0x1f0] sm:$0xff]
    %v244 = vld [vmem:[#allocation7 + $0x1f8] sm:$0xff]
    %v245 = vld [vmem:[#allocation9] sm:$0xff]
    %v246 = vld [vmem:[#allocation9 + $0x8] sm:$0xff]
    %v247 = vld [vmem:[#allocation9 + $0x10] sm:$0xff]
    %v248 = vld [vmem:[#allocation9 + $0x18] sm:$0xff]
    %v249 = vld [vmem:[#allocation9 + $0x20] sm:$0xff]
    %v250 = vld [vmem:[#allocation9 + $0x28] sm:$0xff]
    %v251 = vld [vmem:[#allocation9 + $0x30] sm:$0xff]
    %v252 = vld [vmem:[#allocation9 + $0x38] sm:$0xff]
    %v253 = vld [vmem:[#allocation9 + $0x40] sm:$0xff]
    %v254 = vld [vmem:[#allocation9 + $0x48] sm:$0xff]
    %v255 = vld [vmem:[#allocation9 + $0x50] sm:$0xff]
    %v256 = vld [vmem:[#allocation9 + $0x58] sm:$0xff]
    %v257 = vld [vmem:[#allocation9 + $0x60] sm:$0xff]
    %v258 = vld [vmem:[#allocation9 + $0x68] sm:$0xff]
    %v259 = vld [vmem:[#allocation9 + $0x70] sm:$0xff]
    %v260 = vld [vmem:[#allocation9 + $0x78] sm:$0xff]
    %v261 = vld [vmem:[#allocation9 + $0x80] sm:$0xff]
    %v262 = vld [vmem:[#allocation9 + $0x88] sm:$0xff]
    %v263 = vld [vmem:[#allocation9 + $0x90] sm:$0xff]
    %v264 = vld [vmem:[#allocation9 + $0x98] sm:$0xff]
    %v265 = vld [vmem:[#allocation9 + $0xa0] sm:$0xff]
    %v266 = vld [vmem:[#allocation9 + $0xa8] sm:$0xff]
    %v267 = vld [vmem:[#allocation9 + $0xb0] sm:$0xff]
    %v268 = vld [vmem:[#allocation9 + $0xb8] sm:$0xff]
    %v269 = vld [vmem:[#allocation9 + $0xc0] sm:$0xff]
    %v270 = vld [vmem:[#allocation9 + $0xc8] sm:$0xff]
    %v271 = vld [vmem:[#allocation9 + $0xd0] sm:$0xff]
    %v272 = vld [vmem:[#allocation9 + $0xd8] sm:$0xff]
    %v273 = vld [vmem:[#allocation9 + $0xe0] sm:$0xff]
    %v274 = vld [vmem:[#allocation9 + $0xe8] sm:$0xff]
    %v275 = vld [vmem:[#allocation9 + $0xf0] sm:$0xff]
    %v276 = vld [vmem:[#allocation9 + $0xf8] sm:$0xff]
    %v277 = vld [vmem:[#allocation9 + $0x100] sm:$0xff]
    %v278 = vld [vmem:[#allocation9 + $0x108] sm:$0xff]
    %v279 = vld [vmem:[#allocation9 + $0x110] sm:$0xff]
    %v280 = vld [vmem:[#allocation9 + $0x118] sm:$0xff]
    %v281 = vld [vmem:[#allocation9 + $0x120] sm:$0xff]
    %v282 = vld [vmem:[#allocation9 + $0x128] sm:$0xff]
    %v283 = vld [vmem:[#allocation9 + $0x130] sm:$0xff]
    %v284 = vld [vmem:[#allocation9 + $0x138] sm:$0xff]
    %v285 = vld [vmem:[#allocation9 + $0x140] sm:$0xff]
    %v286 = vld [vmem:[#allocation9 + $0x148] sm:$0xff]
    %v287 = vld [vmem:[#allocation9 + $0x150] sm:$0xff]
    %v288 = vld [vmem:[#allocation9 + $0x158] sm:$0xff]
    %v289 = vld [vmem:[#allocation9 + $0x160] sm:$0xff]
    %v290 = vld [vmem:[#allocation9 + $0x168] sm:$0xff]
    %v291 = vld [vmem:[#allocation9 + $0x170] sm:$0xff]
    %v292 = vld [vmem:[#allocation9 + $0x178] sm:$0xff]
    %v293 = vld [vmem:[#allocation9 + $0x180] sm:$0xff]
    %v294 = vld [vmem:[#allocation9 + $0x188] sm:$0xff]
    %v295 = vld [vmem:[#allocation9 + $0x190] sm:$0xff]
    %v296 = vld [vmem:[#allocation9 + $0x198] sm:$0xff]
    %v297 = vld [vmem:[#allocation9 + $0x1a0] sm:$0xff]
    %v298 = vld [vmem:[#allocation9 + $0x1a8] sm:$0xff]
    %v299 = vld [vmem:[#allocation9 + $0x1b0] sm:$0xff]
    %v300 = vld [vmem:[#allocation9 + $0x1b8] sm:$0xff]
    %v301 = vld [vmem:[#allocation9 + $0x1c0] sm:$0xff]
    %v302 = vld [vmem:[#allocation9 + $0x1c8] sm:$0xff]
    %v303 = vld [vmem:[#allocation9 + $0x1d0] sm:$0xff]
    %v304 = vld [vmem:[#allocation9 + $0x1d8] sm:$0xff]
    %v305 = vld [vmem:[#allocation9 + $0x1e0] sm:$0xff]
    %v306 = vld [vmem:[#allocation9 + $0x1e8] sm:$0xff]
    %v307 = vld [vmem:[#allocation9 + $0x1f0] sm:$0xff]
    %v308 = vld [vmem:[#allocation9 + $0x1f8] sm:$0xff]
    %v309 = vld [vmem:[#allocation9 + $0x200] sm:$0xff]
    %v310 = vld [vmem:[#allocation9 + $0x208] sm:$0xff]
    %v311 = vld [vmem:[#allocation9 + $0x210] sm:$0xff]
    %v312 = vld [vmem:[#allocation9 + $0x218] sm:$0xff]
    %v313 = vld [vmem:[#allocation9 + $0x220] sm:$0xff]
    %v314 = vld [vmem:[#allocation9 + $0x228] sm:$0xff]
    %v315 = vld [vmem:[#allocation9 + $0x230] sm:$0xff]
    %v316 = vld [vmem:[#allocation9 + $0x238] sm:$0xff]
    %v317 = vld [vmem:[#allocation9 + $0x240] sm:$0xff]
    %v318 = vld [vmem:[#allocation9 + $0x248] sm:$0xff]
    %v319 = vld [vmem:[#allocation9 + $0x250] sm:$0xff]
    %v320 = vld [vmem:[#allocation9 + $0x258] sm:$0xff]
    %v321 = vld [vmem:[#allocation9 + $0x260] sm:$0xff]
    %v322 = vld [vmem:[#allocation9 + $0x268] sm:$0xff]
    %v323 = vld [vmem:[#allocation9 + $0x270] sm:$0xff]
    %v324 = vld [vmem:[#allocation9 + $0x278] sm:$0xff]
    %v325 = vld [vmem:[#allocation9 + $0x280] sm:$0xff]
    %v326 = vld [vmem:[#allocation9 + $0x288] sm:$0xff]
    %v327 = vld [vmem:[#allocation9 + $0x290] sm:$0xff]
    %v328 = vld [vmem:[#allocation9 + $0x298] sm:$0xff]
    %v329 = vld [vmem:[#allocation9 + $0x2a0] sm:$0xff]
    %v330 = vld [vmem:[#allocation9 + $0x2a8] sm:$0xff]
    %v331 = vld [vmem:[#allocation9 + $0x2b0] sm:$0xff]
    %v332 = vld [vmem:[#allocation9 + $0x2b8] sm:$0xff]
    %v333 = vld [vmem:[#allocation9 + $0x2c0] sm:$0xff]
    %v334 = vld [vmem:[#allocation9 + $0x2c8] sm:$0xff]
    %v335 = vld [vmem:[#allocation9 + $0x2d0] sm:$0xff]
    %v336 = vld [vmem:[#allocation9 + $0x2d8] sm:$0xff]
    %v337 = vld [vmem:[#allocation9 + $0x2e0] sm:$0xff]
    %v338 = vld [vmem:[#allocation9 + $0x2e8] sm:$0xff]
    %v339 = vld [vmem:[#allocation9 + $0x2f0] sm:$0xff]
    %v340 = vld [vmem:[#allocation9 + $0x2f8] sm:$0xff]
    %v341 = vld [vmem:[#allocation9 + $0x300] sm:$0xff]
    %v342 = vld [vmem:[#allocation9 + $0x308] sm:$0xff]
    %v343 = vld [vmem:[#allocation9 + $0x310] sm:$0xff]
    %v344 = vld [vmem:[#allocation9 + $0x318] sm:$0xff]
    %v345 = vld [vmem:[#allocation9 + $0x320] sm:$0xff]
    %v346 = vld [vmem:[#allocation9 + $0x328] sm:$0xff]
    %v347 = vld [vmem:[#allocation9 + $0x330] sm:$0xff]
    %v348 = vld [vmem:[#allocation9 + $0x338] sm:$0xff]
    %v349 = vld [vmem:[#allocation9 + $0x340] sm:$0xff]
    %v350 = vld [vmem:[#allocation9 + $0x348] sm:$0xff]
    %v351 = vld [vmem:[#allocation9 + $0x350] sm:$0xff]
    %v352 = vld [vmem:[#allocation9 + $0x358] sm:$0xff]
    %v353 = vld [vmem:[#allocation9 + $0x360] sm:$0xff]
    %v354 = vld [vmem:[#allocation9 + $0x368] sm:$0xff]
    %v355 = vld [vmem:[#allocation9 + $0x370] sm:$0xff]
    %v356 = vld [vmem:[#allocation9 + $0x378] sm:$0xff]
    %v357 = vld [vmem:[#allocation9 + $0x380] sm:$0xff]
    %v358 = vld [vmem:[#allocation9 + $0x388] sm:$0xff]
    %v359 = vld [vmem:[#allocation9 + $0x390] sm:$0xff]
    %v360 = vld [vmem:[#allocation9 + $0x398] sm:$0xff]
    %v361 = vld [vmem:[#allocation9 + $0x3a0] sm:$0xff]
    %v362 = vld [vmem:[#allocation9 + $0x3a8] sm:$0xff]
    %v363 = vld [vmem:[#allocation9 + $0x3b0] sm:$0xff]
    %v364 = vld [vmem:[#allocation9 + $0x3b8] sm:$0xff]
    %v365 = vld [vmem:[#allocation9 + $0x3c0] sm:$0xff]
    %v366 = vld [vmem:[#allocation9 + $0x3c8] sm:$0xff]
    %v367 = vld [vmem:[#allocation9 + $0x3d0] sm:$0xff]
    %v368 = vld [vmem:[#allocation9 + $0x3d8] sm:$0xff]
    %v369 = vld [vmem:[#allocation9 + $0x3e0] sm:$0xff]
    %v370 = vld [vmem:[#allocation9 + $0x3e8] sm:$0xff]
    %v371 = vld [vmem:[#allocation9 + $0x3f0] sm:$0xff]
    %v372 = vld [vmem:[#allocation9 + $0x3f8] sm:$0xff]
    %v373 = vld [vmem:[#allocation9 + $0x400] sm:$0xff]
    %v374 = vld [vmem:[#allocation9 + $0x408] sm:$0xff]
    %v375 = vld [vmem:[#allocation9 + $0x410] sm:$0xff]
    %v376 = vld [vmem:[#allocation9 + $0x418] sm:$0xff]
    %v377 = vld [vmem:[#allocation9 + $0x420] sm:$0xff]
    %v378 = vld [vmem:[#allocation9 + $0x428] sm:$0xff]
    %v379 = vld [vmem:[#allocation9 + $0x430] sm:$0xff]
    %v380 = vld [vmem:[#allocation9 + $0x438] sm:$0xff]
    %v381 = vld [vmem:[#allocation9 + $0x440] sm:$0xff]
    %v382 = vld [vmem:[#allocation9 + $0x448] sm:$0xff]
    %v383 = vld [vmem:[#allocation9 + $0x450] sm:$0xff]
    %v384 = vld [vmem:[#allocation9 + $0x458] sm:$0xff]
    %v385 = vld [vmem:[#allocation9 + $0x460] sm:$0xff]
    %v386 = vld [vmem:[#allocation9 + $0x468] sm:$0xff]
    %v387 = vld [vmem:[#allocation9 + $0x470] sm:$0xff]
    %v388 = vld [vmem:[#allocation9 + $0x478] sm:$0xff]
    %v389 = vld [vmem:[#allocation9 + $0x480] sm:$0xff]
    %v390 = vld [vmem:[#allocation9 + $0x488] sm:$0xff]
    %v391 = vld [vmem:[#allocation9 + $0x490] sm:$0xff]
    %v392 = vld [vmem:[#allocation9 + $0x498] sm:$0xff]
    %v393 = vld [vmem:[#allocation9 + $0x4a0] sm:$0xff]
    %v394 = vld [vmem:[#allocation9 + $0x4a8] sm:$0xff]
    %v395 = vld [vmem:[#allocation9 + $0x4b0] sm:$0xff]
    %v396 = vld [vmem:[#allocation9 + $0x4b8] sm:$0xff]
    %v397 = vld [vmem:[#allocation9 + $0x4c0] sm:$0xff]
    %v398 = vld [vmem:[#allocation9 + $0x4c8] sm:$0xff]
    %v399 = vld [vmem:[#allocation9 + $0x4d0] sm:$0xff]
    %v400 = vld [vmem:[#allocation9 + $0x4d8] sm:$0xff]
    %v401 = vld [vmem:[#allocation9 + $0x4e0] sm:$0xff]
    %v402 = vld [vmem:[#allocation9 + $0x4e8] sm:$0xff]
    %v403 = vld [vmem:[#allocation9 + $0x4f0] sm:$0xff]
    %v404 = vld [vmem:[#allocation9 + $0x4f8] sm:$0xff]
    %v405 = vld [vmem:[#allocation9 + $0x500] sm:$0xff]
    %v406 = vld [vmem:[#allocation9 + $0x508] sm:$0xff]
    %v407 = vld [vmem:[#allocation9 + $0x510] sm:$0xff]
    %v408 = vld [vmem:[#allocation9 + $0x518] sm:$0xff]
    %v409 = vld [vmem:[#allocation9 + $0x520] sm:$0xff]
    %v410 = vld [vmem:[#allocation9 + $0x528] sm:$0xff]
    %v411 = vld [vmem:[#allocation9 + $0x530] sm:$0xff]
    %v412 = vld [vmem:[#allocation9 + $0x538] sm:$0xff]
    %v413 = vld [vmem:[#allocation9 + $0x540] sm:$0xff]
    %v414 = vld [vmem:[#allocation9 + $0x548] sm:$0xff]
    %v415 = vld [vmem:[#allocation9 + $0x550] sm:$0xff]
    %v416 = vld [vmem:[#allocation9 + $0x558] sm:$0xff]
    %v417 = vld [vmem:[#allocation9 + $0x560] sm:$0xff]
    %v418 = vld [vmem:[#allocation9 + $0x568] sm:$0xff]
    %v419 = vld [vmem:[#allocation9 + $0x570] sm:$0xff]
    %v420 = vld [vmem:[#allocation9 + $0x578] sm:$0xff]
    %v421 = vld [vmem:[#allocation9 + $0x580] sm:$0xff]
    %v422 = vld [vmem:[#allocation9 + $0x588] sm:$0xff]
    %v423 = vld [vmem:[#allocation9 + $0x590] sm:$0xff]
    %v424 = vld [vmem:[#allocation9 + $0x598] sm:$0xff]
    %v425 = vld [vmem:[#allocation9 + $0x5a0] sm:$0xff]
    %v426 = vld [vmem:[#allocation9 + $0x5a8] sm:$0xff]
    %v427 = vld [vmem:[#allocation9 + $0x5b0] sm:$0xff]
    %v428 = vld [vmem:[#allocation9 + $0x5b8] sm:$0xff]
    %v429 = vld [vmem:[#allocation9 + $0x5c0] sm:$0xff]
    %v430 = vld [vmem:[#allocation9 + $0x5c8] sm:$0xff]
    %v431 = vld [vmem:[#allocation9 + $0x5d0] sm:$0xff]
    %v432 = vld [vmem:[#allocation9 + $0x5d8] sm:$0xff]
    %v433 = vld [vmem:[#allocation9 + $0x5e0] sm:$0xff]
    %v434 = vld [vmem:[#allocation9 + $0x5e8] sm:$0xff]
    %v435 = vld [vmem:[#allocation9 + $0x5f0] sm:$0xff]
    %v436 = vld [vmem:[#allocation9 + $0x5f8] sm:$0xff]
    %v437 = vld [vmem:[#allocation10] sm:$0xff]
    %v438 = vld [vmem:[#allocation10 + $0x8] sm:$0xff]
    %v439 = vld [vmem:[#allocation10 + $0x10] sm:$0xff]
    %v440 = vld [vmem:[#allocation10 + $0x18] sm:$0xff]
    %v441 = vld [vmem:[#allocation10 + $0x20] sm:$0xff]
    %v442 = vld [vmem:[#allocation10 + $0x28] sm:$0xff]
    %v443 = vld [vmem:[#allocation10 + $0x30] sm:$0xff]
    %v444 = vld [vmem:[#allocation10 + $0x38] sm:$0xff]
    %v445 = vld [vmem:[#allocation10 + $0x40] sm:$0xff]
    %v446 = vld [vmem:[#allocation10 + $0x48] sm:$0xff]
    %v447 = vld [vmem:[#allocation10 + $0x50] sm:$0xff]
    %v448 = vld [vmem:[#allocation10 + $0x58] sm:$0xff]
    %v449 = vld [vmem:[#allocation10 + $0x60] sm:$0xff]
    %v450 = vld [vmem:[#allocation10 + $0x68] sm:$0xff]
    %v451 = vld [vmem:[#allocation10 + $0x70] sm:$0xff]
    %v452 = vld [vmem:[#allocation10 + $0x78] sm:$0xff]
    %v453 = vld [vmem:[#allocation10 + $0x80] sm:$0xff]
    %v454 = vld [vmem:[#allocation10 + $0x88] sm:$0xff]
    %v455 = vld [vmem:[#allocation10 + $0x90] sm:$0xff]
    %v456 = vld [vmem:[#allocation10 + $0x98] sm:$0xff]
    %v457 = vld [vmem:[#allocation10 + $0xa0] sm:$0xff]
    %v458 = vld [vmem:[#allocation10 + $0xa8] sm:$0xff]
    %v459 = vld [vmem:[#allocation10 + $0xb0] sm:$0xff]
    %v460 = vld [vmem:[#allocation10 + $0xb8] sm:$0xff]
    %v461 = vld [vmem:[#allocation10 + $0xc0] sm:$0xff]
    %v462 = vld [vmem:[#allocation10 + $0xc8] sm:$0xff]
    %v463 = vld [vmem:[#allocation10 + $0xd0] sm:$0xff]
    %v464 = vld [vmem:[#allocation10 + $0xd8] sm:$0xff]
    %v465 = vld [vmem:[#allocation10 + $0xe0] sm:$0xff]
    %v466 = vld [vmem:[#allocation10 + $0xe8] sm:$0xff]
    %v467 = vld [vmem:[#allocation10 + $0xf0] sm:$0xff]
    %v468 = vld [vmem:[#allocation10 + $0xf8] sm:$0xff]
    %v469 = vld [vmem:[#allocation10 + $0x100] sm:$0xff]
    %v470 = vld [vmem:[#allocation10 + $0x108] sm:$0xff]
    %v471 = vld [vmem:[#allocation10 + $0x110] sm:$0xff]
    %v472 = vld [vmem:[#allocation10 + $0x118] sm:$0xff]
    %v473 = vld [vmem:[#allocation10 + $0x120] sm:$0xff]
    %v474 = vld [vmem:[#allocation10 + $0x128] sm:$0xff]
    %v475 = vld [vmem:[#allocation10 + $0x130] sm:$0xff]
    %v476 = vld [vmem:[#allocation10 + $0x138] sm:$0xff]
    %v477 = vld [vmem:[#allocation10 + $0x140] sm:$0xff]
    %v478 = vld [vmem:[#allocation10 + $0x148] sm:$0xff]
    %v479 = vld [vmem:[#allocation10 + $0x150] sm:$0xff]
    %v480 = vld [vmem:[#allocation10 + $0x158] sm:$0xff]
    %v481 = vld [vmem:[#allocation10 + $0x160] sm:$0xff]
    %v482 = vld [vmem:[#allocation10 + $0x168] sm:$0xff]
    %v483 = vld [vmem:[#allocation10 + $0x170] sm:$0xff]
    %v484 = vld [vmem:[#allocation10 + $0x178] sm:$0xff]
    %v485 = vld [vmem:[#allocation10 + $0x180] sm:$0xff]
    %v486 = vld [vmem:[#allocation10 + $0x188] sm:$0xff]
    %v487 = vld [vmem:[#allocation10 + $0x190] sm:$0xff]
    %v488 = vld [vmem:[#allocation10 + $0x198] sm:$0xff]
    %v489 = vld [vmem:[#allocation10 + $0x1a0] sm:$0xff]
    %v490 = vld [vmem:[#allocation10 + $0x1a8] sm:$0xff]
    %v491 = vld [vmem:[#allocation10 + $0x1b0] sm:$0xff]
    %v492 = vld [vmem:[#allocation10 + $0x1b8] sm:$0xff]
    %v493 = vld [vmem:[#allocation10 + $0x1c0] sm:$0xff]
    %v494 = vld [vmem:[#allocation10 + $0x1c8] sm:$0xff]
    %v495 = vld [vmem:[#allocation10 + $0x1d0] sm:$0xff]
    %v496 = vld [vmem:[#allocation10 + $0x1d8] sm:$0xff]
    %v497 = vld [vmem:[#allocation10 + $0x1e0] sm:$0xff]
    %v498 = vld [vmem:[#allocation10 + $0x1e8] sm:$0xff]
    %v499 = vld [vmem:[#allocation10 + $0x1f0] sm:$0xff]
    %v500 = vld [vmem:[#allocation10 + $0x1f8] sm:$0xff]
    %v501 = vld [vmem:[#allocation10 + $0x200] sm:$0xff]
    %v502 = vld [vmem:[#allocation10 + $0x208] sm:$0xff]
    %v503 = vld [vmem:[#allocation10 + $0x210] sm:$0xff]
    %v504 = vld [vmem:[#allocation10 + $0x218] sm:$0xff]
    %v505 = vld [vmem:[#allocation10 + $0x220] sm:$0xff]
    %v506 = vld [vmem:[#allocation10 + $0x228] sm:$0xff]
    %v507 = vld [vmem:[#allocation10 + $0x230] sm:$0xff]
    %v508 = vld [vmem:[#allocation10 + $0x238] sm:$0xff]
    %v509 = vld [vmem:[#allocation10 + $0x240] sm:$0xff]
    %v510 = vld [vmem:[#allocation10 + $0x248] sm:$0xff]
    %v511 = vld [vmem:[#allocation10 + $0x250] sm:$0xff]
    %v512 = vld [vmem:[#allocation10 + $0x258] sm:$0xff]
    %v513 = vld [vmem:[#allocation10 + $0x260] sm:$0xff]
    %v514 = vld [vmem:[#allocation10 + $0x268] sm:$0xff]
    %v515 = vld [vmem:[#allocation10 + $0x270] sm:$0xff]
    %v516 = vld [vmem:[#allocation10 + $0x278] sm:$0xff]
    %v517 = vld [vmem:[#allocation10 + $0x280] sm:$0xff]
    %v518 = vld [vmem:[#allocation10 + $0x288] sm:$0xff]
    %v519 = vld [vmem:[#allocation10 + $0x290] sm:$0xff]
    %v520 = vld [vmem:[#allocation10 + $0x298] sm:$0xff]
    %v521 = vld [vmem:[#allocation10 + $0x2a0] sm:$0xff]
    %v522 = vld [vmem:[#allocation10 + $0x2a8] sm:$0xff]
    %v523 = vld [vmem:[#allocation10 + $0x2b0] sm:$0xff]
    %v524 = vld [vmem:[#allocation10 + $0x2b8] sm:$0xff]
    %v525 = vld [vmem:[#allocation10 + $0x2c0] sm:$0xff]
    %v526 = vld [vmem:[#allocation10 + $0x2c8] sm:$0xff]
    %v527 = vld [vmem:[#allocation10 + $0x2d0] sm:$0xff]
    %v528 = vld [vmem:[#allocation10 + $0x2d8] sm:$0xff]
    %v529 = vld [vmem:[#allocation10 + $0x2e0] sm:$0xff]
    %v530 = vld [vmem:[#allocation10 + $0x2e8] sm:$0xff]
    %v531 = vld [vmem:[#allocation10 + $0x2f0] sm:$0xff]
    %v532 = vld [vmem:[#allocation10 + $0x2f8] sm:$0xff]
    %v533 = vld [vmem:[#allocation10 + $0x300] sm:$0xff]
    %v534 = vld [vmem:[#allocation10 + $0x308] sm:$0xff]
    %v535 = vld [vmem:[#allocation10 + $0x310] sm:$0xff]
    %v536 = vld [vmem:[#allocation10 + $0x318] sm:$0xff]
    %v537 = vld [vmem:[#allocation10 + $0x320] sm:$0xff]
    %v538 = vld [vmem:[#allocation10 + $0x328] sm:$0xff]
    %v539 = vld [vmem:[#allocation10 + $0x330] sm:$0xff]
    %v540 = vld [vmem:[#allocation10 + $0x338] sm:$0xff]
    %v541 = vld [vmem:[#allocation10 + $0x340] sm:$0xff]
    %v542 = vld [vmem:[#allocation10 + $0x348] sm:$0xff]
    %v543 = vld [vmem:[#allocation10 + $0x350] sm:$0xff]
    %v544 = vld [vmem:[#allocation10 + $0x358] sm:$0xff]
    %v545 = vld [vmem:[#allocation10 + $0x360] sm:$0xff]
    %v546 = vld [vmem:[#allocation10 + $0x368] sm:$0xff]
    %v547 = vld [vmem:[#allocation10 + $0x370] sm:$0xff]
    %v548 = vld [vmem:[#allocation10 + $0x378] sm:$0xff]
    %v549 = vld [vmem:[#allocation10 + $0x380] sm:$0xff]
    %v550 = vld [vmem:[#allocation10 + $0x388] sm:$0xff]
    %v551 = vld [vmem:[#allocation10 + $0x390] sm:$0xff]
    %v552 = vld [vmem:[#allocation10 + $0x398] sm:$0xff]
    %v553 = vld [vmem:[#allocation10 + $0x3a0] sm:$0xff]
    %v554 = vld [vmem:[#allocation10 + $0x3a8] sm:$0xff]
    %v555 = vld [vmem:[#allocation10 + $0x3b0] sm:$0xff]
    %v556 = vld [vmem:[#allocation10 + $0x3b8] sm:$0xff]
    %v557 = vld [vmem:[#allocation10 + $0x3c0] sm:$0xff]
    %v558 = vld [vmem:[#allocation10 + $0x3c8] sm:$0xff]
    %v559 = vld [vmem:[#allocation10 + $0x3d0] sm:$0xff]
    %v560 = vld [vmem:[#allocation10 + $0x3d8] sm:$0xff]
    %v561 = vld [vmem:[#allocation10 + $0x3e0] sm:$0xff]
    %v562 = vld [vmem:[#allocation10 + $0x3e8] sm:$0xff]
    %v563 = vld [vmem:[#allocation10 + $0x3f0] sm:$0xff]
    %v564 = vld [vmem:[#allocation10 + $0x3f8] sm:$0xff]
    %v565 = vld [vmem:[#allocation10 + $0x400] sm:$0xff]
    %v566 = vld [vmem:[#allocation10 + $0x408] sm:$0xff]
    %v567 = vld [vmem:[#allocation10 + $0x410] sm:$0xff]
    %v568 = vld [vmem:[#allocation10 + $0x418] sm:$0xff]
    %v569 = vld [vmem:[#allocation10 + $0x420] sm:$0xff]
    %v570 = vld [vmem:[#allocation10 + $0x428] sm:$0xff]
    %v571 = vld [vmem:[#allocation10 + $0x430] sm:$0xff]
    %v572 = vld [vmem:[#allocation10 + $0x438] sm:$0xff]
    %v573 = vld [vmem:[#allocation10 + $0x440] sm:$0xff]
    %v574 = vld [vmem:[#allocation10 + $0x448] sm:$0xff]
    %v575 = vld [vmem:[#allocation10 + $0x450] sm:$0xff]
    %v576 = vld [vmem:[#allocation10 + $0x458] sm:$0xff]
    %v577 = vld [vmem:[#allocation10 + $0x460] sm:$0xff]
    %v578 = vld [vmem:[#allocation10 + $0x468] sm:$0xff]
    %v579 = vld [vmem:[#allocation10 + $0x470] sm:$0xff]
    %v580 = vld [vmem:[#allocation10 + $0x478] sm:$0xff]
    %v581 = vld [vmem:[#allocation10 + $0x480] sm:$0xff]
    %v582 = vld [vmem:[#allocation10 + $0x488] sm:$0xff]
    %v583 = vld [vmem:[#allocation10 + $0x490] sm:$0xff]
    %v584 = vld [vmem:[#allocation10 + $0x498] sm:$0xff]
    %v585 = vld [vmem:[#allocation10 + $0x4a0] sm:$0xff]
    %v586 = vld [vmem:[#allocation10 + $0x4a8] sm:$0xff]
    %v587 = vld [vmem:[#allocation10 + $0x4b0] sm:$0xff]
    %v588 = vld [vmem:[#allocation10 + $0x4b8] sm:$0xff]
    %v589 = vld [vmem:[#allocation10 + $0x4c0] sm:$0xff]
    %v590 = vld [vmem:[#allocation10 + $0x4c8] sm:$0xff]
    %v591 = vld [vmem:[#allocation10 + $0x4d0] sm:$0xff]
    %v592 = vld [vmem:[#allocation10 + $0x4d8] sm:$0xff]
    %v593 = vld [vmem:[#allocation10 + $0x4e0] sm:$0xff]
    %v594 = vld [vmem:[#allocation10 + $0x4e8] sm:$0xff]
    %v595 = vld [vmem:[#allocation10 + $0x4f0] sm:$0xff]
    %v596 = vld [vmem:[#allocation10 + $0x4f8] sm:$0xff]
    %v597 = vld [vmem:[#allocation10 + $0x500] sm:$0xff]
    %v598 = vld [vmem:[#allocation10 + $0x508] sm:$0xff]
    %v599 = vld [vmem:[#allocation10 + $0x510] sm:$0xff]
    %v600 = vld [vmem:[#allocation10 + $0x518] sm:$0xff]
    %v601 = vld [vmem:[#allocation10 + $0x520] sm:$0xff]
    %v602 = vld [vmem:[#allocation10 + $0x528] sm:$0xff]
    %v603 = vld [vmem:[#allocation10 + $0x530] sm:$0xff]
    %v604 = vld [vmem:[#allocation10 + $0x538] sm:$0xff]
    %v605 = vld [vmem:[#allocation10 + $0x540] sm:$0xff]
    %v606 = vld [vmem:[#allocation10 + $0x548] sm:$0xff]
    %v607 = vld [vmem:[#allocation10 + $0x550] sm:$0xff]
    %v608 = vld [vmem:[#allocation10 + $0x558] sm:$0xff]
    %v609 = vld [vmem:[#allocation10 + $0x560] sm:$0xff]
    %v610 = vld [vmem:[#allocation10 + $0x568] sm:$0xff]
    %v611 = vld [vmem:[#allocation10 + $0x570] sm:$0xff]
    %v612 = vld [vmem:[#allocation10 + $0x578] sm:$0xff]
    %v613 = vld [vmem:[#allocation10 + $0x580] sm:$0xff]
    %v614 = vld [vmem:[#allocation10 + $0x588] sm:$0xff]
    %v615 = vld [vmem:[#allocation10 + $0x590] sm:$0xff]
    %v616 = vld [vmem:[#allocation10 + $0x598] sm:$0xff]
    %v617 = vld [vmem:[#allocation10 + $0x5a0] sm:$0xff]
    %v618 = vld [vmem:[#allocation10 + $0x5a8] sm:$0xff]
    %v619 = vld [vmem:[#allocation10 + $0x5b0] sm:$0xff]
    %v620 = vld [vmem:[#allocation10 + $0x5b8] sm:$0xff]
    %v621 = vld [vmem:[#allocation10 + $0x5c0] sm:$0xff]
    %v622 = vld [vmem:[#allocation10 + $0x5c8] sm:$0xff]
    %v623 = vld [vmem:[#allocation10 + $0x5d0] sm:$0xff]
    %v624 = vld [vmem:[#allocation10 + $0x5d8] sm:$0xff]
    %v625 = vld [vmem:[#allocation10 + $0x5e0] sm:$0xff]
    %v626 = vld [vmem:[#allocation10 + $0x5e8] sm:$0xff]
    %v627 = vld [vmem:[#allocation10 + $0x5f0] sm:$0xff]
    %v628 = vld [vmem:[#allocation10 + $0x5f8] sm:$0xff]
    %v629 = vld [vmem:[#allocation12] sm:$0xff]
    %v630 = vld [vmem:[#allocation12 + $0x8] sm:$0xff]
    %v631 = vld [vmem:[#allocation12 + $0x10] sm:$0xff]
    %v632 = vld [vmem:[#allocation12 + $0x18] sm:$0xff]
    %v633 = vld [vmem:[#allocation12 + $0x20] sm:$0xff]
    %v634 = vld [vmem:[#allocation12 + $0x28] sm:$0xff]
    %v635 = vld [vmem:[#allocation12 + $0x30] sm:$0xff]
    %v636 = vld [vmem:[#allocation12 + $0x38] sm:$0xff]
    %v637 = vld [vmem:[#allocation12 + $0x40] sm:$0xff]
    %v638 = vld [vmem:[#allocation12 + $0x48] sm:$0xff]
    %v639 = vld [vmem:[#allocation12 + $0x50] sm:$0xff]
    %v640 = vld [vmem:[#allocation12 + $0x58] sm:$0xff]
    %v641 = vld [vmem:[#allocation12 + $0x60] sm:$0xff]
    %v642 = vld [vmem:[#allocation12 + $0x68] sm:$0xff]
    %v643 = vld [vmem:[#allocation12 + $0x70] sm:$0xff]
    %v644 = vld [vmem:[#allocation12 + $0x78] sm:$0xff]
    %v645 = vld [vmem:[#allocation12 + $0x80] sm:$0xff]
    %v646 = vld [vmem:[#allocation12 + $0x88] sm:$0xff]
    %v647 = vld [vmem:[#allocation12 + $0x90] sm:$0xff]
    %v648 = vld [vmem:[#allocation12 + $0x98] sm:$0xff]
    %v649 = vld [vmem:[#allocation12 + $0xa0] sm:$0xff]
    %v650 = vld [vmem:[#allocation12 + $0xa8] sm:$0xff]
    %v651 = vld [vmem:[#allocation12 + $0xb0] sm:$0xff]
    %v652 = vld [vmem:[#allocation12 + $0xb8] sm:$0xff]
    %v653 = vld [vmem:[#allocation12 + $0xc0] sm:$0xff]
    %v654 = vld [vmem:[#allocation12 + $0xc8] sm:$0xff]
    %v655 = vld [vmem:[#allocation12 + $0xd0] sm:$0xff]
    %v656 = vld [vmem:[#allocation12 + $0xd8] sm:$0xff]
    %v657 = vld [vmem:[#allocation12 + $0xe0] sm:$0xff]
    %v658 = vld [vmem:[#allocation12 + $0xe8] sm:$0xff]
    %v659 = vld [vmem:[#allocation12 + $0xf0] sm:$0xff]
    %v660 = vld [vmem:[#allocation12 + $0xf8] sm:$0xff]
    %v661 = vld [vmem:[#allocation12 + $0x100] sm:$0xff]
    %v662 = vld [vmem:[#allocation12 + $0x108] sm:$0xff]
    %v663 = vld [vmem:[#allocation12 + $0x110] sm:$0xff]
    %v664 = vld [vmem:[#allocation12 + $0x118] sm:$0xff]
    %v665 = vld [vmem:[#allocation12 + $0x120] sm:$0xff]
    %v666 = vld [vmem:[#allocation12 + $0x128] sm:$0xff]
    %v667 = vld [vmem:[#allocation12 + $0x130] sm:$0xff]
    %v668 = vld [vmem:[#allocation12 + $0x138] sm:$0xff]
    %v669 = vld [vmem:[#allocation12 + $0x140] sm:$0xff]
    %v670 = vld [vmem:[#allocation12 + $0x148] sm:$0xff]
    %v671 = vld [vmem:[#allocation12 + $0x150] sm:$0xff]
    %v672 = vld [vmem:[#allocation12 + $0x158] sm:$0xff]
    %v673 = vld [vmem:[#allocation12 + $0x160] sm:$0xff]
    %v674 = vld [vmem:[#allocation12 + $0x168] sm:$0xff]
    %v675 = vld [vmem:[#allocation12 + $0x170] sm:$0xff]
    %v676 = vld [vmem:[#allocation12 + $0x178] sm:$0xff]
    %v677 = vld [vmem:[#allocation12 + $0x180] sm:$0xff]
    %v678 = vld [vmem:[#allocation12 + $0x188] sm:$0xff]
    %v679 = vld [vmem:[#allocation12 + $0x190] sm:$0xff]
    %v680 = vld [vmem:[#allocation12 + $0x198] sm:$0xff]
    %v681 = vld [vmem:[#allocation12 + $0x1a0] sm:$0xff]
    %v682 = vld [vmem:[#allocation12 + $0x1a8] sm:$0xff]
    %v683 = vld [vmem:[#allocation12 + $0x1b0] sm:$0xff]
    %v684 = vld [vmem:[#allocation12 + $0x1b8] sm:$0xff]
    %v685 = vld [vmem:[#allocation12 + $0x1c0] sm:$0xff]
    %v686 = vld [vmem:[#allocation12 + $0x1c8] sm:$0xff]
    %v687 = vld [vmem:[#allocation12 + $0x1d0] sm:$0xff]
    %v688 = vld [vmem:[#allocation12 + $0x1d8] sm:$0xff]
    %v689 = vld [vmem:[#allocation12 + $0x1e0] sm:$0xff]
    %v690 = vld [vmem:[#allocation12 + $0x1e8] sm:$0xff]
    %v691 = vld [vmem:[#allocation12 + $0x1f0] sm:$0xff]
    %v692 = vld [vmem:[#allocation12 + $0x1f8] sm:$0xff]
    %v693 = vld [vmem:[#allocation12 + $0x200] sm:$0xff]
    %v694 = vld [vmem:[#allocation12 + $0x208] sm:$0xff]
    %v695 = vld [vmem:[#allocation12 + $0x210] sm:$0xff]
    %v696 = vld [vmem:[#allocation12 + $0x218] sm:$0xff]
    %v697 = vld [vmem:[#allocation12 + $0x220] sm:$0xff]
    %v698 = vld [vmem:[#allocation12 + $0x228] sm:$0xff]
    %v699 = vld [vmem:[#allocation12 + $0x230] sm:$0xff]
    %v700 = vld [vmem:[#allocation12 + $0x238] sm:$0xff]
    %v701 = vld [vmem:[#allocation12 + $0x240] sm:$0xff]
    %v702 = vld [vmem:[#allocation12 + $0x248] sm:$0xff]
    %v703 = vld [vmem:[#allocation12 + $0x250] sm:$0xff]
    %v704 = vld [vmem:[#allocation12 + $0x258] sm:$0xff]
    %v705 = vld [vmem:[#allocation12 + $0x260] sm:$0xff]
    %v706 = vld [vmem:[#allocation12 + $0x268] sm:$0xff]
    %v707 = vld [vmem:[#allocation12 + $0x270] sm:$0xff]
    %v708 = vld [vmem:[#allocation12 + $0x278] sm:$0xff]
    %v709 = vld [vmem:[#allocation12 + $0x280] sm:$0xff]
    %v710 = vld [vmem:[#allocation12 + $0x288] sm:$0xff]
    %v711 = vld [vmem:[#allocation12 + $0x290] sm:$0xff]
    %v712 = vld [vmem:[#allocation12 + $0x298] sm:$0xff]
    %v713 = vld [vmem:[#allocation12 + $0x2a0] sm:$0xff]
    %v714 = vld [vmem:[#allocation12 + $0x2a8] sm:$0xff]
    %v715 = vld [vmem:[#allocation12 + $0x2b0] sm:$0xff]
    %v716 = vld [vmem:[#allocation12 + $0x2b8] sm:$0xff]
    %v717 = vld [vmem:[#allocation12 + $0x2c0] sm:$0xff]
    %v718 = vld [vmem:[#allocation12 + $0x2c8] sm:$0xff]
    %v719 = vld [vmem:[#allocation12 + $0x2d0] sm:$0xff]
    %v720 = vld [vmem:[#allocation12 + $0x2d8] sm:$0xff]
    %v721 = vld [vmem:[#allocation12 + $0x2e0] sm:$0xff]
    %v722 = vld [vmem:[#allocation12 + $0x2e8] sm:$0xff]
    %v723 = vld [vmem:[#allocation12 + $0x2f0] sm:$0xff]
    %v724 = vld [vmem:[#allocation12 + $0x2f8] sm:$0xff]
    %v725 = vld [vmem:[#allocation12 + $0x300] sm:$0xff]
    %v726 = vld [vmem:[#allocation12 + $0x308] sm:$0xff]
    %v727 = vld [vmem:[#allocation12 + $0x310] sm:$0xff]
    %v728 = vld [vmem:[#allocation12 + $0x318] sm:$0xff]
    %v729 = vld [vmem:[#allocation12 + $0x320] sm:$0xff]
    %v730 = vld [vmem:[#allocation12 + $0x328] sm:$0xff]
    %v731 = vld [vmem:[#allocation12 + $0x330] sm:$0xff]
    %v732 = vld [vmem:[#allocation12 + $0x338] sm:$0xff]
    %v733 = vld [vmem:[#allocation12 + $0x340] sm:$0xff]
    %v734 = vld [vmem:[#allocation12 + $0x348] sm:$0xff]
    %v735 = vld [vmem:[#allocation12 + $0x350] sm:$0xff]
    %v736 = vld [vmem:[#allocation12 + $0x358] sm:$0xff]
    %v737 = vld [vmem:[#allocation12 + $0x360] sm:$0xff]
    %v738 = vld [vmem:[#allocation12 + $0x368] sm:$0xff]
    %v739 = vld [vmem:[#allocation12 + $0x370] sm:$0xff]
    %v740 = vld [vmem:[#allocation12 + $0x378] sm:$0xff]
    %v741 = vld [vmem:[#allocation12 + $0x380] sm:$0xff]
    %v742 = vld [vmem:[#allocation12 + $0x388] sm:$0xff]
    %v743 = vld [vmem:[#allocation12 + $0x390] sm:$0xff]
    %v744 = vld [vmem:[#allocation12 + $0x398] sm:$0xff]
    %v745 = vld [vmem:[#allocation12 + $0x3a0] sm:$0xff]
    %v746 = vld [vmem:[#allocation12 + $0x3a8] sm:$0xff]
    %v747 = vld [vmem:[#allocation12 + $0x3b0] sm:$0xff]
    %v748 = vld [vmem:[#allocation12 + $0x3b8] sm:$0xff]
    %v749 = vld [vmem:[#allocation12 + $0x3c0] sm:$0xff]
    %v750 = vld [vmem:[#allocation12 + $0x3c8] sm:$0xff]
    %v751 = vld [vmem:[#allocation12 + $0x3d0] sm:$0xff]
    %v752 = vld [vmem:[#allocation12 + $0x3d8] sm:$0xff]
    %v753 = vld [vmem:[#allocation12 + $0x3e0] sm:$0xff]
    %v754 = vld [vmem:[#allocation12 + $0x3e8] sm:$0xff]
    %v755 = vld [vmem:[#allocation12 + $0x3f0] sm:$0xff]
    %v756 = vld [vmem:[#allocation12 + $0x3f8] sm:$0xff]
    %v757 = vld [vmem:[#allocation12 + $0x400] sm:$0xff]
    %v758 = vld [vmem:[#allocation12 + $0x408] sm:$0xff]
    %v759 = vld [vmem:[#allocation12 + $0x410] sm:$0xff]
    %v760 = vld [vmem:[#allocation12 + $0x418] sm:$0xff]
    %v761 = vld [vmem:[#allocation12 + $0x420] sm:$0xff]
    %v762 = vld [vmem:[#allocation12 + $0x428] sm:$0xff]
    %v763 = vld [vmem:[#allocation12 + $0x430] sm:$0xff]
    %v764 = vld [vmem:[#allocation12 + $0x438] sm:$0xff]
    %v765 = vld [vmem:[#allocation12 + $0x440] sm:$0xff]
    %v766 = vld [vmem:[#allocation12 + $0x448] sm:$0xff]
    %v767 = vld [vmem:[#allocation12 + $0x450] sm:$0xff]
    %v768 = vld [vmem:[#allocation12 + $0x458] sm:$0xff]
    %v769 = vld [vmem:[#allocation12 + $0x460] sm:$0xff]
    %v770 = vld [vmem:[#allocation12 + $0x468] sm:$0xff]
    %v771 = vld [vmem:[#allocation12 + $0x470] sm:$0xff]
    %v772 = vld [vmem:[#allocation12 + $0x478] sm:$0xff]
    %v773 = vld [vmem:[#allocation12 + $0x480] sm:$0xff]
    %v774 = vld [vmem:[#allocation12 + $0x488] sm:$0xff]
    %v775 = vld [vmem:[#allocation12 + $0x490] sm:$0xff]
    %v776 = vld [vmem:[#allocation12 + $0x498] sm:$0xff]
    %v777 = vld [vmem:[#allocation12 + $0x4a0] sm:$0xff]
    %v778 = vld [vmem:[#allocation12 + $0x4a8] sm:$0xff]
    %v779 = vld [vmem:[#allocation12 + $0x4b0] sm:$0xff]
    %v780 = vld [vmem:[#allocation12 + $0x4b8] sm:$0xff]
    %v781 = vld [vmem:[#allocation12 + $0x4c0] sm:$0xff]
    %v782 = vld [vmem:[#allocation12 + $0x4c8] sm:$0xff]
    %v783 = vld [vmem:[#allocation12 + $0x4d0] sm:$0xff]
    %v784 = vld [vmem:[#allocation12 + $0x4d8] sm:$0xff]
    %v785 = vld [vmem:[#allocation12 + $0x4e0] sm:$0xff]
    %v786 = vld [vmem:[#allocation12 + $0x4e8] sm:$0xff]
    %v787 = vld [vmem:[#allocation12 + $0x4f0] sm:$0xff]
    %v788 = vld [vmem:[#allocation12 + $0x4f8] sm:$0xff]
    %v789 = vld [vmem:[#allocation12 + $0x500] sm:$0xff]
    %v790 = vld [vmem:[#allocation12 + $0x508] sm:$0xff]
    %v791 = vld [vmem:[#allocation12 + $0x510] sm:$0xff]
    %v792 = vld [vmem:[#allocation12 + $0x518] sm:$0xff]
    %v793 = vld [vmem:[#allocation12 + $0x520] sm:$0xff]
    %v794 = vld [vmem:[#allocation12 + $0x528] sm:$0xff]
    %v795 = vld [vmem:[#allocation12 + $0x530] sm:$0xff]
    %v796 = vld [vmem:[#allocation12 + $0x538] sm:$0xff]
    %v797 = vld [vmem:[#allocation12 + $0x540] sm:$0xff]
    %v798 = vld [vmem:[#allocation12 + $0x548] sm:$0xff]
    %v799 = vld [vmem:[#allocation12 + $0x550] sm:$0xff]
    %v800 = vld [vmem:[#allocation12 + $0x558] sm:$0xff]
    %v801 = vld [vmem:[#allocation12 + $0x560] sm:$0xff]
    %v802 = vld [vmem:[#allocation12 + $0x568] sm:$0xff]
    %v803 = vld [vmem:[#allocation12 + $0x570] sm:$0xff]
    %v804 = vld [vmem:[#allocation12 + $0x578] sm:$0xff]
    %v805 = vld [vmem:[#allocation12 + $0x580] sm:$0xff]
    %v806 = vld [vmem:[#allocation12 + $0x588] sm:$0xff]
    %v807 = vld [vmem:[#allocation12 + $0x590] sm:$0xff]
    %v808 = vld [vmem:[#allocation12 + $0x598] sm:$0xff]
    %v809 = vld [vmem:[#allocation12 + $0x5a0] sm:$0xff]
    %v810 = vld [vmem:[#allocation12 + $0x5a8] sm:$0xff]
    %v811 = vld [vmem:[#allocation12 + $0x5b0] sm:$0xff]
    %v812 = vld [vmem:[#allocation12 + $0x5b8] sm:$0xff]
    %v813 = vld [vmem:[#allocation12 + $0x5c0] sm:$0xff]
    %v814 = vld [vmem:[#allocation12 + $0x5c8] sm:$0xff]
    %v815 = vld [vmem:[#allocation12 + $0x5d0] sm:$0xff]
    %v816 = vld [vmem:[#allocation12 + $0x5d8] sm:$0xff]
    %v817 = vld [vmem:[#allocation12 + $0x5e0] sm:$0xff]
    %v818 = vld [vmem:[#allocation12 + $0x5e8] sm:$0xff]
    %v819 = vld [vmem:[#allocation12 + $0x5f0] sm:$0xff]
    %v820 = vld [vmem:[#allocation12 + $0x5f8] sm:$0xff]
    %v821 = vld [vmem:[#allocation12 + $0x600] sm:$0xff]
    %v822 = vld [vmem:[#allocation12 + $0x608] sm:$0xff]
    %v823 = vld [vmem:[#allocation12 + $0x610] sm:$0xff]
    %v824 = vld [vmem:[#allocation12 + $0x618] sm:$0xff]
    %v825 = vld [vmem:[#allocation12 + $0x620] sm:$0xff]
    %v826 = vld [vmem:[#allocation12 + $0x628] sm:$0xff]
    %v827 = vld [vmem:[#allocation12 + $0x630] sm:$0xff]
    %v828 = vld [vmem:[#allocation12 + $0x638] sm:$0xff]
    %v829 = vld [vmem:[#allocation12 + $0x640] sm:$0xff]
    %v830 = vld [vmem:[#allocation12 + $0x648] sm:$0xff]
    %v831 = vld [vmem:[#allocation12 + $0x650] sm:$0xff]
    %v832 = vld [vmem:[#allocation12 + $0x658] sm:$0xff]
    %v833 = vld [vmem:[#allocation12 + $0x660] sm:$0xff]
    %v834 = vld [vmem:[#allocation12 + $0x668] sm:$0xff]
    %v835 = vld [vmem:[#allocation12 + $0x670] sm:$0xff]
    %v836 = vld [vmem:[#allocation12 + $0x678] sm:$0xff]
    %v837 = vld [vmem:[#allocation12 + $0x680] sm:$0xff]
    %v838 = vld [vmem:[#allocation12 + $0x688] sm:$0xff]
    %v839 = vld [vmem:[#allocation12 + $0x690] sm:$0xff]
    %v840 = vld [vmem:[#allocation12 + $0x698] sm:$0xff]
    %v841 = vld [vmem:[#allocation12 + $0x6a0] sm:$0xff]
    %v842 = vld [vmem:[#allocation12 + $0x6a8] sm:$0xff]
    %v843 = vld [vmem:[#allocation12 + $0x6b0] sm:$0xff]
    %v844 = vld [vmem:[#allocation12 + $0x6b8] sm:$0xff]
    %v845 = vld [vmem:[#allocation12 + $0x6c0] sm:$0xff]
    %v846 = vld [vmem:[#allocation12 + $0x6c8] sm:$0xff]
    %v847 = vld [vmem:[#allocation12 + $0x6d0] sm:$0xff]
    %v848 = vld [vmem:[#allocation12 + $0x6d8] sm:$0xff]
    %v849 = vld [vmem:[#allocation12 + $0x6e0] sm:$0xff]
    %v850 = vld [vmem:[#allocation12 + $0x6e8] sm:$0xff]
    %v851 = vld [vmem:[#allocation12 + $0x6f0] sm:$0xff]
    %v852 = vld [vmem:[#allocation12 + $0x6f8] sm:$0xff]
    %v853 = vld [vmem:[#allocation13] sm:$0xff]
    %v854 = vld [vmem:[#allocation13 + $0x8] sm:$0xff]
    %v855 = vld [vmem:[#allocation13 + $0x10] sm:$0xff]
    %v856 = vld [vmem:[#allocation13 + $0x18] sm:$0xff]
    %v857 = vld [vmem:[#allocation13 + $0x20] sm:$0xff]
    %v858 = vld [vmem:[#allocation13 + $0x28] sm:$0xff]
    %v859 = vld [vmem:[#allocation13 + $0x30] sm:$0xff]
    %v860 = vld [vmem:[#allocation13 + $0x38] sm:$0xff]
    %v861 = vld [vmem:[#allocation13 + $0x40] sm:$0xff]
    %v862 = vld [vmem:[#allocation13 + $0x48] sm:$0xff]
    %v863 = vld [vmem:[#allocation13 + $0x50] sm:$0xff]
    %v864 = vld [vmem:[#allocation13 + $0x58] sm:$0xff]
    %v865 = vld [vmem:[#allocation13 + $0x60] sm:$0xff]
    %v866 = vld [vmem:[#allocation13 + $0x68] sm:$0xff]
    %v867 = vld [vmem:[#allocation13 + $0x70] sm:$0xff]
    %v868 = vld [vmem:[#allocation13 + $0x78] sm:$0xff]
    %v869 = vpack.c.bf16 %v156, %v155
    %v870 = vperm.slane %v853, 0
    %v879 = vunpack.c.l.b16 %v157
    %v880 = vunpack.c.l.b16 %v158
    %v881 = vunpack.c.l.b16 %v159
    %v882 = vunpack.c.l.b16 %v160
    %v883 = vunpack.c.l.b16 %v161
    %v884 = vunpack.c.l.b16 %v162
    %v885 = vunpack.c.l.b16 %v163
    %v886 = vunpack.c.l.b16 %v164
    %v887 = vpack.c.b16 %v880, %v879
    %v888 = vpack.c.b16 %v882, %v881
    %v889 = vpack.c.b16 %v884, %v883
    %v890 = vpack.c.b16 %v886, %v885
    %vm895 = vcmask 523264
    %v897 = vsel %vm895, %v869, 0
    %899 = vmatpush.bf16.msra.mxu0 0
    %900 = vmatpush.bf16.msra.mxu0 0
    %901 = vmatpush.bf16.msra.mxu0 0
    %902 = vmatpush.bf16.msra.mxu0 0
    %903 = vmatpush.bf16.msra.mxu0 %v890
    %904 = vmatpush.bf16.msra.mxu0 %v889
    %905 = vmatpush.bf16.msra.mxu0 %v888
    %906 = vmatpush.bf16.msra.mxu0 %v887
    %907 = vmatmul.bf16.gmra.mxu0 %v897
    %v908 = vpop.f32.mrf.mxu0
    %v909 = vadd.f32 %v870, %v908
    %v910 = vpop.f32.mrf.mxu0
    %v911 = vadd.f32 %v870, %v910
    %912 = vdwg.mxu0
    %vm913 = vcmp.gt.f32.partialorder %v909, 0.0
    %vm914 = vcmp.gt.f32.partialorder %v911, 0.0
    %v915 = vmul.f32 %v909, 0.2
    %v916 = vmul.f32 %v911, 0.2
    %v917 = vsel %vm913, %v909, %v915
    %v918 = vsel %vm914, %v911, %v916
    %v919 = vpack.c.bf16 %v918, %v917
    %v936 = vunpack.c.l.b16 %v165
    %v937 = vunpack.c.h.b16 %v165
    %v938 = vunpack.c.l.b16 %v166
    %v939 = vunpack.c.h.b16 %v166
    %v940 = vunpack.c.l.b16 %v167
    %v941 = vunpack.c.h.b16 %v167
    %v942 = vunpack.c.l.b16 %v168
    %v943 = vunpack.c.h.b16 %v168
    %v944 = vunpack.c.l.b16 %v169
    %v945 = vunpack.c.h.b16 %v169
    %v946 = vunpack.c.l.b16 %v170
    %v947 = vunpack.c.h.b16 %v170
    %v948 = vunpack.c.l.b16 %v171
    %v949 = vunpack.c.h.b16 %v171
    %v950 = vunpack.c.l.b16 %v172
    %v951 = vunpack.c.h.b16 %v172
    %v952 = vunpack.c.l.b16 %v173
    %v953 = vunpack.c.h.b16 %v173
    %v954 = vunpack.c.l.b16 %v174
    %v955 = vunpack.c.h.b16 %v174
    %v956 = vunpack.c.l.b16 %v175
    %v957 = vunpack.c.h.b16 %v175
    %v958 = vunpack.c.l.b16 %v176
    %v959 = vunpack.c.h.b16 %v176
    %v960 = vunpack.c.l.b16 %v177
    %v961 = vunpack.c.h.b16 %v177
    %v962 = vunpack.c.l.b16 %v178
    %v963 = vunpack.c.h.b16 %v178
    %v964 = vunpack.c.l.b16 %v179
    %v965 = vunpack.c.h.b16 %v179
    %v966 = vunpack.c.l.b16 %v180
    %v967 = vunpack.c.h.b16 %v180
    %v968 = vpack.c.b16 %v938, %v936
    %v969 = vpack.c.b16 %v939, %v937
    %v970 = vpack.c.b16 %v942, %v940
    %v971 = vpack.c.b16 %v943, %v941
    %v972 = vpack.c.b16 %v946, %v944
    %v973 = vpack.c.b16 %v947, %v945
    %v974 = vpack.c.b16 %v950, %v948
    %v975 = vpack.c.b16 %v951, %v949
    %v976 = vpack.c.b16 %v954, %v952
    %v977 = vpack.c.b16 %v955, %v953
    %v978 = vpack.c.b16 %v958, %v956
    %v979 = vpack.c.b16 %v959, %v957
    %v980 = vpack.c.b16 %v962, %v960
    %v981 = vpack.c.b16 %v963, %v961
    %v982 = vpack.c.b16 %v966, %v964
    %v983 = vpack.c.b16 %v967, %v965
    %1000 = vmatpush.bf16.msra.mxu0 %v982
    %1001 = vmatpush.bf16.msra.mxu0 %v980
    %1002 = vmatpush.bf16.msra.mxu0 %v978
    %1003 = vmatpush.bf16.msra.mxu0 %v976
    %1004 = vmatpush.bf16.msra.mxu0 %v974
    %1005 = vmatpush.bf16.msra.mxu0 %v972
    %1006 = vmatpush.bf16.msra.mxu0 %v970
    %1007 = vmatpush.bf16.msra.mxu0 %v968
    %1008 = vmatmul.bf16.gmra.mxu0 %v919
    %v1009 = vpop.f32.mrf.mxu0
    %v1010 = vadd.f32 0.0, %v1009
    %v1011 = vpop.f32.mrf.mxu0
    %v1012 = vadd.f32 0.0, %v1011
    %1013 = vdwg.mxu0
    %1014 = vmatpush.bf16.msra.mxu0 %v983
    %1015 = vmatpush.bf16.msra.mxu0 %v981
    %1016 = vmatpush.bf16.msra.mxu0 %v979
    %1017 = vmatpush.bf16.msra.mxu0 %v977
    %1018 = vmatpush.bf16.msra.mxu0 %v975
    %1019 = vmatpush.bf16.msra.mxu0 %v973
    %1020 = vmatpush.bf16.msra.mxu0 %v971
    %1021 = vmatpush.bf16.msra.mxu0 %v969
    %1022 = vmatmul.bf16.gmra.mxu0 %v919
    %v1023 = vpop.f32.mrf.mxu0
    %v1024 = vadd.f32 0.0, %v1023
    %v1025 = vpop.f32.mrf.mxu0
    %v1026 = vadd.f32 0.0, %v1025
    %1027 = vdwg.mxu0
    %v1028 = vadd.f32 %v1010, %v1012
    %v1029 = vrot.slane %v1028, 4
    %v1030 = vadd.f32 %v1028, %v1029
    %v1031 = vrot.slane %v1030, 2
    %v1032 = vadd.f32 %v1030, %v1031
    %v1033 = vrot.slane %v1032, 1
    %v1034 = vadd.f32 %v1032, %v1033
    %v1035 = vadd.f32 %v1024, %v1026
    %v1036 = vrot.slane %v1035, 4
    %v1037 = vadd.f32 %v1035, %v1036
    %v1038 = vrot.slane %v1037, 2
    %v1039 = vadd.f32 %v1037, %v1038
    %v1040 = vrot.slane %v1039, 1
    %v1041 = vadd.f32 %v1039, %v1040
    %v1042 = vrcp.pop 16.0
    %v1043 = vmul.f32 16.0, %v1042
    %v1044 = vsub.f32 1.0, %v1043
    %v1045 = vmul.f32 %v1042, %v1044
    %v1046 = vadd.f32 %v1042, %v1045
    %vm1047 = vweird.f32 %v1042
    %v1048 = vsel %vm1047, %v1042, %v1046
    %v1049 = vmul.f32 %v1034, %v1048
    %v1050 = vmul.f32 %v1041, %v1048
    %v1051 = vsub.f32 %v1010, %v1049
    %v1052 = vsub.f32 %v1024, %v1050
    %v1053 = vsub.f32 %v1012, %v1049
    %v1054 = vsub.f32 %v1026, %v1050
    %v1055 = vmul.f32 %v1051, %v1051
    %v1056 = vmul.f32 %v1052, %v1052
    %v1057 = vmul.f32 %v1053, %v1053
    %v1058 = vmul.f32 %v1054, %v1054
    %v1059 = vadd.f32 %v1055, %v1057
    %v1060 = vrot.slane %v1059, 4
    %v1061 = vadd.f32 %v1059, %v1060
    %v1062 = vrot.slane %v1061, 2
    %v1063 = vadd.f32 %v1061, %v1062
    %v1064 = vrot.slane %v1063, 1
    %v1065 = vadd.f32 %v1063, %v1064
    %v1066 = vadd.f32 %v1056, %v1058
    %v1067 = vrot.slane %v1066, 4
    %v1068 = vadd.f32 %v1066, %v1067
    %v1069 = vrot.slane %v1068, 2
    %v1070 = vadd.f32 %v1068, %v1069
    %v1071 = vrot.slane %v1070, 1
    %v1072 = vadd.f32 %v1070, %v1071
    %v1073 = vmul.f32 %v1065, %v1048
    %v1074 = vmul.f32 %v1072, %v1048
    %vm1075 = vcmp.gt.f32.partialorder %v1073, 0.0
    %vm1076 = vcmp.gt.f32.partialorder %v1074, 0.0
    %v1077 = vrsqrt.pop %v1073
    %v1078 = vmul.f32 %v1077, %v1073
    %v1079 = vmul.f32 %v1078, %v1077
    %v1080 = vmul.f32 0.5, %v1079
    %v1081 = vsub.f32 1.5, %v1080
    %v1082 = vmul.f32 %v1077, %v1081
    %vm1083 = vweird.f32 %v1073
    %vm1084 = vweird.f32 %v1077
    %vm1085 = vmor %vm1083, %vm1084
    %v1086 = vsel %vm1085, %v1077, %v1082
    %v1087 = vrsqrt.pop %v1074
    %v1088 = vmul.f32 %v1087, %v1074
    %v1089 = vmul.f32 %v1088, %v1087
    %v1090 = vmul.f32 0.5, %v1089
    %v1091 = vsub.f32 1.5, %v1090
    %v1092 = vmul.f32 %v1087, %v1091
    %vm1093 = vweird.f32 %v1074
    %vm1094 = vweird.f32 %v1087
    %vm1095 = vmor %vm1093, %vm1094
    %v1096 = vsel %vm1095, %v1087, %v1092
    %v1097 = vsel %vm1075, %v1086, 0.0
    %v1098 = vsel %vm1076, %v1096, 0.0
    %v1099 = vmul.f32 %v853, %v1097
    %v1100 = vmul.f32 %v854, %v1098
    %v1101 = vperm.slane %v1099, 1
    %v1102 = vperm.slane %v1100, 1
    %v1103 = vmul.f32 %v1051, %v1101
    %v1104 = vmul.f32 %v1052, %v1102
    %v1105 = vmul.f32 %v1053, %v1101
    %v1106 = vmul.f32 %v1054, %v1102
    %v1107 = vperm.slane %v853, 2
    %v1108 = vperm.slane %v854, 2
    %v1109 = vadd.f32 %v1103, %v1107
    %v1110 = vadd.f32 %v1104, %v1108
    %v1111 = vadd.f32 %v1105, %v1107
    %v1112 = vadd.f32 %v1106, %v1108
    %vm1113 = vcmp.gt.f32.partialorder %v1109, 0.0
    %vm1114 = vcmp.gt.f32.partialorder %v1110, 0.0
    %vm1115 = vcmp.gt.f32.partialorder %v1111, 0.0
    %vm1116 = vcmp.gt.f32.partialorder %v1112, 0.0
    %v1117 = vmul.f32 %v1109, 0.2
    %v1118 = vmul.f32 %v1110, 0.2
    %v1119 = vmul.f32 %v1111, 0.2
    %v1120 = vmul.f32 %v1112, 0.2
    %v1121 = vsel %vm1113, %v1109, %v1117
    %v1122 = vsel %vm1114, %v1110, %v1118
    %v1123 = vsel %vm1115, %v1111, %v1119
    %v1124 = vsel %vm1116, %v1112, %v1120
    %v1125 = vpack.c.bf16 %v1123, %v1121
    %v1126 = vpack.c.bf16 %v1124, %v1122
    %v1191 = vunpack.c.l.b16 %v181
    %v1192 = vunpack.c.h.b16 %v181
    %v1193 = vunpack.c.l.b16 %v182
    %v1194 = vunpack.c.h.b16 %v182
    %v1195 = vunpack.c.l.b16 %v183
    %v1196 = vunpack.c.h.b16 %v183
    %v1197 = vunpack.c.l.b16 %v184
    %v1198 = vunpack.c.h.b16 %v184
    %v1199 = vunpack.c.l.b16 %v185
    %v1200 = vunpack.c.h.b16 %v185
    %v1201 = vunpack.c.l.b16 %v186
    %v1202 = vunpack.c.h.b16 %v186
    %v1203 = vunpack.c.l.b16 %v187
    %v1204 = vunpack.c.h.b16 %v187
    %v1205 = vunpack.c.l.b16 %v188
    %v1206 = vunpack.c.h.b16 %v188
    %v1207 = vunpack.c.l.b16 %v189
    %v1208 = vunpack.c.h.b16 %v189
    %v1209 = vunpack.c.l.b16 %v190
    %v1210 = vunpack.c.h.b16 %v190
    %v1211 = vunpack.c.l.b16 %v191
    %v1212 = vunpack.c.h.b16 %v191
    %v1213 = vunpack.c.l.b16 %v192
    %v1214 = vunpack.c.h.b16 %v192
    %v1215 = vunpack.c.l.b16 %v193
    %v1216 = vunpack.c.h.b16 %v193
    %v1217 = vunpack.c.l.b16 %v194
    %v1218 = vunpack.c.h.b16 %v194
    %v1219 = vunpack.c.l.b16 %v195
    %v1220 = vunpack.c.h.b16 %v195
    %v1221 = vunpack.c.l.b16 %v196
    %v1222 = vunpack.c.h.b16 %v196
    %v1223 = vunpack.c.l.b16 %v197
    %v1224 = vunpack.c.h.b16 %v197
    %v1225 = vunpack.c.l.b16 %v198
    %v1226 = vunpack.c.h.b16 %v198
    %v1227 = vunpack.c.l.b16 %v199
    %v1228 = vunpack.c.h.b16 %v199
    %v1229 = vunpack.c.l.b16 %v200
    %v1230 = vunpack.c.h.b16 %v200
    %v1231 = vunpack.c.l.b16 %v201
    %v1232 = vunpack.c.h.b16 %v201
    %v1233 = vunpack.c.l.b16 %v202
    %v1234 = vunpack.c.h.b16 %v202
    %v1235 = vunpack.c.l.b16 %v203
    %v1236 = vunpack.c.h.b16 %v203
    %v1237 = vunpack.c.l.b16 %v204
    %v1238 = vunpack.c.h.b16 %v204
    %v1239 = vunpack.c.l.b16 %v205
    %v1240 = vunpack.c.h.b16 %v205
    %v1241 = vunpack.c.l.b16 %v206
    %v1242 = vunpack.c.h.b16 %v206
    %v1243 = vunpack.c.l.b16 %v207
    %v1244 = vunpack.c.h.b16 %v207
    %v1245 = vunpack.c.l.b16 %v208
    %v1246 = vunpack.c.h.b16 %v208
    %v1247 = vunpack.c.l.b16 %v209
    %v1248 = vunpack.c.h.b16 %v209
    %v1249 = vunpack.c.l.b16 %v210
    %v1250 = vunpack.c.h.b16 %v210
    %v1251 = vunpack.c.l.b16 %v211
    %v1252 = vunpack.c.h.b16 %v211
    %v1253 = vunpack.c.l.b16 %v212
    %v1254 = vunpack.c.h.b16 %v212
    %v1255 = vunpack.c.l.b16 %v213
    %v1256 = vunpack.c.h.b16 %v213
    %v1257 = vunpack.c.l.b16 %v214
    %v1258 = vunpack.c.h.b16 %v214
    %v1259 = vunpack.c.l.b16 %v215
    %v1260 = vunpack.c.h.b16 %v215
    %v1261 = vunpack.c.l.b16 %v216
    %v1262 = vunpack.c.h.b16 %v216
    %v1263 = vunpack.c.l.b16 %v217
    %v1264 = vunpack.c.h.b16 %v217
    %v1265 = vunpack.c.l.b16 %v218
    %v1266 = vunpack.c.h.b16 %v218
    %v1267 = vunpack.c.l.b16 %v219
    %v1268 = vunpack.c.h.b16 %v219
    %v1269 = vunpack.c.l.b16 %v220
    %v1270 = vunpack.c.h.b16 %v220
    %v1271 = vunpack.c.l.b16 %v221
    %v1272 = vunpack.c.h.b16 %v221
    %v1273 = vunpack.c.l.b16 %v222
    %v1274 = vunpack.c.h.b16 %v222
    %v1275 = vunpack.c.l.b16 %v223
    %v1276 = vunpack.c.h.b16 %v223
    %v1277 = vunpack.c.l.b16 %v224
    %v1278 = vunpack.c.h.b16 %v224
    %v1279 = vunpack.c.l.b16 %v225
    %v1280 = vunpack.c.h.b16 %v225
    %v1281 = vunpack.c.l.b16 %v226
    %v1282 = vunpack.c.h.b16 %v226
    %v1283 = vunpack.c.l.b16 %v227
    %v1284 = vunpack.c.h.b16 %v227
    %v1285 = vunpack.c.l.b16 %v228
    %v1286 = vunpack.c.h.b16 %v228
    %v1287 = vunpack.c.l.b16 %v229
    %v1288 = vunpack.c.h.b16 %v229
    %v1289 = vunpack.c.l.b16 %v230
    %v1290 = vunpack.c.h.b16 %v230
    %v1291 = vunpack.c.l.b16 %v231
    %v1292 = vunpack.c.h.b16 %v231
    %v1293 = vunpack.c.l.b16 %v232
    %v1294 = vunpack.c.h.b16 %v232
    %v1295 = vunpack.c.l.b16 %v233
    %v1296 = vunpack.c.h.b16 %v233
    %v1297 = vunpack.c.l.b16 %v234
    %v1298 = vunpack.c.h.b16 %v234
    %v1299 = vunpack.c.l.b16 %v235
    %v1300 = vunpack.c.h.b16 %v235
    %v1301 = vunpack.c.l.b16 %v236
    %v1302 = vunpack.c.h.b16 %v236
    %v1303 = vunpack.c.l.b16 %v237
    %v1304 = vunpack.c.h.b16 %v237
    %v1305 = vunpack.c.l.b16 %v238
    %v1306 = vunpack.c.h.b16 %v238
    %v1307 = vunpack.c.l.b16 %v239
    %v1308 = vunpack.c.h.b16 %v239
    %v1309 = vunpack.c.l.b16 %v240
    %v1310 = vunpack.c.h.b16 %v240
    %v1311 = vunpack.c.l.b16 %v241
    %v1312 = vunpack.c.h.b16 %v241
    %v1313 = vunpack.c.l.b16 %v242
    %v1314 = vunpack.c.h.b16 %v242
    %v1315 = vunpack.c.l.b16 %v243
    %v1316 = vunpack.c.h.b16 %v243
    %v1317 = vunpack.c.l.b16 %v244
    %v1318 = vunpack.c.h.b16 %v244
    %v1319 = vpack.c.b16 %v1195, %v1191
    %v1320 = vpack.c.b16 %v1196, %v1192
    %v1321 = vpack.c.b16 %v1197, %v1193
    %v1322 = vpack.c.b16 %v1198, %v1194
    %v1323 = vpack.c.b16 %v1203, %v1199
    %v1324 = vpack.c.b16 %v1204, %v1200
    %v1325 = vpack.c.b16 %v1205, %v1201
    %v1326 = vpack.c.b16 %v1206, %v1202
    %v1327 = vpack.c.b16 %v1211, %v1207
    %v1328 = vpack.c.b16 %v1212, %v1208
    %v1329 = vpack.c.b16 %v1213, %v1209
    %v1330 = vpack.c.b16 %v1214, %v1210
    %v1331 = vpack.c.b16 %v1219, %v1215
    %v1332 = vpack.c.b16 %v1220, %v1216
    %v1333 = vpack.c.b16 %v1221, %v1217
    %v1334 = vpack.c.b16 %v1222, %v1218
    %v1335 = vpack.c.b16 %v1227, %v1223
    %v1336 = vpack.c.b16 %v1228, %v1224
    %v1337 = vpack.c.b16 %v1229, %v1225
    %v1338 = vpack.c.b16 %v1230, %v1226
    %v1339 = vpack.c.b16 %v1235, %v1231
    %v1340 = vpack.c.b16 %v1236, %v1232
    %v1341 = vpack.c.b16 %v1237, %v1233
    %v1342 = vpack.c.b16 %v1238, %v1234
    %v1343 = vpack.c.b16 %v1243, %v1239
    %v1344 = vpack.c.b16 %v1244, %v1240
    %v1345 = vpack.c.b16 %v1245, %v1241
    %v1346 = vpack.c.b16 %v1246, %v1242
    %v1347 = vpack.c.b16 %v1251, %v1247
    %v1348 = vpack.c.b16 %v1252, %v1248
    %v1349 = vpack.c.b16 %v1253, %v1249
    %v1350 = vpack.c.b16 %v1254, %v1250
    %v1351 = vpack.c.b16 %v1259, %v1255
    %v1352 = vpack.c.b16 %v1260, %v1256
    %v1353 = vpack.c.b16 %v1261, %v1257
    %v1354 = vpack.c.b16 %v1262, %v1258
    %v1355 = vpack.c.b16 %v1267, %v1263
    %v1356 = vpack.c.b16 %v1268, %v1264
    %v1357 = vpack.c.b16 %v1269, %v1265
    %v1358 = vpack.c.b16 %v1270, %v1266
    %v1359 = vpack.c.b16 %v1275, %v1271
    %v1360 = vpack.c.b16 %v1276, %v1272
    %v1361 = vpack.c.b16 %v1277, %v1273
    %v1362 = vpack.c.b16 %v1278, %v1274
    %v1363 = vpack.c.b16 %v1283, %v1279
    %v1364 = vpack.c.b16 %v1284, %v1280
    %v1365 = vpack.c.b16 %v1285, %v1281
    %v1366 = vpack.c.b16 %v1286, %v1282
    %v1367 = vpack.c.b16 %v1291, %v1287
    %v1368 = vpack.c.b16 %v1292, %v1288
    %v1369 = vpack.c.b16 %v1293, %v1289
    %v1370 = vpack.c.b16 %v1294, %v1290
    %v1371 = vpack.c.b16 %v1299, %v1295
    %v1372 = vpack.c.b16 %v1300, %v1296
    %v1373 = vpack.c.b16 %v1301, %v1297
    %v1374 = vpack.c.b16 %v1302, %v1298
    %v1375 = vpack.c.b16 %v1307, %v1303
    %v1376 = vpack.c.b16 %v1308, %v1304
    %v1377 = vpack.c.b16 %v1309, %v1305
    %v1378 = vpack.c.b16 %v1310, %v1306
    %v1379 = vpack.c.b16 %v1315, %v1311
    %v1380 = vpack.c.b16 %v1316, %v1312
    %v1381 = vpack.c.b16 %v1317, %v1313
    %v1382 = vpack.c.b16 %v1318, %v1314
    %1447 = vmatpush.bf16.msra.mxu0 %v1347
    %1448 = vmatpush.bf16.msra.mxu0 %v1343
    %1449 = vmatpush.bf16.msra.mxu0 %v1339
    %1450 = vmatpush.bf16.msra.mxu0 %v1335
    %1451 = vmatpush.bf16.msra.mxu0 %v1331
    %1452 = vmatpush.bf16.msra.mxu0 %v1327
    %1453 = vmatpush.bf16.msra.mxu0 %v1323
    %1454 = vmatpush.bf16.msra.mxu0 %v1319
    %1455 = vmatmul.bf16.gmra.mxu0 %v1125
    %v1456 = vpop.f32.mrf.mxu0
    %v1457 = vadd.f32 0.0, %v1456
    %v1458 = vpop.f32.mrf.mxu0
    %v1459 = vadd.f32 0.0, %v1458
    %1460 = vdwg.mxu0
    %1461 = vmatpush.bf16.msra.mxu0 %v1379
    %1462 = vmatpush.bf16.msra.mxu0 %v1375
    %1463 = vmatpush.bf16.msra.mxu0 %v1371
    %1464 = vmatpush.bf16.msra.mxu0 %v1367
    %1465 = vmatpush.bf16.msra.mxu0 %v1363
    %1466 = vmatpush.bf16.msra.mxu0 %v1359
    %1467 = vmatpush.bf16.msra.mxu0 %v1355
    %1468 = vmatpush.bf16.msra.mxu0 %v1351
    %1469 = vmatmul.bf16.gmra.mxu0 %v1126
    %v1470 = vpop.f32.mrf.mxu0
    %v1471 = vadd.f32 %v1457, %v1470
    %v1472 = vpop.f32.mrf.mxu0
    %v1473 = vadd.f32 %v1459, %v1472
    %1474 = vdwg.mxu0
    %1475 = vmatpush.bf16.msra.mxu0 %v1348
    %1476 = vmatpush.bf16.msra.mxu0 %v1344
    %1477 = vmatpush.bf16.msra.mxu0 %v1340
    %1478 = vmatpush.bf16.msra.mxu0 %v1336
    %1479 = vmatpush.bf16.msra.mxu0 %v1332
    %1480 = vmatpush.bf16.msra.mxu0 %v1328
    %1481 = vmatpush.bf16.msra.mxu0 %v1324
    %1482 = vmatpush.bf16.msra.mxu0 %v1320
    %1483 = vmatmul.bf16.gmra.mxu0 %v1125
    %v1484 = vpop.f32.mrf.mxu0
    %v1485 = vadd.f32 0.0, %v1484
    %v1486 = vpop.f32.mrf.mxu0
    %v1487 = vadd.f32 0.0, %v1486
    %1488 = vdwg.mxu0
    %1489 = vmatpush.bf16.msra.mxu0 %v1380
    %1490 = vmatpush.bf16.msra.mxu0 %v1376
    %1491 = vmatpush.bf16.msra.mxu0 %v1372
    %1492 = vmatpush.bf16.msra.mxu0 %v1368
    %1493 = vmatpush.bf16.msra.mxu0 %v1364
    %1494 = vmatpush.bf16.msra.mxu0 %v1360
    %1495 = vmatpush.bf16.msra.mxu0 %v1356
    %1496 = vmatpush.bf16.msra.mxu0 %v1352
    %1497 = vmatmul.bf16.gmra.mxu0 %v1126
    %v1498 = vpop.f32.mrf.mxu0
    %v1499 = vadd.f32 %v1485, %v1498
    %v1500 = vpop.f32.mrf.mxu0
    %v1501 = vadd.f32 %v1487, %v1500
    %1502 = vdwg.mxu0
    %1503 = vmatpush.bf16.msra.mxu0 %v1349
    %1504 = vmatpush.bf16.msra.mxu0 %v1345
    %1505 = vmatpush.bf16.msra.mxu0 %v1341
    %1506 = vmatpush.bf16.msra.mxu0 %v1337
    %1507 = vmatpush.bf16.msra.mxu0 %v1333
    %1508 = vmatpush.bf16.msra.mxu0 %v1329
    %1509 = vmatpush.bf16.msra.mxu0 %v1325
    %1510 = vmatpush.bf16.msra.mxu0 %v1321
    %1511 = vmatmul.bf16.gmra.mxu0 %v1125
    %v1512 = vpop.f32.mrf.mxu0
    %v1513 = vadd.f32 0.0, %v1512
    %v1514 = vpop.f32.mrf.mxu0
    %v1515 = vadd.f32 0.0, %v1514
    %1516 = vdwg.mxu0
    %1517 = vmatpush.bf16.msra.mxu0 %v1381
    %1518 = vmatpush.bf16.msra.mxu0 %v1377
    %1519 = vmatpush.bf16.msra.mxu0 %v1373
    %1520 = vmatpush.bf16.msra.mxu0 %v1369
    %1521 = vmatpush.bf16.msra.mxu0 %v1365
    %1522 = vmatpush.bf16.msra.mxu0 %v1361
    %1523 = vmatpush.bf16.msra.mxu0 %v1357
    %1524 = vmatpush.bf16.msra.mxu0 %v1353
    %1525 = vmatmul.bf16.gmra.mxu0 %v1126
    %v1526 = vpop.f32.mrf.mxu0
    %v1527 = vadd.f32 %v1513, %v1526
    %v1528 = vpop.f32.mrf.mxu0
    %v1529 = vadd.f32 %v1515, %v1528
    %1530 = vdwg.mxu0
    %1531 = vmatpush.bf16.msra.mxu0 %v1350
    %1532 = vmatpush.bf16.msra.mxu0 %v1346
    %1533 = vmatpush.bf16.msra.mxu0 %v1342
    %1534 = vmatpush.bf16.msra.mxu0 %v1338
    %1535 = vmatpush.bf16.msra.mxu0 %v1334
    %1536 = vmatpush.bf16.msra.mxu0 %v1330
    %1537 = vmatpush.bf16.msra.mxu0 %v1326
    %1538 = vmatpush.bf16.msra.mxu0 %v1322
    %1539 = vmatmul.bf16.gmra.mxu0 %v1125
    %v1540 = vpop.f32.mrf.mxu0
    %v1541 = vadd.f32 0.0, %v1540
    %v1542 = vpop.f32.mrf.mxu0
    %v1543 = vadd.f32 0.0, %v1542
    %1544 = vdwg.mxu0
    %1545 = vmatpush.bf16.msra.mxu0 %v1382
    %1546 = vmatpush.bf16.msra.mxu0 %v1378
    %1547 = vmatpush.bf16.msra.mxu0 %v1374
    %1548 = vmatpush.bf16.msra.mxu0 %v1370
    %1549 = vmatpush.bf16.msra.mxu0 %v1366
    %1550 = vmatpush.bf16.msra.mxu0 %v1362
    %1551 = vmatpush.bf16.msra.mxu0 %v1358
    %1552 = vmatpush.bf16.msra.mxu0 %v1354
    %1553 = vmatmul.bf16.gmra.mxu0 %v1126
    %v1554 = vpop.f32.mrf.mxu0
    %v1555 = vadd.f32 %v1541, %v1554
    %v1556 = vpop.f32.mrf.mxu0
    %v1557 = vadd.f32 %v1543, %v1556
    %1558 = vdwg.mxu0
    %v1559 = vadd.f32 %v1471, %v1473
    %v1560 = vrot.slane %v1559, 4
    %v1561 = vadd.f32 %v1559, %v1560
    %v1562 = vrot.slane %v1561, 2
    %v1563 = vadd.f32 %v1561, %v1562
    %v1564 = vrot.slane %v1563, 1
    %v1565 = vadd.f32 %v1563, %v1564
    %v1566 = vadd.f32 %v1499, %v1501
    %v1567 = vrot.slane %v1566, 4
    %v1568 = vadd.f32 %v1566, %v1567
    %v1569 = vrot.slane %v1568, 2
    %v1570 = vadd.f32 %v1568, %v1569
    %v1571 = vrot.slane %v1570, 1
    %v1572 = vadd.f32 %v1570, %v1571
    %v1573 = vadd.f32 %v1527, %v1529
    %v1574 = vrot.slane %v1573, 4
    %v1575 = vadd.f32 %v1573, %v1574
    %v1576 = vrot.slane %v1575, 2
    %v1577 = vadd.f32 %v1575, %v1576
    %v1578 = vrot.slane %v1577, 1
    %v1579 = vadd.f32 %v1577, %v1578
    %v1580 = vadd.f32 %v1555, %v1557
    %v1581 = vrot.slane %v1580, 4
    %v1582 = vadd.f32 %v1580, %v1581
    %v1583 = vrot.slane %v1582, 2
    %v1584 = vadd.f32 %v1582, %v1583
    %v1585 = vrot.slane %v1584, 1
    %v1586 = vadd.f32 %v1584, %v1585
    %v1587 = vmul.f32 %v1565, %v1048
    %v1588 = vmul.f32 %v1572, %v1048
    %v1589 = vmul.f32 %v1579, %v1048
    %v1590 = vmul.f32 %v1586, %v1048
    %v1591 = vsub.f32 %v1471, %v1587
    %v1592 = vsub.f32 %v1499, %v1588
    %v1593 = vsub.f32 %v1527, %v1589
    %v1594 = vsub.f32 %v1555, %v1590
    %v1595 = vsub.f32 %v1473, %v1587
    %v1596 = vsub.f32 %v1501, %v1588
    %v1597 = vsub.f32 %v1529, %v1589
    %v1598 = vsub.f32 %v1557, %v1590
    %v1599 = vmul.f32 %v1591, %v1591
    %v1600 = vmul.f32 %v1592, %v1592
    %v1601 = vmul.f32 %v1593, %v1593
    %v1602 = vmul.f32 %v1594, %v1594
    %v1603 = vmul.f32 %v1595, %v1595
    %v1604 = vmul.f32 %v1596, %v1596
    %v1605 = vmul.f32 %v1597, %v1597
    %v1606 = vmul.f32 %v1598, %v1598
    %v1607 = vadd.f32 %v1599, %v1603
    %v1608 = vrot.slane %v1607, 4
    %v1609 = vadd.f32 %v1607, %v1608
    %v1610 = vrot.slane %v1609, 2
    %v1611 = vadd.f32 %v1609, %v1610
    %v1612 = vrot.slane %v1611, 1
    %v1613 = vadd.f32 %v1611, %v1612
    %v1614 = vadd.f32 %v1600, %v1604
    %v1615 = vrot.slane %v1614, 4
    %v1616 = vadd.f32 %v1614, %v1615
    %v1617 = vrot.slane %v1616, 2
    %v1618 = vadd.f32 %v1616, %v1617
    %v1619 = vrot.slane %v1618, 1
    %v1620 = vadd.f32 %v1618, %v1619
    %v1621 = vadd.f32 %v1601, %v1605
    %v1622 = vrot.slane %v1621, 4
    %v1623 = vadd.f32 %v1621, %v1622
    %v1624 = vrot.slane %v1623, 2
    %v1625 = vadd.f32 %v1623, %v1624
    %v1626 = vrot.slane %v1625, 1
    %v1627 = vadd.f32 %v1625, %v1626
    %v1628 = vadd.f32 %v1602, %v1606
    %v1629 = vrot.slane %v1628, 4
    %v1630 = vadd.f32 %v1628, %v1629
    %v1631 = vrot.slane %v1630, 2
    %v1632 = vadd.f32 %v1630, %v1631
    %v1633 = vrot.slane %v1632, 1
    %v1634 = vadd.f32 %v1632, %v1633
    %v1635 = vmul.f32 %v1613, %v1048
    %v1636 = vmul.f32 %v1620, %v1048
    %v1637 = vmul.f32 %v1627, %v1048
    %v1638 = vmul.f32 %v1634, %v1048
    %vm1639 = vcmp.gt.f32.partialorder %v1635, 0.0
    %vm1640 = vcmp.gt.f32.partialorder %v1636, 0.0
    %vm1641 = vcmp.gt.f32.partialorder %v1637, 0.0
    %vm1642 = vcmp.gt.f32.partialorder %v1638, 0.0
    %v1643 = vrsqrt.pop %v1635
    %v1644 = vmul.f32 %v1643, %v1635
    %v1645 = vmul.f32 %v1644, %v1643
    %v1646 = vmul.f32 0.5, %v1645
    %v1647 = vsub.f32 1.5, %v1646
    %v1648 = vmul.f32 %v1643, %v1647
    %vm1649 = vweird.f32 %v1635
    %vm1650 = vweird.f32 %v1643
    %vm1651 = vmor %vm1649, %vm1650
    %v1652 = vsel %vm1651, %v1643, %v1648
    %v1653 = vrsqrt.pop %v1636
    %v1654 = vmul.f32 %v1653, %v1636
    %v1655 = vmul.f32 %v1654, %v1653
    %v1656 = vmul.f32 0.5, %v1655
    %v1657 = vsub.f32 1.5, %v1656
    %v1658 = vmul.f32 %v1653, %v1657
    %vm1659 = vweird.f32 %v1636
    %vm1660 = vweird.f32 %v1653
    %vm1661 = vmor %vm1659, %vm1660
    %v1662 = vsel %vm1661, %v1653, %v1658
    %v1663 = vrsqrt.pop %v1637
    %v1664 = vmul.f32 %v1663, %v1637
    %v1665 = vmul.f32 %v1664, %v1663
    %v1666 = vmul.f32 0.5, %v1665
    %v1667 = vsub.f32 1.5, %v1666
    %v1668 = vmul.f32 %v1663, %v1667
    %vm1669 = vweird.f32 %v1637
    %vm1670 = vweird.f32 %v1663
    %vm1671 = vmor %vm1669, %vm1670
    %v1672 = vsel %vm1671, %v1663, %v1668
    %v1673 = vrsqrt.pop %v1638
    %v1674 = vmul.f32 %v1673, %v1638
    %v1675 = vmul.f32 %v1674, %v1673
    %v1676 = vmul.f32 0.5, %v1675
    %v1677 = vsub.f32 1.5, %v1676
    %v1678 = vmul.f32 %v1673, %v1677
    %vm1679 = vweird.f32 %v1638
    %vm1680 = vweird.f32 %v1673
    %vm1681 = vmor %vm1679, %vm1680
    %v1682 = vsel %vm1681, %v1673, %v1678
    %v1683 = vsel %vm1639, %v1652, 0.0
    %v1684 = vsel %vm1640, %v1662, 0.0
    %v1685 = vsel %vm1641, %v1672, 0.0
    %v1686 = vsel %vm1642, %v1682, 0.0
    %v1687 = vmul.f32 %v853, %v1683
    %v1688 = vmul.f32 %v854, %v1684
    %v1689 = vmul.f32 %v855, %v1685
    %v1690 = vmul.f32 %v856, %v1686
    %v1691 = vperm.slane %v1687, 3
    %v1692 = vperm.slane %v1688, 3
    %v1693 = vperm.slane %v1689, 3
    %v1694 = vperm.slane %v1690, 3
    %v1695 = vmul.f32 %v1591, %v1691
    %v1696 = vmul.f32 %v1592, %v1692
    %v1697 = vmul.f32 %v1593, %v1693
    %v1698 = vmul.f32 %v1594, %v1694
    %v1699 = vmul.f32 %v1595, %v1691
    %v1700 = vmul.f32 %v1596, %v1692
    %v1701 = vmul.f32 %v1597, %v1693
    %v1702 = vmul.f32 %v1598, %v1694
    %v1703 = vperm.slane %v853, 4
    %v1704 = vperm.slane %v854, 4
    %v1705 = vperm.slane %v855, 4
    %v1706 = vperm.slane %v856, 4
    %v1707 = vadd.f32 %v1695, %v1703
    %v1708 = vadd.f32 %v1696, %v1704
    %v1709 = vadd.f32 %v1697, %v1705
    %v1710 = vadd.f32 %v1698, %v1706
    %v1711 = vadd.f32 %v1699, %v1703
    %v1712 = vadd.f32 %v1700, %v1704
    %v1713 = vadd.f32 %v1701, %v1705
    %v1714 = vadd.f32 %v1702, %v1706
    %vm1715 = vcmp.gt.f32.partialorder %v1707, 0.0
    %vm1716 = vcmp.gt.f32.partialorder %v1708, 0.0
    %vm1717 = vcmp.gt.f32.partialorder %v1709, 0.0
    %vm1718 = vcmp.gt.f32.partialorder %v1710, 0.0
    %vm1719 = vcmp.gt.f32.partialorder %v1711, 0.0
    %vm1720 = vcmp.gt.f32.partialorder %v1712, 0.0
    %vm1721 = vcmp.gt.f32.partialorder %v1713, 0.0
    %vm1722 = vcmp.gt.f32.partialorder %v1714, 0.0
    %v1723 = vmul.f32 %v1707, 0.2
    %v1724 = vmul.f32 %v1708, 0.2
    %v1725 = vmul.f32 %v1709, 0.2
    %v1726 = vmul.f32 %v1710, 0.2
    %v1727 = vmul.f32 %v1711, 0.2
    %v1728 = vmul.f32 %v1712, 0.2
    %v1729 = vmul.f32 %v1713, 0.2
    %v1730 = vmul.f32 %v1714, 0.2
    %v1731 = vsel %vm1715, %v1707, %v1723
    %v1732 = vsel %vm1716, %v1708, %v1724
    %v1733 = vsel %vm1717, %v1709, %v1725
    %v1734 = vsel %vm1718, %v1710, %v1726
    %v1735 = vsel %vm1719, %v1711, %v1727
    %v1736 = vsel %vm1720, %v1712, %v1728
    %v1737 = vsel %vm1721, %v1713, %v1729
    %v1738 = vsel %vm1722, %v1714, %v1730
    %v1739 = vpack.c.bf16 %v1735, %v1731
    %v1740 = vpack.c.bf16 %v1736, %v1732
    %v1741 = vpack.c.bf16 %v1737, %v1733
    %v1742 = vpack.c.bf16 %v1738, %v1734
    %v1935 = vunpack.c.l.b16 %v245
    %v1936 = vunpack.c.h.b16 %v245
    %v1937 = vunpack.c.l.b16 %v246
    %v1938 = vunpack.c.h.b16 %v246
    %v1939 = vunpack.c.l.b16 %v247
    %v1940 = vunpack.c.h.b16 %v247
    %v1941 = vunpack.c.l.b16 %v248
    %v1942 = vunpack.c.h.b16 %v248
    %v1943 = vunpack.c.l.b16 %v249
    %v1944 = vunpack.c.h.b16 %v249
    %v1945 = vunpack.c.l.b16 %v250
    %v1946 = vunpack.c.h.b16 %v250
    %v1947 = vunpack.c.l.b16 %v251
    %v1948 = vunpack.c.h.b16 %v251
    %v1949 = vunpack.c.l.b16 %v252
    %v1950 = vunpack.c.h.b16 %v252
    %v1951 = vunpack.c.l.b16 %v253
    %v1952 = vunpack.c.h.b16 %v253
    %v1953 = vunpack.c.l.b16 %v254
    %v1954 = vunpack.c.h.b16 %v254
    %v1955 = vunpack.c.l.b16 %v255
    %v1956 = vunpack.c.h.b16 %v255
    %v1957 = vunpack.c.l.b16 %v256
    %v1958 = vunpack.c.h.b16 %v256
    %v1959 = vunpack.c.l.b16 %v257
    %v1960 = vunpack.c.h.b16 %v257
    %v1961 = vunpack.c.l.b16 %v258
    %v1962 = vunpack.c.h.b16 %v258
    %v1963 = vunpack.c.l.b16 %v259
    %v1964 = vunpack.c.h.b16 %v259
    %v1965 = vunpack.c.l.b16 %v260
    %v1966 = vunpack.c.h.b16 %v260
    %v1967 = vunpack.c.l.b16 %v261
    %v1968 = vunpack.c.h.b16 %v261
    %v1969 = vunpack.c.l.b16 %v262
    %v1970 = vunpack.c.h.b16 %v262
    %v1971 = vunpack.c.l.b16 %v263
    %v1972 = vunpack.c.h.b16 %v263
    %v1973 = vunpack.c.l.b16 %v264
    %v1974 = vunpack.c.h.b16 %v264
    %v1975 = vunpack.c.l.b16 %v265
    %v1976 = vunpack.c.h.b16 %v265
    %v1977 = vunpack.c.l.b16 %v266
    %v1978 = vunpack.c.h.b16 %v266
    %v1979 = vunpack.c.l.b16 %v267
    %v1980 = vunpack.c.h.b16 %v267
    %v1981 = vunpack.c.l.b16 %v268
    %v1982 = vunpack.c.h.b16 %v268
    %v1983 = vunpack.c.l.b16 %v269
    %v1984 = vunpack.c.h.b16 %v269
    %v1985 = vunpack.c.l.b16 %v270
    %v1986 = vunpack.c.h.b16 %v270
    %v1987 = vunpack.c.l.b16 %v271
    %v1988 = vunpack.c.h.b16 %v271
    %v1989 = vunpack.c.l.b16 %v272
    %v1990 = vunpack.c.h.b16 %v272
    %v1991 = vunpack.c.l.b16 %v273
    %v1992 = vunpack.c.h.b16 %v273
    %v1993 = vunpack.c.l.b16 %v274
    %v1994 = vunpack.c.h.b16 %v274
    %v1995 = vunpack.c.l.b16 %v275
    %v1996 = vunpack.c.h.b16 %v275
    %v1997 = vunpack.c.l.b16 %v276
    %v1998 = vunpack.c.h.b16 %v276
    %v1999 = vunpack.c.l.b16 %v277
    %v2000 = vunpack.c.h.b16 %v277
    %v2001 = vunpack.c.l.b16 %v278
    %v2002 = vunpack.c.h.b16 %v278
    %v2003 = vunpack.c.l.b16 %v279
    %v2004 = vunpack.c.h.b16 %v279
    %v2005 = vunpack.c.l.b16 %v280
    %v2006 = vunpack.c.h.b16 %v280
    %v2007 = vunpack.c.l.b16 %v281
    %v2008 = vunpack.c.h.b16 %v281
    %v2009 = vunpack.c.l.b16 %v282
    %v2010 = vunpack.c.h.b16 %v282
    %v2011 = vunpack.c.l.b16 %v283
    %v2012 = vunpack.c.h.b16 %v283
    %v2013 = vunpack.c.l.b16 %v284
    %v2014 = vunpack.c.h.b16 %v284
    %v2015 = vunpack.c.l.b16 %v285
    %v2016 = vunpack.c.h.b16 %v285
    %v2017 = vunpack.c.l.b16 %v286
    %v2018 = vunpack.c.h.b16 %v286
    %v2019 = vunpack.c.l.b16 %v287
    %v2020 = vunpack.c.h.b16 %v287
    %v2021 = vunpack.c.l.b16 %v288
    %v2022 = vunpack.c.h.b16 %v288
    %v2023 = vunpack.c.l.b16 %v289
    %v2024 = vunpack.c.h.b16 %v289
    %v2025 = vunpack.c.l.b16 %v290
    %v2026 = vunpack.c.h.b16 %v290
    %v2027 = vunpack.c.l.b16 %v291
    %v2028 = vunpack.c.h.b16 %v291
    %v2029 = vunpack.c.l.b16 %v292
    %v2030 = vunpack.c.h.b16 %v292
    %v2031 = vunpack.c.l.b16 %v293
    %v2032 = vunpack.c.h.b16 %v293
    %v2033 = vunpack.c.l.b16 %v294
    %v2034 = vunpack.c.h.b16 %v294
    %v2035 = vunpack.c.l.b16 %v295
    %v2036 = vunpack.c.h.b16 %v295
    %v2037 = vunpack.c.l.b16 %v296
    %v2038 = vunpack.c.h.b16 %v296
    %v2039 = vunpack.c.l.b16 %v297
    %v2040 = vunpack.c.h.b16 %v297
    %v2041 = vunpack.c.l.b16 %v298
    %v2042 = vunpack.c.h.b16 %v298
    %v2043 = vunpack.c.l.b16 %v299
    %v2044 = vunpack.c.h.b16 %v299
    %v2045 = vunpack.c.l.b16 %v300
    %v2046 = vunpack.c.h.b16 %v300
    %v2047 = vunpack.c.l.b16 %v301
    %v2048 = vunpack.c.h.b16 %v301
    %v2049 = vunpack.c.l.b16 %v302
    %v2050 = vunpack.c.h.b16 %v302
    %v2051 = vunpack.c.l.b16 %v303
    %v2052 = vunpack.c.h.b16 %v303
    %v2053 = vunpack.c.l.b16 %v304
    %v2054 = vunpack.c.h.b16 %v304
    %v2055 = vunpack.c.l.b16 %v305
    %v2056 = vunpack.c.h.b16 %v305
    %v2057 = vunpack.c.l.b16 %v306
    %v2058 = vunpack.c.h.b16 %v306
    %v2059 = vunpack.c.l.b16 %v307
    %v2060 = vunpack.c.h.b16 %v307
    %v2061 = vunpack.c.l.b16 %v308
    %v2062 = vunpack.c.h.b16 %v308
    %v2063 = vunpack.c.l.b16 %v309
    %v2064 = vunpack.c.h.b16 %v309
    %v2065 = vunpack.c.l.b16 %v310
    %v2066 = vunpack.c.h.b16 %v310
    %v2067 = vunpack.c.l.b16 %v311
    %v2068 = vunpack.c.h.b16 %v311
    %v2069 = vunpack.c.l.b16 %v312
    %v2070 = vunpack.c.h.b16 %v312
    %v2071 = vunpack.c.l.b16 %v313
    %v2072 = vunpack.c.h.b16 %v313
    %v2073 = vunpack.c.l.b16 %v314
    %v2074 = vunpack.c.h.b16 %v314
    %v2075 = vunpack.c.l.b16 %v315
    %v2076 = vunpack.c.h.b16 %v315
    %v2077 = vunpack.c.l.b16 %v316
    %v2078 = vunpack.c.h.b16 %v316
    %v2079 = vunpack.c.l.b16 %v317
    %v2080 = vunpack.c.h.b16 %v317
    %v2081 = vunpack.c.l.b16 %v318
    %v2082 = vunpack.c.h.b16 %v318
    %v2083 = vunpack.c.l.b16 %v319
    %v2084 = vunpack.c.h.b16 %v319
    %v2085 = vunpack.c.l.b16 %v320
    %v2086 = vunpack.c.h.b16 %v320
    %v2087 = vunpack.c.l.b16 %v321
    %v2088 = vunpack.c.h.b16 %v321
    %v2089 = vunpack.c.l.b16 %v322
    %v2090 = vunpack.c.h.b16 %v322
    %v2091 = vunpack.c.l.b16 %v323
    %v2092 = vunpack.c.h.b16 %v323
    %v2093 = vunpack.c.l.b16 %v324
    %v2094 = vunpack.c.h.b16 %v324
    %v2095 = vunpack.c.l.b16 %v325
    %v2096 = vunpack.c.h.b16 %v325
    %v2097 = vunpack.c.l.b16 %v326
    %v2098 = vunpack.c.h.b16 %v326
    %v2099 = vunpack.c.l.b16 %v327
    %v2100 = vunpack.c.h.b16 %v327
    %v2101 = vunpack.c.l.b16 %v328
    %v2102 = vunpack.c.h.b16 %v328
    %v2103 = vunpack.c.l.b16 %v329
    %v2104 = vunpack.c.h.b16 %v329
    %v2105 = vunpack.c.l.b16 %v330
    %v2106 = vunpack.c.h.b16 %v330
    %v2107 = vunpack.c.l.b16 %v331
    %v2108 = vunpack.c.h.b16 %v331
    %v2109 = vunpack.c.l.b16 %v332
    %v2110 = vunpack.c.h.b16 %v332
    %v2111 = vunpack.c.l.b16 %v333
    %v2112 = vunpack.c.h.b16 %v333
    %v2113 = vunpack.c.l.b16 %v334
    %v2114 = vunpack.c.h.b16 %v334
    %v2115 = vunpack.c.l.b16 %v335
    %v2116 = vunpack.c.h.b16 %v335
    %v2117 = vunpack.c.l.b16 %v336
    %v2118 = vunpack.c.h.b16 %v336
    %v2119 = vunpack.c.l.b16 %v337
    %v2120 = vunpack.c.h.b16 %v337
    %v2121 = vunpack.c.l.b16 %v338
    %v2122 = vunpack.c.h.b16 %v338
    %v2123 = vunpack.c.l.b16 %v339
    %v2124 = vunpack.c.h.b16 %v339
    %v2125 = vunpack.c.l.b16 %v340
    %v2126 = vunpack.c.h.b16 %v340
    %v2127 = vunpack.c.l.b16 %v341
    %v2128 = vunpack.c.h.b16 %v341
    %v2129 = vunpack.c.l.b16 %v342
    %v2130 = vunpack.c.h.b16 %v342
    %v2131 = vunpack.c.l.b16 %v343
    %v2132 = vunpack.c.h.b16 %v343
    %v2133 = vunpack.c.l.b16 %v344
    %v2134 = vunpack.c.h.b16 %v344
    %v2135 = vunpack.c.l.b16 %v345
    %v2136 = vunpack.c.h.b16 %v345
    %v2137 = vunpack.c.l.b16 %v346
    %v2138 = vunpack.c.h.b16 %v346
    %v2139 = vunpack.c.l.b16 %v347
    %v2140 = vunpack.c.h.b16 %v347
    %v2141 = vunpack.c.l.b16 %v348
    %v2142 = vunpack.c.h.b16 %v348
    %v2143 = vunpack.c.l.b16 %v349
    %v2144 = vunpack.c.h.b16 %v349
    %v2145 = vunpack.c.l.b16 %v350
    %v2146 = vunpack.c.h.b16 %v350
    %v2147 = vunpack.c.l.b16 %v351
    %v2148 = vunpack.c.h.b16 %v351
    %v2149 = vunpack.c.l.b16 %v352
    %v2150 = vunpack.c.h.b16 %v352
    %v2151 = vunpack.c.l.b16 %v353
    %v2152 = vunpack.c.h.b16 %v353
    %v2153 = vunpack.c.l.b16 %v354
    %v2154 = vunpack.c.h.b16 %v354
    %v2155 = vunpack.c.l.b16 %v355
    %v2156 = vunpack.c.h.b16 %v355
    %v2157 = vunpack.c.l.b16 %v356
    %v2158 = vunpack.c.h.b16 %v356
    %v2159 = vunpack.c.l.b16 %v357
    %v2160 = vunpack.c.h.b16 %v357
    %v2161 = vunpack.c.l.b16 %v358
    %v2162 = vunpack.c.h.b16 %v358
    %v2163 = vunpack.c.l.b16 %v359
    %v2164 = vunpack.c.h.b16 %v359
    %v2165 = vunpack.c.l.b16 %v360
    %v2166 = vunpack.c.h.b16 %v360
    %v2167 = vunpack.c.l.b16 %v361
    %v2168 = vunpack.c.h.b16 %v361
    %v2169 = vunpack.c.l.b16 %v362
    %v2170 = vunpack.c.h.b16 %v362
    %v2171 = vunpack.c.l.b16 %v363
    %v2172 = vunpack.c.h.b16 %v363
    %v2173 = vunpack.c.l.b16 %v364
    %v2174 = vunpack.c.h.b16 %v364
    %v2175 = vunpack.c.l.b16 %v365
    %v2176 = vunpack.c.h.b16 %v365
    %v2177 = vunpack.c.l.b16 %v366
    %v2178 = vunpack.c.h.b16 %v366
    %v2179 = vunpack.c.l.b16 %v367
    %v2180 = vunpack.c.h.b16 %v367
    %v2181 = vunpack.c.l.b16 %v368
    %v2182 = vunpack.c.h.b16 %v368
    %v2183 = vunpack.c.l.b16 %v369
    %v2184 = vunpack.c.h.b16 %v369
    %v2185 = vunpack.c.l.b16 %v370
    %v2186 = vunpack.c.h.b16 %v370
    %v2187 = vunpack.c.l.b16 %v371
    %v2188 = vunpack.c.h.b16 %v371
    %v2189 = vunpack.c.l.b16 %v372
    %v2190 = vunpack.c.h.b16 %v372
    %v2191 = vunpack.c.l.b16 %v373
    %v2192 = vunpack.c.h.b16 %v373
    %v2193 = vunpack.c.l.b16 %v374
    %v2194 = vunpack.c.h.b16 %v374
    %v2195 = vunpack.c.l.b16 %v375
    %v2196 = vunpack.c.h.b16 %v375
    %v2197 = vunpack.c.l.b16 %v376
    %v2198 = vunpack.c.h.b16 %v376
    %v2199 = vunpack.c.l.b16 %v377
    %v2200 = vunpack.c.h.b16 %v377
    %v2201 = vunpack.c.l.b16 %v378
    %v2202 = vunpack.c.h.b16 %v378
    %v2203 = vunpack.c.l.b16 %v379
    %v2204 = vunpack.c.h.b16 %v379
    %v2205 = vunpack.c.l.b16 %v380
    %v2206 = vunpack.c.h.b16 %v380
    %v2207 = vunpack.c.l.b16 %v381
    %v2208 = vunpack.c.h.b16 %v381
    %v2209 = vunpack.c.l.b16 %v382
    %v2210 = vunpack.c.h.b16 %v382
    %v2211 = vunpack.c.l.b16 %v383
    %v2212 = vunpack.c.h.b16 %v383
    %v2213 = vunpack.c.l.b16 %v384
    %v2214 = vunpack.c.h.b16 %v384
    %v2215 = vunpack.c.l.b16 %v385
    %v2216 = vunpack.c.h.b16 %v385
    %v2217 = vunpack.c.l.b16 %v386
    %v2218 = vunpack.c.h.b16 %v386
    %v2219 = vunpack.c.l.b16 %v387
    %v2220 = vunpack.c.h.b16 %v387
    %v2221 = vunpack.c.l.b16 %v388
    %v2222 = vunpack.c.h.b16 %v388
    %v2223 = vunpack.c.l.b16 %v389
    %v2224 = vunpack.c.h.b16 %v389
    %v2225 = vunpack.c.l.b16 %v390
    %v2226 = vunpack.c.h.b16 %v390
    %v2227 = vunpack.c.l.b16 %v391
    %v2228 = vunpack.c.h.b16 %v391
    %v2229 = vunpack.c.l.b16 %v392
    %v2230 = vunpack.c.h.b16 %v392
    %v2231 = vunpack.c.l.b16 %v393
    %v2232 = vunpack.c.h.b16 %v393
    %v2233 = vunpack.c.l.b16 %v394
    %v2234 = vunpack.c.h.b16 %v394
    %v2235 = vunpack.c.l.b16 %v395
    %v2236 = vunpack.c.h.b16 %v395
    %v2237 = vunpack.c.l.b16 %v396
    %v2238 = vunpack.c.h.b16 %v396
    %v2239 = vunpack.c.l.b16 %v397
    %v2240 = vunpack.c.h.b16 %v397
    %v2241 = vunpack.c.l.b16 %v398
    %v2242 = vunpack.c.h.b16 %v398
    %v2243 = vunpack.c.l.b16 %v399
    %v2244 = vunpack.c.h.b16 %v399
    %v2245 = vunpack.c.l.b16 %v400
    %v2246 = vunpack.c.h.b16 %v400
    %v2247 = vunpack.c.l.b16 %v401
    %v2248 = vunpack.c.h.b16 %v401
    %v2249 = vunpack.c.l.b16 %v402
    %v2250 = vunpack.c.h.b16 %v402
    %v2251 = vunpack.c.l.b16 %v403
    %v2252 = vunpack.c.h.b16 %v403
    %v2253 = vunpack.c.l.b16 %v404
    %v2254 = vunpack.c.h.b16 %v404
    %v2255 = vunpack.c.l.b16 %v405
    %v2256 = vunpack.c.h.b16 %v405
    %v2257 = vunpack.c.l.b16 %v406
    %v2258 = vunpack.c.h.b16 %v406
    %v2259 = vunpack.c.l.b16 %v407
    %v2260 = vunpack.c.h.b16 %v407
    %v2261 = vunpack.c.l.b16 %v408
    %v2262 = vunpack.c.h.b16 %v408
    %v2263 = vunpack.c.l.b16 %v409
    %v2264 = vunpack.c.h.b16 %v409
    %v2265 = vunpack.c.l.b16 %v410
    %v2266 = vunpack.c.h.b16 %v410
    %v2267 = vunpack.c.l.b16 %v411
    %v2268 = vunpack.c.h.b16 %v411
    %v2269 = vunpack.c.l.b16 %v412
    %v2270 = vunpack.c.h.b16 %v412
    %v2271 = vunpack.c.l.b16 %v413
    %v2272 = vunpack.c.h.b16 %v413
    %v2273 = vunpack.c.l.b16 %v414
    %v2274 = vunpack.c.h.b16 %v414
    %v2275 = vunpack.c.l.b16 %v415
    %v2276 = vunpack.c.h.b16 %v415
    %v2277 = vunpack.c.l.b16 %v416
    %v2278 = vunpack.c.h.b16 %v416
    %v2279 = vunpack.c.l.b16 %v417
    %v2280 = vunpack.c.h.b16 %v417
    %v2281 = vunpack.c.l.b16 %v418
    %v2282 = vunpack.c.h.b16 %v418
    %v2283 = vunpack.c.l.b16 %v419
    %v2284 = vunpack.c.h.b16 %v419
    %v2285 = vunpack.c.l.b16 %v420
    %v2286 = vunpack.c.h.b16 %v420
    %v2287 = vunpack.c.l.b16 %v421
    %v2288 = vunpack.c.h.b16 %v421
    %v2289 = vunpack.c.l.b16 %v422
    %v2290 = vunpack.c.h.b16 %v422
    %v2291 = vunpack.c.l.b16 %v423
    %v2292 = vunpack.c.h.b16 %v423
    %v2293 = vunpack.c.l.b16 %v424
    %v2294 = vunpack.c.h.b16 %v424
    %v2295 = vunpack.c.l.b16 %v425
    %v2296 = vunpack.c.h.b16 %v425
    %v2297 = vunpack.c.l.b16 %v426
    %v2298 = vunpack.c.h.b16 %v426
    %v2299 = vunpack.c.l.b16 %v427
    %v2300 = vunpack.c.h.b16 %v427
    %v2301 = vunpack.c.l.b16 %v428
    %v2302 = vunpack.c.h.b16 %v428
    %v2303 = vunpack.c.l.b16 %v429
    %v2304 = vunpack.c.h.b16 %v429
    %v2305 = vunpack.c.l.b16 %v430
    %v2306 = vunpack.c.h.b16 %v430
    %v2307 = vunpack.c.l.b16 %v431
    %v2308 = vunpack.c.h.b16 %v431
    %v2309 = vunpack.c.l.b16 %v432
    %v2310 = vunpack.c.h.b16 %v432
    %v2311 = vunpack.c.l.b16 %v433
    %v2312 = vunpack.c.h.b16 %v433
    %v2313 = vunpack.c.l.b16 %v434
    %v2314 = vunpack.c.h.b16 %v434
    %v2315 = vunpack.c.l.b16 %v435
    %v2316 = vunpack.c.h.b16 %v435
    %v2317 = vunpack.c.l.b16 %v436
    %v2318 = vunpack.c.h.b16 %v436
    %v2319 = vpack.c.b16 %v1941, %v1935
    %v2320 = vpack.c.b16 %v1942, %v1936
    %v2321 = vpack.c.b16 %v1943, %v1937
    %v2322 = vpack.c.b16 %v1944, %v1938
    %v2323 = vpack.c.b16 %v1945, %v1939
    %v2324 = vpack.c.b16 %v1946, %v1940
    %v2325 = vpack.c.b16 %v1953, %v1947
    %v2326 = vpack.c.b16 %v1954, %v1948
    %v2327 = vpack.c.b16 %v1955, %v1949
    %v2328 = vpack.c.b16 %v1956, %v1950
    %v2329 = vpack.c.b16 %v1957, %v1951
    %v2330 = vpack.c.b16 %v1958, %v1952
    %v2331 = vpack.c.b16 %v1965, %v1959
    %v2332 = vpack.c.b16 %v1966, %v1960
    %v2333 = vpack.c.b16 %v1967, %v1961
    %v2334 = vpack.c.b16 %v1968, %v1962
    %v2335 = vpack.c.b16 %v1969, %v1963
    %v2336 = vpack.c.b16 %v1970, %v1964
    %v2337 = vpack.c.b16 %v1977, %v1971
    %v2338 = vpack.c.b16 %v1978, %v1972
    %v2339 = vpack.c.b16 %v1979, %v1973
    %v2340 = vpack.c.b16 %v1980, %v1974
    %v2341 = vpack.c.b16 %v1981, %v1975
    %v2342 = vpack.c.b16 %v1982, %v1976
    %v2343 = vpack.c.b16 %v1989, %v1983
    %v2344 = vpack.c.b16 %v1990, %v1984
    %v2345 = vpack.c.b16 %v1991, %v1985
    %v2346 = vpack.c.b16 %v1992, %v1986
    %v2347 = vpack.c.b16 %v1993, %v1987
    %v2348 = vpack.c.b16 %v1994, %v1988
    %v2349 = vpack.c.b16 %v2001, %v1995
    %v2350 = vpack.c.b16 %v2002, %v1996
    %v2351 = vpack.c.b16 %v2003, %v1997
    %v2352 = vpack.c.b16 %v2004, %v1998
    %v2353 = vpack.c.b16 %v2005, %v1999
    %v2354 = vpack.c.b16 %v2006, %v2000
    %v2355 = vpack.c.b16 %v2013, %v2007
    %v2356 = vpack.c.b16 %v2014, %v2008
    %v2357 = vpack.c.b16 %v2015, %v2009
    %v2358 = vpack.c.b16 %v2016, %v2010
    %v2359 = vpack.c.b16 %v2017, %v2011
    %v2360 = vpack.c.b16 %v2018, %v2012
    %v2361 = vpack.c.b16 %v2025, %v2019
    %v2362 = vpack.c.b16 %v2026, %v2020
    %v2363 = vpack.c.b16 %v2027, %v2021
    %v2364 = vpack.c.b16 %v2028, %v2022
    %v2365 = vpack.c.b16 %v2029, %v2023
    %v2366 = vpack.c.b16 %v2030, %v2024
    %v2367 = vpack.c.b16 %v2037, %v2031
    %v2368 = vpack.c.b16 %v2038, %v2032
    %v2369 = vpack.c.b16 %v2039, %v2033
    %v2370 = vpack.c.b16 %v2040, %v2034
    %v2371 = vpack.c.b16 %v2041, %v2035
    %v2372 = vpack.c.b16 %v2042, %v2036
    %v2373 = vpack.c.b16 %v2049, %v2043
    %v2374 = vpack.c.b16 %v2050, %v2044
    %v2375 = vpack.c.b16 %v2051, %v2045
    %v2376 = vpack.c.b16 %v2052, %v2046
    %v2377 = vpack.c.b16 %v2053, %v2047
    %v2378 = vpack.c.b16 %v2054, %v2048
    %v2379 = vpack.c.b16 %v2061, %v2055
    %v2380 = vpack.c.b16 %v2062, %v2056
    %v2381 = vpack.c.b16 %v2063, %v2057
    %v2382 = vpack.c.b16 %v2064, %v2058
    %v2383 = vpack.c.b16 %v2065, %v2059
    %v2384 = vpack.c.b16 %v2066, %v2060
    %v2385 = vpack.c.b16 %v2073, %v2067
    %v2386 = vpack.c.b16 %v2074, %v2068
    %v2387 = vpack.c.b16 %v2075, %v2069
    %v2388 = vpack.c.b16 %v2076, %v2070
    %v2389 = vpack.c.b16 %v2077, %v2071
    %v2390 = vpack.c.b16 %v2078, %v2072
    %v2391 = vpack.c.b16 %v2085, %v2079
    %v2392 = vpack.c.b16 %v2086, %v2080
    %v2393 = vpack.c.b16 %v2087, %v2081
    %v2394 = vpack.c.b16 %v2088, %v2082
    %v2395 = vpack.c.b16 %v2089, %v2083
    %v2396 = vpack.c.b16 %v2090, %v2084
    %v2397 = vpack.c.b16 %v2097, %v2091
    %v2398 = vpack.c.b16 %v2098, %v2092
    %v2399 = vpack.c.b16 %v2099, %v2093
    %v2400 = vpack.c.b16 %v2100, %v2094
    %v2401 = vpack.c.b16 %v2101, %v2095
    %v2402 = vpack.c.b16 %v2102, %v2096
    %v2403 = vpack.c.b16 %v2109, %v2103
    %v2404 = vpack.c.b16 %v2110, %v2104
    %v2405 = vpack.c.b16 %v2111, %v2105
    %v2406 = vpack.c.b16 %v2112, %v2106
    %v2407 = vpack.c.b16 %v2113, %v2107
    %v2408 = vpack.c.b16 %v2114, %v2108
    %v2409 = vpack.c.b16 %v2121, %v2115
    %v2410 = vpack.c.b16 %v2122, %v2116
    %v2411 = vpack.c.b16 %v2123, %v2117
    %v2412 = vpack.c.b16 %v2124, %v2118
    %v2413 = vpack.c.b16 %v2125, %v2119
    %v2414 = vpack.c.b16 %v2126, %v2120
    %v2415 = vpack.c.b16 %v2133, %v2127
    %v2416 = vpack.c.b16 %v2134, %v2128
    %v2417 = vpack.c.b16 %v2135, %v2129
    %v2418 = vpack.c.b16 %v2136, %v2130
    %v2419 = vpack.c.b16 %v2137, %v2131
    %v2420 = vpack.c.b16 %v2138, %v2132
    %v2421 = vpack.c.b16 %v2145, %v2139
    %v2422 = vpack.c.b16 %v2146, %v2140
    %v2423 = vpack.c.b16 %v2147, %v2141
    %v2424 = vpack.c.b16 %v2148, %v2142
    %v2425 = vpack.c.b16 %v2149, %v2143
    %v2426 = vpack.c.b16 %v2150, %v2144
    %v2427 = vpack.c.b16 %v2157, %v2151
    %v2428 = vpack.c.b16 %v2158, %v2152
    %v2429 = vpack.c.b16 %v2159, %v2153
    %v2430 = vpack.c.b16 %v2160, %v2154
    %v2431 = vpack.c.b16 %v2161, %v2155
    %v2432 = vpack.c.b16 %v2162, %v2156
    %v2433 = vpack.c.b16 %v2169, %v2163
    %v2434 = vpack.c.b16 %v2170, %v2164
    %v2435 = vpack.c.b16 %v2171, %v2165
    %v2436 = vpack.c.b16 %v2172, %v2166
    %v2437 = vpack.c.b16 %v2173, %v2167
    %v2438 = vpack.c.b16 %v2174, %v2168
    %v2439 = vpack.c.b16 %v2181, %v2175
    %v2440 = vpack.c.b16 %v2182, %v2176
    %v2441 = vpack.c.b16 %v2183, %v2177
    %v2442 = vpack.c.b16 %v2184, %v2178
    %v2443 = vpack.c.b16 %v2185, %v2179
    %v2444 = vpack.c.b16 %v2186, %v2180
    %v2445 = vpack.c.b16 %v2193, %v2187
    %v2446 = vpack.c.b16 %v2194, %v2188
    %v2447 = vpack.c.b16 %v2195, %v2189
    %v2448 = vpack.c.b16 %v2196, %v2190
    %v2449 = vpack.c.b16 %v2197, %v2191
    %v2450 = vpack.c.b16 %v2198, %v2192
    %v2451 = vpack.c.b16 %v2205, %v2199
    %v2452 = vpack.c.b16 %v2206, %v2200
    %v2453 = vpack.c.b16 %v2207, %v2201
    %v2454 = vpack.c.b16 %v2208, %v2202
    %v2455 = vpack.c.b16 %v2209, %v2203
    %v2456 = vpack.c.b16 %v2210, %v2204
    %v2457 = vpack.c.b16 %v2217, %v2211
    %v2458 = vpack.c.b16 %v2218, %v2212
    %v2459 = vpack.c.b16 %v2219, %v2213
    %v2460 = vpack.c.b16 %v2220, %v2214
    %v2461 = vpack.c.b16 %v2221, %v2215
    %v2462 = vpack.c.b16 %v2222, %v2216
    %v2463 = vpack.c.b16 %v2229, %v2223
    %v2464 = vpack.c.b16 %v2230, %v2224
    %v2465 = vpack.c.b16 %v2231, %v2225
    %v2466 = vpack.c.b16 %v2232, %v2226
    %v2467 = vpack.c.b16 %v2233, %v2227
    %v2468 = vpack.c.b16 %v2234, %v2228
    %v2469 = vpack.c.b16 %v2241, %v2235
    %v2470 = vpack.c.b16 %v2242, %v2236
    %v2471 = vpack.c.b16 %v2243, %v2237
    %v2472 = vpack.c.b16 %v2244, %v2238
    %v2473 = vpack.c.b16 %v2245, %v2239
    %v2474 = vpack.c.b16 %v2246, %v2240
    %v2475 = vpack.c.b16 %v2253, %v2247
    %v2476 = vpack.c.b16 %v2254, %v2248
    %v2477 = vpack.c.b16 %v2255, %v2249
    %v2478 = vpack.c.b16 %v2256, %v2250
    %v2479 = vpack.c.b16 %v2257, %v2251
    %v2480 = vpack.c.b16 %v2258, %v2252
    %v2481 = vpack.c.b16 %v2265, %v2259
    %v2482 = vpack.c.b16 %v2266, %v2260
    %v2483 = vpack.c.b16 %v2267, %v2261
    %v2484 = vpack.c.b16 %v2268, %v2262
    %v2485 = vpack.c.b16 %v2269, %v2263
    %v2486 = vpack.c.b16 %v2270, %v2264
    %v2487 = vpack.c.b16 %v2277, %v2271
    %v2488 = vpack.c.b16 %v2278, %v2272
    %v2489 = vpack.c.b16 %v2279, %v2273
    %v2490 = vpack.c.b16 %v2280, %v2274
    %v2491 = vpack.c.b16 %v2281, %v2275
    %v2492 = vpack.c.b16 %v2282, %v2276
    %v2493 = vpack.c.b16 %v2289, %v2283
    %v2494 = vpack.c.b16 %v2290, %v2284
    %v2495 = vpack.c.b16 %v2291, %v2285
    %v2496 = vpack.c.b16 %v2292, %v2286
    %v2497 = vpack.c.b16 %v2293, %v2287
    %v2498 = vpack.c.b16 %v2294, %v2288
    %v2499 = vpack.c.b16 %v2301, %v2295
    %v2500 = vpack.c.b16 %v2302, %v2296
    %v2501 = vpack.c.b16 %v2303, %v2297
    %v2502 = vpack.c.b16 %v2304, %v2298
    %v2503 = vpack.c.b16 %v2305, %v2299
    %v2504 = vpack.c.b16 %v2306, %v2300
    %v2505 = vpack.c.b16 %v2313, %v2307
    %v2506 = vpack.c.b16 %v2314, %v2308
    %v2507 = vpack.c.b16 %v2315, %v2309
    %v2508 = vpack.c.b16 %v2316, %v2310
    %v2509 = vpack.c.b16 %v2317, %v2311
    %v2510 = vpack.c.b16 %v2318, %v2312
    %2703 = vmatpush.bf16.msra.mxu0 %v2361
    %2704 = vmatpush.bf16.msra.mxu0 %v2355
    %2705 = vmatpush.bf16.msra.mxu0 %v2349
    %2706 = vmatpush.bf16.msra.mxu0 %v2343
    %2707 = vmatpush.bf16.msra.mxu0 %v2337
    %2708 = vmatpush.bf16.msra.mxu0 %v2331
    %2709 = vmatpush.bf16.msra.mxu0 %v2325
    %2710 = vmatpush.bf16.msra.mxu0 %v2319
    %2711 = vmatmul.bf16.gmra.mxu0 %v1739
    %v2712 = vpop.f32.mrf.mxu0
    %v2713 = vadd.f32 0.0, %v2712
    %v2714 = vpop.f32.mrf.mxu0
    %v2715 = vadd.f32 0.0, %v2714
    %2716 = vdwg.mxu0
    %2717 = vmatpush.bf16.msra.mxu0 %v2409
    %2718 = vmatpush.bf16.msra.mxu0 %v2403
    %2719 = vmatpush.bf16.msra.mxu0 %v2397
    %2720 = vmatpush.bf16.msra.mxu0 %v2391
    %2721 = vmatpush.bf16.msra.mxu0 %v2385
    %2722 = vmatpush.bf16.msra.mxu0 %v2379
    %2723 = vmatpush.bf16.msra.mxu0 %v2373
    %2724 = vmatpush.bf16.msra.mxu0 %v2367
    %2725 = vmatmul.bf16.gmra.mxu0 %v1740
    %v2726 = vpop.f32.mrf.mxu0
    %v2727 = vadd.f32 %v2713, %v2726
    %v2728 = vpop.f32.mrf.mxu0
    %v2729 = vadd.f32 %v2715, %v2728
    %2730 = vdwg.mxu0
    %2731 = vmatpush.bf16.msra.mxu0 %v2457
    %2732 = vmatpush.bf16.msra.mxu0 %v2451
    %2733 = vmatpush.bf16.msra.mxu0 %v2445
    %2734 = vmatpush.bf16.msra.mxu0 %v2439
    %2735 = vmatpush.bf16.msra.mxu0 %v2433
    %2736 = vmatpush.bf16.msra.mxu0 %v2427
    %2737 = vmatpush.bf16.msra.mxu0 %v2421
    %2738 = vmatpush.bf16.msra.mxu0 %v2415
    %2739 = vmatmul.bf16.gmra.mxu0 %v1741
    %v2740 = vpop.f32.mrf.mxu0
    %v2741 = vadd.f32 %v2727, %v2740
    %v2742 = vpop.f32.mrf.mxu0
    %v2743 = vadd.f32 %v2729, %v2742
    %2744 = vdwg.mxu0
    %2745 = vmatpush.bf16.msra.mxu0 %v2505
    %2746 = vmatpush.bf16.msra.mxu0 %v2499
    %2747 = vmatpush.bf16.msra.mxu0 %v2493
    %2748 = vmatpush.bf16.msra.mxu0 %v2487
    %2749 = vmatpush.bf16.msra.mxu0 %v2481
    %2750 = vmatpush.bf16.msra.mxu0 %v2475
    %2751 = vmatpush.bf16.msra.mxu0 %v2469
    %2752 = vmatpush.bf16.msra.mxu0 %v2463
    %2753 = vmatmul.bf16.gmra.mxu0 %v1742
    %v2754 = vpop.f32.mrf.mxu0
    %v2755 = vadd.f32 %v2741, %v2754
    %v2756 = vpop.f32.mrf.mxu0
    %v2757 = vadd.f32 %v2743, %v2756
    %2758 = vdwg.mxu0
    %2759 = vmatpush.bf16.msra.mxu0 %v2362
    %2760 = vmatpush.bf16.msra.mxu0 %v2356
    %2761 = vmatpush.bf16.msra.mxu0 %v2350
    %2762 = vmatpush.bf16.msra.mxu0 %v2344
    %2763 = vmatpush.bf16.msra.mxu0 %v2338
    %2764 = vmatpush.bf16.msra.mxu0 %v2332
    %2765 = vmatpush.bf16.msra.mxu0 %v2326
    %2766 = vmatpush.bf16.msra.mxu0 %v2320
    %2767 = vmatmul.bf16.gmra.mxu0 %v1739
    %v2768 = vpop.f32.mrf.mxu0
    %v2769 = vadd.f32 0.0, %v2768
    %v2770 = vpop.f32.mrf.mxu0
    %v2771 = vadd.f32 0.0, %v2770
    %2772 = vdwg.mxu0
    %2773 = vmatpush.bf16.msra.mxu0 %v2410
    %2774 = vmatpush.bf16.msra.mxu0 %v2404
    %2775 = vmatpush.bf16.msra.mxu0 %v2398
    %2776 = vmatpush.bf16.msra.mxu0 %v2392
    %2777 = vmatpush.bf16.msra.mxu0 %v2386
    %2778 = vmatpush.bf16.msra.mxu0 %v2380
    %2779 = vmatpush.bf16.msra.mxu0 %v2374
    %2780 = vmatpush.bf16.msra.mxu0 %v2368
    %2781 = vmatmul.bf16.gmra.mxu0 %v1740
    %v2782 = vpop.f32.mrf.mxu0
    %v2783 = vadd.f32 %v2769, %v2782
    %v2784 = vpop.f32.mrf.mxu0
    %v2785 = vadd.f32 %v2771, %v2784
    %2786 = vdwg.mxu0
    %2787 = vmatpush.bf16.msra.mxu0 %v2458
    %2788 = vmatpush.bf16.msra.mxu0 %v2452
    %2789 = vmatpush.bf16.msra.mxu0 %v2446
    %2790 = vmatpush.bf16.msra.mxu0 %v2440
    %2791 = vmatpush.bf16.msra.mxu0 %v2434
    %2792 = vmatpush.bf16.msra.mxu0 %v2428
    %2793 = vmatpush.bf16.msra.mxu0 %v2422
    %2794 = vmatpush.bf16.msra.mxu0 %v2416
    %2795 = vmatmul.bf16.gmra.mxu0 %v1741
    %v2796 = vpop.f32.mrf.mxu0
    %v2797 = vadd.f32 %v2783, %v2796
    %v2798 = vpop.f32.mrf.mxu0
    %v2799 = vadd.f32 %v2785, %v2798
    %2800 = vdwg.mxu0
    %2801 = vmatpush.bf16.msra.mxu0 %v2506
    %2802 = vmatpush.bf16.msra.mxu0 %v2500
    %2803 = vmatpush.bf16.msra.mxu0 %v2494
    %2804 = vmatpush.bf16.msra.mxu0 %v2488
    %2805 = vmatpush.bf16.msra.mxu0 %v2482
    %2806 = vmatpush.bf16.msra.mxu0 %v2476
    %2807 = vmatpush.bf16.msra.mxu0 %v2470
    %2808 = vmatpush.bf16.msra.mxu0 %v2464
    %2809 = vmatmul.bf16.gmra.mxu0 %v1742
    %v2810 = vpop.f32.mrf.mxu0
    %v2811 = vadd.f32 %v2797, %v2810
    %v2812 = vpop.f32.mrf.mxu0
    %v2813 = vadd.f32 %v2799, %v2812
    %2814 = vdwg.mxu0
    %2815 = vmatpush.bf16.msra.mxu0 %v2363
    %2816 = vmatpush.bf16.msra.mxu0 %v2357
    %2817 = vmatpush.bf16.msra.mxu0 %v2351
    %2818 = vmatpush.bf16.msra.mxu0 %v2345
    %2819 = vmatpush.bf16.msra.mxu0 %v2339
    %2820 = vmatpush.bf16.msra.mxu0 %v2333
    %2821 = vmatpush.bf16.msra.mxu0 %v2327
    %2822 = vmatpush.bf16.msra.mxu0 %v2321
    %2823 = vmatmul.bf16.gmra.mxu0 %v1739
    %v2824 = vpop.f32.mrf.mxu0
    %v2825 = vadd.f32 0.0, %v2824
    %v2826 = vpop.f32.mrf.mxu0
    %v2827 = vadd.f32 0.0, %v2826
    %2828 = vdwg.mxu0
    %2829 = vmatpush.bf16.msra.mxu0 %v2411
    %2830 = vmatpush.bf16.msra.mxu0 %v2405
    %2831 = vmatpush.bf16.msra.mxu0 %v2399
    %2832 = vmatpush.bf16.msra.mxu0 %v2393
    %2833 = vmatpush.bf16.msra.mxu0 %v2387
    %2834 = vmatpush.bf16.msra.mxu0 %v2381
    %2835 = vmatpush.bf16.msra.mxu0 %v2375
    %2836 = vmatpush.bf16.msra.mxu0 %v2369
    %2837 = vmatmul.bf16.gmra.mxu0 %v1740
    %v2838 = vpop.f32.mrf.mxu0
    %v2839 = vadd.f32 %v2825, %v2838
    %v2840 = vpop.f32.mrf.mxu0
    %v2841 = vadd.f32 %v2827, %v2840
    %2842 = vdwg.mxu0
    %2843 = vmatpush.bf16.msra.mxu0 %v2459
    %2844 = vmatpush.bf16.msra.mxu0 %v2453
    %2845 = vmatpush.bf16.msra.mxu0 %v2447
    %2846 = vmatpush.bf16.msra.mxu0 %v2441
    %2847 = vmatpush.bf16.msra.mxu0 %v2435
    %2848 = vmatpush.bf16.msra.mxu0 %v2429
    %2849 = vmatpush.bf16.msra.mxu0 %v2423
    %2850 = vmatpush.bf16.msra.mxu0 %v2417
    %2851 = vmatmul.bf16.gmra.mxu0 %v1741
    %v2852 = vpop.f32.mrf.mxu0
    %v2853 = vadd.f32 %v2839, %v2852
    %v2854 = vpop.f32.mrf.mxu0
    %v2855 = vadd.f32 %v2841, %v2854
    %2856 = vdwg.mxu0
    %2857 = vmatpush.bf16.msra.mxu0 %v2507
    %2858 = vmatpush.bf16.msra.mxu0 %v2501
    %2859 = vmatpush.bf16.msra.mxu0 %v2495
    %2860 = vmatpush.bf16.msra.mxu0 %v2489
    %2861 = vmatpush.bf16.msra.mxu0 %v2483
    %2862 = vmatpush.bf16.msra.mxu0 %v2477
    %2863 = vmatpush.bf16.msra.mxu0 %v2471
    %2864 = vmatpush.bf16.msra.mxu0 %v2465
    %2865 = vmatmul.bf16.gmra.mxu0 %v1742
    %v2866 = vpop.f32.mrf.mxu0
    %v2867 = vadd.f32 %v2853, %v2866
    %v2868 = vpop.f32.mrf.mxu0
    %v2869 = vadd.f32 %v2855, %v2868
    %2870 = vdwg.mxu0
    %2871 = vmatpush.bf16.msra.mxu0 %v2364
    %2872 = vmatpush.bf16.msra.mxu0 %v2358
    %2873 = vmatpush.bf16.msra.mxu0 %v2352
    %2874 = vmatpush.bf16.msra.mxu0 %v2346
    %2875 = vmatpush.bf16.msra.mxu0 %v2340
    %2876 = vmatpush.bf16.msra.mxu0 %v2334
    %2877 = vmatpush.bf16.msra.mxu0 %v2328
    %2878 = vmatpush.bf16.msra.mxu0 %v2322
    %2879 = vmatmul.bf16.gmra.mxu0 %v1739
    %v2880 = vpop.f32.mrf.mxu0
    %v2881 = vadd.f32 0.0, %v2880
    %v2882 = vpop.f32.mrf.mxu0
    %v2883 = vadd.f32 0.0, %v2882
    %2884 = vdwg.mxu0
    %2885 = vmatpush.bf16.msra.mxu0 %v2412
    %2886 = vmatpush.bf16.msra.mxu0 %v2406
    %2887 = vmatpush.bf16.msra.mxu0 %v2400
    %2888 = vmatpush.bf16.msra.mxu0 %v2394
    %2889 = vmatpush.bf16.msra.mxu0 %v2388
    %2890 = vmatpush.bf16.msra.mxu0 %v2382
    %2891 = vmatpush.bf16.msra.mxu0 %v2376
    %2892 = vmatpush.bf16.msra.mxu0 %v2370
    %2893 = vmatmul.bf16.gmra.mxu0 %v1740
    %v2894 = vpop.f32.mrf.mxu0
    %v2895 = vadd.f32 %v2881, %v2894
    %v2896 = vpop.f32.mrf.mxu0
    %v2897 = vadd.f32 %v2883, %v2896
    %2898 = vdwg.mxu0
    %2899 = vmatpush.bf16.msra.mxu0 %v2460
    %2900 = vmatpush.bf16.msra.mxu0 %v2454
    %2901 = vmatpush.bf16.msra.mxu0 %v2448
    %2902 = vmatpush.bf16.msra.mxu0 %v2442
    %2903 = vmatpush.bf16.msra.mxu0 %v2436
    %2904 = vmatpush.bf16.msra.mxu0 %v2430
    %2905 = vmatpush.bf16.msra.mxu0 %v2424
    %2906 = vmatpush.bf16.msra.mxu0 %v2418
    %2907 = vmatmul.bf16.gmra.mxu0 %v1741
    %v2908 = vpop.f32.mrf.mxu0
    %v2909 = vadd.f32 %v2895, %v2908
    %v2910 = vpop.f32.mrf.mxu0
    %v2911 = vadd.f32 %v2897, %v2910
    %2912 = vdwg.mxu0
    %2913 = vmatpush.bf16.msra.mxu0 %v2508
    %2914 = vmatpush.bf16.msra.mxu0 %v2502
    %2915 = vmatpush.bf16.msra.mxu0 %v2496
    %2916 = vmatpush.bf16.msra.mxu0 %v2490
    %2917 = vmatpush.bf16.msra.mxu0 %v2484
    %2918 = vmatpush.bf16.msra.mxu0 %v2478
    %2919 = vmatpush.bf16.msra.mxu0 %v2472
    %2920 = vmatpush.bf16.msra.mxu0 %v2466
    %2921 = vmatmul.bf16.gmra.mxu0 %v1742
    %v2922 = vpop.f32.mrf.mxu0
    %v2923 = vadd.f32 %v2909, %v2922
    %v2924 = vpop.f32.mrf.mxu0
    %v2925 = vadd.f32 %v2911, %v2924
    %2926 = vdwg.mxu0
    %2927 = vmatpush.bf16.msra.mxu0 %v2365
    %2928 = vmatpush.bf16.msra.mxu0 %v2359
    %2929 = vmatpush.bf16.msra.mxu0 %v2353
    %2930 = vmatpush.bf16.msra.mxu0 %v2347
    %2931 = vmatpush.bf16.msra.mxu0 %v2341
    %2932 = vmatpush.bf16.msra.mxu0 %v2335
    %2933 = vmatpush.bf16.msra.mxu0 %v2329
    %2934 = vmatpush.bf16.msra.mxu0 %v2323
    %2935 = vmatmul.bf16.gmra.mxu0 %v1739
    %v2936 = vpop.f32.mrf.mxu0
    %v2937 = vadd.f32 0.0, %v2936
    %v2938 = vpop.f32.mrf.mxu0
    %v2939 = vadd.f32 0.0, %v2938
    %2940 = vdwg.mxu0
    %2941 = vmatpush.bf16.msra.mxu0 %v2413
    %2942 = vmatpush.bf16.msra.mxu0 %v2407
    %2943 = vmatpush.bf16.msra.mxu0 %v2401
    %2944 = vmatpush.bf16.msra.mxu0 %v2395
    %2945 = vmatpush.bf16.msra.mxu0 %v2389
    %2946 = vmatpush.bf16.msra.mxu0 %v2383
    %2947 = vmatpush.bf16.msra.mxu0 %v2377
    %2948 = vmatpush.bf16.msra.mxu0 %v2371
    %2949 = vmatmul.bf16.gmra.mxu0 %v1740
    %v2950 = vpop.f32.mrf.mxu0
    %v2951 = vadd.f32 %v2937, %v2950
    %v2952 = vpop.f32.mrf.mxu0
    %v2953 = vadd.f32 %v2939, %v2952
    %2954 = vdwg.mxu0
    %2955 = vmatpush.bf16.msra.mxu0 %v2461
    %2956 = vmatpush.bf16.msra.mxu0 %v2455
    %2957 = vmatpush.bf16.msra.mxu0 %v2449
    %2958 = vmatpush.bf16.msra.mxu0 %v2443
    %2959 = vmatpush.bf16.msra.mxu0 %v2437
    %2960 = vmatpush.bf16.msra.mxu0 %v2431
    %2961 = vmatpush.bf16.msra.mxu0 %v2425
    %2962 = vmatpush.bf16.msra.mxu0 %v2419
    %2963 = vmatmul.bf16.gmra.mxu0 %v1741
    %v2964 = vpop.f32.mrf.mxu0
    %v2965 = vadd.f32 %v2951, %v2964
    %v2966 = vpop.f32.mrf.mxu0
    %v2967 = vadd.f32 %v2953, %v2966
    %2968 = vdwg.mxu0
    %2969 = vmatpush.bf16.msra.mxu0 %v2509
    %2970 = vmatpush.bf16.msra.mxu0 %v2503
    %2971 = vmatpush.bf16.msra.mxu0 %v2497
    %2972 = vmatpush.bf16.msra.mxu0 %v2491
    %2973 = vmatpush.bf16.msra.mxu0 %v2485
    %2974 = vmatpush.bf16.msra.mxu0 %v2479
    %2975 = vmatpush.bf16.msra.mxu0 %v2473
    %2976 = vmatpush.bf16.msra.mxu0 %v2467
    %2977 = vmatmul.bf16.gmra.mxu0 %v1742
    %v2978 = vpop.f32.mrf.mxu0
    %v2979 = vadd.f32 %v2965, %v2978
    %v2980 = vpop.f32.mrf.mxu0
    %v2981 = vadd.f32 %v2967, %v2980
    %2982 = vdwg.mxu0
    %2983 = vmatpush.bf16.msra.mxu0 %v2366
    %2984 = vmatpush.bf16.msra.mxu0 %v2360
    %2985 = vmatpush.bf16.msra.mxu0 %v2354
    %2986 = vmatpush.bf16.msra.mxu0 %v2348
    %2987 = vmatpush.bf16.msra.mxu0 %v2342
    %2988 = vmatpush.bf16.msra.mxu0 %v2336
    %2989 = vmatpush.bf16.msra.mxu0 %v2330
    %2990 = vmatpush.bf16.msra.mxu0 %v2324
    %2991 = vmatmul.bf16.gmra.mxu0 %v1739
    %v2992 = vpop.f32.mrf.mxu0
    %v2993 = vadd.f32 0.0, %v2992
    %v2994 = vpop.f32.mrf.mxu0
    %v2995 = vadd.f32 0.0, %v2994
    %2996 = vdwg.mxu0
    %2997 = vmatpush.bf16.msra.mxu0 %v2414
    %2998 = vmatpush.bf16.msra.mxu0 %v2408
    %2999 = vmatpush.bf16.msra.mxu0 %v2402
    %3000 = vmatpush.bf16.msra.mxu0 %v2396
    %3001 = vmatpush.bf16.msra.mxu0 %v2390
    %3002 = vmatpush.bf16.msra.mxu0 %v2384
    %3003 = vmatpush.bf16.msra.mxu0 %v2378
    %3004 = vmatpush.bf16.msra.mxu0 %v2372
    %3005 = vmatmul.bf16.gmra.mxu0 %v1740
    %v3006 = vpop.f32.mrf.mxu0
    %v3007 = vadd.f32 %v2993, %v3006
    %v3008 = vpop.f32.mrf.mxu0
    %v3009 = vadd.f32 %v2995, %v3008
    %3010 = vdwg.mxu0
    %3011 = vmatpush.bf16.msra.mxu0 %v2462
    %3012 = vmatpush.bf16.msra.mxu0 %v2456
    %3013 = vmatpush.bf16.msra.mxu0 %v2450
    %3014 = vmatpush.bf16.msra.mxu0 %v2444
    %3015 = vmatpush.bf16.msra.mxu0 %v2438
    %3016 = vmatpush.bf16.msra.mxu0 %v2432
    %3017 = vmatpush.bf16.msra.mxu0 %v2426
    %3018 = vmatpush.bf16.msra.mxu0 %v2420
    %3019 = vmatmul.bf16.gmra.mxu0 %v1741
    %v3020 = vpop.f32.mrf.mxu0
    %v3021 = vadd.f32 %v3007, %v3020
    %v3022 = vpop.f32.mrf.mxu0
    %v3023 = vadd.f32 %v3009, %v3022
    %3024 = vdwg.mxu0
    %3025 = vmatpush.bf16.msra.mxu0 %v2510
    %3026 = vmatpush.bf16.msra.mxu0 %v2504
    %3027 = vmatpush.bf16.msra.mxu0 %v2498
    %3028 = vmatpush.bf16.msra.mxu0 %v2492
    %3029 = vmatpush.bf16.msra.mxu0 %v2486
    %3030 = vmatpush.bf16.msra.mxu0 %v2480
    %3031 = vmatpush.bf16.msra.mxu0 %v2474
    %3032 = vmatpush.bf16.msra.mxu0 %v2468
    %3033 = vmatmul.bf16.gmra.mxu0 %v1742
    %v3034 = vpop.f32.mrf.mxu0
    %v3035 = vadd.f32 %v3021, %v3034
    %v3036 = vpop.f32.mrf.mxu0
    %v3037 = vadd.f32 %v3023, %v3036
    %3038 = vdwg.mxu0
    %v3039 = vadd.f32 %v2755, %v2757
    %v3040 = vrot.slane %v3039, 4
    %v3041 = vadd.f32 %v3039, %v3040
    %v3042 = vrot.slane %v3041, 2
    %v3043 = vadd.f32 %v3041, %v3042
    %v3044 = vrot.slane %v3043, 1
    %v3045 = vadd.f32 %v3043, %v3044
    %v3046 = vadd.f32 %v2811, %v2813
    %v3047 = vrot.slane %v3046, 4
    %v3048 = vadd.f32 %v3046, %v3047
    %v3049 = vrot.slane %v3048, 2
    %v3050 = vadd.f32 %v3048, %v3049
    %v3051 = vrot.slane %v3050, 1
    %v3052 = vadd.f32 %v3050, %v3051
    %v3053 = vadd.f32 %v2867, %v2869
    %v3054 = vrot.slane %v3053, 4
    %v3055 = vadd.f32 %v3053, %v3054
    %v3056 = vrot.slane %v3055, 2
    %v3057 = vadd.f32 %v3055, %v3056
    %v3058 = vrot.slane %v3057, 1
    %v3059 = vadd.f32 %v3057, %v3058
    %v3060 = vadd.f32 %v2923, %v2925
    %v3061 = vrot.slane %v3060, 4
    %v3062 = vadd.f32 %v3060, %v3061
    %v3063 = vrot.slane %v3062, 2
    %v3064 = vadd.f32 %v3062, %v3063
    %v3065 = vrot.slane %v3064, 1
    %v3066 = vadd.f32 %v3064, %v3065
    %v3067 = vadd.f32 %v2979, %v2981
    %v3068 = vrot.slane %v3067, 4
    %v3069 = vadd.f32 %v3067, %v3068
    %v3070 = vrot.slane %v3069, 2
    %v3071 = vadd.f32 %v3069, %v3070
    %v3072 = vrot.slane %v3071, 1
    %v3073 = vadd.f32 %v3071, %v3072
    %v3074 = vadd.f32 %v3035, %v3037
    %v3075 = vrot.slane %v3074, 4
    %v3076 = vadd.f32 %v3074, %v3075
    %v3077 = vrot.slane %v3076, 2
    %v3078 = vadd.f32 %v3076, %v3077
    %v3079 = vrot.slane %v3078, 1
    %v3080 = vadd.f32 %v3078, %v3079
    %v3081 = vmul.f32 %v3045, %v1048
    %v3082 = vmul.f32 %v3052, %v1048
    %v3083 = vmul.f32 %v3059, %v1048
    %v3084 = vmul.f32 %v3066, %v1048
    %v3085 = vmul.f32 %v3073, %v1048
    %v3086 = vmul.f32 %v3080, %v1048
    %v3087 = vsub.f32 %v2755, %v3081
    %v3088 = vsub.f32 %v2811, %v3082
    %v3089 = vsub.f32 %v2867, %v3083
    %v3090 = vsub.f32 %v2923, %v3084
    %v3091 = vsub.f32 %v2979, %v3085
    %v3092 = vsub.f32 %v3035, %v3086
    %v3093 = vsub.f32 %v2757, %v3081
    %v3094 = vsub.f32 %v2813, %v3082
    %v3095 = vsub.f32 %v2869, %v3083
    %v3096 = vsub.f32 %v2925, %v3084
    %v3097 = vsub.f32 %v2981, %v3085
    %v3098 = vsub.f32 %v3037, %v3086
    %v3099 = vmul.f32 %v3087, %v3087
    %v3100 = vmul.f32 %v3088, %v3088
    %v3101 = vmul.f32 %v3089, %v3089
    %v3102 = vmul.f32 %v3090, %v3090
    %v3103 = vmul.f32 %v3091, %v3091
    %v3104 = vmul.f32 %v3092, %v3092
    %v3105 = vmul.f32 %v3093, %v3093
    %v3106 = vmul.f32 %v3094, %v3094
    %v3107 = vmul.f32 %v3095, %v3095
    %v3108 = vmul.f32 %v3096, %v3096
    %v3109 = vmul.f32 %v3097, %v3097
    %v3110 = vmul.f32 %v3098, %v3098
    %v3111 = vadd.f32 %v3099, %v3105
    %v3112 = vrot.slane %v3111, 4
    %v3113 = vadd.f32 %v3111, %v3112
    %v3114 = vrot.slane %v3113, 2
    %v3115 = vadd.f32 %v3113, %v3114
    %v3116 = vrot.slane %v3115, 1
    %v3117 = vadd.f32 %v3115, %v3116
    %v3118 = vadd.f32 %v3100, %v3106
    %v3119 = vrot.slane %v3118, 4
    %v3120 = vadd.f32 %v3118, %v3119
    %v3121 = vrot.slane %v3120, 2
    %v3122 = vadd.f32 %v3120, %v3121
    %v3123 = vrot.slane %v3122, 1
    %v3124 = vadd.f32 %v3122, %v3123
    %v3125 = vadd.f32 %v3101, %v3107
    %v3126 = vrot.slane %v3125, 4
    %v3127 = vadd.f32 %v3125, %v3126
    %v3128 = vrot.slane %v3127, 2
    %v3129 = vadd.f32 %v3127, %v3128
    %v3130 = vrot.slane %v3129, 1
    %v3131 = vadd.f32 %v3129, %v3130
    %v3132 = vadd.f32 %v3102, %v3108
    %v3133 = vrot.slane %v3132, 4
    %v3134 = vadd.f32 %v3132, %v3133
    %v3135 = vrot.slane %v3134, 2
    %v3136 = vadd.f32 %v3134, %v3135
    %v3137 = vrot.slane %v3136, 1
    %v3138 = vadd.f32 %v3136, %v3137
    %v3139 = vadd.f32 %v3103, %v3109
    %v3140 = vrot.slane %v3139, 4
    %v3141 = vadd.f32 %v3139, %v3140
    %v3142 = vrot.slane %v3141, 2
    %v3143 = vadd.f32 %v3141, %v3142
    %v3144 = vrot.slane %v3143, 1
    %v3145 = vadd.f32 %v3143, %v3144
    %v3146 = vadd.f32 %v3104, %v3110
    %v3147 = vrot.slane %v3146, 4
    %v3148 = vadd.f32 %v3146, %v3147
    %v3149 = vrot.slane %v3148, 2
    %v3150 = vadd.f32 %v3148, %v3149
    %v3151 = vrot.slane %v3150, 1
    %v3152 = vadd.f32 %v3150, %v3151
    %v3153 = vmul.f32 %v3117, %v1048
    %v3154 = vmul.f32 %v3124, %v1048
    %v3155 = vmul.f32 %v3131, %v1048
    %v3156 = vmul.f32 %v3138, %v1048
    %v3157 = vmul.f32 %v3145, %v1048
    %v3158 = vmul.f32 %v3152, %v1048
    %vm3159 = vcmp.gt.f32.partialorder %v3153, 0.0
    %vm3160 = vcmp.gt.f32.partialorder %v3154, 0.0
    %vm3161 = vcmp.gt.f32.partialorder %v3155, 0.0
    %vm3162 = vcmp.gt.f32.partialorder %v3156, 0.0
    %vm3163 = vcmp.gt.f32.partialorder %v3157, 0.0
    %vm3164 = vcmp.gt.f32.partialorder %v3158, 0.0
    %v3165 = vrsqrt.pop %v3153
    %v3166 = vmul.f32 %v3165, %v3153
    %v3167 = vmul.f32 %v3166, %v3165
    %v3168 = vmul.f32 0.5, %v3167
    %v3169 = vsub.f32 1.5, %v3168
    %v3170 = vmul.f32 %v3165, %v3169
    %vm3171 = vweird.f32 %v3153
    %vm3172 = vweird.f32 %v3165
    %vm3173 = vmor %vm3171, %vm3172
    %v3174 = vsel %vm3173, %v3165, %v3170
    %v3175 = vrsqrt.pop %v3154
    %v3176 = vmul.f32 %v3175, %v3154
    %v3177 = vmul.f32 %v3176, %v3175
    %v3178 = vmul.f32 0.5, %v3177
    %v3179 = vsub.f32 1.5, %v3178
    %v3180 = vmul.f32 %v3175, %v3179
    %vm3181 = vweird.f32 %v3154
    %vm3182 = vweird.f32 %v3175
    %vm3183 = vmor %vm3181, %vm3182
    %v3184 = vsel %vm3183, %v3175, %v3180
    %v3185 = vrsqrt.pop %v3155
    %v3186 = vmul.f32 %v3185, %v3155
    %v3187 = vmul.f32 %v3186, %v3185
    %v3188 = vmul.f32 0.5, %v3187
    %v3189 = vsub.f32 1.5, %v3188
    %v3190 = vmul.f32 %v3185, %v3189
    %vm3191 = vweird.f32 %v3155
    %vm3192 = vweird.f32 %v3185
    %vm3193 = vmor %vm3191, %vm3192
    %v3194 = vsel %vm3193, %v3185, %v3190
    %v3195 = vrsqrt.pop %v3156
    %v3196 = vmul.f32 %v3195, %v3156
    %v3197 = vmul.f32 %v3196, %v3195
    %v3198 = vmul.f32 0.5, %v3197
    %v3199 = vsub.f32 1.5, %v3198
    %v3200 = vmul.f32 %v3195, %v3199
    %vm3201 = vweird.f32 %v3156
    %vm3202 = vweird.f32 %v3195
    %vm3203 = vmor %vm3201, %vm3202
    %v3204 = vsel %vm3203, %v3195, %v3200
    %v3205 = vrsqrt.pop %v3157
    %v3206 = vmul.f32 %v3205, %v3157
    %v3207 = vmul.f32 %v3206, %v3205
    %v3208 = vmul.f32 0.5, %v3207
    %v3209 = vsub.f32 1.5, %v3208
    %v3210 = vmul.f32 %v3205, %v3209
    %vm3211 = vweird.f32 %v3157
    %vm3212 = vweird.f32 %v3205
    %vm3213 = vmor %vm3211, %vm3212
    %v3214 = vsel %vm3213, %v3205, %v3210
    %v3215 = vrsqrt.pop %v3158
    %v3216 = vmul.f32 %v3215, %v3158
    %v3217 = vmul.f32 %v3216, %v3215
    %v3218 = vmul.f32 0.5, %v3217
    %v3219 = vsub.f32 1.5, %v3218
    %v3220 = vmul.f32 %v3215, %v3219
    %vm3221 = vweird.f32 %v3158
    %vm3222 = vweird.f32 %v3215
    %vm3223 = vmor %vm3221, %vm3222
    %v3224 = vsel %vm3223, %v3215, %v3220
    %v3225 = vsel %vm3159, %v3174, 0.0
    %v3226 = vsel %vm3160, %v3184, 0.0
    %v3227 = vsel %vm3161, %v3194, 0.0
    %v3228 = vsel %vm3162, %v3204, 0.0
    %v3229 = vsel %vm3163, %v3214, 0.0
    %v3230 = vsel %vm3164, %v3224, 0.0
    %v3231 = vmul.f32 %v853, %v3225
    %v3232 = vmul.f32 %v854, %v3226
    %v3233 = vmul.f32 %v855, %v3227
    %v3234 = vmul.f32 %v856, %v3228
    %v3235 = vmul.f32 %v857, %v3229
    %v3236 = vmul.f32 %v858, %v3230
    %v3237 = vperm.slane %v3231, 5
    %v3238 = vperm.slane %v3232, 5
    %v3239 = vperm.slane %v3233, 5
    %v3240 = vperm.slane %v3234, 5
    %v3241 = vperm.slane %v3235, 5
    %v3242 = vperm.slane %v3236, 5
    %v3243 = vmul.f32 %v3087, %v3237
    %v3244 = vmul.f32 %v3088, %v3238
    %v3245 = vmul.f32 %v3089, %v3239
    %v3246 = vmul.f32 %v3090, %v3240
    %v3247 = vmul.f32 %v3091, %v3241
    %v3248 = vmul.f32 %v3092, %v3242
    %v3249 = vmul.f32 %v3093, %v3237
    %v3250 = vmul.f32 %v3094, %v3238
    %v3251 = vmul.f32 %v3095, %v3239
    %v3252 = vmul.f32 %v3096, %v3240
    %v3253 = vmul.f32 %v3097, %v3241
    %v3254 = vmul.f32 %v3098, %v3242
    %v3255 = vperm.slane %v853, 6
    %v3256 = vperm.slane %v854, 6
    %v3257 = vperm.slane %v855, 6
    %v3258 = vperm.slane %v856, 6
    %v3259 = vperm.slane %v857, 6
    %v3260 = vperm.slane %v858, 6
    %v3261 = vadd.f32 %v3243, %v3255
    %v3262 = vadd.f32 %v3244, %v3256
    %v3263 = vadd.f32 %v3245, %v3257
    %v3264 = vadd.f32 %v3246, %v3258
    %v3265 = vadd.f32 %v3247, %v3259
    %v3266 = vadd.f32 %v3248, %v3260
    %v3267 = vadd.f32 %v3249, %v3255
    %v3268 = vadd.f32 %v3250, %v3256
    %v3269 = vadd.f32 %v3251, %v3257
    %v3270 = vadd.f32 %v3252, %v3258
    %v3271 = vadd.f32 %v3253, %v3259
    %v3272 = vadd.f32 %v3254, %v3260
    %vm3273 = vcmp.gt.f32.partialorder %v3261, 0.0
    %vm3274 = vcmp.gt.f32.partialorder %v3262, 0.0
    %vm3275 = vcmp.gt.f32.partialorder %v3263, 0.0
    %vm3276 = vcmp.gt.f32.partialorder %v3264, 0.0
    %vm3277 = vcmp.gt.f32.partialorder %v3265, 0.0
    %vm3278 = vcmp.gt.f32.partialorder %v3266, 0.0
    %vm3279 = vcmp.gt.f32.partialorder %v3267, 0.0
    %vm3280 = vcmp.gt.f32.partialorder %v3268, 0.0
    %vm3281 = vcmp.gt.f32.partialorder %v3269, 0.0
    %vm3282 = vcmp.gt.f32.partialorder %v3270, 0.0
    %vm3283 = vcmp.gt.f32.partialorder %v3271, 0.0
    %vm3284 = vcmp.gt.f32.partialorder %v3272, 0.0
    %v3285 = vmul.f32 %v3261, 0.2
    %v3286 = vmul.f32 %v3262, 0.2
    %v3287 = vmul.f32 %v3263, 0.2
    %v3288 = vmul.f32 %v3264, 0.2
    %v3289 = vmul.f32 %v3265, 0.2
    %v3290 = vmul.f32 %v3266, 0.2
    %v3291 = vmul.f32 %v3267, 0.2
    %v3292 = vmul.f32 %v3268, 0.2
    %v3293 = vmul.f32 %v3269, 0.2
    %v3294 = vmul.f32 %v3270, 0.2
    %v3295 = vmul.f32 %v3271, 0.2
    %v3296 = vmul.f32 %v3272, 0.2
    %v3297 = vsel %vm3273, %v3261, %v3285
    %v3298 = vsel %vm3274, %v3262, %v3286
    %v3299 = vsel %vm3275, %v3263, %v3287
    %v3300 = vsel %vm3276, %v3264, %v3288
    %v3301 = vsel %vm3277, %v3265, %v3289
    %v3302 = vsel %vm3278, %v3266, %v3290
    %v3303 = vsel %vm3279, %v3267, %v3291
    %v3304 = vsel %vm3280, %v3268, %v3292
    %v3305 = vsel %vm3281, %v3269, %v3293
    %v3306 = vsel %vm3282, %v3270, %v3294
    %v3307 = vsel %vm3283, %v3271, %v3295
    %v3308 = vsel %vm3284, %v3272, %v3296
    %v3309 = vunpack.c.0.s8 %v437
    %v3310 = vunpack.c.0.s8 %v438
    %v3311 = vunpack.c.0.s8 %v439
    %v3312 = vunpack.c.0.s8 %v440
    %v3313 = vunpack.c.0.s8 %v441
    %v3314 = vunpack.c.0.s8 %v442
    %v3315 = vunpack.c.0.s8 %v443
    %v3316 = vunpack.c.0.s8 %v444
    %v3317 = vunpack.c.1.s8 %v437
    %v3318 = vunpack.c.1.s8 %v438
    %v3319 = vunpack.c.1.s8 %v439
    %v3320 = vunpack.c.1.s8 %v440
    %v3321 = vunpack.c.1.s8 %v441
    %v3322 = vunpack.c.1.s8 %v442
    %v3323 = vunpack.c.1.s8 %v443
    %v3324 = vunpack.c.1.s8 %v444
    %v3325 = vunpack.c.2.s8 %v437
    %v3326 = vunpack.c.2.s8 %v438
    %v3327 = vunpack.c.2.s8 %v439
    %v3328 = vunpack.c.2.s8 %v440
    %v3329 = vunpack.c.2.s8 %v441
    %v3330 = vunpack.c.2.s8 %v442
    %v3331 = vunpack.c.2.s8 %v443
    %v3332 = vunpack.c.2.s8 %v444
    %v3333 = vunpack.c.3.s8 %v437
    %v3334 = vunpack.c.3.s8 %v438
    %v3335 = vunpack.c.3.s8 %v439
    %v3336 = vunpack.c.3.s8 %v440
    %v3337 = vunpack.c.3.s8 %v441
    %v3338 = vunpack.c.3.s8 %v442
    %v3339 = vunpack.c.3.s8 %v443
    %v3340 = vunpack.c.3.s8 %v444
    %v3341 = vunpack.c.0.s8 %v445
    %v3342 = vunpack.c.0.s8 %v446
    %v3343 = vunpack.c.0.s8 %v447
    %v3344 = vunpack.c.0.s8 %v448
    %v3345 = vunpack.c.0.s8 %v449
    %v3346 = vunpack.c.0.s8 %v450
    %v3347 = vunpack.c.0.s8 %v451
    %v3348 = vunpack.c.0.s8 %v452
    %v3349 = vunpack.c.1.s8 %v445
    %v3350 = vunpack.c.1.s8 %v446
    %v3351 = vunpack.c.1.s8 %v447
    %v3352 = vunpack.c.1.s8 %v448
    %v3353 = vunpack.c.1.s8 %v449
    %v3354 = vunpack.c.1.s8 %v450
    %v3355 = vunpack.c.1.s8 %v451
    %v3356 = vunpack.c.1.s8 %v452
    %v3357 = vunpack.c.2.s8 %v445
    %v3358 = vunpack.c.2.s8 %v446
    %v3359 = vunpack.c.2.s8 %v447
    %v3360 = vunpack.c.2.s8 %v448
    %v3361 = vunpack.c.2.s8 %v449
    %v3362 = vunpack.c.2.s8 %v450
    %v3363 = vunpack.c.2.s8 %v451
    %v3364 = vunpack.c.2.s8 %v452
    %v3365 = vunpack.c.3.s8 %v445
    %v3366 = vunpack.c.3.s8 %v446
    %v3367 = vunpack.c.3.s8 %v447
    %v3368 = vunpack.c.3.s8 %v448
    %v3369 = vunpack.c.3.s8 %v449
    %v3370 = vunpack.c.3.s8 %v450
    %v3371 = vunpack.c.3.s8 %v451
    %v3372 = vunpack.c.3.s8 %v452
    %v3373 = vunpack.c.0.s8 %v453
    %v3374 = vunpack.c.0.s8 %v454
    %v3375 = vunpack.c.0.s8 %v455
    %v3376 = vunpack.c.0.s8 %v456
    %v3377 = vunpack.c.0.s8 %v457
    %v3378 = vunpack.c.0.s8 %v458
    %v3379 = vunpack.c.0.s8 %v459
    %v3380 = vunpack.c.0.s8 %v460
    %v3381 = vunpack.c.1.s8 %v453
    %v3382 = vunpack.c.1.s8 %v454
    %v3383 = vunpack.c.1.s8 %v455
    %v3384 = vunpack.c.1.s8 %v456
    %v3385 = vunpack.c.1.s8 %v457
    %v3386 = vunpack.c.1.s8 %v458
    %v3387 = vunpack.c.1.s8 %v459
    %v3388 = vunpack.c.1.s8 %v460
    %v3389 = vunpack.c.2.s8 %v453
    %v3390 = vunpack.c.2.s8 %v454
    %v3391 = vunpack.c.2.s8 %v455
    %v3392 = vunpack.c.2.s8 %v456
    %v3393 = vunpack.c.2.s8 %v457
    %v3394 = vunpack.c.2.s8 %v458
    %v3395 = vunpack.c.2.s8 %v459
    %v3396 = vunpack.c.2.s8 %v460
    %v3397 = vunpack.c.3.s8 %v453
    %v3398 = vunpack.c.3.s8 %v454
    %v3399 = vunpack.c.3.s8 %v455
    %v3400 = vunpack.c.3.s8 %v456
    %v3401 = vunpack.c.3.s8 %v457
    %v3402 = vunpack.c.3.s8 %v458
    %v3403 = vunpack.c.3.s8 %v459
    %v3404 = vunpack.c.3.s8 %v460
    %v3405 = vunpack.c.0.s8 %v461
    %v3406 = vunpack.c.0.s8 %v462
    %v3407 = vunpack.c.0.s8 %v463
    %v3408 = vunpack.c.0.s8 %v464
    %v3409 = vunpack.c.0.s8 %v465
    %v3410 = vunpack.c.0.s8 %v466
    %v3411 = vunpack.c.0.s8 %v467
    %v3412 = vunpack.c.0.s8 %v468
    %v3413 = vunpack.c.1.s8 %v461
    %v3414 = vunpack.c.1.s8 %v462
    %v3415 = vunpack.c.1.s8 %v463
    %v3416 = vunpack.c.1.s8 %v464
    %v3417 = vunpack.c.1.s8 %v465
    %v3418 = vunpack.c.1.s8 %v466
    %v3419 = vunpack.c.1.s8 %v467
    %v3420 = vunpack.c.1.s8 %v468
    %v3421 = vunpack.c.2.s8 %v461
    %v3422 = vunpack.c.2.s8 %v462
    %v3423 = vunpack.c.2.s8 %v463
    %v3424 = vunpack.c.2.s8 %v464
    %v3425 = vunpack.c.2.s8 %v465
    %v3426 = vunpack.c.2.s8 %v466
    %v3427 = vunpack.c.2.s8 %v467
    %v3428 = vunpack.c.2.s8 %v468
    %v3429 = vunpack.c.3.s8 %v461
    %v3430 = vunpack.c.3.s8 %v462
    %v3431 = vunpack.c.3.s8 %v463
    %v3432 = vunpack.c.3.s8 %v464
    %v3433 = vunpack.c.3.s8 %v465
    %v3434 = vunpack.c.3.s8 %v466
    %v3435 = vunpack.c.3.s8 %v467
    %v3436 = vunpack.c.3.s8 %v468
    %v3437 = vunpack.c.0.s8 %v469
    %v3438 = vunpack.c.0.s8 %v470
    %v3439 = vunpack.c.0.s8 %v471
    %v3440 = vunpack.c.0.s8 %v472
    %v3441 = vunpack.c.0.s8 %v473
    %v3442 = vunpack.c.0.s8 %v474
    %v3443 = vunpack.c.0.s8 %v475
    %v3444 = vunpack.c.0.s8 %v476
    %v3445 = vunpack.c.1.s8 %v469
    %v3446 = vunpack.c.1.s8 %v470
    %v3447 = vunpack.c.1.s8 %v471
    %v3448 = vunpack.c.1.s8 %v472
    %v3449 = vunpack.c.1.s8 %v473
    %v3450 = vunpack.c.1.s8 %v474
    %v3451 = vunpack.c.1.s8 %v475
    %v3452 = vunpack.c.1.s8 %v476
    %v3453 = vunpack.c.2.s8 %v469
    %v3454 = vunpack.c.2.s8 %v470
    %v3455 = vunpack.c.2.s8 %v471
    %v3456 = vunpack.c.2.s8 %v472
    %v3457 = vunpack.c.2.s8 %v473
    %v3458 = vunpack.c.2.s8 %v474
    %v3459 = vunpack.c.2.s8 %v475
    %v3460 = vunpack.c.2.s8 %v476
    %v3461 = vunpack.c.3.s8 %v469
    %v3462 = vunpack.c.3.s8 %v470
    %v3463 = vunpack.c.3.s8 %v471
    %v3464 = vunpack.c.3.s8 %v472
    %v3465 = vunpack.c.3.s8 %v473
    %v3466 = vunpack.c.3.s8 %v474
    %v3467 = vunpack.c.3.s8 %v475
    %v3468 = vunpack.c.3.s8 %v476
    %v3469 = vunpack.c.0.s8 %v477
    %v3470 = vunpack.c.0.s8 %v478
    %v3471 = vunpack.c.0.s8 %v479
    %v3472 = vunpack.c.0.s8 %v480
    %v3473 = vunpack.c.0.s8 %v481
    %v3474 = vunpack.c.0.s8 %v482
    %v3475 = vunpack.c.0.s8 %v483
    %v3476 = vunpack.c.0.s8 %v484
    %v3477 = vunpack.c.1.s8 %v477
    %v3478 = vunpack.c.1.s8 %v478
    %v3479 = vunpack.c.1.s8 %v479
    %v3480 = vunpack.c.1.s8 %v480
    %v3481 = vunpack.c.1.s8 %v481
    %v3482 = vunpack.c.1.s8 %v482
    %v3483 = vunpack.c.1.s8 %v483
    %v3484 = vunpack.c.1.s8 %v484
    %v3485 = vunpack.c.2.s8 %v477
    %v3486 = vunpack.c.2.s8 %v478
    %v3487 = vunpack.c.2.s8 %v479
    %v3488 = vunpack.c.2.s8 %v480
    %v3489 = vunpack.c.2.s8 %v481
    %v3490 = vunpack.c.2.s8 %v482
    %v3491 = vunpack.c.2.s8 %v483
    %v3492 = vunpack.c.2.s8 %v484
    %v3493 = vunpack.c.3.s8 %v477
    %v3494 = vunpack.c.3.s8 %v478
    %v3495 = vunpack.c.3.s8 %v479
    %v3496 = vunpack.c.3.s8 %v480
    %v3497 = vunpack.c.3.s8 %v481
    %v3498 = vunpack.c.3.s8 %v482
    %v3499 = vunpack.c.3.s8 %v483
    %v3500 = vunpack.c.3.s8 %v484
    %v3501 = vunpack.c.0.s8 %v485
    %v3502 = vunpack.c.0.s8 %v486
    %v3503 = vunpack.c.0.s8 %v487
    %v3504 = vunpack.c.0.s8 %v488
    %v3505 = vunpack.c.0.s8 %v489
    %v3506 = vunpack.c.0.s8 %v490
    %v3507 = vunpack.c.0.s8 %v491
    %v3508 = vunpack.c.0.s8 %v492
    %v3509 = vunpack.c.1.s8 %v485
    %v3510 = vunpack.c.1.s8 %v486
    %v3511 = vunpack.c.1.s8 %v487
    %v3512 = vunpack.c.1.s8 %v488
    %v3513 = vunpack.c.1.s8 %v489
    %v3514 = vunpack.c.1.s8 %v490
    %v3515 = vunpack.c.1.s8 %v491
    %v3516 = vunpack.c.1.s8 %v492
    %v3517 = vunpack.c.2.s8 %v485
    %v3518 = vunpack.c.2.s8 %v486
    %v3519 = vunpack.c.2.s8 %v487
    %v3520 = vunpack.c.2.s8 %v488
    %v3521 = vunpack.c.2.s8 %v489
    %v3522 = vunpack.c.2.s8 %v490
    %v3523 = vunpack.c.2.s8 %v491
    %v3524 = vunpack.c.2.s8 %v492
    %v3525 = vunpack.c.3.s8 %v485
    %v3526 = vunpack.c.3.s8 %v486
    %v3527 = vunpack.c.3.s8 %v487
    %v3528 = vunpack.c.3.s8 %v488
    %v3529 = vunpack.c.3.s8 %v489
    %v3530 = vunpack.c.3.s8 %v490
    %v3531 = vunpack.c.3.s8 %v491
    %v3532 = vunpack.c.3.s8 %v492
    %v3533 = vunpack.c.0.s8 %v493
    %v3534 = vunpack.c.0.s8 %v494
    %v3535 = vunpack.c.0.s8 %v495
    %v3536 = vunpack.c.0.s8 %v496
    %v3537 = vunpack.c.0.s8 %v497
    %v3538 = vunpack.c.0.s8 %v498
    %v3539 = vunpack.c.0.s8 %v499
    %v3540 = vunpack.c.0.s8 %v500
    %v3541 = vunpack.c.1.s8 %v493
    %v3542 = vunpack.c.1.s8 %v494
    %v3543 = vunpack.c.1.s8 %v495
    %v3544 = vunpack.c.1.s8 %v496
    %v3545 = vunpack.c.1.s8 %v497
    %v3546 = vunpack.c.1.s8 %v498
    %v3547 = vunpack.c.1.s8 %v499
    %v3548 = vunpack.c.1.s8 %v500
    %v3549 = vunpack.c.2.s8 %v493
    %v3550 = vunpack.c.2.s8 %v494
    %v3551 = vunpack.c.2.s8 %v495
    %v3552 = vunpack.c.2.s8 %v496
    %v3553 = vunpack.c.2.s8 %v497
    %v3554 = vunpack.c.2.s8 %v498
    %v3555 = vunpack.c.2.s8 %v499
    %v3556 = vunpack.c.2.s8 %v500
    %v3557 = vunpack.c.3.s8 %v493
    %v3558 = vunpack.c.3.s8 %v494
    %v3559 = vunpack.c.3.s8 %v495
    %v3560 = vunpack.c.3.s8 %v496
    %v3561 = vunpack.c.3.s8 %v497
    %v3562 = vunpack.c.3.s8 %v498
    %v3563 = vunpack.c.3.s8 %v499
    %v3564 = vunpack.c.3.s8 %v500
    %v3565 = vunpack.c.0.s8 %v501
    %v3566 = vunpack.c.0.s8 %v502
    %v3567 = vunpack.c.0.s8 %v503
    %v3568 = vunpack.c.0.s8 %v504
    %v3569 = vunpack.c.0.s8 %v505
    %v3570 = vunpack.c.0.s8 %v506
    %v3571 = vunpack.c.0.s8 %v507
    %v3572 = vunpack.c.0.s8 %v508
    %v3573 = vunpack.c.1.s8 %v501
    %v3574 = vunpack.c.1.s8 %v502
    %v3575 = vunpack.c.1.s8 %v503
    %v3576 = vunpack.c.1.s8 %v504
    %v3577 = vunpack.c.1.s8 %v505
    %v3578 = vunpack.c.1.s8 %v506
    %v3579 = vunpack.c.1.s8 %v507
    %v3580 = vunpack.c.1.s8 %v508
    %v3581 = vunpack.c.2.s8 %v501
    %v3582 = vunpack.c.2.s8 %v502
    %v3583 = vunpack.c.2.s8 %v503
    %v3584 = vunpack.c.2.s8 %v504
    %v3585 = vunpack.c.2.s8 %v505
    %v3586 = vunpack.c.2.s8 %v506
    %v3587 = vunpack.c.2.s8 %v507
    %v3588 = vunpack.c.2.s8 %v508
    %v3589 = vunpack.c.3.s8 %v501
    %v3590 = vunpack.c.3.s8 %v502
    %v3591 = vunpack.c.3.s8 %v503
    %v3592 = vunpack.c.3.s8 %v504
    %v3593 = vunpack.c.3.s8 %v505
    %v3594 = vunpack.c.3.s8 %v506
    %v3595 = vunpack.c.3.s8 %v507
    %v3596 = vunpack.c.3.s8 %v508
    %v3597 = vunpack.c.0.s8 %v509
    %v3598 = vunpack.c.0.s8 %v510
    %v3599 = vunpack.c.0.s8 %v511
    %v3600 = vunpack.c.0.s8 %v512
    %v3601 = vunpack.c.0.s8 %v513
    %v3602 = vunpack.c.0.s8 %v514
    %v3603 = vunpack.c.0.s8 %v515
    %v3604 = vunpack.c.0.s8 %v516
    %v3605 = vunpack.c.1.s8 %v509
    %v3606 = vunpack.c.1.s8 %v510
    %v3607 = vunpack.c.1.s8 %v511
    %v3608 = vunpack.c.1.s8 %v512
    %v3609 = vunpack.c.1.s8 %v513
    %v3610 = vunpack.c.1.s8 %v514
    %v3611 = vunpack.c.1.s8 %v515
    %v3612 = vunpack.c.1.s8 %v516
    %v3613 = vunpack.c.2.s8 %v509
    %v3614 = vunpack.c.2.s8 %v510
    %v3615 = vunpack.c.2.s8 %v511
    %v3616 = vunpack.c.2.s8 %v512
    %v3617 = vunpack.c.2.s8 %v513
    %v3618 = vunpack.c.2.s8 %v514
    %v3619 = vunpack.c.2.s8 %v515
    %v3620 = vunpack.c.2.s8 %v516
    %v3621 = vunpack.c.3.s8 %v509
    %v3622 = vunpack.c.3.s8 %v510
    %v3623 = vunpack.c.3.s8 %v511
    %v3624 = vunpack.c.3.s8 %v512
    %v3625 = vunpack.c.3.s8 %v513
    %v3626 = vunpack.c.3.s8 %v514
    %v3627 = vunpack.c.3.s8 %v515
    %v3628 = vunpack.c.3.s8 %v516
    %v3629 = vunpack.c.0.s8 %v517
    %v3630 = vunpack.c.0.s8 %v518
    %v3631 = vunpack.c.0.s8 %v519
    %v3632 = vunpack.c.0.s8 %v520
    %v3633 = vunpack.c.0.s8 %v521
    %v3634 = vunpack.c.0.s8 %v522
    %v3635 = vunpack.c.0.s8 %v523
    %v3636 = vunpack.c.0.s8 %v524
    %v3637 = vunpack.c.1.s8 %v517
    %v3638 = vunpack.c.1.s8 %v518
    %v3639 = vunpack.c.1.s8 %v519
    %v3640 = vunpack.c.1.s8 %v520
    %v3641 = vunpack.c.1.s8 %v521
    %v3642 = vunpack.c.1.s8 %v522
    %v3643 = vunpack.c.1.s8 %v523
    %v3644 = vunpack.c.1.s8 %v524
    %v3645 = vunpack.c.2.s8 %v517
    %v3646 = vunpack.c.2.s8 %v518
    %v3647 = vunpack.c.2.s8 %v519
    %v3648 = vunpack.c.2.s8 %v520
    %v3649 = vunpack.c.2.s8 %v521
    %v3650 = vunpack.c.2.s8 %v522
    %v3651 = vunpack.c.2.s8 %v523
    %v3652 = vunpack.c.2.s8 %v524
    %v3653 = vunpack.c.3.s8 %v517
    %v3654 = vunpack.c.3.s8 %v518
    %v3655 = vunpack.c.3.s8 %v519
    %v3656 = vunpack.c.3.s8 %v520
    %v3657 = vunpack.c.3.s8 %v521
    %v3658 = vunpack.c.3.s8 %v522
    %v3659 = vunpack.c.3.s8 %v523
    %v3660 = vunpack.c.3.s8 %v524
    %v3661 = vunpack.c.0.s8 %v525
    %v3662 = vunpack.c.0.s8 %v526
    %v3663 = vunpack.c.0.s8 %v527
    %v3664 = vunpack.c.0.s8 %v528
    %v3665 = vunpack.c.0.s8 %v529
    %v3666 = vunpack.c.0.s8 %v530
    %v3667 = vunpack.c.0.s8 %v531
    %v3668 = vunpack.c.0.s8 %v532
    %v3669 = vunpack.c.1.s8 %v525
    %v3670 = vunpack.c.1.s8 %v526
    %v3671 = vunpack.c.1.s8 %v527
    %v3672 = vunpack.c.1.s8 %v528
    %v3673 = vunpack.c.1.s8 %v529
    %v3674 = vunpack.c.1.s8 %v530
    %v3675 = vunpack.c.1.s8 %v531
    %v3676 = vunpack.c.1.s8 %v532
    %v3677 = vunpack.c.2.s8 %v525
    %v3678 = vunpack.c.2.s8 %v526
    %v3679 = vunpack.c.2.s8 %v527
    %v3680 = vunpack.c.2.s8 %v528
    %v3681 = vunpack.c.2.s8 %v529
    %v3682 = vunpack.c.2.s8 %v530
    %v3683 = vunpack.c.2.s8 %v531
    %v3684 = vunpack.c.2.s8 %v532
    %v3685 = vunpack.c.3.s8 %v525
    %v3686 = vunpack.c.3.s8 %v526
    %v3687 = vunpack.c.3.s8 %v527
    %v3688 = vunpack.c.3.s8 %v528
    %v3689 = vunpack.c.3.s8 %v529
    %v3690 = vunpack.c.3.s8 %v530
    %v3691 = vunpack.c.3.s8 %v531
    %v3692 = vunpack.c.3.s8 %v532
    %v3693 = vunpack.c.0.s8 %v533
    %v3694 = vunpack.c.0.s8 %v534
    %v3695 = vunpack.c.0.s8 %v535
    %v3696 = vunpack.c.0.s8 %v536
    %v3697 = vunpack.c.0.s8 %v537
    %v3698 = vunpack.c.0.s8 %v538
    %v3699 = vunpack.c.0.s8 %v539
    %v3700 = vunpack.c.0.s8 %v540
    %v3701 = vunpack.c.1.s8 %v533
    %v3702 = vunpack.c.1.s8 %v534
    %v3703 = vunpack.c.1.s8 %v535
    %v3704 = vunpack.c.1.s8 %v536
    %v3705 = vunpack.c.1.s8 %v537
    %v3706 = vunpack.c.1.s8 %v538
    %v3707 = vunpack.c.1.s8 %v539
    %v3708 = vunpack.c.1.s8 %v540
    %v3709 = vunpack.c.2.s8 %v533
    %v3710 = vunpack.c.2.s8 %v534
    %v3711 = vunpack.c.2.s8 %v535
    %v3712 = vunpack.c.2.s8 %v536
    %v3713 = vunpack.c.2.s8 %v537
    %v3714 = vunpack.c.2.s8 %v538
    %v3715 = vunpack.c.2.s8 %v539
    %v3716 = vunpack.c.2.s8 %v540
    %v3717 = vunpack.c.3.s8 %v533
    %v3718 = vunpack.c.3.s8 %v534
    %v3719 = vunpack.c.3.s8 %v535
    %v3720 = vunpack.c.3.s8 %v536
    %v3721 = vunpack.c.3.s8 %v537
    %v3722 = vunpack.c.3.s8 %v538
    %v3723 = vunpack.c.3.s8 %v539
    %v3724 = vunpack.c.3.s8 %v540
    %v3725 = vunpack.c.0.s8 %v541
    %v3726 = vunpack.c.0.s8 %v542
    %v3727 = vunpack.c.0.s8 %v543
    %v3728 = vunpack.c.0.s8 %v544
    %v3729 = vunpack.c.0.s8 %v545
    %v3730 = vunpack.c.0.s8 %v546
    %v3731 = vunpack.c.0.s8 %v547
    %v3732 = vunpack.c.0.s8 %v548
    %v3733 = vunpack.c.1.s8 %v541
    %v3734 = vunpack.c.1.s8 %v542
    %v3735 = vunpack.c.1.s8 %v543
    %v3736 = vunpack.c.1.s8 %v544
    %v3737 = vunpack.c.1.s8 %v545
    %v3738 = vunpack.c.1.s8 %v546
    %v3739 = vunpack.c.1.s8 %v547
    %v3740 = vunpack.c.1.s8 %v548
    %v3741 = vunpack.c.2.s8 %v541
    %v3742 = vunpack.c.2.s8 %v542
    %v3743 = vunpack.c.2.s8 %v543
    %v3744 = vunpack.c.2.s8 %v544
    %v3745 = vunpack.c.2.s8 %v545
    %v3746 = vunpack.c.2.s8 %v546
    %v3747 = vunpack.c.2.s8 %v547
    %v3748 = vunpack.c.2.s8 %v548
    %v3749 = vunpack.c.3.s8 %v541
    %v3750 = vunpack.c.3.s8 %v542
    %v3751 = vunpack.c.3.s8 %v543
    %v3752 = vunpack.c.3.s8 %v544
    %v3753 = vunpack.c.3.s8 %v545
    %v3754 = vunpack.c.3.s8 %v546
    %v3755 = vunpack.c.3.s8 %v547
    %v3756 = vunpack.c.3.s8 %v548
    %v3757 = vunpack.c.0.s8 %v549
    %v3758 = vunpack.c.0.s8 %v550
    %v3759 = vunpack.c.0.s8 %v551
    %v3760 = vunpack.c.0.s8 %v552
    %v3761 = vunpack.c.0.s8 %v553
    %v3762 = vunpack.c.0.s8 %v554
    %v3763 = vunpack.c.0.s8 %v555
    %v3764 = vunpack.c.0.s8 %v556
    %v3765 = vunpack.c.1.s8 %v549
    %v3766 = vunpack.c.1.s8 %v550
    %v3767 = vunpack.c.1.s8 %v551
    %v3768 = vunpack.c.1.s8 %v552
    %v3769 = vunpack.c.1.s8 %v553
    %v3770 = vunpack.c.1.s8 %v554
    %v3771 = vunpack.c.1.s8 %v555
    %v3772 = vunpack.c.1.s8 %v556
    %v3773 = vunpack.c.2.s8 %v549
    %v3774 = vunpack.c.2.s8 %v550
    %v3775 = vunpack.c.2.s8 %v551
    %v3776 = vunpack.c.2.s8 %v552
    %v3777 = vunpack.c.2.s8 %v553
    %v3778 = vunpack.c.2.s8 %v554
    %v3779 = vunpack.c.2.s8 %v555
    %v3780 = vunpack.c.2.s8 %v556
    %v3781 = vunpack.c.3.s8 %v549
    %v3782 = vunpack.c.3.s8 %v550
    %v3783 = vunpack.c.3.s8 %v551
    %v3784 = vunpack.c.3.s8 %v552
    %v3785 = vunpack.c.3.s8 %v553
    %v3786 = vunpack.c.3.s8 %v554
    %v3787 = vunpack.c.3.s8 %v555
    %v3788 = vunpack.c.3.s8 %v556
    %v3789 = vunpack.c.0.s8 %v557
    %v3790 = vunpack.c.0.s8 %v558
    %v3791 = vunpack.c.0.s8 %v559
    %v3792 = vunpack.c.0.s8 %v560
    %v3793 = vunpack.c.0.s8 %v561
    %v3794 = vunpack.c.0.s8 %v562
    %v3795 = vunpack.c.0.s8 %v563
    %v3796 = vunpack.c.0.s8 %v564
    %v3797 = vunpack.c.1.s8 %v557
    %v3798 = vunpack.c.1.s8 %v558
    %v3799 = vunpack.c.1.s8 %v559
    %v3800 = vunpack.c.1.s8 %v560
    %v3801 = vunpack.c.1.s8 %v561
    %v3802 = vunpack.c.1.s8 %v562
    %v3803 = vunpack.c.1.s8 %v563
    %v3804 = vunpack.c.1.s8 %v564
    %v3805 = vunpack.c.2.s8 %v557
    %v3806 = vunpack.c.2.s8 %v558
    %v3807 = vunpack.c.2.s8 %v559
    %v3808 = vunpack.c.2.s8 %v560
    %v3809 = vunpack.c.2.s8 %v561
    %v3810 = vunpack.c.2.s8 %v562
    %v3811 = vunpack.c.2.s8 %v563
    %v3812 = vunpack.c.2.s8 %v564
    %v3813 = vunpack.c.3.s8 %v557
    %v3814 = vunpack.c.3.s8 %v558
    %v3815 = vunpack.c.3.s8 %v559
    %v3816 = vunpack.c.3.s8 %v560
    %v3817 = vunpack.c.3.s8 %v561
    %v3818 = vunpack.c.3.s8 %v562
    %v3819 = vunpack.c.3.s8 %v563
    %v3820 = vunpack.c.3.s8 %v564
    %v3821 = vunpack.c.0.s8 %v565
    %v3822 = vunpack.c.0.s8 %v566
    %v3823 = vunpack.c.0.s8 %v567
    %v3824 = vunpack.c.0.s8 %v568
    %v3825 = vunpack.c.0.s8 %v569
    %v3826 = vunpack.c.0.s8 %v570
    %v3827 = vunpack.c.0.s8 %v571
    %v3828 = vunpack.c.0.s8 %v572
    %v3829 = vunpack.c.1.s8 %v565
    %v3830 = vunpack.c.1.s8 %v566
    %v3831 = vunpack.c.1.s8 %v567
    %v3832 = vunpack.c.1.s8 %v568
    %v3833 = vunpack.c.1.s8 %v569
    %v3834 = vunpack.c.1.s8 %v570
    %v3835 = vunpack.c.1.s8 %v571
    %v3836 = vunpack.c.1.s8 %v572
    %v3837 = vunpack.c.2.s8 %v565
    %v3838 = vunpack.c.2.s8 %v566
    %v3839 = vunpack.c.2.s8 %v567
    %v3840 = vunpack.c.2.s8 %v568
    %v3841 = vunpack.c.2.s8 %v569
    %v3842 = vunpack.c.2.s8 %v570
    %v3843 = vunpack.c.2.s8 %v571
    %v3844 = vunpack.c.2.s8 %v572
    %v3845 = vunpack.c.3.s8 %v565
    %v3846 = vunpack.c.3.s8 %v566
    %v3847 = vunpack.c.3.s8 %v567
    %v3848 = vunpack.c.3.s8 %v568
    %v3849 = vunpack.c.3.s8 %v569
    %v3850 = vunpack.c.3.s8 %v570
    %v3851 = vunpack.c.3.s8 %v571
    %v3852 = vunpack.c.3.s8 %v572
    %v3853 = vunpack.c.0.s8 %v573
    %v3854 = vunpack.c.0.s8 %v574
    %v3855 = vunpack.c.0.s8 %v575
    %v3856 = vunpack.c.0.s8 %v576
    %v3857 = vunpack.c.0.s8 %v577
    %v3858 = vunpack.c.0.s8 %v578
    %v3859 = vunpack.c.0.s8 %v579
    %v3860 = vunpack.c.0.s8 %v580
    %v3861 = vunpack.c.1.s8 %v573
    %v3862 = vunpack.c.1.s8 %v574
    %v3863 = vunpack.c.1.s8 %v575
    %v3864 = vunpack.c.1.s8 %v576
    %v3865 = vunpack.c.1.s8 %v577
    %v3866 = vunpack.c.1.s8 %v578
    %v3867 = vunpack.c.1.s8 %v579
    %v3868 = vunpack.c.1.s8 %v580
    %v3869 = vunpack.c.2.s8 %v573
    %v3870 = vunpack.c.2.s8 %v574
    %v3871 = vunpack.c.2.s8 %v575
    %v3872 = vunpack.c.2.s8 %v576
    %v3873 = vunpack.c.2.s8 %v577
    %v3874 = vunpack.c.2.s8 %v578
    %v3875 = vunpack.c.2.s8 %v579
    %v3876 = vunpack.c.2.s8 %v580
    %v3877 = vunpack.c.3.s8 %v573
    %v3878 = vunpack.c.3.s8 %v574
    %v3879 = vunpack.c.3.s8 %v575
    %v3880 = vunpack.c.3.s8 %v576
    %v3881 = vunpack.c.3.s8 %v577
    %v3882 = vunpack.c.3.s8 %v578
    %v3883 = vunpack.c.3.s8 %v579
    %v3884 = vunpack.c.3.s8 %v580
    %v3885 = vunpack.c.0.s8 %v581
    %v3886 = vunpack.c.0.s8 %v582
    %v3887 = vunpack.c.0.s8 %v583
    %v3888 = vunpack.c.0.s8 %v584
    %v3889 = vunpack.c.0.s8 %v585
    %v3890 = vunpack.c.0.s8 %v586
    %v3891 = vunpack.c.0.s8 %v587
    %v3892 = vunpack.c.0.s8 %v588
    %v3893 = vunpack.c.1.s8 %v581
    %v3894 = vunpack.c.1.s8 %v582
    %v3895 = vunpack.c.1.s8 %v583
    %v3896 = vunpack.c.1.s8 %v584
    %v3897 = vunpack.c.1.s8 %v585
    %v3898 = vunpack.c.1.s8 %v586
    %v3899 = vunpack.c.1.s8 %v587
    %v3900 = vunpack.c.1.s8 %v588
    %v3901 = vunpack.c.2.s8 %v581
    %v3902 = vunpack.c.2.s8 %v582
    %v3903 = vunpack.c.2.s8 %v583
    %v3904 = vunpack.c.2.s8 %v584
    %v3905 = vunpack.c.2.s8 %v585
    %v3906 = vunpack.c.2.s8 %v586
    %v3907 = vunpack.c.2.s8 %v587
    %v3908 = vunpack.c.2.s8 %v588
    %v3909 = vunpack.c.3.s8 %v581
    %v3910 = vunpack.c.3.s8 %v582
    %v3911 = vunpack.c.3.s8 %v583
    %v3912 = vunpack.c.3.s8 %v584
    %v3913 = vunpack.c.3.s8 %v585
    %v3914 = vunpack.c.3.s8 %v586
    %v3915 = vunpack.c.3.s8 %v587
    %v3916 = vunpack.c.3.s8 %v588
    %v3917 = vunpack.c.0.s8 %v589
    %v3918 = vunpack.c.0.s8 %v590
    %v3919 = vunpack.c.0.s8 %v591
    %v3920 = vunpack.c.0.s8 %v592
    %v3921 = vunpack.c.0.s8 %v593
    %v3922 = vunpack.c.0.s8 %v594
    %v3923 = vunpack.c.0.s8 %v595
    %v3924 = vunpack.c.0.s8 %v596
    %v3925 = vunpack.c.1.s8 %v589
    %v3926 = vunpack.c.1.s8 %v590
    %v3927 = vunpack.c.1.s8 %v591
    %v3928 = vunpack.c.1.s8 %v592
    %v3929 = vunpack.c.1.s8 %v593
    %v3930 = vunpack.c.1.s8 %v594
    %v3931 = vunpack.c.1.s8 %v595
    %v3932 = vunpack.c.1.s8 %v596
    %v3933 = vunpack.c.2.s8 %v589
    %v3934 = vunpack.c.2.s8 %v590
    %v3935 = vunpack.c.2.s8 %v591
    %v3936 = vunpack.c.2.s8 %v592
    %v3937 = vunpack.c.2.s8 %v593
    %v3938 = vunpack.c.2.s8 %v594
    %v3939 = vunpack.c.2.s8 %v595
    %v3940 = vunpack.c.2.s8 %v596
    %v3941 = vunpack.c.3.s8 %v589
    %v3942 = vunpack.c.3.s8 %v590
    %v3943 = vunpack.c.3.s8 %v591
    %v3944 = vunpack.c.3.s8 %v592
    %v3945 = vunpack.c.3.s8 %v593
    %v3946 = vunpack.c.3.s8 %v594
    %v3947 = vunpack.c.3.s8 %v595
    %v3948 = vunpack.c.3.s8 %v596
    %v3949 = vunpack.c.0.s8 %v597
    %v3950 = vunpack.c.0.s8 %v598
    %v3951 = vunpack.c.0.s8 %v599
    %v3952 = vunpack.c.0.s8 %v600
    %v3953 = vunpack.c.0.s8 %v601
    %v3954 = vunpack.c.0.s8 %v602
    %v3955 = vunpack.c.0.s8 %v603
    %v3956 = vunpack.c.0.s8 %v604
    %v3957 = vunpack.c.1.s8 %v597
    %v3958 = vunpack.c.1.s8 %v598
    %v3959 = vunpack.c.1.s8 %v599
    %v3960 = vunpack.c.1.s8 %v600
    %v3961 = vunpack.c.1.s8 %v601
    %v3962 = vunpack.c.1.s8 %v602
    %v3963 = vunpack.c.1.s8 %v603
    %v3964 = vunpack.c.1.s8 %v604
    %v3965 = vunpack.c.2.s8 %v597
    %v3966 = vunpack.c.2.s8 %v598
    %v3967 = vunpack.c.2.s8 %v599
    %v3968 = vunpack.c.2.s8 %v600
    %v3969 = vunpack.c.2.s8 %v601
    %v3970 = vunpack.c.2.s8 %v602
    %v3971 = vunpack.c.2.s8 %v603
    %v3972 = vunpack.c.2.s8 %v604
    %v3973 = vunpack.c.3.s8 %v597
    %v3974 = vunpack.c.3.s8 %v598
    %v3975 = vunpack.c.3.s8 %v599
    %v3976 = vunpack.c.3.s8 %v600
    %v3977 = vunpack.c.3.s8 %v601
    %v3978 = vunpack.c.3.s8 %v602
    %v3979 = vunpack.c.3.s8 %v603
    %v3980 = vunpack.c.3.s8 %v604
    %v3981 = vunpack.c.0.s8 %v605
    %v3982 = vunpack.c.0.s8 %v606
    %v3983 = vunpack.c.0.s8 %v607
    %v3984 = vunpack.c.0.s8 %v608
    %v3985 = vunpack.c.0.s8 %v609
    %v3986 = vunpack.c.0.s8 %v610
    %v3987 = vunpack.c.0.s8 %v611
    %v3988 = vunpack.c.0.s8 %v612
    %v3989 = vunpack.c.1.s8 %v605
    %v3990 = vunpack.c.1.s8 %v606
    %v3991 = vunpack.c.1.s8 %v607
    %v3992 = vunpack.c.1.s8 %v608
    %v3993 = vunpack.c.1.s8 %v609
    %v3994 = vunpack.c.1.s8 %v610
    %v3995 = vunpack.c.1.s8 %v611
    %v3996 = vunpack.c.1.s8 %v612
    %v3997 = vunpack.c.2.s8 %v605
    %v3998 = vunpack.c.2.s8 %v606
    %v3999 = vunpack.c.2.s8 %v607
    %v4000 = vunpack.c.2.s8 %v608
    %v4001 = vunpack.c.2.s8 %v609
    %v4002 = vunpack.c.2.s8 %v610
    %v4003 = vunpack.c.2.s8 %v611
    %v4004 = vunpack.c.2.s8 %v612
    %v4005 = vunpack.c.3.s8 %v605
    %v4006 = vunpack.c.3.s8 %v606
    %v4007 = vunpack.c.3.s8 %v607
    %v4008 = vunpack.c.3.s8 %v608
    %v4009 = vunpack.c.3.s8 %v609
    %v4010 = vunpack.c.3.s8 %v610
    %v4011 = vunpack.c.3.s8 %v611
    %v4012 = vunpack.c.3.s8 %v612
    %v4013 = vunpack.c.0.s8 %v613
    %v4014 = vunpack.c.0.s8 %v614
    %v4015 = vunpack.c.0.s8 %v615
    %v4016 = vunpack.c.0.s8 %v616
    %v4017 = vunpack.c.0.s8 %v617
    %v4018 = vunpack.c.0.s8 %v618
    %v4019 = vunpack.c.0.s8 %v619
    %v4020 = vunpack.c.0.s8 %v620
    %v4021 = vunpack.c.1.s8 %v613
    %v4022 = vunpack.c.1.s8 %v614
    %v4023 = vunpack.c.1.s8 %v615
    %v4024 = vunpack.c.1.s8 %v616
    %v4025 = vunpack.c.1.s8 %v617
    %v4026 = vunpack.c.1.s8 %v618
    %v4027 = vunpack.c.1.s8 %v619
    %v4028 = vunpack.c.1.s8 %v620
    %v4029 = vunpack.c.2.s8 %v613
    %v4030 = vunpack.c.2.s8 %v614
    %v4031 = vunpack.c.2.s8 %v615
    %v4032 = vunpack.c.2.s8 %v616
    %v4033 = vunpack.c.2.s8 %v617
    %v4034 = vunpack.c.2.s8 %v618
    %v4035 = vunpack.c.2.s8 %v619
    %v4036 = vunpack.c.2.s8 %v620
    %v4037 = vunpack.c.3.s8 %v613
    %v4038 = vunpack.c.3.s8 %v614
    %v4039 = vunpack.c.3.s8 %v615
    %v4040 = vunpack.c.3.s8 %v616
    %v4041 = vunpack.c.3.s8 %v617
    %v4042 = vunpack.c.3.s8 %v618
    %v4043 = vunpack.c.3.s8 %v619
    %v4044 = vunpack.c.3.s8 %v620
    %v4045 = vunpack.c.0.s8 %v621
    %v4046 = vunpack.c.0.s8 %v622
    %v4047 = vunpack.c.0.s8 %v623
    %v4048 = vunpack.c.0.s8 %v624
    %v4049 = vunpack.c.0.s8 %v625
    %v4050 = vunpack.c.0.s8 %v626
    %v4051 = vunpack.c.0.s8 %v627
    %v4052 = vunpack.c.0.s8 %v628
    %v4053 = vunpack.c.1.s8 %v621
    %v4054 = vunpack.c.1.s8 %v622
    %v4055 = vunpack.c.1.s8 %v623
    %v4056 = vunpack.c.1.s8 %v624
    %v4057 = vunpack.c.1.s8 %v625
    %v4058 = vunpack.c.1.s8 %v626
    %v4059 = vunpack.c.1.s8 %v627
    %v4060 = vunpack.c.1.s8 %v628
    %v4061 = vunpack.c.2.s8 %v621
    %v4062 = vunpack.c.2.s8 %v622
    %v4063 = vunpack.c.2.s8 %v623
    %v4064 = vunpack.c.2.s8 %v624
    %v4065 = vunpack.c.2.s8 %v625
    %v4066 = vunpack.c.2.s8 %v626
    %v4067 = vunpack.c.2.s8 %v627
    %v4068 = vunpack.c.2.s8 %v628
    %v4069 = vunpack.c.3.s8 %v621
    %v4070 = vunpack.c.3.s8 %v622
    %v4071 = vunpack.c.3.s8 %v623
    %v4072 = vunpack.c.3.s8 %v624
    %v4073 = vunpack.c.3.s8 %v625
    %v4074 = vunpack.c.3.s8 %v626
    %v4075 = vunpack.c.3.s8 %v627
    %v4076 = vunpack.c.3.s8 %v628
    %v4077 = vcvt.s32.f32 %v3309
    %v4078 = vcvt.s32.f32 %v3310
    %v4079 = vcvt.s32.f32 %v3311
    %v4080 = vcvt.s32.f32 %v3312
    %v4081 = vcvt.s32.f32 %v3313
    %v4082 = vcvt.s32.f32 %v3314
    %v4083 = vcvt.s32.f32 %v3315
    %v4084 = vcvt.s32.f32 %v3316
    %v4085 = vcvt.s32.f32 %v3317
    %v4086 = vcvt.s32.f32 %v3318
    %v4087 = vcvt.s32.f32 %v3319
    %v4088 = vcvt.s32.f32 %v3320
    %v4089 = vcvt.s32.f32 %v3321
    %v4090 = vcvt.s32.f32 %v3322
    %v4091 = vcvt.s32.f32 %v3323
    %v4092 = vcvt.s32.f32 %v3324
    %v4093 = vcvt.s32.f32 %v3325
    %v4094 = vcvt.s32.f32 %v3326
    %v4095 = vcvt.s32.f32 %v3327
    %v4096 = vcvt.s32.f32 %v3328
    %v4097 = vcvt.s32.f32 %v3329
    %v4098 = vcvt.s32.f32 %v3330
    %v4099 = vcvt.s32.f32 %v3331
    %v4100 = vcvt.s32.f32 %v3332
    %v4101 = vcvt.s32.f32 %v3333
    %v4102 = vcvt.s32.f32 %v3334
    %v4103 = vcvt.s32.f32 %v3335
    %v4104 = vcvt.s32.f32 %v3336
    %v4105 = vcvt.s32.f32 %v3337
    %v4106 = vcvt.s32.f32 %v3338
    %v4107 = vcvt.s32.f32 %v3339
    %v4108 = vcvt.s32.f32 %v3340
    %v4109 = vcvt.s32.f32 %v3341
    %v4110 = vcvt.s32.f32 %v3342
    %v4111 = vcvt.s32.f32 %v3343
    %v4112 = vcvt.s32.f32 %v3344
    %v4113 = vcvt.s32.f32 %v3345
    %v4114 = vcvt.s32.f32 %v3346
    %v4115 = vcvt.s32.f32 %v3347
    %v4116 = vcvt.s32.f32 %v3348
    %v4117 = vcvt.s32.f32 %v3349
    %v4118 = vcvt.s32.f32 %v3350
    %v4119 = vcvt.s32.f32 %v3351
    %v4120 = vcvt.s32.f32 %v3352
    %v4121 = vcvt.s32.f32 %v3353
    %v4122 = vcvt.s32.f32 %v3354
    %v4123 = vcvt.s32.f32 %v3355
    %v4124 = vcvt.s32.f32 %v3356
    %v4125 = vcvt.s32.f32 %v3357
    %v4126 = vcvt.s32.f32 %v3358
    %v4127 = vcvt.s32.f32 %v3359
    %v4128 = vcvt.s32.f32 %v3360
    %v4129 = vcvt.s32.f32 %v3361
    %v4130 = vcvt.s32.f32 %v3362
    %v4131 = vcvt.s32.f32 %v3363
    %v4132 = vcvt.s32.f32 %v3364
    %v4133 = vcvt.s32.f32 %v3365
    %v4134 = vcvt.s32.f32 %v3366
    %v4135 = vcvt.s32.f32 %v3367
    %v4136 = vcvt.s32.f32 %v3368
    %v4137 = vcvt.s32.f32 %v3369
    %v4138 = vcvt.s32.f32 %v3370
    %v4139 = vcvt.s32.f32 %v3371
    %v4140 = vcvt.s32.f32 %v3372
    %v4141 = vcvt.s32.f32 %v3373
    %v4142 = vcvt.s32.f32 %v3374
    %v4143 = vcvt.s32.f32 %v3375
    %v4144 = vcvt.s32.f32 %v3376
    %v4145 = vcvt.s32.f32 %v3377
    %v4146 = vcvt.s32.f32 %v3378
    %v4147 = vcvt.s32.f32 %v3379
    %v4148 = vcvt.s32.f32 %v3380
    %v4149 = vcvt.s32.f32 %v3381
    %v4150 = vcvt.s32.f32 %v3382
    %v4151 = vcvt.s32.f32 %v3383
    %v4152 = vcvt.s32.f32 %v3384
    %v4153 = vcvt.s32.f32 %v3385
    %v4154 = vcvt.s32.f32 %v3386
    %v4155 = vcvt.s32.f32 %v3387
    %v4156 = vcvt.s32.f32 %v3388
    %v4157 = vcvt.s32.f32 %v3389
    %v4158 = vcvt.s32.f32 %v3390
    %v4159 = vcvt.s32.f32 %v3391
    %v4160 = vcvt.s32.f32 %v3392
    %v4161 = vcvt.s32.f32 %v3393
    %v4162 = vcvt.s32.f32 %v3394
    %v4163 = vcvt.s32.f32 %v3395
    %v4164 = vcvt.s32.f32 %v3396
    %v4165 = vcvt.s32.f32 %v3397
    %v4166 = vcvt.s32.f32 %v3398
    %v4167 = vcvt.s32.f32 %v3399
    %v4168 = vcvt.s32.f32 %v3400
    %v4169 = vcvt.s32.f32 %v3401
    %v4170 = vcvt.s32.f32 %v3402
    %v4171 = vcvt.s32.f32 %v3403
    %v4172 = vcvt.s32.f32 %v3404
    %v4173 = vcvt.s32.f32 %v3405
    %v4174 = vcvt.s32.f32 %v3406
    %v4175 = vcvt.s32.f32 %v3407
    %v4176 = vcvt.s32.f32 %v3408
    %v4177 = vcvt.s32.f32 %v3409
    %v4178 = vcvt.s32.f32 %v3410
    %v4179 = vcvt.s32.f32 %v3411
    %v4180 = vcvt.s32.f32 %v3412
    %v4181 = vcvt.s32.f32 %v3413
    %v4182 = vcvt.s32.f32 %v3414
    %v4183 = vcvt.s32.f32 %v3415
    %v4184 = vcvt.s32.f32 %v3416
    %v4185 = vcvt.s32.f32 %v3417
    %v4186 = vcvt.s32.f32 %v3418
    %v4187 = vcvt.s32.f32 %v3419
    %v4188 = vcvt.s32.f32 %v3420
    %v4189 = vcvt.s32.f32 %v3421
    %v4190 = vcvt.s32.f32 %v3422
    %v4191 = vcvt.s32.f32 %v3423
    %v4192 = vcvt.s32.f32 %v3424
    %v4193 = vcvt.s32.f32 %v3425
    %v4194 = vcvt.s32.f32 %v3426
    %v4195 = vcvt.s32.f32 %v3427
    %v4196 = vcvt.s32.f32 %v3428
    %v4197 = vcvt.s32.f32 %v3429
    %v4198 = vcvt.s32.f32 %v3430
    %v4199 = vcvt.s32.f32 %v3431
    %v4200 = vcvt.s32.f32 %v3432
    %v4201 = vcvt.s32.f32 %v3433
    %v4202 = vcvt.s32.f32 %v3434
    %v4203 = vcvt.s32.f32 %v3435
    %v4204 = vcvt.s32.f32 %v3436
    %v4205 = vcvt.s32.f32 %v3437
    %v4206 = vcvt.s32.f32 %v3438
    %v4207 = vcvt.s32.f32 %v3439
    %v4208 = vcvt.s32.f32 %v3440
    %v4209 = vcvt.s32.f32 %v3441
    %v4210 = vcvt.s32.f32 %v3442
    %v4211 = vcvt.s32.f32 %v3443
    %v4212 = vcvt.s32.f32 %v3444
    %v4213 = vcvt.s32.f32 %v3445
    %v4214 = vcvt.s32.f32 %v3446
    %v4215 = vcvt.s32.f32 %v3447
    %v4216 = vcvt.s32.f32 %v3448
    %v4217 = vcvt.s32.f32 %v3449
    %v4218 = vcvt.s32.f32 %v3450
    %v4219 = vcvt.s32.f32 %v3451
    %v4220 = vcvt.s32.f32 %v3452
    %v4221 = vcvt.s32.f32 %v3453
    %v4222 = vcvt.s32.f32 %v3454
    %v4223 = vcvt.s32.f32 %v3455
    %v4224 = vcvt.s32.f32 %v3456
    %v4225 = vcvt.s32.f32 %v3457
    %v4226 = vcvt.s32.f32 %v3458
    %v4227 = vcvt.s32.f32 %v3459
    %v4228 = vcvt.s32.f32 %v3460
    %v4229 = vcvt.s32.f32 %v3461
    %v4230 = vcvt.s32.f32 %v3462
    %v4231 = vcvt.s32.f32 %v3463
    %v4232 = vcvt.s32.f32 %v3464
    %v4233 = vcvt.s32.f32 %v3465
    %v4234 = vcvt.s32.f32 %v3466
    %v4235 = vcvt.s32.f32 %v3467
    %v4236 = vcvt.s32.f32 %v3468
    %v4237 = vcvt.s32.f32 %v3469
    %v4238 = vcvt.s32.f32 %v3470
    %v4239 = vcvt.s32.f32 %v3471
    %v4240 = vcvt.s32.f32 %v3472
    %v4241 = vcvt.s32.f32 %v3473
    %v4242 = vcvt.s32.f32 %v3474
    %v4243 = vcvt.s32.f32 %v3475
    %v4244 = vcvt.s32.f32 %v3476
    %v4245 = vcvt.s32.f32 %v3477
    %v4246 = vcvt.s32.f32 %v3478
    %v4247 = vcvt.s32.f32 %v3479
    %v4248 = vcvt.s32.f32 %v3480
    %v4249 = vcvt.s32.f32 %v3481
    %v4250 = vcvt.s32.f32 %v3482
    %v4251 = vcvt.s32.f32 %v3483
    %v4252 = vcvt.s32.f32 %v3484
    %v4253 = vcvt.s32.f32 %v3485
    %v4254 = vcvt.s32.f32 %v3486
    %v4255 = vcvt.s32.f32 %v3487
    %v4256 = vcvt.s32.f32 %v3488
    %v4257 = vcvt.s32.f32 %v3489
    %v4258 = vcvt.s32.f32 %v3490
    %v4259 = vcvt.s32.f32 %v3491
    %v4260 = vcvt.s32.f32 %v3492
    %v4261 = vcvt.s32.f32 %v3493
    %v4262 = vcvt.s32.f32 %v3494
    %v4263 = vcvt.s32.f32 %v3495
    %v4264 = vcvt.s32.f32 %v3496
    %v4265 = vcvt.s32.f32 %v3497
    %v4266 = vcvt.s32.f32 %v3498
    %v4267 = vcvt.s32.f32 %v3499
    %v4268 = vcvt.s32.f32 %v3500
    %v4269 = vcvt.s32.f32 %v3501
    %v4270 = vcvt.s32.f32 %v3502
    %v4271 = vcvt.s32.f32 %v3503
    %v4272 = vcvt.s32.f32 %v3504
    %v4273 = vcvt.s32.f32 %v3505
    %v4274 = vcvt.s32.f32 %v3506
    %v4275 = vcvt.s32.f32 %v3507
    %v4276 = vcvt.s32.f32 %v3508
    %v4277 = vcvt.s32.f32 %v3509
    %v4278 = vcvt.s32.f32 %v3510
    %v4279 = vcvt.s32.f32 %v3511
    %v4280 = vcvt.s32.f32 %v3512
    %v4281 = vcvt.s32.f32 %v3513
    %v4282 = vcvt.s32.f32 %v3514
    %v4283 = vcvt.s32.f32 %v3515
    %v4284 = vcvt.s32.f32 %v3516
    %v4285 = vcvt.s32.f32 %v3517
    %v4286 = vcvt.s32.f32 %v3518
    %v4287 = vcvt.s32.f32 %v3519
    %v4288 = vcvt.s32.f32 %v3520
    %v4289 = vcvt.s32.f32 %v3521
    %v4290 = vcvt.s32.f32 %v3522
    %v4291 = vcvt.s32.f32 %v3523
    %v4292 = vcvt.s32.f32 %v3524
    %v4293 = vcvt.s32.f32 %v3525
    %v4294 = vcvt.s32.f32 %v3526
    %v4295 = vcvt.s32.f32 %v3527
    %v4296 = vcvt.s32.f32 %v3528
    %v4297 = vcvt.s32.f32 %v3529
    %v4298 = vcvt.s32.f32 %v3530
    %v4299 = vcvt.s32.f32 %v3531
    %v4300 = vcvt.s32.f32 %v3532
    %v4301 = vcvt.s32.f32 %v3533
    %v4302 = vcvt.s32.f32 %v3534
    %v4303 = vcvt.s32.f32 %v3535
    %v4304 = vcvt.s32.f32 %v3536
    %v4305 = vcvt.s32.f32 %v3537
    %v4306 = vcvt.s32.f32 %v3538
    %v4307 = vcvt.s32.f32 %v3539
    %v4308 = vcvt.s32.f32 %v3540
    %v4309 = vcvt.s32.f32 %v3541
    %v4310 = vcvt.s32.f32 %v3542
    %v4311 = vcvt.s32.f32 %v3543
    %v4312 = vcvt.s32.f32 %v3544
    %v4313 = vcvt.s32.f32 %v3545
    %v4314 = vcvt.s32.f32 %v3546
    %v4315 = vcvt.s32.f32 %v3547
    %v4316 = vcvt.s32.f32 %v3548
    %v4317 = vcvt.s32.f32 %v3549
    %v4318 = vcvt.s32.f32 %v3550
    %v4319 = vcvt.s32.f32 %v3551
    %v4320 = vcvt.s32.f32 %v3552
    %v4321 = vcvt.s32.f32 %v3553
    %v4322 = vcvt.s32.f32 %v3554
    %v4323 = vcvt.s32.f32 %v3555
    %v4324 = vcvt.s32.f32 %v3556
    %v4325 = vcvt.s32.f32 %v3557
    %v4326 = vcvt.s32.f32 %v3558
    %v4327 = vcvt.s32.f32 %v3559
    %v4328 = vcvt.s32.f32 %v3560
    %v4329 = vcvt.s32.f32 %v3561
    %v4330 = vcvt.s32.f32 %v3562
    %v4331 = vcvt.s32.f32 %v3563
    %v4332 = vcvt.s32.f32 %v3564
    %v4333 = vcvt.s32.f32 %v3565
    %v4334 = vcvt.s32.f32 %v3566
    %v4335 = vcvt.s32.f32 %v3567
    %v4336 = vcvt.s32.f32 %v3568
    %v4337 = vcvt.s32.f32 %v3569
    %v4338 = vcvt.s32.f32 %v3570
    %v4339 = vcvt.s32.f32 %v3571
    %v4340 = vcvt.s32.f32 %v3572
    %v4341 = vcvt.s32.f32 %v3573
    %v4342 = vcvt.s32.f32 %v3574
    %v4343 = vcvt.s32.f32 %v3575
    %v4344 = vcvt.s32.f32 %v3576
    %v4345 = vcvt.s32.f32 %v3577
    %v4346 = vcvt.s32.f32 %v3578
    %v4347 = vcvt.s32.f32 %v3579
    %v4348 = vcvt.s32.f32 %v3580
    %v4349 = vcvt.s32.f32 %v3581
    %v4350 = vcvt.s32.f32 %v3582
    %v4351 = vcvt.s32.f32 %v3583
    %v4352 = vcvt.s32.f32 %v3584
    %v4353 = vcvt.s32.f32 %v3585
    %v4354 = vcvt.s32.f32 %v3586
    %v4355 = vcvt.s32.f32 %v3587
    %v4356 = vcvt.s32.f32 %v3588
    %v4357 = vcvt.s32.f32 %v3589
    %v4358 = vcvt.s32.f32 %v3590
    %v4359 = vcvt.s32.f32 %v3591
    %v4360 = vcvt.s32.f32 %v3592
    %v4361 = vcvt.s32.f32 %v3593
    %v4362 = vcvt.s32.f32 %v3594
    %v4363 = vcvt.s32.f32 %v3595
    %v4364 = vcvt.s32.f32 %v3596
    %v4365 = vcvt.s32.f32 %v3597
    %v4366 = vcvt.s32.f32 %v3598
    %v4367 = vcvt.s32.f32 %v3599
    %v4368 = vcvt.s32.f32 %v3600
    %v4369 = vcvt.s32.f32 %v3601
    %v4370 = vcvt.s32.f32 %v3602
    %v4371 = vcvt.s32.f32 %v3603
    %v4372 = vcvt.s32.f32 %v3604
    %v4373 = vcvt.s32.f32 %v3605
    %v4374 = vcvt.s32.f32 %v3606
    %v4375 = vcvt.s32.f32 %v3607
    %v4376 = vcvt.s32.f32 %v3608
    %v4377 = vcvt.s32.f32 %v3609
    %v4378 = vcvt.s32.f32 %v3610
    %v4379 = vcvt.s32.f32 %v3611
    %v4380 = vcvt.s32.f32 %v3612
    %v4381 = vcvt.s32.f32 %v3613
    %v4382 = vcvt.s32.f32 %v3614
    %v4383 = vcvt.s32.f32 %v3615
    %v4384 = vcvt.s32.f32 %v3616
    %v4385 = vcvt.s32.f32 %v3617
    %v4386 = vcvt.s32.f32 %v3618
    %v4387 = vcvt.s32.f32 %v3619
    %v4388 = vcvt.s32.f32 %v3620
    %v4389 = vcvt.s32.f32 %v3621
    %v4390 = vcvt.s32.f32 %v3622
    %v4391 = vcvt.s32.f32 %v3623
    %v4392 = vcvt.s32.f32 %v3624
    %v4393 = vcvt.s32.f32 %v3625
    %v4394 = vcvt.s32.f32 %v3626
    %v4395 = vcvt.s32.f32 %v3627
    %v4396 = vcvt.s32.f32 %v3628
    %v4397 = vcvt.s32.f32 %v3629
    %v4398 = vcvt.s32.f32 %v3630
    %v4399 = vcvt.s32.f32 %v3631
    %v4400 = vcvt.s32.f32 %v3632
    %v4401 = vcvt.s32.f32 %v3633
    %v4402 = vcvt.s32.f32 %v3634
    %v4403 = vcvt.s32.f32 %v3635
    %v4404 = vcvt.s32.f32 %v3636
    %v4405 = vcvt.s32.f32 %v3637
    %v4406 = vcvt.s32.f32 %v3638
    %v4407 = vcvt.s32.f32 %v3639
    %v4408 = vcvt.s32.f32 %v3640
    %v4409 = vcvt.s32.f32 %v3641
    %v4410 = vcvt.s32.f32 %v3642
    %v4411 = vcvt.s32.f32 %v3643
    %v4412 = vcvt.s32.f32 %v3644
    %v4413 = vcvt.s32.f32 %v3645
    %v4414 = vcvt.s32.f32 %v3646
    %v4415 = vcvt.s32.f32 %v3647
    %v4416 = vcvt.s32.f32 %v3648
    %v4417 = vcvt.s32.f32 %v3649
    %v4418 = vcvt.s32.f32 %v3650
    %v4419 = vcvt.s32.f32 %v3651
    %v4420 = vcvt.s32.f32 %v3652
    %v4421 = vcvt.s32.f32 %v3653
    %v4422 = vcvt.s32.f32 %v3654
    %v4423 = vcvt.s32.f32 %v3655
    %v4424 = vcvt.s32.f32 %v3656
    %v4425 = vcvt.s32.f32 %v3657
    %v4426 = vcvt.s32.f32 %v3658
    %v4427 = vcvt.s32.f32 %v3659
    %v4428 = vcvt.s32.f32 %v3660
    %v4429 = vcvt.s32.f32 %v3661
    %v4430 = vcvt.s32.f32 %v3662
    %v4431 = vcvt.s32.f32 %v3663
    %v4432 = vcvt.s32.f32 %v3664
    %v4433 = vcvt.s32.f32 %v3665
    %v4434 = vcvt.s32.f32 %v3666
    %v4435 = vcvt.s32.f32 %v3667
    %v4436 = vcvt.s32.f32 %v3668
    %v4437 = vcvt.s32.f32 %v3669
    %v4438 = vcvt.s32.f32 %v3670
    %v4439 = vcvt.s32.f32 %v3671
    %v4440 = vcvt.s32.f32 %v3672
    %v4441 = vcvt.s32.f32 %v3673
    %v4442 = vcvt.s32.f32 %v3674
    %v4443 = vcvt.s32.f32 %v3675
    %v4444 = vcvt.s32.f32 %v3676
    %v4445 = vcvt.s32.f32 %v3677
    %v4446 = vcvt.s32.f32 %v3678
    %v4447 = vcvt.s32.f32 %v3679
    %v4448 = vcvt.s32.f32 %v3680
    %v4449 = vcvt.s32.f32 %v3681
    %v4450 = vcvt.s32.f32 %v3682
    %v4451 = vcvt.s32.f32 %v3683
    %v4452 = vcvt.s32.f32 %v3684
    %v4453 = vcvt.s32.f32 %v3685
    %v4454 = vcvt.s32.f32 %v3686
    %v4455 = vcvt.s32.f32 %v3687
    %v4456 = vcvt.s32.f32 %v3688
    %v4457 = vcvt.s32.f32 %v3689
    %v4458 = vcvt.s32.f32 %v3690
    %v4459 = vcvt.s32.f32 %v3691
    %v4460 = vcvt.s32.f32 %v3692
    %v4461 = vcvt.s32.f32 %v3693
    %v4462 = vcvt.s32.f32 %v3694
    %v4463 = vcvt.s32.f32 %v3695
    %v4464 = vcvt.s32.f32 %v3696
    %v4465 = vcvt.s32.f32 %v3697
    %v4466 = vcvt.s32.f32 %v3698
    %v4467 = vcvt.s32.f32 %v3699
    %v4468 = vcvt.s32.f32 %v3700
    %v4469 = vcvt.s32.f32 %v3701
    %v4470 = vcvt.s32.f32 %v3702
    %v4471 = vcvt.s32.f32 %v3703
    %v4472 = vcvt.s32.f32 %v3704
    %v4473 = vcvt.s32.f32 %v3705
    %v4474 = vcvt.s32.f32 %v3706
    %v4475 = vcvt.s32.f32 %v3707
    %v4476 = vcvt.s32.f32 %v3708
    %v4477 = vcvt.s32.f32 %v3709
    %v4478 = vcvt.s32.f32 %v3710
    %v4479 = vcvt.s32.f32 %v3711
    %v4480 = vcvt.s32.f32 %v3712
    %v4481 = vcvt.s32.f32 %v3713
    %v4482 = vcvt.s32.f32 %v3714
    %v4483 = vcvt.s32.f32 %v3715
    %v4484 = vcvt.s32.f32 %v3716
    %v4485 = vcvt.s32.f32 %v3717
    %v4486 = vcvt.s32.f32 %v3718
    %v4487 = vcvt.s32.f32 %v3719
    %v4488 = vcvt.s32.f32 %v3720
    %v4489 = vcvt.s32.f32 %v3721
    %v4490 = vcvt.s32.f32 %v3722
    %v4491 = vcvt.s32.f32 %v3723
    %v4492 = vcvt.s32.f32 %v3724
    %v4493 = vcvt.s32.f32 %v3725
    %v4494 = vcvt.s32.f32 %v3726
    %v4495 = vcvt.s32.f32 %v3727
    %v4496 = vcvt.s32.f32 %v3728
    %v4497 = vcvt.s32.f32 %v3729
    %v4498 = vcvt.s32.f32 %v3730
    %v4499 = vcvt.s32.f32 %v3731
    %v4500 = vcvt.s32.f32 %v3732
    %v4501 = vcvt.s32.f32 %v3733
    %v4502 = vcvt.s32.f32 %v3734
    %v4503 = vcvt.s32.f32 %v3735
    %v4504 = vcvt.s32.f32 %v3736
    %v4505 = vcvt.s32.f32 %v3737
    %v4506 = vcvt.s32.f32 %v3738
    %v4507 = vcvt.s32.f32 %v3739
    %v4508 = vcvt.s32.f32 %v3740
    %v4509 = vcvt.s32.f32 %v3741
    %v4510 = vcvt.s32.f32 %v3742
    %v4511 = vcvt.s32.f32 %v3743
    %v4512 = vcvt.s32.f32 %v3744
    %v4513 = vcvt.s32.f32 %v3745
    %v4514 = vcvt.s32.f32 %v3746
    %v4515 = vcvt.s32.f32 %v3747
    %v4516 = vcvt.s32.f32 %v3748
    %v4517 = vcvt.s32.f32 %v3749
    %v4518 = vcvt.s32.f32 %v3750
    %v4519 = vcvt.s32.f32 %v3751
    %v4520 = vcvt.s32.f32 %v3752
    %v4521 = vcvt.s32.f32 %v3753
    %v4522 = vcvt.s32.f32 %v3754
    %v4523 = vcvt.s32.f32 %v3755
    %v4524 = vcvt.s32.f32 %v3756
    %v4525 = vcvt.s32.f32 %v3757
    %v4526 = vcvt.s32.f32 %v3758
    %v4527 = vcvt.s32.f32 %v3759
    %v4528 = vcvt.s32.f32 %v3760
    %v4529 = vcvt.s32.f32 %v3761
    %v4530 = vcvt.s32.f32 %v3762
    %v4531 = vcvt.s32.f32 %v3763
    %v4532 = vcvt.s32.f32 %v3764
    %v4533 = vcvt.s32.f32 %v3765
    %v4534 = vcvt.s32.f32 %v3766
    %v4535 = vcvt.s32.f32 %v3767
    %v4536 = vcvt.s32.f32 %v3768
    %v4537 = vcvt.s32.f32 %v3769
    %v4538 = vcvt.s32.f32 %v3770
    %v4539 = vcvt.s32.f32 %v3771
    %v4540 = vcvt.s32.f32 %v3772
    %v4541 = vcvt.s32.f32 %v3773
    %v4542 = vcvt.s32.f32 %v3774
    %v4543 = vcvt.s32.f32 %v3775
    %v4544 = vcvt.s32.f32 %v3776
    %v4545 = vcvt.s32.f32 %v3777
    %v4546 = vcvt.s32.f32 %v3778
    %v4547 = vcvt.s32.f32 %v3779
    %v4548 = vcvt.s32.f32 %v3780
    %v4549 = vcvt.s32.f32 %v3781
    %v4550 = vcvt.s32.f32 %v3782
    %v4551 = vcvt.s32.f32 %v3783
    %v4552 = vcvt.s32.f32 %v3784
    %v4553 = vcvt.s32.f32 %v3785
    %v4554 = vcvt.s32.f32 %v3786
    %v4555 = vcvt.s32.f32 %v3787
    %v4556 = vcvt.s32.f32 %v3788
    %v4557 = vcvt.s32.f32 %v3789
    %v4558 = vcvt.s32.f32 %v3790
    %v4559 = vcvt.s32.f32 %v3791
    %v4560 = vcvt.s32.f32 %v3792
    %v4561 = vcvt.s32.f32 %v3793
    %v4562 = vcvt.s32.f32 %v3794
    %v4563 = vcvt.s32.f32 %v3795
    %v4564 = vcvt.s32.f32 %v3796
    %v4565 = vcvt.s32.f32 %v3797
    %v4566 = vcvt.s32.f32 %v3798
    %v4567 = vcvt.s32.f32 %v3799
    %v4568 = vcvt.s32.f32 %v3800
    %v4569 = vcvt.s32.f32 %v3801
    %v4570 = vcvt.s32.f32 %v3802
    %v4571 = vcvt.s32.f32 %v3803
    %v4572 = vcvt.s32.f32 %v3804
    %v4573 = vcvt.s32.f32 %v3805
    %v4574 = vcvt.s32.f32 %v3806
    %v4575 = vcvt.s32.f32 %v3807
    %v4576 = vcvt.s32.f32 %v3808
    %v4577 = vcvt.s32.f32 %v3809
    %v4578 = vcvt.s32.f32 %v3810
    %v4579 = vcvt.s32.f32 %v3811
    %v4580 = vcvt.s32.f32 %v3812
    %v4581 = vcvt.s32.f32 %v3813
    %v4582 = vcvt.s32.f32 %v3814
    %v4583 = vcvt.s32.f32 %v3815
    %v4584 = vcvt.s32.f32 %v3816
    %v4585 = vcvt.s32.f32 %v3817
    %v4586 = vcvt.s32.f32 %v3818
    %v4587 = vcvt.s32.f32 %v3819
    %v4588 = vcvt.s32.f32 %v3820
    %v4589 = vcvt.s32.f32 %v3821
    %v4590 = vcvt.s32.f32 %v3822
    %v4591 = vcvt.s32.f32 %v3823
    %v4592 = vcvt.s32.f32 %v3824
    %v4593 = vcvt.s32.f32 %v3825
    %v4594 = vcvt.s32.f32 %v3826
    %v4595 = vcvt.s32.f32 %v3827
    %v4596 = vcvt.s32.f32 %v3828
    %v4597 = vcvt.s32.f32 %v3829
    %v4598 = vcvt.s32.f32 %v3830
    %v4599 = vcvt.s32.f32 %v3831
    %v4600 = vcvt.s32.f32 %v3832
    %v4601 = vcvt.s32.f32 %v3833
    %v4602 = vcvt.s32.f32 %v3834
    %v4603 = vcvt.s32.f32 %v3835
    %v4604 = vcvt.s32.f32 %v3836
    %v4605 = vcvt.s32.f32 %v3837
    %v4606 = vcvt.s32.f32 %v3838
    %v4607 = vcvt.s32.f32 %v3839
    %v4608 = vcvt.s32.f32 %v3840
    %v4609 = vcvt.s32.f32 %v3841
    %v4610 = vcvt.s32.f32 %v3842
    %v4611 = vcvt.s32.f32 %v3843
    %v4612 = vcvt.s32.f32 %v3844
    %v4613 = vcvt.s32.f32 %v3845
    %v4614 = vcvt.s32.f32 %v3846
    %v4615 = vcvt.s32.f32 %v3847
    %v4616 = vcvt.s32.f32 %v3848
    %v4617 = vcvt.s32.f32 %v3849
    %v4618 = vcvt.s32.f32 %v3850
    %v4619 = vcvt.s32.f32 %v3851
    %v4620 = vcvt.s32.f32 %v3852
    %v4621 = vcvt.s32.f32 %v3853
    %v4622 = vcvt.s32.f32 %v3854
    %v4623 = vcvt.s32.f32 %v3855
    %v4624 = vcvt.s32.f32 %v3856
    %v4625 = vcvt.s32.f32 %v3857
    %v4626 = vcvt.s32.f32 %v3858
    %v4627 = vcvt.s32.f32 %v3859
    %v4628 = vcvt.s32.f32 %v3860
    %v4629 = vcvt.s32.f32 %v3861
    %v4630 = vcvt.s32.f32 %v3862
    %v4631 = vcvt.s32.f32 %v3863
    %v4632 = vcvt.s32.f32 %v3864
    %v4633 = vcvt.s32.f32 %v3865
    %v4634 = vcvt.s32.f32 %v3866
    %v4635 = vcvt.s32.f32 %v3867
    %v4636 = vcvt.s32.f32 %v3868
    %v4637 = vcvt.s32.f32 %v3869
    %v4638 = vcvt.s32.f32 %v3870
    %v4639 = vcvt.s32.f32 %v3871
    %v4640 = vcvt.s32.f32 %v3872
    %v4641 = vcvt.s32.f32 %v3873
    %v4642 = vcvt.s32.f32 %v3874
    %v4643 = vcvt.s32.f32 %v3875
    %v4644 = vcvt.s32.f32 %v3876
    %v4645 = vcvt.s32.f32 %v3877
    %v4646 = vcvt.s32.f32 %v3878
    %v4647 = vcvt.s32.f32 %v3879
    %v4648 = vcvt.s32.f32 %v3880
    %v4649 = vcvt.s32.f32 %v3881
    %v4650 = vcvt.s32.f32 %v3882
    %v4651 = vcvt.s32.f32 %v3883
    %v4652 = vcvt.s32.f32 %v3884
    %v4653 = vcvt.s32.f32 %v3885
    %v4654 = vcvt.s32.f32 %v3886
    %v4655 = vcvt.s32.f32 %v3887
    %v4656 = vcvt.s32.f32 %v3888
    %v4657 = vcvt.s32.f32 %v3889
    %v4658 = vcvt.s32.f32 %v3890
    %v4659 = vcvt.s32.f32 %v3891
    %v4660 = vcvt.s32.f32 %v3892
    %v4661 = vcvt.s32.f32 %v3893
    %v4662 = vcvt.s32.f32 %v3894
    %v4663 = vcvt.s32.f32 %v3895
    %v4664 = vcvt.s32.f32 %v3896
    %v4665 = vcvt.s32.f32 %v3897
    %v4666 = vcvt.s32.f32 %v3898
    %v4667 = vcvt.s32.f32 %v3899
    %v4668 = vcvt.s32.f32 %v3900
    %v4669 = vcvt.s32.f32 %v3901
    %v4670 = vcvt.s32.f32 %v3902
    %v4671 = vcvt.s32.f32 %v3903
    %v4672 = vcvt.s32.f32 %v3904
    %v4673 = vcvt.s32.f32 %v3905
    %v4674 = vcvt.s32.f32 %v3906
    %v4675 = vcvt.s32.f32 %v3907
    %v4676 = vcvt.s32.f32 %v3908
    %v4677 = vcvt.s32.f32 %v3909
    %v4678 = vcvt.s32.f32 %v3910
    %v4679 = vcvt.s32.f32 %v3911
    %v4680 = vcvt.s32.f32 %v3912
    %v4681 = vcvt.s32.f32 %v3913
    %v4682 = vcvt.s32.f32 %v3914
    %v4683 = vcvt.s32.f32 %v3915
    %v4684 = vcvt.s32.f32 %v3916
    %v4685 = vcvt.s32.f32 %v3917
    %v4686 = vcvt.s32.f32 %v3918
    %v4687 = vcvt.s32.f32 %v3919
    %v4688 = vcvt.s32.f32 %v3920
    %v4689 = vcvt.s32.f32 %v3921
    %v4690 = vcvt.s32.f32 %v3922
    %v4691 = vcvt.s32.f32 %v3923
    %v4692 = vcvt.s32.f32 %v3924
    %v4693 = vcvt.s32.f32 %v3925
    %v4694 = vcvt.s32.f32 %v3926
    %v4695 = vcvt.s32.f32 %v3927
    %v4696 = vcvt.s32.f32 %v3928
    %v4697 = vcvt.s32.f32 %v3929
    %v4698 = vcvt.s32.f32 %v3930
    %v4699 = vcvt.s32.f32 %v3931
    %v4700 = vcvt.s32.f32 %v3932
    %v4701 = vcvt.s32.f32 %v3933
    %v4702 = vcvt.s32.f32 %v3934
    %v4703 = vcvt.s32.f32 %v3935
    %v4704 = vcvt.s32.f32 %v3936
    %v4705 = vcvt.s32.f32 %v3937
    %v4706 = vcvt.s32.f32 %v3938
    %v4707 = vcvt.s32.f32 %v3939
    %v4708 = vcvt.s32.f32 %v3940
    %v4709 = vcvt.s32.f32 %v3941
    %v4710 = vcvt.s32.f32 %v3942
    %v4711 = vcvt.s32.f32 %v3943
    %v4712 = vcvt.s32.f32 %v3944
    %v4713 = vcvt.s32.f32 %v3945
    %v4714 = vcvt.s32.f32 %v3946
    %v4715 = vcvt.s32.f32 %v3947
    %v4716 = vcvt.s32.f32 %v3948
    %v4717 = vcvt.s32.f32 %v3949
    %v4718 = vcvt.s32.f32 %v3950
    %v4719 = vcvt.s32.f32 %v3951
    %v4720 = vcvt.s32.f32 %v3952
    %v4721 = vcvt.s32.f32 %v3953
    %v4722 = vcvt.s32.f32 %v3954
    %v4723 = vcvt.s32.f32 %v3955
    %v4724 = vcvt.s32.f32 %v3956
    %v4725 = vcvt.s32.f32 %v3957
    %v4726 = vcvt.s32.f32 %v3958
    %v4727 = vcvt.s32.f32 %v3959
    %v4728 = vcvt.s32.f32 %v3960
    %v4729 = vcvt.s32.f32 %v3961
    %v4730 = vcvt.s32.f32 %v3962
    %v4731 = vcvt.s32.f32 %v3963
    %v4732 = vcvt.s32.f32 %v3964
    %v4733 = vcvt.s32.f32 %v3965
    %v4734 = vcvt.s32.f32 %v3966
    %v4735 = vcvt.s32.f32 %v3967
    %v4736 = vcvt.s32.f32 %v3968
    %v4737 = vcvt.s32.f32 %v3969
    %v4738 = vcvt.s32.f32 %v3970
    %v4739 = vcvt.s32.f32 %v3971
    %v4740 = vcvt.s32.f32 %v3972
    %v4741 = vcvt.s32.f32 %v3973
    %v4742 = vcvt.s32.f32 %v3974
    %v4743 = vcvt.s32.f32 %v3975
    %v4744 = vcvt.s32.f32 %v3976
    %v4745 = vcvt.s32.f32 %v3977
    %v4746 = vcvt.s32.f32 %v3978
    %v4747 = vcvt.s32.f32 %v3979
    %v4748 = vcvt.s32.f32 %v3980
    %v4749 = vcvt.s32.f32 %v3981
    %v4750 = vcvt.s32.f32 %v3982
    %v4751 = vcvt.s32.f32 %v3983
    %v4752 = vcvt.s32.f32 %v3984
    %v4753 = vcvt.s32.f32 %v3985
    %v4754 = vcvt.s32.f32 %v3986
    %v4755 = vcvt.s32.f32 %v3987
    %v4756 = vcvt.s32.f32 %v3988
    %v4757 = vcvt.s32.f32 %v3989
    %v4758 = vcvt.s32.f32 %v3990
    %v4759 = vcvt.s32.f32 %v3991
    %v4760 = vcvt.s32.f32 %v3992
    %v4761 = vcvt.s32.f32 %v3993
    %v4762 = vcvt.s32.f32 %v3994
    %v4763 = vcvt.s32.f32 %v3995
    %v4764 = vcvt.s32.f32 %v3996
    %v4765 = vcvt.s32.f32 %v3997
    %v4766 = vcvt.s32.f32 %v3998
    %v4767 = vcvt.s32.f32 %v3999
    %v4768 = vcvt.s32.f32 %v4000
    %v4769 = vcvt.s32.f32 %v4001
    %v4770 = vcvt.s32.f32 %v4002
    %v4771 = vcvt.s32.f32 %v4003
    %v4772 = vcvt.s32.f32 %v4004
    %v4773 = vcvt.s32.f32 %v4005
    %v4774 = vcvt.s32.f32 %v4006
    %v4775 = vcvt.s32.f32 %v4007
    %v4776 = vcvt.s32.f32 %v4008
    %v4777 = vcvt.s32.f32 %v4009
    %v4778 = vcvt.s32.f32 %v4010
    %v4779 = vcvt.s32.f32 %v4011
    %v4780 = vcvt.s32.f32 %v4012
    %v4781 = vcvt.s32.f32 %v4013
    %v4782 = vcvt.s32.f32 %v4014
    %v4783 = vcvt.s32.f32 %v4015
    %v4784 = vcvt.s32.f32 %v4016
    %v4785 = vcvt.s32.f32 %v4017
    %v4786 = vcvt.s32.f32 %v4018
    %v4787 = vcvt.s32.f32 %v4019
    %v4788 = vcvt.s32.f32 %v4020
    %v4789 = vcvt.s32.f32 %v4021
    %v4790 = vcvt.s32.f32 %v4022
    %v4791 = vcvt.s32.f32 %v4023
    %v4792 = vcvt.s32.f32 %v4024
    %v4793 = vcvt.s32.f32 %v4025
    %v4794 = vcvt.s32.f32 %v4026
    %v4795 = vcvt.s32.f32 %v4027
    %v4796 = vcvt.s32.f32 %v4028
    %v4797 = vcvt.s32.f32 %v4029
    %v4798 = vcvt.s32.f32 %v4030
    %v4799 = vcvt.s32.f32 %v4031
    %v4800 = vcvt.s32.f32 %v4032
    %v4801 = vcvt.s32.f32 %v4033
    %v4802 = vcvt.s32.f32 %v4034
    %v4803 = vcvt.s32.f32 %v4035
    %v4804 = vcvt.s32.f32 %v4036
    %v4805 = vcvt.s32.f32 %v4037
    %v4806 = vcvt.s32.f32 %v4038
    %v4807 = vcvt.s32.f32 %v4039
    %v4808 = vcvt.s32.f32 %v4040
    %v4809 = vcvt.s32.f32 %v4041
    %v4810 = vcvt.s32.f32 %v4042
    %v4811 = vcvt.s32.f32 %v4043
    %v4812 = vcvt.s32.f32 %v4044
    %v4813 = vcvt.s32.f32 %v4045
    %v4814 = vcvt.s32.f32 %v4046
    %v4815 = vcvt.s32.f32 %v4047
    %v4816 = vcvt.s32.f32 %v4048
    %v4817 = vcvt.s32.f32 %v4049
    %v4818 = vcvt.s32.f32 %v4050
    %v4819 = vcvt.s32.f32 %v4051
    %v4820 = vcvt.s32.f32 %v4052
    %v4821 = vcvt.s32.f32 %v4053
    %v4822 = vcvt.s32.f32 %v4054
    %v4823 = vcvt.s32.f32 %v4055
    %v4824 = vcvt.s32.f32 %v4056
    %v4825 = vcvt.s32.f32 %v4057
    %v4826 = vcvt.s32.f32 %v4058
    %v4827 = vcvt.s32.f32 %v4059
    %v4828 = vcvt.s32.f32 %v4060
    %v4829 = vcvt.s32.f32 %v4061
    %v4830 = vcvt.s32.f32 %v4062
    %v4831 = vcvt.s32.f32 %v4063
    %v4832 = vcvt.s32.f32 %v4064
    %v4833 = vcvt.s32.f32 %v4065
    %v4834 = vcvt.s32.f32 %v4066
    %v4835 = vcvt.s32.f32 %v4067
    %v4836 = vcvt.s32.f32 %v4068
    %v4837 = vcvt.s32.f32 %v4069
    %v4838 = vcvt.s32.f32 %v4070
    %v4839 = vcvt.s32.f32 %v4071
    %v4840 = vcvt.s32.f32 %v4072
    %v4841 = vcvt.s32.f32 %v4073
    %v4842 = vcvt.s32.f32 %v4074
    %v4843 = vcvt.s32.f32 %v4075
    %v4844 = vcvt.s32.f32 %v4076
    %v4845 = vpack.c.bf16 %v4085, %v4077
    %v4846 = vpack.c.bf16 %v4086, %v4078
    %v4847 = vpack.c.bf16 %v4087, %v4079
    %v4848 = vpack.c.bf16 %v4088, %v4080
    %v4849 = vpack.c.bf16 %v4089, %v4081
    %v4850 = vpack.c.bf16 %v4090, %v4082
    %v4851 = vpack.c.bf16 %v4091, %v4083
    %v4852 = vpack.c.bf16 %v4092, %v4084
    %v4853 = vpack.c.bf16 %v4101, %v4093
    %v4854 = vpack.c.bf16 %v4102, %v4094
    %v4855 = vpack.c.bf16 %v4103, %v4095
    %v4856 = vpack.c.bf16 %v4104, %v4096
    %v4857 = vpack.c.bf16 %v4105, %v4097
    %v4858 = vpack.c.bf16 %v4106, %v4098
    %v4859 = vpack.c.bf16 %v4107, %v4099
    %v4860 = vpack.c.bf16 %v4108, %v4100
    %v4861 = vpack.c.bf16 %v4117, %v4109
    %v4862 = vpack.c.bf16 %v4118, %v4110
    %v4863 = vpack.c.bf16 %v4119, %v4111
    %v4864 = vpack.c.bf16 %v4120, %v4112
    %v4865 = vpack.c.bf16 %v4121, %v4113
    %v4866 = vpack.c.bf16 %v4122, %v4114
    %v4867 = vpack.c.bf16 %v4123, %v4115
    %v4868 = vpack.c.bf16 %v4124, %v4116
    %v4869 = vpack.c.bf16 %v4133, %v4125
    %v4870 = vpack.c.bf16 %v4134, %v4126
    %v4871 = vpack.c.bf16 %v4135, %v4127
    %v4872 = vpack.c.bf16 %v4136, %v4128
    %v4873 = vpack.c.bf16 %v4137, %v4129
    %v4874 = vpack.c.bf16 %v4138, %v4130
    %v4875 = vpack.c.bf16 %v4139, %v4131
    %v4876 = vpack.c.bf16 %v4140, %v4132
    %v4877 = vpack.c.bf16 %v4149, %v4141
    %v4878 = vpack.c.bf16 %v4150, %v4142
    %v4879 = vpack.c.bf16 %v4151, %v4143
    %v4880 = vpack.c.bf16 %v4152, %v4144
    %v4881 = vpack.c.bf16 %v4153, %v4145
    %v4882 = vpack.c.bf16 %v4154, %v4146
    %v4883 = vpack.c.bf16 %v4155, %v4147
    %v4884 = vpack.c.bf16 %v4156, %v4148
    %v4885 = vpack.c.bf16 %v4165, %v4157
    %v4886 = vpack.c.bf16 %v4166, %v4158
    %v4887 = vpack.c.bf16 %v4167, %v4159
    %v4888 = vpack.c.bf16 %v4168, %v4160
    %v4889 = vpack.c.bf16 %v4169, %v4161
    %v4890 = vpack.c.bf16 %v4170, %v4162
    %v4891 = vpack.c.bf16 %v4171, %v4163
    %v4892 = vpack.c.bf16 %v4172, %v4164
    %v4893 = vpack.c.bf16 %v4181, %v4173
    %v4894 = vpack.c.bf16 %v4182, %v4174
    %v4895 = vpack.c.bf16 %v4183, %v4175
    %v4896 = vpack.c.bf16 %v4184, %v4176
    %v4897 = vpack.c.bf16 %v4185, %v4177
    %v4898 = vpack.c.bf16 %v4186, %v4178
    %v4899 = vpack.c.bf16 %v4187, %v4179
    %v4900 = vpack.c.bf16 %v4188, %v4180
    %v4901 = vpack.c.bf16 %v4197, %v4189
    %v4902 = vpack.c.bf16 %v4198, %v4190
    %v4903 = vpack.c.bf16 %v4199, %v4191
    %v4904 = vpack.c.bf16 %v4200, %v4192
    %v4905 = vpack.c.bf16 %v4201, %v4193
    %v4906 = vpack.c.bf16 %v4202, %v4194
    %v4907 = vpack.c.bf16 %v4203, %v4195
    %v4908 = vpack.c.bf16 %v4204, %v4196
    %v4909 = vpack.c.bf16 %v4213, %v4205
    %v4910 = vpack.c.bf16 %v4214, %v4206
    %v4911 = vpack.c.bf16 %v4215, %v4207
    %v4912 = vpack.c.bf16 %v4216, %v4208
    %v4913 = vpack.c.bf16 %v4217, %v4209
    %v4914 = vpack.c.bf16 %v4218, %v4210
    %v4915 = vpack.c.bf16 %v4219, %v4211
    %v4916 = vpack.c.bf16 %v4220, %v4212
    %v4917 = vpack.c.bf16 %v4229, %v4221
    %v4918 = vpack.c.bf16 %v4230, %v4222
    %v4919 = vpack.c.bf16 %v4231, %v4223
    %v4920 = vpack.c.bf16 %v4232, %v4224
    %v4921 = vpack.c.bf16 %v4233, %v4225
    %v4922 = vpack.c.bf16 %v4234, %v4226
    %v4923 = vpack.c.bf16 %v4235, %v4227
    %v4924 = vpack.c.bf16 %v4236, %v4228
    %v4925 = vpack.c.bf16 %v4245, %v4237
    %v4926 = vpack.c.bf16 %v4246, %v4238
    %v4927 = vpack.c.bf16 %v4247, %v4239
    %v4928 = vpack.c.bf16 %v4248, %v4240
    %v4929 = vpack.c.bf16 %v4249, %v4241
    %v4930 = vpack.c.bf16 %v4250, %v4242
    %v4931 = vpack.c.bf16 %v4251, %v4243
    %v4932 = vpack.c.bf16 %v4252, %v4244
    %v4933 = vpack.c.bf16 %v4261, %v4253
    %v4934 = vpack.c.bf16 %v4262, %v4254
    %v4935 = vpack.c.bf16 %v4263, %v4255
    %v4936 = vpack.c.bf16 %v4264, %v4256
    %v4937 = vpack.c.bf16 %v4265, %v4257
    %v4938 = vpack.c.bf16 %v4266, %v4258
    %v4939 = vpack.c.bf16 %v4267, %v4259
    %v4940 = vpack.c.bf16 %v4268, %v4260
    %v4941 = vpack.c.bf16 %v4277, %v4269
    %v4942 = vpack.c.bf16 %v4278, %v4270
    %v4943 = vpack.c.bf16 %v4279, %v4271
    %v4944 = vpack.c.bf16 %v4280, %v4272
    %v4945 = vpack.c.bf16 %v4281, %v4273
    %v4946 = vpack.c.bf16 %v4282, %v4274
    %v4947 = vpack.c.bf16 %v4283, %v4275
    %v4948 = vpack.c.bf16 %v4284, %v4276
    %v4949 = vpack.c.bf16 %v4293, %v4285
    %v4950 = vpack.c.bf16 %v4294, %v4286
    %v4951 = vpack.c.bf16 %v4295, %v4287
    %v4952 = vpack.c.bf16 %v4296, %v4288
    %v4953 = vpack.c.bf16 %v4297, %v4289
    %v4954 = vpack.c.bf16 %v4298, %v4290
    %v4955 = vpack.c.bf16 %v4299, %v4291
    %v4956 = vpack.c.bf16 %v4300, %v4292
    %v4957 = vpack.c.bf16 %v4309, %v4301
    %v4958 = vpack.c.bf16 %v4310, %v4302
    %v4959 = vpack.c.bf16 %v4311, %v4303
    %v4960 = vpack.c.bf16 %v4312, %v4304
    %v4961 = vpack.c.bf16 %v4313, %v4305
    %v4962 = vpack.c.bf16 %v4314, %v4306
    %v4963 = vpack.c.bf16 %v4315, %v4307
    %v4964 = vpack.c.bf16 %v4316, %v4308
    %v4965 = vpack.c.bf16 %v4325, %v4317
    %v4966 = vpack.c.bf16 %v4326, %v4318
    %v4967 = vpack.c.bf16 %v4327, %v4319
    %v4968 = vpack.c.bf16 %v4328, %v4320
    %v4969 = vpack.c.bf16 %v4329, %v4321
    %v4970 = vpack.c.bf16 %v4330, %v4322
    %v4971 = vpack.c.bf16 %v4331, %v4323
    %v4972 = vpack.c.bf16 %v4332, %v4324
    %v4973 = vpack.c.bf16 %v4341, %v4333
    %v4974 = vpack.c.bf16 %v4342, %v4334
    %v4975 = vpack.c.bf16 %v4343, %v4335
    %v4976 = vpack.c.bf16 %v4344, %v4336
    %v4977 = vpack.c.bf16 %v4345, %v4337
    %v4978 = vpack.c.bf16 %v4346, %v4338
    %v4979 = vpack.c.bf16 %v4347, %v4339
    %v4980 = vpack.c.bf16 %v4348, %v4340
    %v4981 = vpack.c.bf16 %v4357, %v4349
    %v4982 = vpack.c.bf16 %v4358, %v4350
    %v4983 = vpack.c.bf16 %v4359, %v4351
    %v4984 = vpack.c.bf16 %v4360, %v4352
    %v4985 = vpack.c.bf16 %v4361, %v4353
    %v4986 = vpack.c.bf16 %v4362, %v4354
    %v4987 = vpack.c.bf16 %v4363, %v4355
    %v4988 = vpack.c.bf16 %v4364, %v4356
    %v4989 = vpack.c.bf16 %v4373, %v4365
    %v4990 = vpack.c.bf16 %v4374, %v4366
    %v4991 = vpack.c.bf16 %v4375, %v4367
    %v4992 = vpack.c.bf16 %v4376, %v4368
    %v4993 = vpack.c.bf16 %v4377, %v4369
    %v4994 = vpack.c.bf16 %v4378, %v4370
    %v4995 = vpack.c.bf16 %v4379, %v4371
    %v4996 = vpack.c.bf16 %v4380, %v4372
    %v4997 = vpack.c.bf16 %v4389, %v4381
    %v4998 = vpack.c.bf16 %v4390, %v4382
    %v4999 = vpack.c.bf16 %v4391, %v4383
    %v5000 = vpack.c.bf16 %v4392, %v4384
    %v5001 = vpack.c.bf16 %v4393, %v4385
    %v5002 = vpack.c.bf16 %v4394, %v4386
    %v5003 = vpack.c.bf16 %v4395, %v4387
    %v5004 = vpack.c.bf16 %v4396, %v4388
    %v5005 = vpack.c.bf16 %v4405, %v4397
    %v5006 = vpack.c.bf16 %v4406, %v4398
    %v5007 = vpack.c.bf16 %v4407, %v4399
    %v5008 = vpack.c.bf16 %v4408, %v4400
    %v5009 = vpack.c.bf16 %v4409, %v4401
    %v5010 = vpack.c.bf16 %v4410, %v4402
    %v5011 = vpack.c.bf16 %v4411, %v4403
    %v5012 = vpack.c.bf16 %v4412, %v4404
    %v5013 = vpack.c.bf16 %v4421, %v4413
    %v5014 = vpack.c.bf16 %v4422, %v4414
    %v5015 = vpack.c.bf16 %v4423, %v4415
    %v5016 = vpack.c.bf16 %v4424, %v4416
    %v5017 = vpack.c.bf16 %v4425, %v4417
    %v5018 = vpack.c.bf16 %v4426, %v4418
    %v5019 = vpack.c.bf16 %v4427, %v4419
    %v5020 = vpack.c.bf16 %v4428, %v4420
    %v5021 = vpack.c.bf16 %v4437, %v4429
    %v5022 = vpack.c.bf16 %v4438, %v4430
    %v5023 = vpack.c.bf16 %v4439, %v4431
    %v5024 = vpack.c.bf16 %v4440, %v4432
    %v5025 = vpack.c.bf16 %v4441, %v4433
    %v5026 = vpack.c.bf16 %v4442, %v4434
    %v5027 = vpack.c.bf16 %v4443, %v4435
    %v5028 = vpack.c.bf16 %v4444, %v4436
    %v5029 = vpack.c.bf16 %v4453, %v4445
    %v5030 = vpack.c.bf16 %v4454, %v4446
    %v5031 = vpack.c.bf16 %v4455, %v4447
    %v5032 = vpack.c.bf16 %v4456, %v4448
    %v5033 = vpack.c.bf16 %v4457, %v4449
    %v5034 = vpack.c.bf16 %v4458, %v4450
    %v5035 = vpack.c.bf16 %v4459, %v4451
    %v5036 = vpack.c.bf16 %v4460, %v4452
    %v5037 = vpack.c.bf16 %v4469, %v4461
    %v5038 = vpack.c.bf16 %v4470, %v4462
    %v5039 = vpack.c.bf16 %v4471, %v4463
    %v5040 = vpack.c.bf16 %v4472, %v4464
    %v5041 = vpack.c.bf16 %v4473, %v4465
    %v5042 = vpack.c.bf16 %v4474, %v4466
    %v5043 = vpack.c.bf16 %v4475, %v4467
    %v5044 = vpack.c.bf16 %v4476, %v4468
    %v5045 = vpack.c.bf16 %v4485, %v4477
    %v5046 = vpack.c.bf16 %v4486, %v4478
    %v5047 = vpack.c.bf16 %v4487, %v4479
    %v5048 = vpack.c.bf16 %v4488, %v4480
    %v5049 = vpack.c.bf16 %v4489, %v4481
    %v5050 = vpack.c.bf16 %v4490, %v4482
    %v5051 = vpack.c.bf16 %v4491, %v4483
    %v5052 = vpack.c.bf16 %v4492, %v4484
    %v5053 = vpack.c.bf16 %v4501, %v4493
    %v5054 = vpack.c.bf16 %v4502, %v4494
    %v5055 = vpack.c.bf16 %v4503, %v4495
    %v5056 = vpack.c.bf16 %v4504, %v4496
    %v5057 = vpack.c.bf16 %v4505, %v4497
    %v5058 = vpack.c.bf16 %v4506, %v4498
    %v5059 = vpack.c.bf16 %v4507, %v4499
    %v5060 = vpack.c.bf16 %v4508, %v4500
    %v5061 = vpack.c.bf16 %v4517, %v4509
    %v5062 = vpack.c.bf16 %v4518, %v4510
    %v5063 = vpack.c.bf16 %v4519, %v4511
    %v5064 = vpack.c.bf16 %v4520, %v4512
    %v5065 = vpack.c.bf16 %v4521, %v4513
    %v5066 = vpack.c.bf16 %v4522, %v4514
    %v5067 = vpack.c.bf16 %v4523, %v4515
    %v5068 = vpack.c.bf16 %v4524, %v4516
    %v5069 = vpack.c.bf16 %v4533, %v4525
    %v5070 = vpack.c.bf16 %v4534, %v4526
    %v5071 = vpack.c.bf16 %v4535, %v4527
    %v5072 = vpack.c.bf16 %v4536, %v4528
    %v5073 = vpack.c.bf16 %v4537, %v4529
    %v5074 = vpack.c.bf16 %v4538, %v4530
    %v5075 = vpack.c.bf16 %v4539, %v4531
    %v5076 = vpack.c.bf16 %v4540, %v4532
    %v5077 = vpack.c.bf16 %v4549, %v4541
    %v5078 = vpack.c.bf16 %v4550, %v4542
    %v5079 = vpack.c.bf16 %v4551, %v4543
    %v5080 = vpack.c.bf16 %v4552, %v4544
    %v5081 = vpack.c.bf16 %v4553, %v4545
    %v5082 = vpack.c.bf16 %v4554, %v4546
    %v5083 = vpack.c.bf16 %v4555, %v4547
    %v5084 = vpack.c.bf16 %v4556, %v4548
    %v5085 = vpack.c.bf16 %v4565, %v4557
    %v5086 = vpack.c.bf16 %v4566, %v4558
    %v5087 = vpack.c.bf16 %v4567, %v4559
    %v5088 = vpack.c.bf16 %v4568, %v4560
    %v5089 = vpack.c.bf16 %v4569, %v4561
    %v5090 = vpack.c.bf16 %v4570, %v4562
    %v5091 = vpack.c.bf16 %v4571, %v4563
    %v5092 = vpack.c.bf16 %v4572, %v4564
    %v5093 = vpack.c.bf16 %v4581, %v4573
    %v5094 = vpack.c.bf16 %v4582, %v4574
    %v5095 = vpack.c.bf16 %v4583, %v4575
    %v5096 = vpack.c.bf16 %v4584, %v4576
    %v5097 = vpack.c.bf16 %v4585, %v4577
    %v5098 = vpack.c.bf16 %v4586, %v4578
    %v5099 = vpack.c.bf16 %v4587, %v4579
    %v5100 = vpack.c.bf16 %v4588, %v4580
    %v5101 = vpack.c.bf16 %v4597, %v4589
    %v5102 = vpack.c.bf16 %v4598, %v4590
    %v5103 = vpack.c.bf16 %v4599, %v4591
    %v5104 = vpack.c.bf16 %v4600, %v4592
    %v5105 = vpack.c.bf16 %v4601, %v4593
    %v5106 = vpack.c.bf16 %v4602, %v4594
    %v5107 = vpack.c.bf16 %v4603, %v4595
    %v5108 = vpack.c.bf16 %v4604, %v4596
    %v5109 = vpack.c.bf16 %v4613, %v4605
    %v5110 = vpack.c.bf16 %v4614, %v4606
    %v5111 = vpack.c.bf16 %v4615, %v4607
    %v5112 = vpack.c.bf16 %v4616, %v4608
    %v5113 = vpack.c.bf16 %v4617, %v4609
    %v5114 = vpack.c.bf16 %v4618, %v4610
    %v5115 = vpack.c.bf16 %v4619, %v4611
    %v5116 = vpack.c.bf16 %v4620, %v4612
    %v5117 = vpack.c.bf16 %v4629, %v4621
    %v5118 = vpack.c.bf16 %v4630, %v4622
    %v5119 = vpack.c.bf16 %v4631, %v4623
    %v5120 = vpack.c.bf16 %v4632, %v4624
    %v5121 = vpack.c.bf16 %v4633, %v4625
    %v5122 = vpack.c.bf16 %v4634, %v4626
    %v5123 = vpack.c.bf16 %v4635, %v4627
    %v5124 = vpack.c.bf16 %v4636, %v4628
    %v5125 = vpack.c.bf16 %v4645, %v4637
    %v5126 = vpack.c.bf16 %v4646, %v4638
    %v5127 = vpack.c.bf16 %v4647, %v4639
    %v5128 = vpack.c.bf16 %v4648, %v4640
    %v5129 = vpack.c.bf16 %v4649, %v4641
    %v5130 = vpack.c.bf16 %v4650, %v4642
    %v5131 = vpack.c.bf16 %v4651, %v4643
    %v5132 = vpack.c.bf16 %v4652, %v4644
    %v5133 = vpack.c.bf16 %v4661, %v4653
    %v5134 = vpack.c.bf16 %v4662, %v4654
    %v5135 = vpack.c.bf16 %v4663, %v4655
    %v5136 = vpack.c.bf16 %v4664, %v4656
    %v5137 = vpack.c.bf16 %v4665, %v4657
    %v5138 = vpack.c.bf16 %v4666, %v4658
    %v5139 = vpack.c.bf16 %v4667, %v4659
    %v5140 = vpack.c.bf16 %v4668, %v4660
    %v5141 = vpack.c.bf16 %v4677, %v4669
    %v5142 = vpack.c.bf16 %v4678, %v4670
    %v5143 = vpack.c.bf16 %v4679, %v4671
    %v5144 = vpack.c.bf16 %v4680, %v4672
    %v5145 = vpack.c.bf16 %v4681, %v4673
    %v5146 = vpack.c.bf16 %v4682, %v4674
    %v5147 = vpack.c.bf16 %v4683, %v4675
    %v5148 = vpack.c.bf16 %v4684, %v4676
    %v5149 = vpack.c.bf16 %v4693, %v4685
    %v5150 = vpack.c.bf16 %v4694, %v4686
    %v5151 = vpack.c.bf16 %v4695, %v4687
    %v5152 = vpack.c.bf16 %v4696, %v4688
    %v5153 = vpack.c.bf16 %v4697, %v4689
    %v5154 = vpack.c.bf16 %v4698, %v4690
    %v5155 = vpack.c.bf16 %v4699, %v4691
    %v5156 = vpack.c.bf16 %v4700, %v4692
    %v5157 = vpack.c.bf16 %v4709, %v4701
    %v5158 = vpack.c.bf16 %v4710, %v4702
    %v5159 = vpack.c.bf16 %v4711, %v4703
    %v5160 = vpack.c.bf16 %v4712, %v4704
    %v5161 = vpack.c.bf16 %v4713, %v4705
    %v5162 = vpack.c.bf16 %v4714, %v4706
    %v5163 = vpack.c.bf16 %v4715, %v4707
    %v5164 = vpack.c.bf16 %v4716, %v4708
    %v5165 = vpack.c.bf16 %v4725, %v4717
    %v5166 = vpack.c.bf16 %v4726, %v4718
    %v5167 = vpack.c.bf16 %v4727, %v4719
    %v5168 = vpack.c.bf16 %v4728, %v4720
    %v5169 = vpack.c.bf16 %v4729, %v4721
    %v5170 = vpack.c.bf16 %v4730, %v4722
    %v5171 = vpack.c.bf16 %v4731, %v4723
    %v5172 = vpack.c.bf16 %v4732, %v4724
    %v5173 = vpack.c.bf16 %v4741, %v4733
    %v5174 = vpack.c.bf16 %v4742, %v4734
    %v5175 = vpack.c.bf16 %v4743, %v4735
    %v5176 = vpack.c.bf16 %v4744, %v4736
    %v5177 = vpack.c.bf16 %v4745, %v4737
    %v5178 = vpack.c.bf16 %v4746, %v4738
    %v5179 = vpack.c.bf16 %v4747, %v4739
    %v5180 = vpack.c.bf16 %v4748, %v4740
    %v5181 = vpack.c.bf16 %v4757, %v4749
    %v5182 = vpack.c.bf16 %v4758, %v4750
    %v5183 = vpack.c.bf16 %v4759, %v4751
    %v5184 = vpack.c.bf16 %v4760, %v4752
    %v5185 = vpack.c.bf16 %v4761, %v4753
    %v5186 = vpack.c.bf16 %v4762, %v4754
    %v5187 = vpack.c.bf16 %v4763, %v4755
    %v5188 = vpack.c.bf16 %v4764, %v4756
    %v5189 = vpack.c.bf16 %v4773, %v4765
    %v5190 = vpack.c.bf16 %v4774, %v4766
    %v5191 = vpack.c.bf16 %v4775, %v4767
    %v5192 = vpack.c.bf16 %v4776, %v4768
    %v5193 = vpack.c.bf16 %v4777, %v4769
    %v5194 = vpack.c.bf16 %v4778, %v4770
    %v5195 = vpack.c.bf16 %v4779, %v4771
    %v5196 = vpack.c.bf16 %v4780, %v4772
    %v5197 = vpack.c.bf16 %v4789, %v4781
    %v5198 = vpack.c.bf16 %v4790, %v4782
    %v5199 = vpack.c.bf16 %v4791, %v4783
    %v5200 = vpack.c.bf16 %v4792, %v4784
    %v5201 = vpack.c.bf16 %v4793, %v4785
    %v5202 = vpack.c.bf16 %v4794, %v4786
    %v5203 = vpack.c.bf16 %v4795, %v4787
    %v5204 = vpack.c.bf16 %v4796, %v4788
    %v5205 = vpack.c.bf16 %v4805, %v4797
    %v5206 = vpack.c.bf16 %v4806, %v4798
    %v5207 = vpack.c.bf16 %v4807, %v4799
    %v5208 = vpack.c.bf16 %v4808, %v4800
    %v5209 = vpack.c.bf16 %v4809, %v4801
    %v5210 = vpack.c.bf16 %v4810, %v4802
    %v5211 = vpack.c.bf16 %v4811, %v4803
    %v5212 = vpack.c.bf16 %v4812, %v4804
    %v5213 = vpack.c.bf16 %v4821, %v4813
    %v5214 = vpack.c.bf16 %v4822, %v4814
    %v5215 = vpack.c.bf16 %v4823, %v4815
    %v5216 = vpack.c.bf16 %v4824, %v4816
    %v5217 = vpack.c.bf16 %v4825, %v4817
    %v5218 = vpack.c.bf16 %v4826, %v4818
    %v5219 = vpack.c.bf16 %v4827, %v4819
    %v5220 = vpack.c.bf16 %v4828, %v4820
    %v5221 = vpack.c.bf16 %v4837, %v4829
    %v5222 = vpack.c.bf16 %v4838, %v4830
    %v5223 = vpack.c.bf16 %v4839, %v4831
    %v5224 = vpack.c.bf16 %v4840, %v4832
    %v5225 = vpack.c.bf16 %v4841, %v4833
    %v5226 = vpack.c.bf16 %v4842, %v4834
    %v5227 = vpack.c.bf16 %v4843, %v4835
    %v5228 = vpack.c.bf16 %v4844, %v4836
    %v5229 = vpack.c.bf16 %v3303, %v3297
    %v5230 = vpack.c.bf16 %v3304, %v3298
    %v5231 = vpack.c.bf16 %v3305, %v3299
    %v5232 = vpack.c.bf16 %v3306, %v3300
    %v5233 = vpack.c.bf16 %v3307, %v3301
    %v5234 = vpack.c.bf16 %v3308, %v3302
    %5235 = vmatpush.bf16.msra.mxu0 %v4901
    %5236 = vmatpush.bf16.msra.mxu0 %v4893
    %5237 = vmatpush.bf16.msra.mxu0 %v4885
    %5238 = vmatpush.bf16.msra.mxu0 %v4877
    %5239 = vmatpush.bf16.msra.mxu0 %v4869
    %5240 = vmatpush.bf16.msra.mxu0 %v4861
    %5241 = vmatpush.bf16.msra.mxu0 %v4853
    %5242 = vmatpush.bf16.msra.mxu0 %v4845
    %5243 = vmatmul.bf16.gmra.mxu0 %v5229
    %v5244 = vpop.f32.mrf.mxu0
    %v5245 = vadd.f32 0.0, %v5244
    %v5246 = vpop.f32.mrf.mxu0
    %v5247 = vadd.f32 0.0, %v5246
    %5248 = vdwg.mxu0
    %5249 = vmatpush.bf16.msra.mxu0 %v4965
    %5250 = vmatpush.bf16.msra.mxu0 %v4957
    %5251 = vmatpush.bf16.msra.mxu0 %v4949
    %5252 = vmatpush.bf16.msra.mxu0 %v4941
    %5253 = vmatpush.bf16.msra.mxu0 %v4933
    %5254 = vmatpush.bf16.msra.mxu0 %v4925
    %5255 = vmatpush.bf16.msra.mxu0 %v4917
    %5256 = vmatpush.bf16.msra.mxu0 %v4909
    %5257 = vmatmul.bf16.gmra.mxu0 %v5230
    %v5258 = vpop.f32.mrf.mxu0
    %v5259 = vadd.f32 %v5245, %v5258
    %v5260 = vpop.f32.mrf.mxu0
    %v5261 = vadd.f32 %v5247, %v5260
    %5262 = vdwg.mxu0
    %5263 = vmatpush.bf16.msra.mxu0 %v5029
    %5264 = vmatpush.bf16.msra.mxu0 %v5021
    %5265 = vmatpush.bf16.msra.mxu0 %v5013
    %5266 = vmatpush.bf16.msra.mxu0 %v5005
    %5267 = vmatpush.bf16.msra.mxu0 %v4997
    %5268 = vmatpush.bf16.msra.mxu0 %v4989
    %5269 = vmatpush.bf16.msra.mxu0 %v4981
    %5270 = vmatpush.bf16.msra.mxu0 %v4973
    %5271 = vmatmul.bf16.gmra.mxu0 %v5231
    %v5272 = vpop.f32.mrf.mxu0
    %v5273 = vadd.f32 %v5259, %v5272
    %v5274 = vpop.f32.mrf.mxu0
    %v5275 = vadd.f32 %v5261, %v5274
    %5276 = vdwg.mxu0
    %5277 = vmatpush.bf16.msra.mxu0 %v5093
    %5278 = vmatpush.bf16.msra.mxu0 %v5085
    %5279 = vmatpush.bf16.msra.mxu0 %v5077
    %5280 = vmatpush.bf16.msra.mxu0 %v5069
    %5281 = vmatpush.bf16.msra.mxu0 %v5061
    %5282 = vmatpush.bf16.msra.mxu0 %v5053
    %5283 = vmatpush.bf16.msra.mxu0 %v5045
    %5284 = vmatpush.bf16.msra.mxu0 %v5037
    %5285 = vmatmul.bf16.gmra.mxu0 %v5232
    %v5286 = vpop.f32.mrf.mxu0
    %v5287 = vadd.f32 %v5273, %v5286
    %v5288 = vpop.f32.mrf.mxu0
    %v5289 = vadd.f32 %v5275, %v5288
    %5290 = vdwg.mxu0
    %5291 = vmatpush.bf16.msra.mxu0 %v5157
    %5292 = vmatpush.bf16.msra.mxu0 %v5149
    %5293 = vmatpush.bf16.msra.mxu0 %v5141
    %5294 = vmatpush.bf16.msra.mxu0 %v5133
    %5295 = vmatpush.bf16.msra.mxu0 %v5125
    %5296 = vmatpush.bf16.msra.mxu0 %v5117
    %5297 = vmatpush.bf16.msra.mxu0 %v5109
    %5298 = vmatpush.bf16.msra.mxu0 %v5101
    %5299 = vmatmul.bf16.gmra.mxu0 %v5233
    %v5300 = vpop.f32.mrf.mxu0
    %v5301 = vadd.f32 %v5287, %v5300
    %v5302 = vpop.f32.mrf.mxu0
    %v5303 = vadd.f32 %v5289, %v5302
    %5304 = vdwg.mxu0
    %5305 = vmatpush.bf16.msra.mxu0 %v5221
    %5306 = vmatpush.bf16.msra.mxu0 %v5213
    %5307 = vmatpush.bf16.msra.mxu0 %v5205
    %5308 = vmatpush.bf16.msra.mxu0 %v5197
    %5309 = vmatpush.bf16.msra.mxu0 %v5189
    %5310 = vmatpush.bf16.msra.mxu0 %v5181
    %5311 = vmatpush.bf16.msra.mxu0 %v5173
    %5312 = vmatpush.bf16.msra.mxu0 %v5165
    %5313 = vmatmul.bf16.gmra.mxu0 %v5234
    %v5314 = vpop.f32.mrf.mxu0
    %v5315 = vadd.f32 %v5301, %v5314
    %v5316 = vpop.f32.mrf.mxu0
    %v5317 = vadd.f32 %v5303, %v5316
    %5318 = vdwg.mxu0
    %5319 = vmatpush.bf16.msra.mxu0 %v4902
    %5320 = vmatpush.bf16.msra.mxu0 %v4894
    %5321 = vmatpush.bf16.msra.mxu0 %v4886
    %5322 = vmatpush.bf16.msra.mxu0 %v4878
    %5323 = vmatpush.bf16.msra.mxu0 %v4870
    %5324 = vmatpush.bf16.msra.mxu0 %v4862
    %5325 = vmatpush.bf16.msra.mxu0 %v4854
    %5326 = vmatpush.bf16.msra.mxu0 %v4846
    %5327 = vmatmul.bf16.gmra.mxu0 %v5229
    %v5328 = vpop.f32.mrf.mxu0
    %v5329 = vadd.f32 0.0, %v5328
    %v5330 = vpop.f32.mrf.mxu0
    %v5331 = vadd.f32 0.0, %v5330
    %5332 = vdwg.mxu0
    %5333 = vmatpush.bf16.msra.mxu0 %v4966
    %5334 = vmatpush.bf16.msra.mxu0 %v4958
    %5335 = vmatpush.bf16.msra.mxu0 %v4950
    %5336 = vmatpush.bf16.msra.mxu0 %v4942
    %5337 = vmatpush.bf16.msra.mxu0 %v4934
    %5338 = vmatpush.bf16.msra.mxu0 %v4926
    %5339 = vmatpush.bf16.msra.mxu0 %v4918
    %5340 = vmatpush.bf16.msra.mxu0 %v4910
    %5341 = vmatmul.bf16.gmra.mxu0 %v5230
    %v5342 = vpop.f32.mrf.mxu0
    %v5343 = vadd.f32 %v5329, %v5342
    %v5344 = vpop.f32.mrf.mxu0
    %v5345 = vadd.f32 %v5331, %v5344
    %5346 = vdwg.mxu0
    %5347 = vmatpush.bf16.msra.mxu0 %v5030
    %5348 = vmatpush.bf16.msra.mxu0 %v5022
    %5349 = vmatpush.bf16.msra.mxu0 %v5014
    %5350 = vmatpush.bf16.msra.mxu0 %v5006
    %5351 = vmatpush.bf16.msra.mxu0 %v4998
    %5352 = vmatpush.bf16.msra.mxu0 %v4990
    %5353 = vmatpush.bf16.msra.mxu0 %v4982
    %5354 = vmatpush.bf16.msra.mxu0 %v4974
    %5355 = vmatmul.bf16.gmra.mxu0 %v5231
    %v5356 = vpop.f32.mrf.mxu0
    %v5357 = vadd.f32 %v5343, %v5356
    %v5358 = vpop.f32.mrf.mxu0
    %v5359 = vadd.f32 %v5345, %v5358
    %5360 = vdwg.mxu0
    %5361 = vmatpush.bf16.msra.mxu0 %v5094
    %5362 = vmatpush.bf16.msra.mxu0 %v5086
    %5363 = vmatpush.bf16.msra.mxu0 %v5078
    %5364 = vmatpush.bf16.msra.mxu0 %v5070
    %5365 = vmatpush.bf16.msra.mxu0 %v5062
    %5366 = vmatpush.bf16.msra.mxu0 %v5054
    %5367 = vmatpush.bf16.msra.mxu0 %v5046
    %5368 = vmatpush.bf16.msra.mxu0 %v5038
    %5369 = vmatmul.bf16.gmra.mxu0 %v5232
    %v5370 = vpop.f32.mrf.mxu0
    %v5371 = vadd.f32 %v5357, %v5370
    %v5372 = vpop.f32.mrf.mxu0
    %v5373 = vadd.f32 %v5359, %v5372
    %5374 = vdwg.mxu0
    %5375 = vmatpush.bf16.msra.mxu0 %v5158
    %5376 = vmatpush.bf16.msra.mxu0 %v5150
    %5377 = vmatpush.bf16.msra.mxu0 %v5142
    %5378 = vmatpush.bf16.msra.mxu0 %v5134
    %5379 = vmatpush.bf16.msra.mxu0 %v5126
    %5380 = vmatpush.bf16.msra.mxu0 %v5118
    %5381 = vmatpush.bf16.msra.mxu0 %v5110
    %5382 = vmatpush.bf16.msra.mxu0 %v5102
    %5383 = vmatmul.bf16.gmra.mxu0 %v5233
    %v5384 = vpop.f32.mrf.mxu0
    %v5385 = vadd.f32 %v5371, %v5384
    %v5386 = vpop.f32.mrf.mxu0
    %v5387 = vadd.f32 %v5373, %v5386
    %5388 = vdwg.mxu0
    %5389 = vmatpush.bf16.msra.mxu0 %v5222
    %5390 = vmatpush.bf16.msra.mxu0 %v5214
    %5391 = vmatpush.bf16.msra.mxu0 %v5206
    %5392 = vmatpush.bf16.msra.mxu0 %v5198
    %5393 = vmatpush.bf16.msra.mxu0 %v5190
    %5394 = vmatpush.bf16.msra.mxu0 %v5182
    %5395 = vmatpush.bf16.msra.mxu0 %v5174
    %5396 = vmatpush.bf16.msra.mxu0 %v5166
    %5397 = vmatmul.bf16.gmra.mxu0 %v5234
    %v5398 = vpop.f32.mrf.mxu0
    %v5399 = vadd.f32 %v5385, %v5398
    %v5400 = vpop.f32.mrf.mxu0
    %v5401 = vadd.f32 %v5387, %v5400
    %5402 = vdwg.mxu0
    %5403 = vmatpush.bf16.msra.mxu0 %v4903
    %5404 = vmatpush.bf16.msra.mxu0 %v4895
    %5405 = vmatpush.bf16.msra.mxu0 %v4887
    %5406 = vmatpush.bf16.msra.mxu0 %v4879
    %5407 = vmatpush.bf16.msra.mxu0 %v4871
    %5408 = vmatpush.bf16.msra.mxu0 %v4863
    %5409 = vmatpush.bf16.msra.mxu0 %v4855
    %5410 = vmatpush.bf16.msra.mxu0 %v4847
    %5411 = vmatmul.bf16.gmra.mxu0 %v5229
    %v5412 = vpop.f32.mrf.mxu0
    %v5413 = vadd.f32 0.0, %v5412
    %v5414 = vpop.f32.mrf.mxu0
    %v5415 = vadd.f32 0.0, %v5414
    %5416 = vdwg.mxu0
    %5417 = vmatpush.bf16.msra.mxu0 %v4967
    %5418 = vmatpush.bf16.msra.mxu0 %v4959
    %5419 = vmatpush.bf16.msra.mxu0 %v4951
    %5420 = vmatpush.bf16.msra.mxu0 %v4943
    %5421 = vmatpush.bf16.msra.mxu0 %v4935
    %5422 = vmatpush.bf16.msra.mxu0 %v4927
    %5423 = vmatpush.bf16.msra.mxu0 %v4919
    %5424 = vmatpush.bf16.msra.mxu0 %v4911
    %5425 = vmatmul.bf16.gmra.mxu0 %v5230
    %v5426 = vpop.f32.mrf.mxu0
    %v5427 = vadd.f32 %v5413, %v5426
    %v5428 = vpop.f32.mrf.mxu0
    %v5429 = vadd.f32 %v5415, %v5428
    %5430 = vdwg.mxu0
    %5431 = vmatpush.bf16.msra.mxu0 %v5031
    %5432 = vmatpush.bf16.msra.mxu0 %v5023
    %5433 = vmatpush.bf16.msra.mxu0 %v5015
    %5434 = vmatpush.bf16.msra.mxu0 %v5007
    %5435 = vmatpush.bf16.msra.mxu0 %v4999
    %5436 = vmatpush.bf16.msra.mxu0 %v4991
    %5437 = vmatpush.bf16.msra.mxu0 %v4983
    %5438 = vmatpush.bf16.msra.mxu0 %v4975
    %5439 = vmatmul.bf16.gmra.mxu0 %v5231
    %v5440 = vpop.f32.mrf.mxu0
    %v5441 = vadd.f32 %v5427, %v5440
    %v5442 = vpop.f32.mrf.mxu0
    %v5443 = vadd.f32 %v5429, %v5442
    %5444 = vdwg.mxu0
    %5445 = vmatpush.bf16.msra.mxu0 %v5095
    %5446 = vmatpush.bf16.msra.mxu0 %v5087
    %5447 = vmatpush.bf16.msra.mxu0 %v5079
    %5448 = vmatpush.bf16.msra.mxu0 %v5071
    %5449 = vmatpush.bf16.msra.mxu0 %v5063
    %5450 = vmatpush.bf16.msra.mxu0 %v5055
    %5451 = vmatpush.bf16.msra.mxu0 %v5047
    %5452 = vmatpush.bf16.msra.mxu0 %v5039
    %5453 = vmatmul.bf16.gmra.mxu0 %v5232
    %v5454 = vpop.f32.mrf.mxu0
    %v5455 = vadd.f32 %v5441, %v5454
    %v5456 = vpop.f32.mrf.mxu0
    %v5457 = vadd.f32 %v5443, %v5456
    %5458 = vdwg.mxu0
    %5459 = vmatpush.bf16.msra.mxu0 %v5159
    %5460 = vmatpush.bf16.msra.mxu0 %v5151
    %5461 = vmatpush.bf16.msra.mxu0 %v5143
    %5462 = vmatpush.bf16.msra.mxu0 %v5135
    %5463 = vmatpush.bf16.msra.mxu0 %v5127
    %5464 = vmatpush.bf16.msra.mxu0 %v5119
    %5465 = vmatpush.bf16.msra.mxu0 %v5111
    %5466 = vmatpush.bf16.msra.mxu0 %v5103
    %5467 = vmatmul.bf16.gmra.mxu0 %v5233
    %v5468 = vpop.f32.mrf.mxu0
    %v5469 = vadd.f32 %v5455, %v5468
    %v5470 = vpop.f32.mrf.mxu0
    %v5471 = vadd.f32 %v5457, %v5470
    %5472 = vdwg.mxu0
    %5473 = vmatpush.bf16.msra.mxu0 %v5223
    %5474 = vmatpush.bf16.msra.mxu0 %v5215
    %5475 = vmatpush.bf16.msra.mxu0 %v5207
    %5476 = vmatpush.bf16.msra.mxu0 %v5199
    %5477 = vmatpush.bf16.msra.mxu0 %v5191
    %5478 = vmatpush.bf16.msra.mxu0 %v5183
    %5479 = vmatpush.bf16.msra.mxu0 %v5175
    %5480 = vmatpush.bf16.msra.mxu0 %v5167
    %5481 = vmatmul.bf16.gmra.mxu0 %v5234
    %v5482 = vpop.f32.mrf.mxu0
    %v5483 = vadd.f32 %v5469, %v5482
    %v5484 = vpop.f32.mrf.mxu0
    %v5485 = vadd.f32 %v5471, %v5484
    %5486 = vdwg.mxu0
    %5487 = vmatpush.bf16.msra.mxu0 %v4904
    %5488 = vmatpush.bf16.msra.mxu0 %v4896
    %5489 = vmatpush.bf16.msra.mxu0 %v4888
    %5490 = vmatpush.bf16.msra.mxu0 %v4880
    %5491 = vmatpush.bf16.msra.mxu0 %v4872
    %5492 = vmatpush.bf16.msra.mxu0 %v4864
    %5493 = vmatpush.bf16.msra.mxu0 %v4856
    %5494 = vmatpush.bf16.msra.mxu0 %v4848
    %5495 = vmatmul.bf16.gmra.mxu0 %v5229
    %v5496 = vpop.f32.mrf.mxu0
    %v5497 = vadd.f32 0.0, %v5496
    %v5498 = vpop.f32.mrf.mxu0
    %v5499 = vadd.f32 0.0, %v5498
    %5500 = vdwg.mxu0
    %5501 = vmatpush.bf16.msra.mxu0 %v4968
    %5502 = vmatpush.bf16.msra.mxu0 %v4960
    %5503 = vmatpush.bf16.msra.mxu0 %v4952
    %5504 = vmatpush.bf16.msra.mxu0 %v4944
    %5505 = vmatpush.bf16.msra.mxu0 %v4936
    %5506 = vmatpush.bf16.msra.mxu0 %v4928
    %5507 = vmatpush.bf16.msra.mxu0 %v4920
    %5508 = vmatpush.bf16.msra.mxu0 %v4912
    %5509 = vmatmul.bf16.gmra.mxu0 %v5230
    %v5510 = vpop.f32.mrf.mxu0
    %v5511 = vadd.f32 %v5497, %v5510
    %v5512 = vpop.f32.mrf.mxu0
    %v5513 = vadd.f32 %v5499, %v5512
    %5514 = vdwg.mxu0
    %5515 = vmatpush.bf16.msra.mxu0 %v5032
    %5516 = vmatpush.bf16.msra.mxu0 %v5024
    %5517 = vmatpush.bf16.msra.mxu0 %v5016
    %5518 = vmatpush.bf16.msra.mxu0 %v5008
    %5519 = vmatpush.bf16.msra.mxu0 %v5000
    %5520 = vmatpush.bf16.msra.mxu0 %v4992
    %5521 = vmatpush.bf16.msra.mxu0 %v4984
    %5522 = vmatpush.bf16.msra.mxu0 %v4976
    %5523 = vmatmul.bf16.gmra.mxu0 %v5231
    %v5524 = vpop.f32.mrf.mxu0
    %v5525 = vadd.f32 %v5511, %v5524
    %v5526 = vpop.f32.mrf.mxu0
    %v5527 = vadd.f32 %v5513, %v5526
    %5528 = vdwg.mxu0
    %5529 = vmatpush.bf16.msra.mxu0 %v5096
    %5530 = vmatpush.bf16.msra.mxu0 %v5088
    %5531 = vmatpush.bf16.msra.mxu0 %v5080
    %5532 = vmatpush.bf16.msra.mxu0 %v5072
    %5533 = vmatpush.bf16.msra.mxu0 %v5064
    %5534 = vmatpush.bf16.msra.mxu0 %v5056
    %5535 = vmatpush.bf16.msra.mxu0 %v5048
    %5536 = vmatpush.bf16.msra.mxu0 %v5040
    %5537 = vmatmul.bf16.gmra.mxu0 %v5232
    %v5538 = vpop.f32.mrf.mxu0
    %v5539 = vadd.f32 %v5525, %v5538
    %v5540 = vpop.f32.mrf.mxu0
    %v5541 = vadd.f32 %v5527, %v5540
    %5542 = vdwg.mxu0
    %5543 = vmatpush.bf16.msra.mxu0 %v5160
    %5544 = vmatpush.bf16.msra.mxu0 %v5152
    %5545 = vmatpush.bf16.msra.mxu0 %v5144
    %5546 = vmatpush.bf16.msra.mxu0 %v5136
    %5547 = vmatpush.bf16.msra.mxu0 %v5128
    %5548 = vmatpush.bf16.msra.mxu0 %v5120
    %5549 = vmatpush.bf16.msra.mxu0 %v5112
    %5550 = vmatpush.bf16.msra.mxu0 %v5104
    %5551 = vmatmul.bf16.gmra.mxu0 %v5233
    %v5552 = vpop.f32.mrf.mxu0
    %v5553 = vadd.f32 %v5539, %v5552
    %v5554 = vpop.f32.mrf.mxu0
    %v5555 = vadd.f32 %v5541, %v5554
    %5556 = vdwg.mxu0
    %5557 = vmatpush.bf16.msra.mxu0 %v5224
    %5558 = vmatpush.bf16.msra.mxu0 %v5216
    %5559 = vmatpush.bf16.msra.mxu0 %v5208
    %5560 = vmatpush.bf16.msra.mxu0 %v5200
    %5561 = vmatpush.bf16.msra.mxu0 %v5192
    %5562 = vmatpush.bf16.msra.mxu0 %v5184
    %5563 = vmatpush.bf16.msra.mxu0 %v5176
    %5564 = vmatpush.bf16.msra.mxu0 %v5168
    %5565 = vmatmul.bf16.gmra.mxu0 %v5234
    %v5566 = vpop.f32.mrf.mxu0
    %v5567 = vadd.f32 %v5553, %v5566
    %v5568 = vpop.f32.mrf.mxu0
    %v5569 = vadd.f32 %v5555, %v5568
    %5570 = vdwg.mxu0
    %5571 = vmatpush.bf16.msra.mxu0 %v4905
    %5572 = vmatpush.bf16.msra.mxu0 %v4897
    %5573 = vmatpush.bf16.msra.mxu0 %v4889
    %5574 = vmatpush.bf16.msra.mxu0 %v4881
    %5575 = vmatpush.bf16.msra.mxu0 %v4873
    %5576 = vmatpush.bf16.msra.mxu0 %v4865
    %5577 = vmatpush.bf16.msra.mxu0 %v4857
    %5578 = vmatpush.bf16.msra.mxu0 %v4849
    %5579 = vmatmul.bf16.gmra.mxu0 %v5229
    %v5580 = vpop.f32.mrf.mxu0
    %v5581 = vadd.f32 0.0, %v5580
    %v5582 = vpop.f32.mrf.mxu0
    %v5583 = vadd.f32 0.0, %v5582
    %5584 = vdwg.mxu0
    %5585 = vmatpush.bf16.msra.mxu0 %v4969
    %5586 = vmatpush.bf16.msra.mxu0 %v4961
    %5587 = vmatpush.bf16.msra.mxu0 %v4953
    %5588 = vmatpush.bf16.msra.mxu0 %v4945
    %5589 = vmatpush.bf16.msra.mxu0 %v4937
    %5590 = vmatpush.bf16.msra.mxu0 %v4929
    %5591 = vmatpush.bf16.msra.mxu0 %v4921
    %5592 = vmatpush.bf16.msra.mxu0 %v4913
    %5593 = vmatmul.bf16.gmra.mxu0 %v5230
    %v5594 = vpop.f32.mrf.mxu0
    %v5595 = vadd.f32 %v5581, %v5594
    %v5596 = vpop.f32.mrf.mxu0
    %v5597 = vadd.f32 %v5583, %v5596
    %5598 = vdwg.mxu0
    %5599 = vmatpush.bf16.msra.mxu0 %v5033
    %5600 = vmatpush.bf16.msra.mxu0 %v5025
    %5601 = vmatpush.bf16.msra.mxu0 %v5017
    %5602 = vmatpush.bf16.msra.mxu0 %v5009
    %5603 = vmatpush.bf16.msra.mxu0 %v5001
    %5604 = vmatpush.bf16.msra.mxu0 %v4993
    %5605 = vmatpush.bf16.msra.mxu0 %v4985
    %5606 = vmatpush.bf16.msra.mxu0 %v4977
    %5607 = vmatmul.bf16.gmra.mxu0 %v5231
    %v5608 = vpop.f32.mrf.mxu0
    %v5609 = vadd.f32 %v5595, %v5608
    %v5610 = vpop.f32.mrf.mxu0
    %v5611 = vadd.f32 %v5597, %v5610
    %5612 = vdwg.mxu0
    %5613 = vmatpush.bf16.msra.mxu0 %v5097
    %5614 = vmatpush.bf16.msra.mxu0 %v5089
    %5615 = vmatpush.bf16.msra.mxu0 %v5081
    %5616 = vmatpush.bf16.msra.mxu0 %v5073
    %5617 = vmatpush.bf16.msra.mxu0 %v5065
    %5618 = vmatpush.bf16.msra.mxu0 %v5057
    %5619 = vmatpush.bf16.msra.mxu0 %v5049
    %5620 = vmatpush.bf16.msra.mxu0 %v5041
    %5621 = vmatmul.bf16.gmra.mxu0 %v5232
    %v5622 = vpop.f32.mrf.mxu0
    %v5623 = vadd.f32 %v5609, %v5622
    %v5624 = vpop.f32.mrf.mxu0
    %v5625 = vadd.f32 %v5611, %v5624
    %5626 = vdwg.mxu0
    %5627 = vmatpush.bf16.msra.mxu0 %v5161
    %5628 = vmatpush.bf16.msra.mxu0 %v5153
    %5629 = vmatpush.bf16.msra.mxu0 %v5145
    %5630 = vmatpush.bf16.msra.mxu0 %v5137
    %5631 = vmatpush.bf16.msra.mxu0 %v5129
    %5632 = vmatpush.bf16.msra.mxu0 %v5121
    %5633 = vmatpush.bf16.msra.mxu0 %v5113
    %5634 = vmatpush.bf16.msra.mxu0 %v5105
    %5635 = vmatmul.bf16.gmra.mxu0 %v5233
    %v5636 = vpop.f32.mrf.mxu0
    %v5637 = vadd.f32 %v5623, %v5636
    %v5638 = vpop.f32.mrf.mxu0
    %v5639 = vadd.f32 %v5625, %v5638
    %5640 = vdwg.mxu0
    %5641 = vmatpush.bf16.msra.mxu0 %v5225
    %5642 = vmatpush.bf16.msra.mxu0 %v5217
    %5643 = vmatpush.bf16.msra.mxu0 %v5209
    %5644 = vmatpush.bf16.msra.mxu0 %v5201
    %5645 = vmatpush.bf16.msra.mxu0 %v5193
    %5646 = vmatpush.bf16.msra.mxu0 %v5185
    %5647 = vmatpush.bf16.msra.mxu0 %v5177
    %5648 = vmatpush.bf16.msra.mxu0 %v5169
    %5649 = vmatmul.bf16.gmra.mxu0 %v5234
    %v5650 = vpop.f32.mrf.mxu0
    %v5651 = vadd.f32 %v5637, %v5650
    %v5652 = vpop.f32.mrf.mxu0
    %v5653 = vadd.f32 %v5639, %v5652
    %5654 = vdwg.mxu0
    %5655 = vmatpush.bf16.msra.mxu0 %v4906
    %5656 = vmatpush.bf16.msra.mxu0 %v4898
    %5657 = vmatpush.bf16.msra.mxu0 %v4890
    %5658 = vmatpush.bf16.msra.mxu0 %v4882
    %5659 = vmatpush.bf16.msra.mxu0 %v4874
    %5660 = vmatpush.bf16.msra.mxu0 %v4866
    %5661 = vmatpush.bf16.msra.mxu0 %v4858
    %5662 = vmatpush.bf16.msra.mxu0 %v4850
    %5663 = vmatmul.bf16.gmra.mxu0 %v5229
    %v5664 = vpop.f32.mrf.mxu0
    %v5665 = vadd.f32 0.0, %v5664
    %v5666 = vpop.f32.mrf.mxu0
    %v5667 = vadd.f32 0.0, %v5666
    %5668 = vdwg.mxu0
    %5669 = vmatpush.bf16.msra.mxu0 %v4970
    %5670 = vmatpush.bf16.msra.mxu0 %v4962
    %5671 = vmatpush.bf16.msra.mxu0 %v4954
    %5672 = vmatpush.bf16.msra.mxu0 %v4946
    %5673 = vmatpush.bf16.msra.mxu0 %v4938
    %5674 = vmatpush.bf16.msra.mxu0 %v4930
    %5675 = vmatpush.bf16.msra.mxu0 %v4922
    %5676 = vmatpush.bf16.msra.mxu0 %v4914
    %5677 = vmatmul.bf16.gmra.mxu0 %v5230
    %v5678 = vpop.f32.mrf.mxu0
    %v5679 = vadd.f32 %v5665, %v5678
    %v5680 = vpop.f32.mrf.mxu0
    %v5681 = vadd.f32 %v5667, %v5680
    %5682 = vdwg.mxu0
    %5683 = vmatpush.bf16.msra.mxu0 %v5034
    %5684 = vmatpush.bf16.msra.mxu0 %v5026
    %5685 = vmatpush.bf16.msra.mxu0 %v5018
    %5686 = vmatpush.bf16.msra.mxu0 %v5010
    %5687 = vmatpush.bf16.msra.mxu0 %v5002
    %5688 = vmatpush.bf16.msra.mxu0 %v4994
    %5689 = vmatpush.bf16.msra.mxu0 %v4986
    %5690 = vmatpush.bf16.msra.mxu0 %v4978
    %5691 = vmatmul.bf16.gmra.mxu0 %v5231
    %v5692 = vpop.f32.mrf.mxu0
    %v5693 = vadd.f32 %v5679, %v5692
    %v5694 = vpop.f32.mrf.mxu0
    %v5695 = vadd.f32 %v5681, %v5694
    %5696 = vdwg.mxu0
    %5697 = vmatpush.bf16.msra.mxu0 %v5098
    %5698 = vmatpush.bf16.msra.mxu0 %v5090
    %5699 = vmatpush.bf16.msra.mxu0 %v5082
    %5700 = vmatpush.bf16.msra.mxu0 %v5074
    %5701 = vmatpush.bf16.msra.mxu0 %v5066
    %5702 = vmatpush.bf16.msra.mxu0 %v5058
    %5703 = vmatpush.bf16.msra.mxu0 %v5050
    %5704 = vmatpush.bf16.msra.mxu0 %v5042
    %5705 = vmatmul.bf16.gmra.mxu0 %v5232
    %v5706 = vpop.f32.mrf.mxu0
    %v5707 = vadd.f32 %v5693, %v5706
    %v5708 = vpop.f32.mrf.mxu0
    %v5709 = vadd.f32 %v5695, %v5708
    %5710 = vdwg.mxu0
    %5711 = vmatpush.bf16.msra.mxu0 %v5162
    %5712 = vmatpush.bf16.msra.mxu0 %v5154
    %5713 = vmatpush.bf16.msra.mxu0 %v5146
    %5714 = vmatpush.bf16.msra.mxu0 %v5138
    %5715 = vmatpush.bf16.msra.mxu0 %v5130
    %5716 = vmatpush.bf16.msra.mxu0 %v5122
    %5717 = vmatpush.bf16.msra.mxu0 %v5114
    %5718 = vmatpush.bf16.msra.mxu0 %v5106
    %5719 = vmatmul.bf16.gmra.mxu0 %v5233
    %v5720 = vpop.f32.mrf.mxu0
    %v5721 = vadd.f32 %v5707, %v5720
    %v5722 = vpop.f32.mrf.mxu0
    %v5723 = vadd.f32 %v5709, %v5722
    %5724 = vdwg.mxu0
    %5725 = vmatpush.bf16.msra.mxu0 %v5226
    %5726 = vmatpush.bf16.msra.mxu0 %v5218
    %5727 = vmatpush.bf16.msra.mxu0 %v5210
    %5728 = vmatpush.bf16.msra.mxu0 %v5202
    %5729 = vmatpush.bf16.msra.mxu0 %v5194
    %5730 = vmatpush.bf16.msra.mxu0 %v5186
    %5731 = vmatpush.bf16.msra.mxu0 %v5178
    %5732 = vmatpush.bf16.msra.mxu0 %v5170
    %5733 = vmatmul.bf16.gmra.mxu0 %v5234
    %v5734 = vpop.f32.mrf.mxu0
    %v5735 = vadd.f32 %v5721, %v5734
    %v5736 = vpop.f32.mrf.mxu0
    %v5737 = vadd.f32 %v5723, %v5736
    %5738 = vdwg.mxu0
    %5739 = vmatpush.bf16.msra.mxu0 %v4907
    %5740 = vmatpush.bf16.msra.mxu0 %v4899
    %5741 = vmatpush.bf16.msra.mxu0 %v4891
    %5742 = vmatpush.bf16.msra.mxu0 %v4883
    %5743 = vmatpush.bf16.msra.mxu0 %v4875
    %5744 = vmatpush.bf16.msra.mxu0 %v4867
    %5745 = vmatpush.bf16.msra.mxu0 %v4859
    %5746 = vmatpush.bf16.msra.mxu0 %v4851
    %5747 = vmatmul.bf16.gmra.mxu0 %v5229
    %v5748 = vpop.f32.mrf.mxu0
    %v5749 = vadd.f32 0.0, %v5748
    %v5750 = vpop.f32.mrf.mxu0
    %v5751 = vadd.f32 0.0, %v5750
    %5752 = vdwg.mxu0
    %5753 = vmatpush.bf16.msra.mxu0 %v4971
    %5754 = vmatpush.bf16.msra.mxu0 %v4963
    %5755 = vmatpush.bf16.msra.mxu0 %v4955
    %5756 = vmatpush.bf16.msra.mxu0 %v4947
    %5757 = vmatpush.bf16.msra.mxu0 %v4939
    %5758 = vmatpush.bf16.msra.mxu0 %v4931
    %5759 = vmatpush.bf16.msra.mxu0 %v4923
    %5760 = vmatpush.bf16.msra.mxu0 %v4915
    %5761 = vmatmul.bf16.gmra.mxu0 %v5230
    %v5762 = vpop.f32.mrf.mxu0
    %v5763 = vadd.f32 %v5749, %v5762
    %v5764 = vpop.f32.mrf.mxu0
    %v5765 = vadd.f32 %v5751, %v5764
    %5766 = vdwg.mxu0
    %5767 = vmatpush.bf16.msra.mxu0 %v5035
    %5768 = vmatpush.bf16.msra.mxu0 %v5027
    %5769 = vmatpush.bf16.msra.mxu0 %v5019
    %5770 = vmatpush.bf16.msra.mxu0 %v5011
    %5771 = vmatpush.bf16.msra.mxu0 %v5003
    %5772 = vmatpush.bf16.msra.mxu0 %v4995
    %5773 = vmatpush.bf16.msra.mxu0 %v4987
    %5774 = vmatpush.bf16.msra.mxu0 %v4979
    %5775 = vmatmul.bf16.gmra.mxu0 %v5231
    %v5776 = vpop.f32.mrf.mxu0
    %v5777 = vadd.f32 %v5763, %v5776
    %v5778 = vpop.f32.mrf.mxu0
    %v5779 = vadd.f32 %v5765, %v5778
    %5780 = vdwg.mxu0
    %5781 = vmatpush.bf16.msra.mxu0 %v5099
    %5782 = vmatpush.bf16.msra.mxu0 %v5091
    %5783 = vmatpush.bf16.msra.mxu0 %v5083
    %5784 = vmatpush.bf16.msra.mxu0 %v5075
    %5785 = vmatpush.bf16.msra.mxu0 %v5067
    %5786 = vmatpush.bf16.msra.mxu0 %v5059
    %5787 = vmatpush.bf16.msra.mxu0 %v5051
    %5788 = vmatpush.bf16.msra.mxu0 %v5043
    %5789 = vmatmul.bf16.gmra.mxu0 %v5232
    %v5790 = vpop.f32.mrf.mxu0
    %v5791 = vadd.f32 %v5777, %v5790
    %v5792 = vpop.f32.mrf.mxu0
    %v5793 = vadd.f32 %v5779, %v5792
    %5794 = vdwg.mxu0
    %5795 = vmatpush.bf16.msra.mxu0 %v5163
    %5796 = vmatpush.bf16.msra.mxu0 %v5155
    %5797 = vmatpush.bf16.msra.mxu0 %v5147
    %5798 = vmatpush.bf16.msra.mxu0 %v5139
    %5799 = vmatpush.bf16.msra.mxu0 %v5131
    %5800 = vmatpush.bf16.msra.mxu0 %v5123
    %5801 = vmatpush.bf16.msra.mxu0 %v5115
    %5802 = vmatpush.bf16.msra.mxu0 %v5107
    %5803 = vmatmul.bf16.gmra.mxu0 %v5233
    %v5804 = vpop.f32.mrf.mxu0
    %v5805 = vadd.f32 %v5791, %v5804
    %v5806 = vpop.f32.mrf.mxu0
    %v5807 = vadd.f32 %v5793, %v5806
    %5808 = vdwg.mxu0
    %5809 = vmatpush.bf16.msra.mxu0 %v5227
    %5810 = vmatpush.bf16.msra.mxu0 %v5219
    %5811 = vmatpush.bf16.msra.mxu0 %v5211
    %5812 = vmatpush.bf16.msra.mxu0 %v5203
    %5813 = vmatpush.bf16.msra.mxu0 %v5195
    %5814 = vmatpush.bf16.msra.mxu0 %v5187
    %5815 = vmatpush.bf16.msra.mxu0 %v5179
    %5816 = vmatpush.bf16.msra.mxu0 %v5171
    %5817 = vmatmul.bf16.gmra.mxu0 %v5234
    %v5818 = vpop.f32.mrf.mxu0
    %v5819 = vadd.f32 %v5805, %v5818
    %v5820 = vpop.f32.mrf.mxu0
    %v5821 = vadd.f32 %v5807, %v5820
    %5822 = vdwg.mxu0
    %5823 = vmatpush.bf16.msra.mxu0 %v4908
    %5824 = vmatpush.bf16.msra.mxu0 %v4900
    %5825 = vmatpush.bf16.msra.mxu0 %v4892
    %5826 = vmatpush.bf16.msra.mxu0 %v4884
    %5827 = vmatpush.bf16.msra.mxu0 %v4876
    %5828 = vmatpush.bf16.msra.mxu0 %v4868
    %5829 = vmatpush.bf16.msra.mxu0 %v4860
    %5830 = vmatpush.bf16.msra.mxu0 %v4852
    %5831 = vmatmul.bf16.gmra.mxu0 %v5229
    %v5832 = vpop.f32.mrf.mxu0
    %v5833 = vadd.f32 0.0, %v5832
    %v5834 = vpop.f32.mrf.mxu0
    %v5835 = vadd.f32 0.0, %v5834
    %5836 = vdwg.mxu0
    %5837 = vmatpush.bf16.msra.mxu0 %v4972
    %5838 = vmatpush.bf16.msra.mxu0 %v4964
    %5839 = vmatpush.bf16.msra.mxu0 %v4956
    %5840 = vmatpush.bf16.msra.mxu0 %v4948
    %5841 = vmatpush.bf16.msra.mxu0 %v4940
    %5842 = vmatpush.bf16.msra.mxu0 %v4932
    %5843 = vmatpush.bf16.msra.mxu0 %v4924
    %5844 = vmatpush.bf16.msra.mxu0 %v4916
    %5845 = vmatmul.bf16.gmra.mxu0 %v5230
    %v5846 = vpop.f32.mrf.mxu0
    %v5847 = vadd.f32 %v5833, %v5846
    %v5848 = vpop.f32.mrf.mxu0
    %v5849 = vadd.f32 %v5835, %v5848
    %5850 = vdwg.mxu0
    %5851 = vmatpush.bf16.msra.mxu0 %v5036
    %5852 = vmatpush.bf16.msra.mxu0 %v5028
    %5853 = vmatpush.bf16.msra.mxu0 %v5020
    %5854 = vmatpush.bf16.msra.mxu0 %v5012
    %5855 = vmatpush.bf16.msra.mxu0 %v5004
    %5856 = vmatpush.bf16.msra.mxu0 %v4996
    %5857 = vmatpush.bf16.msra.mxu0 %v4988
    %5858 = vmatpush.bf16.msra.mxu0 %v4980
    %5859 = vmatmul.bf16.gmra.mxu0 %v5231
    %v5860 = vpop.f32.mrf.mxu0
    %v5861 = vadd.f32 %v5847, %v5860
    %v5862 = vpop.f32.mrf.mxu0
    %v5863 = vadd.f32 %v5849, %v5862
    %5864 = vdwg.mxu0
    %5865 = vmatpush.bf16.msra.mxu0 %v5100
    %5866 = vmatpush.bf16.msra.mxu0 %v5092
    %5867 = vmatpush.bf16.msra.mxu0 %v5084
    %5868 = vmatpush.bf16.msra.mxu0 %v5076
    %5869 = vmatpush.bf16.msra.mxu0 %v5068
    %5870 = vmatpush.bf16.msra.mxu0 %v5060
    %5871 = vmatpush.bf16.msra.mxu0 %v5052
    %5872 = vmatpush.bf16.msra.mxu0 %v5044
    %5873 = vmatmul.bf16.gmra.mxu0 %v5232
    %v5874 = vpop.f32.mrf.mxu0
    %v5875 = vadd.f32 %v5861, %v5874
    %v5876 = vpop.f32.mrf.mxu0
    %v5877 = vadd.f32 %v5863, %v5876
    %5878 = vdwg.mxu0
    %5879 = vmatpush.bf16.msra.mxu0 %v5164
    %5880 = vmatpush.bf16.msra.mxu0 %v5156
    %5881 = vmatpush.bf16.msra.mxu0 %v5148
    %5882 = vmatpush.bf16.msra.mxu0 %v5140
    %5883 = vmatpush.bf16.msra.mxu0 %v5132
    %5884 = vmatpush.bf16.msra.mxu0 %v5124
    %5885 = vmatpush.bf16.msra.mxu0 %v5116
    %5886 = vmatpush.bf16.msra.mxu0 %v5108
    %5887 = vmatmul.bf16.gmra.mxu0 %v5233
    %v5888 = vpop.f32.mrf.mxu0
    %v5889 = vadd.f32 %v5875, %v5888
    %v5890 = vpop.f32.mrf.mxu0
    %v5891 = vadd.f32 %v5877, %v5890
    %5892 = vdwg.mxu0
    %5893 = vmatpush.bf16.msra.mxu0 %v5228
    %5894 = vmatpush.bf16.msra.mxu0 %v5220
    %5895 = vmatpush.bf16.msra.mxu0 %v5212
    %5896 = vmatpush.bf16.msra.mxu0 %v5204
    %5897 = vmatpush.bf16.msra.mxu0 %v5196
    %5898 = vmatpush.bf16.msra.mxu0 %v5188
    %5899 = vmatpush.bf16.msra.mxu0 %v5180
    %5900 = vmatpush.bf16.msra.mxu0 %v5172
    %5901 = vmatmul.bf16.gmra.mxu0 %v5234
    %v5902 = vpop.f32.mrf.mxu0
    %v5903 = vadd.f32 %v5889, %v5902
    %v5904 = vpop.f32.mrf.mxu0
    %v5905 = vadd.f32 %v5891, %v5904
    %5906 = vdwg.mxu0
    %v5907 = vperm.slane %v861, 2
    %v5908 = vperm.slane %v862, 2
    %v5909 = vperm.slane %v863, 2
    %v5910 = vperm.slane %v864, 2
    %v5911 = vperm.slane %v865, 2
    %v5912 = vperm.slane %v866, 2
    %v5913 = vperm.slane %v867, 2
    %v5914 = vperm.slane %v868, 2
    %v5915 = vmul.f32 %v5315, %v5907
    %v5916 = vmul.f32 %v5399, %v5908
    %v5917 = vmul.f32 %v5483, %v5909
    %v5918 = vmul.f32 %v5567, %v5910
    %v5919 = vmul.f32 %v5651, %v5911
    %v5920 = vmul.f32 %v5735, %v5912
    %v5921 = vmul.f32 %v5819, %v5913
    %v5922 = vmul.f32 %v5903, %v5914
    %v5923 = vmul.f32 %v5317, %v5907
    %v5924 = vmul.f32 %v5401, %v5908
    %v5925 = vmul.f32 %v5485, %v5909
    %v5926 = vmul.f32 %v5569, %v5910
    %v5927 = vmul.f32 %v5653, %v5911
    %v5928 = vmul.f32 %v5737, %v5912
    %v5929 = vmul.f32 %v5821, %v5913
    %v5930 = vmul.f32 %v5905, %v5914
    %v5931 = vadd.f32 %v5915, %v5923
    %v5932 = vrot.slane %v5931, 4
    %v5933 = vadd.f32 %v5931, %v5932
    %v5934 = vrot.slane %v5933, 2
    %v5935 = vadd.f32 %v5933, %v5934
    %v5936 = vrot.slane %v5935, 1
    %v5937 = vadd.f32 %v5935, %v5936
    %v5938 = vadd.f32 %v5916, %v5924
    %v5939 = vrot.slane %v5938, 4
    %v5940 = vadd.f32 %v5938, %v5939
    %v5941 = vrot.slane %v5940, 2
    %v5942 = vadd.f32 %v5940, %v5941
    %v5943 = vrot.slane %v5942, 1
    %v5944 = vadd.f32 %v5942, %v5943
    %v5945 = vadd.f32 %v5917, %v5925
    %v5946 = vrot.slane %v5945, 4
    %v5947 = vadd.f32 %v5945, %v5946
    %v5948 = vrot.slane %v5947, 2
    %v5949 = vadd.f32 %v5947, %v5948
    %v5950 = vrot.slane %v5949, 1
    %v5951 = vadd.f32 %v5949, %v5950
    %v5952 = vadd.f32 %v5918, %v5926
    %v5953 = vrot.slane %v5952, 4
    %v5954 = vadd.f32 %v5952, %v5953
    %v5955 = vrot.slane %v5954, 2
    %v5956 = vadd.f32 %v5954, %v5955
    %v5957 = vrot.slane %v5956, 1
    %v5958 = vadd.f32 %v5956, %v5957
    %v5959 = vadd.f32 %v5919, %v5927
    %v5960 = vrot.slane %v5959, 4
    %v5961 = vadd.f32 %v5959, %v5960
    %v5962 = vrot.slane %v5961, 2
    %v5963 = vadd.f32 %v5961, %v5962
    %v5964 = vrot.slane %v5963, 1
    %v5965 = vadd.f32 %v5963, %v5964
    %v5966 = vadd.f32 %v5920, %v5928
    %v5967 = vrot.slane %v5966, 4
    %v5968 = vadd.f32 %v5966, %v5967
    %v5969 = vrot.slane %v5968, 2
    %v5970 = vadd.f32 %v5968, %v5969
    %v5971 = vrot.slane %v5970, 1
    %v5972 = vadd.f32 %v5970, %v5971
    %v5973 = vadd.f32 %v5921, %v5929
    %v5974 = vrot.slane %v5973, 4
    %v5975 = vadd.f32 %v5973, %v5974
    %v5976 = vrot.slane %v5975, 2
    %v5977 = vadd.f32 %v5975, %v5976
    %v5978 = vrot.slane %v5977, 1
    %v5979 = vadd.f32 %v5977, %v5978
    %v5980 = vadd.f32 %v5922, %v5930
    %v5981 = vrot.slane %v5980, 4
    %v5982 = vadd.f32 %v5980, %v5981
    %v5983 = vrot.slane %v5982, 2
    %v5984 = vadd.f32 %v5982, %v5983
    %v5985 = vrot.slane %v5984, 1
    %v5986 = vadd.f32 %v5984, %v5985
    %v5987 = vmul.f32 %v5937, %v1048
    %v5988 = vmul.f32 %v5944, %v1048
    %v5989 = vmul.f32 %v5951, %v1048
    %v5990 = vmul.f32 %v5958, %v1048
    %v5991 = vmul.f32 %v5965, %v1048
    %v5992 = vmul.f32 %v5972, %v1048
    %v5993 = vmul.f32 %v5979, %v1048
    %v5994 = vmul.f32 %v5986, %v1048
    %v5995 = vsub.f32 %v5915, %v5987
    %v5996 = vsub.f32 %v5916, %v5988
    %v5997 = vsub.f32 %v5917, %v5989
    %v5998 = vsub.f32 %v5918, %v5990
    %v5999 = vsub.f32 %v5919, %v5991
    %v6000 = vsub.f32 %v5920, %v5992
    %v6001 = vsub.f32 %v5921, %v5993
    %v6002 = vsub.f32 %v5922, %v5994
    %v6003 = vsub.f32 %v5923, %v5987
    %v6004 = vsub.f32 %v5924, %v5988
    %v6005 = vsub.f32 %v5925, %v5989
    %v6006 = vsub.f32 %v5926, %v5990
    %v6007 = vsub.f32 %v5927, %v5991
    %v6008 = vsub.f32 %v5928, %v5992
    %v6009 = vsub.f32 %v5929, %v5993
    %v6010 = vsub.f32 %v5930, %v5994
    %v6011 = vmul.f32 %v5995, %v5995
    %v6012 = vmul.f32 %v5996, %v5996
    %v6013 = vmul.f32 %v5997, %v5997
    %v6014 = vmul.f32 %v5998, %v5998
    %v6015 = vmul.f32 %v5999, %v5999
    %v6016 = vmul.f32 %v6000, %v6000
    %v6017 = vmul.f32 %v6001, %v6001
    %v6018 = vmul.f32 %v6002, %v6002
    %v6019 = vmul.f32 %v6003, %v6003
    %v6020 = vmul.f32 %v6004, %v6004
    %v6021 = vmul.f32 %v6005, %v6005
    %v6022 = vmul.f32 %v6006, %v6006
    %v6023 = vmul.f32 %v6007, %v6007
    %v6024 = vmul.f32 %v6008, %v6008
    %v6025 = vmul.f32 %v6009, %v6009
    %v6026 = vmul.f32 %v6010, %v6010
    %v6027 = vadd.f32 %v6011, %v6019
    %v6028 = vrot.slane %v6027, 4
    %v6029 = vadd.f32 %v6027, %v6028
    %v6030 = vrot.slane %v6029, 2
    %v6031 = vadd.f32 %v6029, %v6030
    %v6032 = vrot.slane %v6031, 1
    %v6033 = vadd.f32 %v6031, %v6032
    %v6034 = vadd.f32 %v6012, %v6020
    %v6035 = vrot.slane %v6034, 4
    %v6036 = vadd.f32 %v6034, %v6035
    %v6037 = vrot.slane %v6036, 2
    %v6038 = vadd.f32 %v6036, %v6037
    %v6039 = vrot.slane %v6038, 1
    %v6040 = vadd.f32 %v6038, %v6039
    %v6041 = vadd.f32 %v6013, %v6021
    %v6042 = vrot.slane %v6041, 4
    %v6043 = vadd.f32 %v6041, %v6042
    %v6044 = vrot.slane %v6043, 2
    %v6045 = vadd.f32 %v6043, %v6044
    %v6046 = vrot.slane %v6045, 1
    %v6047 = vadd.f32 %v6045, %v6046
    %v6048 = vadd.f32 %v6014, %v6022
    %v6049 = vrot.slane %v6048, 4
    %v6050 = vadd.f32 %v6048, %v6049
    %v6051 = vrot.slane %v6050, 2
    %v6052 = vadd.f32 %v6050, %v6051
    %v6053 = vrot.slane %v6052, 1
    %v6054 = vadd.f32 %v6052, %v6053
    %v6055 = vadd.f32 %v6015, %v6023
    %v6056 = vrot.slane %v6055, 4
    %v6057 = vadd.f32 %v6055, %v6056
    %v6058 = vrot.slane %v6057, 2
    %v6059 = vadd.f32 %v6057, %v6058
    %v6060 = vrot.slane %v6059, 1
    %v6061 = vadd.f32 %v6059, %v6060
    %v6062 = vadd.f32 %v6016, %v6024
    %v6063 = vrot.slane %v6062, 4
    %v6064 = vadd.f32 %v6062, %v6063
    %v6065 = vrot.slane %v6064, 2
    %v6066 = vadd.f32 %v6064, %v6065
    %v6067 = vrot.slane %v6066, 1
    %v6068 = vadd.f32 %v6066, %v6067
    %v6069 = vadd.f32 %v6017, %v6025
    %v6070 = vrot.slane %v6069, 4
    %v6071 = vadd.f32 %v6069, %v6070
    %v6072 = vrot.slane %v6071, 2
    %v6073 = vadd.f32 %v6071, %v6072
    %v6074 = vrot.slane %v6073, 1
    %v6075 = vadd.f32 %v6073, %v6074
    %v6076 = vadd.f32 %v6018, %v6026
    %v6077 = vrot.slane %v6076, 4
    %v6078 = vadd.f32 %v6076, %v6077
    %v6079 = vrot.slane %v6078, 2
    %v6080 = vadd.f32 %v6078, %v6079
    %v6081 = vrot.slane %v6080, 1
    %v6082 = vadd.f32 %v6080, %v6081
    %v6083 = vmul.f32 %v6033, %v1048
    %v6084 = vmul.f32 %v6040, %v1048
    %v6085 = vmul.f32 %v6047, %v1048
    %v6086 = vmul.f32 %v6054, %v1048
    %v6087 = vmul.f32 %v6061, %v1048
    %v6088 = vmul.f32 %v6068, %v1048
    %v6089 = vmul.f32 %v6075, %v1048
    %v6090 = vmul.f32 %v6082, %v1048
    %vm6091 = vcmp.gt.f32.partialorder %v6083, 0.0
    %vm6092 = vcmp.gt.f32.partialorder %v6084, 0.0
    %vm6093 = vcmp.gt.f32.partialorder %v6085, 0.0
    %vm6094 = vcmp.gt.f32.partialorder %v6086, 0.0
    %vm6095 = vcmp.gt.f32.partialorder %v6087, 0.0
    %vm6096 = vcmp.gt.f32.partialorder %v6088, 0.0
    %vm6097 = vcmp.gt.f32.partialorder %v6089, 0.0
    %vm6098 = vcmp.gt.f32.partialorder %v6090, 0.0
    %v6099 = vrsqrt.pop %v6083
    %v6100 = vmul.f32 %v6099, %v6083
    %v6101 = vmul.f32 %v6100, %v6099
    %v6102 = vmul.f32 0.5, %v6101
    %v6103 = vsub.f32 1.5, %v6102
    %v6104 = vmul.f32 %v6099, %v6103
    %vm6105 = vweird.f32 %v6083
    %vm6106 = vweird.f32 %v6099
    %vm6107 = vmor %vm6105, %vm6106
    %v6108 = vsel %vm6107, %v6099, %v6104
    %v6109 = vrsqrt.pop %v6084
    %v6110 = vmul.f32 %v6109, %v6084
    %v6111 = vmul.f32 %v6110, %v6109
    %v6112 = vmul.f32 0.5, %v6111
    %v6113 = vsub.f32 1.5, %v6112
    %v6114 = vmul.f32 %v6109, %v6113
    %vm6115 = vweird.f32 %v6084
    %vm6116 = vweird.f32 %v6109
    %vm6117 = vmor %vm6115, %vm6116
    %v6118 = vsel %vm6117, %v6109, %v6114
    %v6119 = vrsqrt.pop %v6085
    %v6120 = vmul.f32 %v6119, %v6085
    %v6121 = vmul.f32 %v6120, %v6119
    %v6122 = vmul.f32 0.5, %v6121
    %v6123 = vsub.f32 1.5, %v6122
    %v6124 = vmul.f32 %v6119, %v6123
    %vm6125 = vweird.f32 %v6085
    %vm6126 = vweird.f32 %v6119
    %vm6127 = vmor %vm6125, %vm6126
    %v6128 = vsel %vm6127, %v6119, %v6124
    %v6129 = vrsqrt.pop %v6086
    %v6130 = vmul.f32 %v6129, %v6086
    %v6131 = vmul.f32 %v6130, %v6129
    %v6132 = vmul.f32 0.5, %v6131
    %v6133 = vsub.f32 1.5, %v6132
    %v6134 = vmul.f32 %v6129, %v6133
    %vm6135 = vweird.f32 %v6086
    %vm6136 = vweird.f32 %v6129
    %vm6137 = vmor %vm6135, %vm6136
    %v6138 = vsel %vm6137, %v6129, %v6134
    %v6139 = vrsqrt.pop %v6087
    %v6140 = vmul.f32 %v6139, %v6087
    %v6141 = vmul.f32 %v6140, %v6139
    %v6142 = vmul.f32 0.5, %v6141
    %v6143 = vsub.f32 1.5, %v6142
    %v6144 = vmul.f32 %v6139, %v6143
    %vm6145 = vweird.f32 %v6087
    %vm6146 = vweird.f32 %v6139
    %vm6147 = vmor %vm6145, %vm6146
    %v6148 = vsel %vm6147, %v6139, %v6144
    %v6149 = vrsqrt.pop %v6088
    %v6150 = vmul.f32 %v6149, %v6088
    %v6151 = vmul.f32 %v6150, %v6149
    %v6152 = vmul.f32 0.5, %v6151
    %v6153 = vsub.f32 1.5, %v6152
    %v6154 = vmul.f32 %v6149, %v6153
    %vm6155 = vweird.f32 %v6088
    %vm6156 = vweird.f32 %v6149
    %vm6157 = vmor %vm6155, %vm6156
    %v6158 = vsel %vm6157, %v6149, %v6154
    %v6159 = vrsqrt.pop %v6089
    %v6160 = vmul.f32 %v6159, %v6089
    %v6161 = vmul.f32 %v6160, %v6159
    %v6162 = vmul.f32 0.5, %v6161
    %v6163 = vsub.f32 1.5, %v6162
    %v6164 = vmul.f32 %v6159, %v6163
    %vm6165 = vweird.f32 %v6089
    %vm6166 = vweird.f32 %v6159
    %vm6167 = vmor %vm6165, %vm6166
    %v6168 = vsel %vm6167, %v6159, %v6164
    %v6169 = vrsqrt.pop %v6090
    %v6170 = vmul.f32 %v6169, %v6090
    %v6171 = vmul.f32 %v6170, %v6169
    %v6172 = vmul.f32 0.5, %v6171
    %v6173 = vsub.f32 1.5, %v6172
    %v6174 = vmul.f32 %v6169, %v6173
    %vm6175 = vweird.f32 %v6090
    %vm6176 = vweird.f32 %v6169
    %vm6177 = vmor %vm6175, %vm6176
    %v6178 = vsel %vm6177, %v6169, %v6174
    %v6179 = vsel %vm6091, %v6108, 0.0
    %v6180 = vsel %vm6092, %v6118, 0.0
    %v6181 = vsel %vm6093, %v6128, 0.0
    %v6182 = vsel %vm6094, %v6138, 0.0
    %v6183 = vsel %vm6095, %v6148, 0.0
    %v6184 = vsel %vm6096, %v6158, 0.0
    %v6185 = vsel %vm6097, %v6168, 0.0
    %v6186 = vsel %vm6098, %v6178, 0.0
    %v6187 = vmul.f32 %v853, %v6179
    %v6188 = vmul.f32 %v854, %v6180
    %v6189 = vmul.f32 %v855, %v6181
    %v6190 = vmul.f32 %v856, %v6182
    %v6191 = vmul.f32 %v857, %v6183
    %v6192 = vmul.f32 %v858, %v6184
    %v6193 = vmul.f32 %v859, %v6185
    %v6194 = vmul.f32 %v860, %v6186
    %v6195 = vperm.slane %v6187, 7
    %v6196 = vperm.slane %v6188, 7
    %v6197 = vperm.slane %v6189, 7
    %v6198 = vperm.slane %v6190, 7
    %v6199 = vperm.slane %v6191, 7
    %v6200 = vperm.slane %v6192, 7
    %v6201 = vperm.slane %v6193, 7
    %v6202 = vperm.slane %v6194, 7
    %v6203 = vmul.f32 %v5995, %v6195
    %v6204 = vmul.f32 %v5996, %v6196
    %v6205 = vmul.f32 %v5997, %v6197
    %v6206 = vmul.f32 %v5998, %v6198
    %v6207 = vmul.f32 %v5999, %v6199
    %v6208 = vmul.f32 %v6000, %v6200
    %v6209 = vmul.f32 %v6001, %v6201
    %v6210 = vmul.f32 %v6002, %v6202
    %v6211 = vmul.f32 %v6003, %v6195
    %v6212 = vmul.f32 %v6004, %v6196
    %v6213 = vmul.f32 %v6005, %v6197
    %v6214 = vmul.f32 %v6006, %v6198
    %v6215 = vmul.f32 %v6007, %v6199
    %v6216 = vmul.f32 %v6008, %v6200
    %v6217 = vmul.f32 %v6009, %v6201
    %v6218 = vmul.f32 %v6010, %v6202
    %v6219 = vperm.slane %v861, 0
    %v6220 = vperm.slane %v862, 0
    %v6221 = vperm.slane %v863, 0
    %v6222 = vperm.slane %v864, 0
    %v6223 = vperm.slane %v865, 0
    %v6224 = vperm.slane %v866, 0
    %v6225 = vperm.slane %v867, 0
    %v6226 = vperm.slane %v868, 0
    %v6227 = vadd.f32 %v6203, %v6219
    %v6228 = vadd.f32 %v6204, %v6220
    %v6229 = vadd.f32 %v6205, %v6221
    %v6230 = vadd.f32 %v6206, %v6222
    %v6231 = vadd.f32 %v6207, %v6223
    %v6232 = vadd.f32 %v6208, %v6224
    %v6233 = vadd.f32 %v6209, %v6225
    %v6234 = vadd.f32 %v6210, %v6226
    %v6235 = vadd.f32 %v6211, %v6219
    %v6236 = vadd.f32 %v6212, %v6220
    %v6237 = vadd.f32 %v6213, %v6221
    %v6238 = vadd.f32 %v6214, %v6222
    %v6239 = vadd.f32 %v6215, %v6223
    %v6240 = vadd.f32 %v6216, %v6224
    %v6241 = vadd.f32 %v6217, %v6225
    %v6242 = vadd.f32 %v6218, %v6226
    %vm6243 = vcmp.gt.f32.partialorder %v6227, 0.0
    %vm6244 = vcmp.gt.f32.partialorder %v6228, 0.0
    %vm6245 = vcmp.gt.f32.partialorder %v6229, 0.0
    %vm6246 = vcmp.gt.f32.partialorder %v6230, 0.0
    %vm6247 = vcmp.gt.f32.partialorder %v6231, 0.0
    %vm6248 = vcmp.gt.f32.partialorder %v6232, 0.0
    %vm6249 = vcmp.gt.f32.partialorder %v6233, 0.0
    %vm6250 = vcmp.gt.f32.partialorder %v6234, 0.0
    %vm6251 = vcmp.gt.f32.partialorder %v6235, 0.0
    %vm6252 = vcmp.gt.f32.partialorder %v6236, 0.0
    %vm6253 = vcmp.gt.f32.partialorder %v6237, 0.0
    %vm6254 = vcmp.gt.f32.partialorder %v6238, 0.0
    %vm6255 = vcmp.gt.f32.partialorder %v6239, 0.0
    %vm6256 = vcmp.gt.f32.partialorder %v6240, 0.0
    %vm6257 = vcmp.gt.f32.partialorder %v6241, 0.0
    %vm6258 = vcmp.gt.f32.partialorder %v6242, 0.0
    %v6259 = vmul.f32 %v6227, 0.2
    %v6260 = vmul.f32 %v6228, 0.2
    %v6261 = vmul.f32 %v6229, 0.2
    %v6262 = vmul.f32 %v6230, 0.2
    %v6263 = vmul.f32 %v6231, 0.2
    %v6264 = vmul.f32 %v6232, 0.2
    %v6265 = vmul.f32 %v6233, 0.2
    %v6266 = vmul.f32 %v6234, 0.2
    %v6267 = vmul.f32 %v6235, 0.2
    %v6268 = vmul.f32 %v6236, 0.2
    %v6269 = vmul.f32 %v6237, 0.2
    %v6270 = vmul.f32 %v6238, 0.2
    %v6271 = vmul.f32 %v6239, 0.2
    %v6272 = vmul.f32 %v6240, 0.2
    %v6273 = vmul.f32 %v6241, 0.2
    %v6274 = vmul.f32 %v6242, 0.2
    %v6275 = vsel %vm6243, %v6227, %v6259
    %v6276 = vsel %vm6244, %v6228, %v6260
    %v6277 = vsel %vm6245, %v6229, %v6261
    %v6278 = vsel %vm6246, %v6230, %v6262
    %v6279 = vsel %vm6247, %v6231, %v6263
    %v6280 = vsel %vm6248, %v6232, %v6264
    %v6281 = vsel %vm6249, %v6233, %v6265
    %v6282 = vsel %vm6250, %v6234, %v6266
    %v6283 = vsel %vm6251, %v6235, %v6267
    %v6284 = vsel %vm6252, %v6236, %v6268
    %v6285 = vsel %vm6253, %v6237, %v6269
    %v6286 = vsel %vm6254, %v6238, %v6270
    %v6287 = vsel %vm6255, %v6239, %v6271
    %v6288 = vsel %vm6256, %v6240, %v6272
    %v6289 = vsel %vm6257, %v6241, %v6273
    %v6290 = vsel %vm6258, %v6242, %v6274
    %v6291 = vunpack.c.0.s8 %v629
    %v6292 = vunpack.c.0.s8 %v630
    %v6293 = vunpack.c.0.s8 %v631
    %v6294 = vunpack.c.0.s8 %v632
    %v6295 = vunpack.c.0.s8 %v633
    %v6296 = vunpack.c.0.s8 %v634
    %v6297 = vunpack.c.0.s8 %v635
    %v6298 = vunpack.c.1.s8 %v629
    %v6299 = vunpack.c.1.s8 %v630
    %v6300 = vunpack.c.1.s8 %v631
    %v6301 = vunpack.c.1.s8 %v632
    %v6302 = vunpack.c.1.s8 %v633
    %v6303 = vunpack.c.1.s8 %v634
    %v6304 = vunpack.c.1.s8 %v635
    %v6305 = vunpack.c.2.s8 %v629
    %v6306 = vunpack.c.2.s8 %v630
    %v6307 = vunpack.c.2.s8 %v631
    %v6308 = vunpack.c.2.s8 %v632
    %v6309 = vunpack.c.2.s8 %v633
    %v6310 = vunpack.c.2.s8 %v634
    %v6311 = vunpack.c.2.s8 %v635
    %v6312 = vunpack.c.3.s8 %v629
    %v6313 = vunpack.c.3.s8 %v630
    %v6314 = vunpack.c.3.s8 %v631
    %v6315 = vunpack.c.3.s8 %v632
    %v6316 = vunpack.c.3.s8 %v633
    %v6317 = vunpack.c.3.s8 %v634
    %v6318 = vunpack.c.3.s8 %v635
    %v6319 = vunpack.c.0.s8 %v636
    %v6320 = vunpack.c.0.s8 %v637
    %v6321 = vunpack.c.0.s8 %v638
    %v6322 = vunpack.c.0.s8 %v639
    %v6323 = vunpack.c.0.s8 %v640
    %v6324 = vunpack.c.0.s8 %v641
    %v6325 = vunpack.c.0.s8 %v642
    %v6326 = vunpack.c.1.s8 %v636
    %v6327 = vunpack.c.1.s8 %v637
    %v6328 = vunpack.c.1.s8 %v638
    %v6329 = vunpack.c.1.s8 %v639
    %v6330 = vunpack.c.1.s8 %v640
    %v6331 = vunpack.c.1.s8 %v641
    %v6332 = vunpack.c.1.s8 %v642
    %v6333 = vunpack.c.2.s8 %v636
    %v6334 = vunpack.c.2.s8 %v637
    %v6335 = vunpack.c.2.s8 %v638
    %v6336 = vunpack.c.2.s8 %v639
    %v6337 = vunpack.c.2.s8 %v640
    %v6338 = vunpack.c.2.s8 %v641
    %v6339 = vunpack.c.2.s8 %v642
    %v6340 = vunpack.c.3.s8 %v636
    %v6341 = vunpack.c.3.s8 %v637
    %v6342 = vunpack.c.3.s8 %v638
    %v6343 = vunpack.c.3.s8 %v639
    %v6344 = vunpack.c.3.s8 %v640
    %v6345 = vunpack.c.3.s8 %v641
    %v6346 = vunpack.c.3.s8 %v642
    %v6347 = vunpack.c.0.s8 %v643
    %v6348 = vunpack.c.0.s8 %v644
    %v6349 = vunpack.c.0.s8 %v645
    %v6350 = vunpack.c.0.s8 %v646
    %v6351 = vunpack.c.0.s8 %v647
    %v6352 = vunpack.c.0.s8 %v648
    %v6353 = vunpack.c.0.s8 %v649
    %v6354 = vunpack.c.1.s8 %v643
    %v6355 = vunpack.c.1.s8 %v644
    %v6356 = vunpack.c.1.s8 %v645
    %v6357 = vunpack.c.1.s8 %v646
    %v6358 = vunpack.c.1.s8 %v647
    %v6359 = vunpack.c.1.s8 %v648
    %v6360 = vunpack.c.1.s8 %v649
    %v6361 = vunpack.c.2.s8 %v643
    %v6362 = vunpack.c.2.s8 %v644
    %v6363 = vunpack.c.2.s8 %v645
    %v6364 = vunpack.c.2.s8 %v646
    %v6365 = vunpack.c.2.s8 %v647
    %v6366 = vunpack.c.2.s8 %v648
    %v6367 = vunpack.c.2.s8 %v649
    %v6368 = vunpack.c.3.s8 %v643
    %v6369 = vunpack.c.3.s8 %v644
    %v6370 = vunpack.c.3.s8 %v645
    %v6371 = vunpack.c.3.s8 %v646
    %v6372 = vunpack.c.3.s8 %v647
    %v6373 = vunpack.c.3.s8 %v648
    %v6374 = vunpack.c.3.s8 %v649
    %v6375 = vunpack.c.0.s8 %v650
    %v6376 = vunpack.c.0.s8 %v651
    %v6377 = vunpack.c.0.s8 %v652
    %v6378 = vunpack.c.0.s8 %v653
    %v6379 = vunpack.c.0.s8 %v654
    %v6380 = vunpack.c.0.s8 %v655
    %v6381 = vunpack.c.0.s8 %v656
    %v6382 = vunpack.c.1.s8 %v650
    %v6383 = vunpack.c.1.s8 %v651
    %v6384 = vunpack.c.1.s8 %v652
    %v6385 = vunpack.c.1.s8 %v653
    %v6386 = vunpack.c.1.s8 %v654
    %v6387 = vunpack.c.1.s8 %v655
    %v6388 = vunpack.c.1.s8 %v656
    %v6389 = vunpack.c.2.s8 %v650
    %v6390 = vunpack.c.2.s8 %v651
    %v6391 = vunpack.c.2.s8 %v652
    %v6392 = vunpack.c.2.s8 %v653
    %v6393 = vunpack.c.2.s8 %v654
    %v6394 = vunpack.c.2.s8 %v655
    %v6395 = vunpack.c.2.s8 %v656
    %v6396 = vunpack.c.3.s8 %v650
    %v6397 = vunpack.c.3.s8 %v651
    %v6398 = vunpack.c.3.s8 %v652
    %v6399 = vunpack.c.3.s8 %v653
    %v6400 = vunpack.c.3.s8 %v654
    %v6401 = vunpack.c.3.s8 %v655
    %v6402 = vunpack.c.3.s8 %v656
    %v6403 = vunpack.c.0.s8 %v657
    %v6404 = vunpack.c.0.s8 %v658
    %v6405 = vunpack.c.0.s8 %v659
    %v6406 = vunpack.c.0.s8 %v660
    %v6407 = vunpack.c.0.s8 %v661
    %v6408 = vunpack.c.0.s8 %v662
    %v6409 = vunpack.c.0.s8 %v663
    %v6410 = vunpack.c.1.s8 %v657
    %v6411 = vunpack.c.1.s8 %v658
    %v6412 = vunpack.c.1.s8 %v659
    %v6413 = vunpack.c.1.s8 %v660
    %v6414 = vunpack.c.1.s8 %v661
    %v6415 = vunpack.c.1.s8 %v662
    %v6416 = vunpack.c.1.s8 %v663
    %v6417 = vunpack.c.2.s8 %v657
    %v6418 = vunpack.c.2.s8 %v658
    %v6419 = vunpack.c.2.s8 %v659
    %v6420 = vunpack.c.2.s8 %v660
    %v6421 = vunpack.c.2.s8 %v661
    %v6422 = vunpack.c.2.s8 %v662
    %v6423 = vunpack.c.2.s8 %v663
    %v6424 = vunpack.c.3.s8 %v657
    %v6425 = vunpack.c.3.s8 %v658
    %v6426 = vunpack.c.3.s8 %v659
    %v6427 = vunpack.c.3.s8 %v660
    %v6428 = vunpack.c.3.s8 %v661
    %v6429 = vunpack.c.3.s8 %v662
    %v6430 = vunpack.c.3.s8 %v663
    %v6431 = vunpack.c.0.s8 %v664
    %v6432 = vunpack.c.0.s8 %v665
    %v6433 = vunpack.c.0.s8 %v666
    %v6434 = vunpack.c.0.s8 %v667
    %v6435 = vunpack.c.0.s8 %v668
    %v6436 = vunpack.c.0.s8 %v669
    %v6437 = vunpack.c.0.s8 %v670
    %v6438 = vunpack.c.1.s8 %v664
    %v6439 = vunpack.c.1.s8 %v665
    %v6440 = vunpack.c.1.s8 %v666
    %v6441 = vunpack.c.1.s8 %v667
    %v6442 = vunpack.c.1.s8 %v668
    %v6443 = vunpack.c.1.s8 %v669
    %v6444 = vunpack.c.1.s8 %v670
    %v6445 = vunpack.c.2.s8 %v664
    %v6446 = vunpack.c.2.s8 %v665
    %v6447 = vunpack.c.2.s8 %v666
    %v6448 = vunpack.c.2.s8 %v667
    %v6449 = vunpack.c.2.s8 %v668
    %v6450 = vunpack.c.2.s8 %v669
    %v6451 = vunpack.c.2.s8 %v670
    %v6452 = vunpack.c.3.s8 %v664
    %v6453 = vunpack.c.3.s8 %v665
    %v6454 = vunpack.c.3.s8 %v666
    %v6455 = vunpack.c.3.s8 %v667
    %v6456 = vunpack.c.3.s8 %v668
    %v6457 = vunpack.c.3.s8 %v669
    %v6458 = vunpack.c.3.s8 %v670
    %v6459 = vunpack.c.0.s8 %v671
    %v6460 = vunpack.c.0.s8 %v672
    %v6461 = vunpack.c.0.s8 %v673
    %v6462 = vunpack.c.0.s8 %v674
    %v6463 = vunpack.c.0.s8 %v675
    %v6464 = vunpack.c.0.s8 %v676
    %v6465 = vunpack.c.0.s8 %v677
    %v6466 = vunpack.c.1.s8 %v671
    %v6467 = vunpack.c.1.s8 %v672
    %v6468 = vunpack.c.1.s8 %v673
    %v6469 = vunpack.c.1.s8 %v674
    %v6470 = vunpack.c.1.s8 %v675
    %v6471 = vunpack.c.1.s8 %v676
    %v6472 = vunpack.c.1.s8 %v677
    %v6473 = vunpack.c.2.s8 %v671
    %v6474 = vunpack.c.2.s8 %v672
    %v6475 = vunpack.c.2.s8 %v673
    %v6476 = vunpack.c.2.s8 %v674
    %v6477 = vunpack.c.2.s8 %v675
    %v6478 = vunpack.c.2.s8 %v676
    %v6479 = vunpack.c.2.s8 %v677
    %v6480 = vunpack.c.3.s8 %v671
    %v6481 = vunpack.c.3.s8 %v672
    %v6482 = vunpack.c.3.s8 %v673
    %v6483 = vunpack.c.3.s8 %v674
    %v6484 = vunpack.c.3.s8 %v675
    %v6485 = vunpack.c.3.s8 %v676
    %v6486 = vunpack.c.3.s8 %v677
    %v6487 = vunpack.c.0.s8 %v678
    %v6488 = vunpack.c.0.s8 %v679
    %v6489 = vunpack.c.0.s8 %v680
    %v6490 = vunpack.c.0.s8 %v681
    %v6491 = vunpack.c.0.s8 %v682
    %v6492 = vunpack.c.0.s8 %v683
    %v6493 = vunpack.c.0.s8 %v684
    %v6494 = vunpack.c.1.s8 %v678
    %v6495 = vunpack.c.1.s8 %v679
    %v6496 = vunpack.c.1.s8 %v680
    %v6497 = vunpack.c.1.s8 %v681
    %v6498 = vunpack.c.1.s8 %v682
    %v6499 = vunpack.c.1.s8 %v683
    %v6500 = vunpack.c.1.s8 %v684
    %v6501 = vunpack.c.2.s8 %v678
    %v6502 = vunpack.c.2.s8 %v679
    %v6503 = vunpack.c.2.s8 %v680
    %v6504 = vunpack.c.2.s8 %v681
    %v6505 = vunpack.c.2.s8 %v682
    %v6506 = vunpack.c.2.s8 %v683
    %v6507 = vunpack.c.2.s8 %v684
    %v6508 = vunpack.c.3.s8 %v678
    %v6509 = vunpack.c.3.s8 %v679
    %v6510 = vunpack.c.3.s8 %v680
    %v6511 = vunpack.c.3.s8 %v681
    %v6512 = vunpack.c.3.s8 %v682
    %v6513 = vunpack.c.3.s8 %v683
    %v6514 = vunpack.c.3.s8 %v684
    %v6515 = vunpack.c.0.s8 %v685
    %v6516 = vunpack.c.0.s8 %v686
    %v6517 = vunpack.c.0.s8 %v687
    %v6518 = vunpack.c.0.s8 %v688
    %v6519 = vunpack.c.0.s8 %v689
    %v6520 = vunpack.c.0.s8 %v690
    %v6521 = vunpack.c.0.s8 %v691
    %v6522 = vunpack.c.1.s8 %v685
    %v6523 = vunpack.c.1.s8 %v686
    %v6524 = vunpack.c.1.s8 %v687
    %v6525 = vunpack.c.1.s8 %v688
    %v6526 = vunpack.c.1.s8 %v689
    %v6527 = vunpack.c.1.s8 %v690
    %v6528 = vunpack.c.1.s8 %v691
    %v6529 = vunpack.c.2.s8 %v685
    %v6530 = vunpack.c.2.s8 %v686
    %v6531 = vunpack.c.2.s8 %v687
    %v6532 = vunpack.c.2.s8 %v688
    %v6533 = vunpack.c.2.s8 %v689
    %v6534 = vunpack.c.2.s8 %v690
    %v6535 = vunpack.c.2.s8 %v691
    %v6536 = vunpack.c.3.s8 %v685
    %v6537 = vunpack.c.3.s8 %v686
    %v6538 = vunpack.c.3.s8 %v687
    %v6539 = vunpack.c.3.s8 %v688
    %v6540 = vunpack.c.3.s8 %v689
    %v6541 = vunpack.c.3.s8 %v690
    %v6542 = vunpack.c.3.s8 %v691
    %v6543 = vunpack.c.0.s8 %v692
    %v6544 = vunpack.c.0.s8 %v693
    %v6545 = vunpack.c.0.s8 %v694
    %v6546 = vunpack.c.0.s8 %v695
    %v6547 = vunpack.c.0.s8 %v696
    %v6548 = vunpack.c.0.s8 %v697
    %v6549 = vunpack.c.0.s8 %v698
    %v6550 = vunpack.c.1.s8 %v692
    %v6551 = vunpack.c.1.s8 %v693
    %v6552 = vunpack.c.1.s8 %v694
    %v6553 = vunpack.c.1.s8 %v695
    %v6554 = vunpack.c.1.s8 %v696
    %v6555 = vunpack.c.1.s8 %v697
    %v6556 = vunpack.c.1.s8 %v698
    %v6557 = vunpack.c.2.s8 %v692
    %v6558 = vunpack.c.2.s8 %v693
    %v6559 = vunpack.c.2.s8 %v694
    %v6560 = vunpack.c.2.s8 %v695
    %v6561 = vunpack.c.2.s8 %v696
    %v6562 = vunpack.c.2.s8 %v697
    %v6563 = vunpack.c.2.s8 %v698
    %v6564 = vunpack.c.3.s8 %v692
    %v6565 = vunpack.c.3.s8 %v693
    %v6566 = vunpack.c.3.s8 %v694
    %v6567 = vunpack.c.3.s8 %v695
    %v6568 = vunpack.c.3.s8 %v696
    %v6569 = vunpack.c.3.s8 %v697
    %v6570 = vunpack.c.3.s8 %v698
    %v6571 = vunpack.c.0.s8 %v699
    %v6572 = vunpack.c.0.s8 %v700
    %v6573 = vunpack.c.0.s8 %v701
    %v6574 = vunpack.c.0.s8 %v702
    %v6575 = vunpack.c.0.s8 %v703
    %v6576 = vunpack.c.0.s8 %v704
    %v6577 = vunpack.c.0.s8 %v705
    %v6578 = vunpack.c.1.s8 %v699
    %v6579 = vunpack.c.1.s8 %v700
    %v6580 = vunpack.c.1.s8 %v701
    %v6581 = vunpack.c.1.s8 %v702
    %v6582 = vunpack.c.1.s8 %v703
    %v6583 = vunpack.c.1.s8 %v704
    %v6584 = vunpack.c.1.s8 %v705
    %v6585 = vunpack.c.2.s8 %v699
    %v6586 = vunpack.c.2.s8 %v700
    %v6587 = vunpack.c.2.s8 %v701
    %v6588 = vunpack.c.2.s8 %v702
    %v6589 = vunpack.c.2.s8 %v703
    %v6590 = vunpack.c.2.s8 %v704
    %v6591 = vunpack.c.2.s8 %v705
    %v6592 = vunpack.c.3.s8 %v699
    %v6593 = vunpack.c.3.s8 %v700
    %v6594 = vunpack.c.3.s8 %v701
    %v6595 = vunpack.c.3.s8 %v702
    %v6596 = vunpack.c.3.s8 %v703
    %v6597 = vunpack.c.3.s8 %v704
    %v6598 = vunpack.c.3.s8 %v705
    %v6599 = vunpack.c.0.s8 %v706
    %v6600 = vunpack.c.0.s8 %v707
    %v6601 = vunpack.c.0.s8 %v708
    %v6602 = vunpack.c.0.s8 %v709
    %v6603 = vunpack.c.0.s8 %v710
    %v6604 = vunpack.c.0.s8 %v711
    %v6605 = vunpack.c.0.s8 %v712
    %v6606 = vunpack.c.1.s8 %v706
    %v6607 = vunpack.c.1.s8 %v707
    %v6608 = vunpack.c.1.s8 %v708
    %v6609 = vunpack.c.1.s8 %v709
    %v6610 = vunpack.c.1.s8 %v710
    %v6611 = vunpack.c.1.s8 %v711
    %v6612 = vunpack.c.1.s8 %v712
    %v6613 = vunpack.c.2.s8 %v706
    %v6614 = vunpack.c.2.s8 %v707
    %v6615 = vunpack.c.2.s8 %v708
    %v6616 = vunpack.c.2.s8 %v709
    %v6617 = vunpack.c.2.s8 %v710
    %v6618 = vunpack.c.2.s8 %v711
    %v6619 = vunpack.c.2.s8 %v712
    %v6620 = vunpack.c.3.s8 %v706
    %v6621 = vunpack.c.3.s8 %v707
    %v6622 = vunpack.c.3.s8 %v708
    %v6623 = vunpack.c.3.s8 %v709
    %v6624 = vunpack.c.3.s8 %v710
    %v6625 = vunpack.c.3.s8 %v711
    %v6626 = vunpack.c.3.s8 %v712
    %v6627 = vunpack.c.0.s8 %v713
    %v6628 = vunpack.c.0.s8 %v714
    %v6629 = vunpack.c.0.s8 %v715
    %v6630 = vunpack.c.0.s8 %v716
    %v6631 = vunpack.c.0.s8 %v717
    %v6632 = vunpack.c.0.s8 %v718
    %v6633 = vunpack.c.0.s8 %v719
    %v6634 = vunpack.c.1.s8 %v713
    %v6635 = vunpack.c.1.s8 %v714
    %v6636 = vunpack.c.1.s8 %v715
    %v6637 = vunpack.c.1.s8 %v716
    %v6638 = vunpack.c.1.s8 %v717
    %v6639 = vunpack.c.1.s8 %v718
    %v6640 = vunpack.c.1.s8 %v719
    %v6641 = vunpack.c.2.s8 %v713
    %v6642 = vunpack.c.2.s8 %v714
    %v6643 = vunpack.c.2.s8 %v715
    %v6644 = vunpack.c.2.s8 %v716
    %v6645 = vunpack.c.2.s8 %v717
    %v6646 = vunpack.c.2.s8 %v718
    %v6647 = vunpack.c.2.s8 %v719
    %v6648 = vunpack.c.3.s8 %v713
    %v6649 = vunpack.c.3.s8 %v714
    %v6650 = vunpack.c.3.s8 %v715
    %v6651 = vunpack.c.3.s8 %v716
    %v6652 = vunpack.c.3.s8 %v717
    %v6653 = vunpack.c.3.s8 %v718
    %v6654 = vunpack.c.3.s8 %v719
    %v6655 = vunpack.c.0.s8 %v720
    %v6656 = vunpack.c.0.s8 %v721
    %v6657 = vunpack.c.0.s8 %v722
    %v6658 = vunpack.c.0.s8 %v723
    %v6659 = vunpack.c.0.s8 %v724
    %v6660 = vunpack.c.0.s8 %v725
    %v6661 = vunpack.c.0.s8 %v726
    %v6662 = vunpack.c.1.s8 %v720
    %v6663 = vunpack.c.1.s8 %v721
    %v6664 = vunpack.c.1.s8 %v722
    %v6665 = vunpack.c.1.s8 %v723
    %v6666 = vunpack.c.1.s8 %v724
    %v6667 = vunpack.c.1.s8 %v725
    %v6668 = vunpack.c.1.s8 %v726
    %v6669 = vunpack.c.2.s8 %v720
    %v6670 = vunpack.c.2.s8 %v721
    %v6671 = vunpack.c.2.s8 %v722
    %v6672 = vunpack.c.2.s8 %v723
    %v6673 = vunpack.c.2.s8 %v724
    %v6674 = vunpack.c.2.s8 %v725
    %v6675 = vunpack.c.2.s8 %v726
    %v6676 = vunpack.c.3.s8 %v720
    %v6677 = vunpack.c.3.s8 %v721
    %v6678 = vunpack.c.3.s8 %v722
    %v6679 = vunpack.c.3.s8 %v723
    %v6680 = vunpack.c.3.s8 %v724
    %v6681 = vunpack.c.3.s8 %v725
    %v6682 = vunpack.c.3.s8 %v726
    %v6683 = vunpack.c.0.s8 %v727
    %v6684 = vunpack.c.0.s8 %v728
    %v6685 = vunpack.c.0.s8 %v729
    %v6686 = vunpack.c.0.s8 %v730
    %v6687 = vunpack.c.0.s8 %v731
    %v6688 = vunpack.c.0.s8 %v732
    %v6689 = vunpack.c.0.s8 %v733
    %v6690 = vunpack.c.1.s8 %v727
    %v6691 = vunpack.c.1.s8 %v728
    %v6692 = vunpack.c.1.s8 %v729
    %v6693 = vunpack.c.1.s8 %v730
    %v6694 = vunpack.c.1.s8 %v731
    %v6695 = vunpack.c.1.s8 %v732
    %v6696 = vunpack.c.1.s8 %v733
    %v6697 = vunpack.c.2.s8 %v727
    %v6698 = vunpack.c.2.s8 %v728
    %v6699 = vunpack.c.2.s8 %v729
    %v6700 = vunpack.c.2.s8 %v730
    %v6701 = vunpack.c.2.s8 %v731
    %v6702 = vunpack.c.2.s8 %v732
    %v6703 = vunpack.c.2.s8 %v733
    %v6704 = vunpack.c.3.s8 %v727
    %v6705 = vunpack.c.3.s8 %v728
    %v6706 = vunpack.c.3.s8 %v729
    %v6707 = vunpack.c.3.s8 %v730
    %v6708 = vunpack.c.3.s8 %v731
    %v6709 = vunpack.c.3.s8 %v732
    %v6710 = vunpack.c.3.s8 %v733
    %v6711 = vunpack.c.0.s8 %v734
    %v6712 = vunpack.c.0.s8 %v735
    %v6713 = vunpack.c.0.s8 %v736
    %v6714 = vunpack.c.0.s8 %v737
    %v6715 = vunpack.c.0.s8 %v738
    %v6716 = vunpack.c.0.s8 %v739
    %v6717 = vunpack.c.0.s8 %v740
    %v6718 = vunpack.c.1.s8 %v734
    %v6719 = vunpack.c.1.s8 %v735
    %v6720 = vunpack.c.1.s8 %v736
    %v6721 = vunpack.c.1.s8 %v737
    %v6722 = vunpack.c.1.s8 %v738
    %v6723 = vunpack.c.1.s8 %v739
    %v6724 = vunpack.c.1.s8 %v740
    %v6725 = vunpack.c.2.s8 %v734
    %v6726 = vunpack.c.2.s8 %v735
    %v6727 = vunpack.c.2.s8 %v736
    %v6728 = vunpack.c.2.s8 %v737
    %v6729 = vunpack.c.2.s8 %v738
    %v6730 = vunpack.c.2.s8 %v739
    %v6731 = vunpack.c.2.s8 %v740
    %v6732 = vunpack.c.3.s8 %v734
    %v6733 = vunpack.c.3.s8 %v735
    %v6734 = vunpack.c.3.s8 %v736
    %v6735 = vunpack.c.3.s8 %v737
    %v6736 = vunpack.c.3.s8 %v738
    %v6737 = vunpack.c.3.s8 %v739
    %v6738 = vunpack.c.3.s8 %v740
    %v6739 = vunpack.c.0.s8 %v741
    %v6740 = vunpack.c.0.s8 %v742
    %v6741 = vunpack.c.0.s8 %v743
    %v6742 = vunpack.c.0.s8 %v744
    %v6743 = vunpack.c.0.s8 %v745
    %v6744 = vunpack.c.0.s8 %v746
    %v6745 = vunpack.c.0.s8 %v747
    %v6746 = vunpack.c.1.s8 %v741
    %v6747 = vunpack.c.1.s8 %v742
    %v6748 = vunpack.c.1.s8 %v743
    %v6749 = vunpack.c.1.s8 %v744
    %v6750 = vunpack.c.1.s8 %v745
    %v6751 = vunpack.c.1.s8 %v746
    %v6752 = vunpack.c.1.s8 %v747
    %v6753 = vunpack.c.2.s8 %v741
    %v6754 = vunpack.c.2.s8 %v742
    %v6755 = vunpack.c.2.s8 %v743
    %v6756 = vunpack.c.2.s8 %v744
    %v6757 = vunpack.c.2.s8 %v745
    %v6758 = vunpack.c.2.s8 %v746
    %v6759 = vunpack.c.2.s8 %v747
    %v6760 = vunpack.c.3.s8 %v741
    %v6761 = vunpack.c.3.s8 %v742
    %v6762 = vunpack.c.3.s8 %v743
    %v6763 = vunpack.c.3.s8 %v744
    %v6764 = vunpack.c.3.s8 %v745
    %v6765 = vunpack.c.3.s8 %v746
    %v6766 = vunpack.c.3.s8 %v747
    %v6767 = vunpack.c.0.s8 %v748
    %v6768 = vunpack.c.0.s8 %v749
    %v6769 = vunpack.c.0.s8 %v750
    %v6770 = vunpack.c.0.s8 %v751
    %v6771 = vunpack.c.0.s8 %v752
    %v6772 = vunpack.c.0.s8 %v753
    %v6773 = vunpack.c.0.s8 %v754
    %v6774 = vunpack.c.1.s8 %v748
    %v6775 = vunpack.c.1.s8 %v749
    %v6776 = vunpack.c.1.s8 %v750
    %v6777 = vunpack.c.1.s8 %v751
    %v6778 = vunpack.c.1.s8 %v752
    %v6779 = vunpack.c.1.s8 %v753
    %v6780 = vunpack.c.1.s8 %v754
    %v6781 = vunpack.c.2.s8 %v748
    %v6782 = vunpack.c.2.s8 %v749
    %v6783 = vunpack.c.2.s8 %v750
    %v6784 = vunpack.c.2.s8 %v751
    %v6785 = vunpack.c.2.s8 %v752
    %v6786 = vunpack.c.2.s8 %v753
    %v6787 = vunpack.c.2.s8 %v754
    %v6788 = vunpack.c.3.s8 %v748
    %v6789 = vunpack.c.3.s8 %v749
    %v6790 = vunpack.c.3.s8 %v750
    %v6791 = vunpack.c.3.s8 %v751
    %v6792 = vunpack.c.3.s8 %v752
    %v6793 = vunpack.c.3.s8 %v753
    %v6794 = vunpack.c.3.s8 %v754
    %v6795 = vunpack.c.0.s8 %v755
    %v6796 = vunpack.c.0.s8 %v756
    %v6797 = vunpack.c.0.s8 %v757
    %v6798 = vunpack.c.0.s8 %v758
    %v6799 = vunpack.c.0.s8 %v759
    %v6800 = vunpack.c.0.s8 %v760
    %v6801 = vunpack.c.0.s8 %v761
    %v6802 = vunpack.c.1.s8 %v755
    %v6803 = vunpack.c.1.s8 %v756
    %v6804 = vunpack.c.1.s8 %v757
    %v6805 = vunpack.c.1.s8 %v758
    %v6806 = vunpack.c.1.s8 %v759
    %v6807 = vunpack.c.1.s8 %v760
    %v6808 = vunpack.c.1.s8 %v761
    %v6809 = vunpack.c.2.s8 %v755
    %v6810 = vunpack.c.2.s8 %v756
    %v6811 = vunpack.c.2.s8 %v757
    %v6812 = vunpack.c.2.s8 %v758
    %v6813 = vunpack.c.2.s8 %v759
    %v6814 = vunpack.c.2.s8 %v760
    %v6815 = vunpack.c.2.s8 %v761
    %v6816 = vunpack.c.3.s8 %v755
    %v6817 = vunpack.c.3.s8 %v756
    %v6818 = vunpack.c.3.s8 %v757
    %v6819 = vunpack.c.3.s8 %v758
    %v6820 = vunpack.c.3.s8 %v759
    %v6821 = vunpack.c.3.s8 %v760
    %v6822 = vunpack.c.3.s8 %v761
    %v6823 = vunpack.c.0.s8 %v762
    %v6824 = vunpack.c.0.s8 %v763
    %v6825 = vunpack.c.0.s8 %v764
    %v6826 = vunpack.c.0.s8 %v765
    %v6827 = vunpack.c.0.s8 %v766
    %v6828 = vunpack.c.0.s8 %v767
    %v6829 = vunpack.c.0.s8 %v768
    %v6830 = vunpack.c.1.s8 %v762
    %v6831 = vunpack.c.1.s8 %v763
    %v6832 = vunpack.c.1.s8 %v764
    %v6833 = vunpack.c.1.s8 %v765
    %v6834 = vunpack.c.1.s8 %v766
    %v6835 = vunpack.c.1.s8 %v767
    %v6836 = vunpack.c.1.s8 %v768
    %v6837 = vunpack.c.2.s8 %v762
    %v6838 = vunpack.c.2.s8 %v763
    %v6839 = vunpack.c.2.s8 %v764
    %v6840 = vunpack.c.2.s8 %v765
    %v6841 = vunpack.c.2.s8 %v766
    %v6842 = vunpack.c.2.s8 %v767
    %v6843 = vunpack.c.2.s8 %v768
    %v6844 = vunpack.c.3.s8 %v762
    %v6845 = vunpack.c.3.s8 %v763
    %v6846 = vunpack.c.3.s8 %v764
    %v6847 = vunpack.c.3.s8 %v765
    %v6848 = vunpack.c.3.s8 %v766
    %v6849 = vunpack.c.3.s8 %v767
    %v6850 = vunpack.c.3.s8 %v768
    %v6851 = vunpack.c.0.s8 %v769
    %v6852 = vunpack.c.0.s8 %v770
    %v6853 = vunpack.c.0.s8 %v771
    %v6854 = vunpack.c.0.s8 %v772
    %v6855 = vunpack.c.0.s8 %v773
    %v6856 = vunpack.c.0.s8 %v774
    %v6857 = vunpack.c.0.s8 %v775
    %v6858 = vunpack.c.1.s8 %v769
    %v6859 = vunpack.c.1.s8 %v770
    %v6860 = vunpack.c.1.s8 %v771
    %v6861 = vunpack.c.1.s8 %v772
    %v6862 = vunpack.c.1.s8 %v773
    %v6863 = vunpack.c.1.s8 %v774
    %v6864 = vunpack.c.1.s8 %v775
    %v6865 = vunpack.c.2.s8 %v769
    %v6866 = vunpack.c.2.s8 %v770
    %v6867 = vunpack.c.2.s8 %v771
    %v6868 = vunpack.c.2.s8 %v772
    %v6869 = vunpack.c.2.s8 %v773
    %v6870 = vunpack.c.2.s8 %v774
    %v6871 = vunpack.c.2.s8 %v775
    %v6872 = vunpack.c.3.s8 %v769
    %v6873 = vunpack.c.3.s8 %v770
    %v6874 = vunpack.c.3.s8 %v771
    %v6875 = vunpack.c.3.s8 %v772
    %v6876 = vunpack.c.3.s8 %v773
    %v6877 = vunpack.c.3.s8 %v774
    %v6878 = vunpack.c.3.s8 %v775
    %v6879 = vunpack.c.0.s8 %v776
    %v6880 = vunpack.c.0.s8 %v777
    %v6881 = vunpack.c.0.s8 %v778
    %v6882 = vunpack.c.0.s8 %v779
    %v6883 = vunpack.c.0.s8 %v780
    %v6884 = vunpack.c.0.s8 %v781
    %v6885 = vunpack.c.0.s8 %v782
    %v6886 = vunpack.c.1.s8 %v776
    %v6887 = vunpack.c.1.s8 %v777
    %v6888 = vunpack.c.1.s8 %v778
    %v6889 = vunpack.c.1.s8 %v779
    %v6890 = vunpack.c.1.s8 %v780
    %v6891 = vunpack.c.1.s8 %v781
    %v6892 = vunpack.c.1.s8 %v782
    %v6893 = vunpack.c.2.s8 %v776
    %v6894 = vunpack.c.2.s8 %v777
    %v6895 = vunpack.c.2.s8 %v778
    %v6896 = vunpack.c.2.s8 %v779
    %v6897 = vunpack.c.2.s8 %v780
    %v6898 = vunpack.c.2.s8 %v781
    %v6899 = vunpack.c.2.s8 %v782
    %v6900 = vunpack.c.3.s8 %v776
    %v6901 = vunpack.c.3.s8 %v777
    %v6902 = vunpack.c.3.s8 %v778
    %v6903 = vunpack.c.3.s8 %v779
    %v6904 = vunpack.c.3.s8 %v780
    %v6905 = vunpack.c.3.s8 %v781
    %v6906 = vunpack.c.3.s8 %v782
    %v6907 = vunpack.c.0.s8 %v783
    %v6908 = vunpack.c.0.s8 %v784
    %v6909 = vunpack.c.0.s8 %v785
    %v6910 = vunpack.c.0.s8 %v786
    %v6911 = vunpack.c.0.s8 %v787
    %v6912 = vunpack.c.0.s8 %v788
    %v6913 = vunpack.c.0.s8 %v789
    %v6914 = vunpack.c.1.s8 %v783
    %v6915 = vunpack.c.1.s8 %v784
    %v6916 = vunpack.c.1.s8 %v785
    %v6917 = vunpack.c.1.s8 %v786
    %v6918 = vunpack.c.1.s8 %v787
    %v6919 = vunpack.c.1.s8 %v788
    %v6920 = vunpack.c.1.s8 %v789
    %v6921 = vunpack.c.2.s8 %v783
    %v6922 = vunpack.c.2.s8 %v784
    %v6923 = vunpack.c.2.s8 %v785
    %v6924 = vunpack.c.2.s8 %v786
    %v6925 = vunpack.c.2.s8 %v787
    %v6926 = vunpack.c.2.s8 %v788
    %v6927 = vunpack.c.2.s8 %v789
    %v6928 = vunpack.c.3.s8 %v783
    %v6929 = vunpack.c.3.s8 %v784
    %v6930 = vunpack.c.3.s8 %v785
    %v6931 = vunpack.c.3.s8 %v786
    %v6932 = vunpack.c.3.s8 %v787
    %v6933 = vunpack.c.3.s8 %v788
    %v6934 = vunpack.c.3.s8 %v789
    %v6935 = vunpack.c.0.s8 %v790
    %v6936 = vunpack.c.0.s8 %v791
    %v6937 = vunpack.c.0.s8 %v792
    %v6938 = vunpack.c.0.s8 %v793
    %v6939 = vunpack.c.0.s8 %v794
    %v6940 = vunpack.c.0.s8 %v795
    %v6941 = vunpack.c.0.s8 %v796
    %v6942 = vunpack.c.1.s8 %v790
    %v6943 = vunpack.c.1.s8 %v791
    %v6944 = vunpack.c.1.s8 %v792
    %v6945 = vunpack.c.1.s8 %v793
    %v6946 = vunpack.c.1.s8 %v794
    %v6947 = vunpack.c.1.s8 %v795
    %v6948 = vunpack.c.1.s8 %v796
    %v6949 = vunpack.c.2.s8 %v790
    %v6950 = vunpack.c.2.s8 %v791
    %v6951 = vunpack.c.2.s8 %v792
    %v6952 = vunpack.c.2.s8 %v793
    %v6953 = vunpack.c.2.s8 %v794
    %v6954 = vunpack.c.2.s8 %v795
    %v6955 = vunpack.c.2.s8 %v796
    %v6956 = vunpack.c.3.s8 %v790
    %v6957 = vunpack.c.3.s8 %v791
    %v6958 = vunpack.c.3.s8 %v792
    %v6959 = vunpack.c.3.s8 %v793
    %v6960 = vunpack.c.3.s8 %v794
    %v6961 = vunpack.c.3.s8 %v795
    %v6962 = vunpack.c.3.s8 %v796
    %v6963 = vunpack.c.0.s8 %v797
    %v6964 = vunpack.c.0.s8 %v798
    %v6965 = vunpack.c.0.s8 %v799
    %v6966 = vunpack.c.0.s8 %v800
    %v6967 = vunpack.c.0.s8 %v801
    %v6968 = vunpack.c.0.s8 %v802
    %v6969 = vunpack.c.0.s8 %v803
    %v6970 = vunpack.c.1.s8 %v797
    %v6971 = vunpack.c.1.s8 %v798
    %v6972 = vunpack.c.1.s8 %v799
    %v6973 = vunpack.c.1.s8 %v800
    %v6974 = vunpack.c.1.s8 %v801
    %v6975 = vunpack.c.1.s8 %v802
    %v6976 = vunpack.c.1.s8 %v803
    %v6977 = vunpack.c.2.s8 %v797
    %v6978 = vunpack.c.2.s8 %v798
    %v6979 = vunpack.c.2.s8 %v799
    %v6980 = vunpack.c.2.s8 %v800
    %v6981 = vunpack.c.2.s8 %v801
    %v6982 = vunpack.c.2.s8 %v802
    %v6983 = vunpack.c.2.s8 %v803
    %v6984 = vunpack.c.3.s8 %v797
    %v6985 = vunpack.c.3.s8 %v798
    %v6986 = vunpack.c.3.s8 %v799
    %v6987 = vunpack.c.3.s8 %v800
    %v6988 = vunpack.c.3.s8 %v801
    %v6989 = vunpack.c.3.s8 %v802
    %v6990 = vunpack.c.3.s8 %v803
    %v6991 = vunpack.c.0.s8 %v804
    %v6992 = vunpack.c.0.s8 %v805
    %v6993 = vunpack.c.0.s8 %v806
    %v6994 = vunpack.c.0.s8 %v807
    %v6995 = vunpack.c.0.s8 %v808
    %v6996 = vunpack.c.0.s8 %v809
    %v6997 = vunpack.c.0.s8 %v810
    %v6998 = vunpack.c.1.s8 %v804
    %v6999 = vunpack.c.1.s8 %v805
    %v7000 = vunpack.c.1.s8 %v806
    %v7001 = vunpack.c.1.s8 %v807
    %v7002 = vunpack.c.1.s8 %v808
    %v7003 = vunpack.c.1.s8 %v809
    %v7004 = vunpack.c.1.s8 %v810
    %v7005 = vunpack.c.2.s8 %v804
    %v7006 = vunpack.c.2.s8 %v805
    %v7007 = vunpack.c.2.s8 %v806
    %v7008 = vunpack.c.2.s8 %v807
    %v7009 = vunpack.c.2.s8 %v808
    %v7010 = vunpack.c.2.s8 %v809
    %v7011 = vunpack.c.2.s8 %v810
    %v7012 = vunpack.c.3.s8 %v804
    %v7013 = vunpack.c.3.s8 %v805
    %v7014 = vunpack.c.3.s8 %v806
    %v7015 = vunpack.c.3.s8 %v807
    %v7016 = vunpack.c.3.s8 %v808
    %v7017 = vunpack.c.3.s8 %v809
    %v7018 = vunpack.c.3.s8 %v810
    %v7019 = vunpack.c.0.s8 %v811
    %v7020 = vunpack.c.0.s8 %v812
    %v7021 = vunpack.c.0.s8 %v813
    %v7022 = vunpack.c.0.s8 %v814
    %v7023 = vunpack.c.0.s8 %v815
    %v7024 = vunpack.c.0.s8 %v816
    %v7025 = vunpack.c.0.s8 %v817
    %v7026 = vunpack.c.1.s8 %v811
    %v7027 = vunpack.c.1.s8 %v812
    %v7028 = vunpack.c.1.s8 %v813
    %v7029 = vunpack.c.1.s8 %v814
    %v7030 = vunpack.c.1.s8 %v815
    %v7031 = vunpack.c.1.s8 %v816
    %v7032 = vunpack.c.1.s8 %v817
    %v7033 = vunpack.c.2.s8 %v811
    %v7034 = vunpack.c.2.s8 %v812
    %v7035 = vunpack.c.2.s8 %v813
    %v7036 = vunpack.c.2.s8 %v814
    %v7037 = vunpack.c.2.s8 %v815
    %v7038 = vunpack.c.2.s8 %v816
    %v7039 = vunpack.c.2.s8 %v817
    %v7040 = vunpack.c.3.s8 %v811
    %v7041 = vunpack.c.3.s8 %v812
    %v7042 = vunpack.c.3.s8 %v813
    %v7043 = vunpack.c.3.s8 %v814
    %v7044 = vunpack.c.3.s8 %v815
    %v7045 = vunpack.c.3.s8 %v816
    %v7046 = vunpack.c.3.s8 %v817
    %v7047 = vunpack.c.0.s8 %v818
    %v7048 = vunpack.c.0.s8 %v819
    %v7049 = vunpack.c.0.s8 %v820
    %v7050 = vunpack.c.0.s8 %v821
    %v7051 = vunpack.c.0.s8 %v822
    %v7052 = vunpack.c.0.s8 %v823
    %v7053 = vunpack.c.0.s8 %v824
    %v7054 = vunpack.c.1.s8 %v818
    %v7055 = vunpack.c.1.s8 %v819
    %v7056 = vunpack.c.1.s8 %v820
    %v7057 = vunpack.c.1.s8 %v821
    %v7058 = vunpack.c.1.s8 %v822
    %v7059 = vunpack.c.1.s8 %v823
    %v7060 = vunpack.c.1.s8 %v824
    %v7061 = vunpack.c.2.s8 %v818
    %v7062 = vunpack.c.2.s8 %v819
    %v7063 = vunpack.c.2.s8 %v820
    %v7064 = vunpack.c.2.s8 %v821
    %v7065 = vunpack.c.2.s8 %v822
    %v7066 = vunpack.c.2.s8 %v823
    %v7067 = vunpack.c.2.s8 %v824
    %v7068 = vunpack.c.3.s8 %v818
    %v7069 = vunpack.c.3.s8 %v819
    %v7070 = vunpack.c.3.s8 %v820
    %v7071 = vunpack.c.3.s8 %v821
    %v7072 = vunpack.c.3.s8 %v822
    %v7073 = vunpack.c.3.s8 %v823
    %v7074 = vunpack.c.3.s8 %v824
    %v7075 = vunpack.c.0.s8 %v825
    %v7076 = vunpack.c.0.s8 %v826
    %v7077 = vunpack.c.0.s8 %v827
    %v7078 = vunpack.c.0.s8 %v828
    %v7079 = vunpack.c.0.s8 %v829
    %v7080 = vunpack.c.0.s8 %v830
    %v7081 = vunpack.c.0.s8 %v831
    %v7082 = vunpack.c.1.s8 %v825
    %v7083 = vunpack.c.1.s8 %v826
    %v7084 = vunpack.c.1.s8 %v827
    %v7085 = vunpack.c.1.s8 %v828
    %v7086 = vunpack.c.1.s8 %v829
    %v7087 = vunpack.c.1.s8 %v830
    %v7088 = vunpack.c.1.s8 %v831
    %v7089 = vunpack.c.2.s8 %v825
    %v7090 = vunpack.c.2.s8 %v826
    %v7091 = vunpack.c.2.s8 %v827
    %v7092 = vunpack.c.2.s8 %v828
    %v7093 = vunpack.c.2.s8 %v829
    %v7094 = vunpack.c.2.s8 %v830
    %v7095 = vunpack.c.2.s8 %v831
    %v7096 = vunpack.c.3.s8 %v825
    %v7097 = vunpack.c.3.s8 %v826
    %v7098 = vunpack.c.3.s8 %v827
    %v7099 = vunpack.c.3.s8 %v828
    %v7100 = vunpack.c.3.s8 %v829
    %v7101 = vunpack.c.3.s8 %v830
    %v7102 = vunpack.c.3.s8 %v831
    %v7103 = vunpack.c.0.s8 %v832
    %v7104 = vunpack.c.0.s8 %v833
    %v7105 = vunpack.c.0.s8 %v834
    %v7106 = vunpack.c.0.s8 %v835
    %v7107 = vunpack.c.0.s8 %v836
    %v7108 = vunpack.c.0.s8 %v837
    %v7109 = vunpack.c.0.s8 %v838
    %v7110 = vunpack.c.1.s8 %v832
    %v7111 = vunpack.c.1.s8 %v833
    %v7112 = vunpack.c.1.s8 %v834
    %v7113 = vunpack.c.1.s8 %v835
    %v7114 = vunpack.c.1.s8 %v836
    %v7115 = vunpack.c.1.s8 %v837
    %v7116 = vunpack.c.1.s8 %v838
    %v7117 = vunpack.c.2.s8 %v832
    %v7118 = vunpack.c.2.s8 %v833
    %v7119 = vunpack.c.2.s8 %v834
    %v7120 = vunpack.c.2.s8 %v835
    %v7121 = vunpack.c.2.s8 %v836
    %v7122 = vunpack.c.2.s8 %v837
    %v7123 = vunpack.c.2.s8 %v838
    %v7124 = vunpack.c.3.s8 %v832
    %v7125 = vunpack.c.3.s8 %v833
    %v7126 = vunpack.c.3.s8 %v834
    %v7127 = vunpack.c.3.s8 %v835
    %v7128 = vunpack.c.3.s8 %v836
    %v7129 = vunpack.c.3.s8 %v837
    %v7130 = vunpack.c.3.s8 %v838
    %v7131 = vunpack.c.0.s8 %v839
    %v7132 = vunpack.c.0.s8 %v840
    %v7133 = vunpack.c.0.s8 %v841
    %v7134 = vunpack.c.0.s8 %v842
    %v7135 = vunpack.c.0.s8 %v843
    %v7136 = vunpack.c.0.s8 %v844
    %v7137 = vunpack.c.0.s8 %v845
    %v7138 = vunpack.c.1.s8 %v839
    %v7139 = vunpack.c.1.s8 %v840
    %v7140 = vunpack.c.1.s8 %v841
    %v7141 = vunpack.c.1.s8 %v842
    %v7142 = vunpack.c.1.s8 %v843
    %v7143 = vunpack.c.1.s8 %v844
    %v7144 = vunpack.c.1.s8 %v845
    %v7145 = vunpack.c.2.s8 %v839
    %v7146 = vunpack.c.2.s8 %v840
    %v7147 = vunpack.c.2.s8 %v841
    %v7148 = vunpack.c.2.s8 %v842
    %v7149 = vunpack.c.2.s8 %v843
    %v7150 = vunpack.c.2.s8 %v844
    %v7151 = vunpack.c.2.s8 %v845
    %v7152 = vunpack.c.3.s8 %v839
    %v7153 = vunpack.c.3.s8 %v840
    %v7154 = vunpack.c.3.s8 %v841
    %v7155 = vunpack.c.3.s8 %v842
    %v7156 = vunpack.c.3.s8 %v843
    %v7157 = vunpack.c.3.s8 %v844
    %v7158 = vunpack.c.3.s8 %v845
    %v7159 = vunpack.c.0.s8 %v846
    %v7160 = vunpack.c.0.s8 %v847
    %v7161 = vunpack.c.0.s8 %v848
    %v7162 = vunpack.c.0.s8 %v849
    %v7163 = vunpack.c.0.s8 %v850
    %v7164 = vunpack.c.0.s8 %v851
    %v7165 = vunpack.c.0.s8 %v852
    %v7166 = vunpack.c.1.s8 %v846
    %v7167 = vunpack.c.1.s8 %v847
    %v7168 = vunpack.c.1.s8 %v848
    %v7169 = vunpack.c.1.s8 %v849
    %v7170 = vunpack.c.1.s8 %v850
    %v7171 = vunpack.c.1.s8 %v851
    %v7172 = vunpack.c.1.s8 %v852
    %v7173 = vunpack.c.2.s8 %v846
    %v7174 = vunpack.c.2.s8 %v847
    %v7175 = vunpack.c.2.s8 %v848
    %v7176 = vunpack.c.2.s8 %v849
    %v7177 = vunpack.c.2.s8 %v850
    %v7178 = vunpack.c.2.s8 %v851
    %v7179 = vunpack.c.2.s8 %v852
    %v7180 = vunpack.c.3.s8 %v846
    %v7181 = vunpack.c.3.s8 %v847
    %v7182 = vunpack.c.3.s8 %v848
    %v7183 = vunpack.c.3.s8 %v849
    %v7184 = vunpack.c.3.s8 %v850
    %v7185 = vunpack.c.3.s8 %v851
    %v7186 = vunpack.c.3.s8 %v852
    %v7187 = vcvt.s32.f32 %v6291
    %v7188 = vcvt.s32.f32 %v6292
    %v7189 = vcvt.s32.f32 %v6293
    %v7190 = vcvt.s32.f32 %v6294
    %v7191 = vcvt.s32.f32 %v6295
    %v7192 = vcvt.s32.f32 %v6296
    %v7193 = vcvt.s32.f32 %v6297
    %v7194 = vcvt.s32.f32 %v6298
    %v7195 = vcvt.s32.f32 %v6299
    %v7196 = vcvt.s32.f32 %v6300
    %v7197 = vcvt.s32.f32 %v6301
    %v7198 = vcvt.s32.f32 %v6302
    %v7199 = vcvt.s32.f32 %v6303
    %v7200 = vcvt.s32.f32 %v6304
    %v7201 = vcvt.s32.f32 %v6305
    %v7202 = vcvt.s32.f32 %v6306
    %v7203 = vcvt.s32.f32 %v6307
    %v7204 = vcvt.s32.f32 %v6308
    %v7205 = vcvt.s32.f32 %v6309
    %v7206 = vcvt.s32.f32 %v6310
    %v7207 = vcvt.s32.f32 %v6311
    %v7208 = vcvt.s32.f32 %v6312
    %v7209 = vcvt.s32.f32 %v6313
    %v7210 = vcvt.s32.f32 %v6314
    %v7211 = vcvt.s32.f32 %v6315
    %v7212 = vcvt.s32.f32 %v6316
    %v7213 = vcvt.s32.f32 %v6317
    %v7214 = vcvt.s32.f32 %v6318
    %v7215 = vcvt.s32.f32 %v6319
    %v7216 = vcvt.s32.f32 %v6320
    %v7217 = vcvt.s32.f32 %v6321
    %v7218 = vcvt.s32.f32 %v6322
    %v7219 = vcvt.s32.f32 %v6323
    %v7220 = vcvt.s32.f32 %v6324
    %v7221 = vcvt.s32.f32 %v6325
    %v7222 = vcvt.s32.f32 %v6326
    %v7223 = vcvt.s32.f32 %v6327
    %v7224 = vcvt.s32.f32 %v6328
    %v7225 = vcvt.s32.f32 %v6329
    %v7226 = vcvt.s32.f32 %v6330
    %v7227 = vcvt.s32.f32 %v6331
    %v7228 = vcvt.s32.f32 %v6332
    %v7229 = vcvt.s32.f32 %v6333
    %v7230 = vcvt.s32.f32 %v6334
    %v7231 = vcvt.s32.f32 %v6335
    %v7232 = vcvt.s32.f32 %v6336
    %v7233 = vcvt.s32.f32 %v6337
    %v7234 = vcvt.s32.f32 %v6338
    %v7235 = vcvt.s32.f32 %v6339
    %v7236 = vcvt.s32.f32 %v6340
    %v7237 = vcvt.s32.f32 %v6341
    %v7238 = vcvt.s32.f32 %v6342
    %v7239 = vcvt.s32.f32 %v6343
    %v7240 = vcvt.s32.f32 %v6344
    %v7241 = vcvt.s32.f32 %v6345
    %v7242 = vcvt.s32.f32 %v6346
    %v7243 = vcvt.s32.f32 %v6347
    %v7244 = vcvt.s32.f32 %v6348
    %v7245 = vcvt.s32.f32 %v6349
    %v7246 = vcvt.s32.f32 %v6350
    %v7247 = vcvt.s32.f32 %v6351
    %v7248 = vcvt.s32.f32 %v6352
    %v7249 = vcvt.s32.f32 %v6353
    %v7250 = vcvt.s32.f32 %v6354
    %v7251 = vcvt.s32.f32 %v6355
    %v7252 = vcvt.s32.f32 %v6356
    %v7253 = vcvt.s32.f32 %v6357
    %v7254 = vcvt.s32.f32 %v6358
    %v7255 = vcvt.s32.f32 %v6359
    %v7256 = vcvt.s32.f32 %v6360
    %v7257 = vcvt.s32.f32 %v6361
    %v7258 = vcvt.s32.f32 %v6362
    %v7259 = vcvt.s32.f32 %v6363
    %v7260 = vcvt.s32.f32 %v6364
    %v7261 = vcvt.s32.f32 %v6365
    %v7262 = vcvt.s32.f32 %v6366
    %v7263 = vcvt.s32.f32 %v6367
    %v7264 = vcvt.s32.f32 %v6368
    %v7265 = vcvt.s32.f32 %v6369
    %v7266 = vcvt.s32.f32 %v6370
    %v7267 = vcvt.s32.f32 %v6371
    %v7268 = vcvt.s32.f32 %v6372
    %v7269 = vcvt.s32.f32 %v6373
    %v7270 = vcvt.s32.f32 %v6374
    %v7271 = vcvt.s32.f32 %v6375
    %v7272 = vcvt.s32.f32 %v6376
    %v7273 = vcvt.s32.f32 %v6377
    %v7274 = vcvt.s32.f32 %v6378
    %v7275 = vcvt.s32.f32 %v6379
    %v7276 = vcvt.s32.f32 %v6380
    %v7277 = vcvt.s32.f32 %v6381
    %v7278 = vcvt.s32.f32 %v6382
    %v7279 = vcvt.s32.f32 %v6383
    %v7280 = vcvt.s32.f32 %v6384
    %v7281 = vcvt.s32.f32 %v6385
    %v7282 = vcvt.s32.f32 %v6386
    %v7283 = vcvt.s32.f32 %v6387
    %v7284 = vcvt.s32.f32 %v6388
    %v7285 = vcvt.s32.f32 %v6389
    %v7286 = vcvt.s32.f32 %v6390
    %v7287 = vcvt.s32.f32 %v6391
    %v7288 = vcvt.s32.f32 %v6392
    %v7289 = vcvt.s32.f32 %v6393
    %v7290 = vcvt.s32.f32 %v6394
    %v7291 = vcvt.s32.f32 %v6395
    %v7292 = vcvt.s32.f32 %v6396
    %v7293 = vcvt.s32.f32 %v6397
    %v7294 = vcvt.s32.f32 %v6398
    %v7295 = vcvt.s32.f32 %v6399
    %v7296 = vcvt.s32.f32 %v6400
    %v7297 = vcvt.s32.f32 %v6401
    %v7298 = vcvt.s32.f32 %v6402
    %v7299 = vcvt.s32.f32 %v6403
    %v7300 = vcvt.s32.f32 %v6404
    %v7301 = vcvt.s32.f32 %v6405
    %v7302 = vcvt.s32.f32 %v6406
    %v7303 = vcvt.s32.f32 %v6407
    %v7304 = vcvt.s32.f32 %v6408
    %v7305 = vcvt.s32.f32 %v6409
    %v7306 = vcvt.s32.f32 %v6410
    %v7307 = vcvt.s32.f32 %v6411
    %v7308 = vcvt.s32.f32 %v6412
    %v7309 = vcvt.s32.f32 %v6413
    %v7310 = vcvt.s32.f32 %v6414
    %v7311 = vcvt.s32.f32 %v6415
    %v7312 = vcvt.s32.f32 %v6416
    %v7313 = vcvt.s32.f32 %v6417
    %v7314 = vcvt.s32.f32 %v6418
    %v7315 = vcvt.s32.f32 %v6419
    %v7316 = vcvt.s32.f32 %v6420
    %v7317 = vcvt.s32.f32 %v6421
    %v7318 = vcvt.s32.f32 %v6422
    %v7319 = vcvt.s32.f32 %v6423
    %v7320 = vcvt.s32.f32 %v6424
    %v7321 = vcvt.s32.f32 %v6425
    %v7322 = vcvt.s32.f32 %v6426
    %v7323 = vcvt.s32.f32 %v6427
    %v7324 = vcvt.s32.f32 %v6428
    %v7325 = vcvt.s32.f32 %v6429
    %v7326 = vcvt.s32.f32 %v6430
    %v7327 = vcvt.s32.f32 %v6431
    %v7328 = vcvt.s32.f32 %v6432
    %v7329 = vcvt.s32.f32 %v6433
    %v7330 = vcvt.s32.f32 %v6434
    %v7331 = vcvt.s32.f32 %v6435
    %v7332 = vcvt.s32.f32 %v6436
    %v7333 = vcvt.s32.f32 %v6437
    %v7334 = vcvt.s32.f32 %v6438
    %v7335 = vcvt.s32.f32 %v6439
    %v7336 = vcvt.s32.f32 %v6440
    %v7337 = vcvt.s32.f32 %v6441
    %v7338 = vcvt.s32.f32 %v6442
    %v7339 = vcvt.s32.f32 %v6443
    %v7340 = vcvt.s32.f32 %v6444
    %v7341 = vcvt.s32.f32 %v6445
    %v7342 = vcvt.s32.f32 %v6446
    %v7343 = vcvt.s32.f32 %v6447
    %v7344 = vcvt.s32.f32 %v6448
    %v7345 = vcvt.s32.f32 %v6449
    %v7346 = vcvt.s32.f32 %v6450
    %v7347 = vcvt.s32.f32 %v6451
    %v7348 = vcvt.s32.f32 %v6452
    %v7349 = vcvt.s32.f32 %v6453
    %v7350 = vcvt.s32.f32 %v6454
    %v7351 = vcvt.s32.f32 %v6455
    %v7352 = vcvt.s32.f32 %v6456
    %v7353 = vcvt.s32.f32 %v6457
    %v7354 = vcvt.s32.f32 %v6458
    %v7355 = vcvt.s32.f32 %v6459
    %v7356 = vcvt.s32.f32 %v6460
    %v7357 = vcvt.s32.f32 %v6461
    %v7358 = vcvt.s32.f32 %v6462
    %v7359 = vcvt.s32.f32 %v6463
    %v7360 = vcvt.s32.f32 %v6464
    %v7361 = vcvt.s32.f32 %v6465
    %v7362 = vcvt.s32.f32 %v6466
    %v7363 = vcvt.s32.f32 %v6467
    %v7364 = vcvt.s32.f32 %v6468
    %v7365 = vcvt.s32.f32 %v6469
    %v7366 = vcvt.s32.f32 %v6470
    %v7367 = vcvt.s32.f32 %v6471
    %v7368 = vcvt.s32.f32 %v6472
    %v7369 = vcvt.s32.f32 %v6473
    %v7370 = vcvt.s32.f32 %v6474
    %v7371 = vcvt.s32.f32 %v6475
    %v7372 = vcvt.s32.f32 %v6476
    %v7373 = vcvt.s32.f32 %v6477
    %v7374 = vcvt.s32.f32 %v6478
    %v7375 = vcvt.s32.f32 %v6479
    %v7376 = vcvt.s32.f32 %v6480
    %v7377 = vcvt.s32.f32 %v6481
    %v7378 = vcvt.s32.f32 %v6482
    %v7379 = vcvt.s32.f32 %v6483
    %v7380 = vcvt.s32.f32 %v6484
    %v7381 = vcvt.s32.f32 %v6485
    %v7382 = vcvt.s32.f32 %v6486
    %v7383 = vcvt.s32.f32 %v6487
    %v7384 = vcvt.s32.f32 %v6488
    %v7385 = vcvt.s32.f32 %v6489
    %v7386 = vcvt.s32.f32 %v6490
    %v7387 = vcvt.s32.f32 %v6491
    %v7388 = vcvt.s32.f32 %v6492
    %v7389 = vcvt.s32.f32 %v6493
    %v7390 = vcvt.s32.f32 %v6494
    %v7391 = vcvt.s32.f32 %v6495
    %v7392 = vcvt.s32.f32 %v6496
    %v7393 = vcvt.s32.f32 %v6497
    %v7394 = vcvt.s32.f32 %v6498
    %v7395 = vcvt.s32.f32 %v6499
    %v7396 = vcvt.s32.f32 %v6500
    %v7397 = vcvt.s32.f32 %v6501
    %v7398 = vcvt.s32.f32 %v6502
    %v7399 = vcvt.s32.f32 %v6503
    %v7400 = vcvt.s32.f32 %v6504
    %v7401 = vcvt.s32.f32 %v6505
    %v7402 = vcvt.s32.f32 %v6506
    %v7403 = vcvt.s32.f32 %v6507
    %v7404 = vcvt.s32.f32 %v6508
    %v7405 = vcvt.s32.f32 %v6509
    %v7406 = vcvt.s32.f32 %v6510
    %v7407 = vcvt.s32.f32 %v6511
    %v7408 = vcvt.s32.f32 %v6512
    %v7409 = vcvt.s32.f32 %v6513
    %v7410 = vcvt.s32.f32 %v6514
    %v7411 = vcvt.s32.f32 %v6515
    %v7412 = vcvt.s32.f32 %v6516
    %v7413 = vcvt.s32.f32 %v6517
    %v7414 = vcvt.s32.f32 %v6518
    %v7415 = vcvt.s32.f32 %v6519
    %v7416 = vcvt.s32.f32 %v6520
    %v7417 = vcvt.s32.f32 %v6521
    %v7418 = vcvt.s32.f32 %v6522
    %v7419 = vcvt.s32.f32 %v6523
    %v7420 = vcvt.s32.f32 %v6524
    %v7421 = vcvt.s32.f32 %v6525
    %v7422 = vcvt.s32.f32 %v6526
    %v7423 = vcvt.s32.f32 %v6527
    %v7424 = vcvt.s32.f32 %v6528
    %v7425 = vcvt.s32.f32 %v6529
    %v7426 = vcvt.s32.f32 %v6530
    %v7427 = vcvt.s32.f32 %v6531
    %v7428 = vcvt.s32.f32 %v6532
    %v7429 = vcvt.s32.f32 %v6533
    %v7430 = vcvt.s32.f32 %v6534
    %v7431 = vcvt.s32.f32 %v6535
    %v7432 = vcvt.s32.f32 %v6536
    %v7433 = vcvt.s32.f32 %v6537
    %v7434 = vcvt.s32.f32 %v6538
    %v7435 = vcvt.s32.f32 %v6539
    %v7436 = vcvt.s32.f32 %v6540
    %v7437 = vcvt.s32.f32 %v6541
    %v7438 = vcvt.s32.f32 %v6542
    %v7439 = vcvt.s32.f32 %v6543
    %v7440 = vcvt.s32.f32 %v6544
    %v7441 = vcvt.s32.f32 %v6545
    %v7442 = vcvt.s32.f32 %v6546
    %v7443 = vcvt.s32.f32 %v6547
    %v7444 = vcvt.s32.f32 %v6548
    %v7445 = vcvt.s32.f32 %v6549
    %v7446 = vcvt.s32.f32 %v6550
    %v7447 = vcvt.s32.f32 %v6551
    %v7448 = vcvt.s32.f32 %v6552
    %v7449 = vcvt.s32.f32 %v6553
    %v7450 = vcvt.s32.f32 %v6554
    %v7451 = vcvt.s32.f32 %v6555
    %v7452 = vcvt.s32.f32 %v6556
    %v7453 = vcvt.s32.f32 %v6557
    %v7454 = vcvt.s32.f32 %v6558
    %v7455 = vcvt.s32.f32 %v6559
    %v7456 = vcvt.s32.f32 %v6560
    %v7457 = vcvt.s32.f32 %v6561
    %v7458 = vcvt.s32.f32 %v6562
    %v7459 = vcvt.s32.f32 %v6563
    %v7460 = vcvt.s32.f32 %v6564
    %v7461 = vcvt.s32.f32 %v6565
    %v7462 = vcvt.s32.f32 %v6566
    %v7463 = vcvt.s32.f32 %v6567
    %v7464 = vcvt.s32.f32 %v6568
    %v7465 = vcvt.s32.f32 %v6569
    %v7466 = vcvt.s32.f32 %v6570
    %v7467 = vcvt.s32.f32 %v6571
    %v7468 = vcvt.s32.f32 %v6572
    %v7469 = vcvt.s32.f32 %v6573
    %v7470 = vcvt.s32.f32 %v6574
    %v7471 = vcvt.s32.f32 %v6575
    %v7472 = vcvt.s32.f32 %v6576
    %v7473 = vcvt.s32.f32 %v6577
    %v7474 = vcvt.s32.f32 %v6578
    %v7475 = vcvt.s32.f32 %v6579
    %v7476 = vcvt.s32.f32 %v6580
    %v7477 = vcvt.s32.f32 %v6581
    %v7478 = vcvt.s32.f32 %v6582
    %v7479 = vcvt.s32.f32 %v6583
    %v7480 = vcvt.s32.f32 %v6584
    %v7481 = vcvt.s32.f32 %v6585
    %v7482 = vcvt.s32.f32 %v6586
    %v7483 = vcvt.s32.f32 %v6587
    %v7484 = vcvt.s32.f32 %v6588
    %v7485 = vcvt.s32.f32 %v6589
    %v7486 = vcvt.s32.f32 %v6590
    %v7487 = vcvt.s32.f32 %v6591
    %v7488 = vcvt.s32.f32 %v6592
    %v7489 = vcvt.s32.f32 %v6593
    %v7490 = vcvt.s32.f32 %v6594
    %v7491 = vcvt.s32.f32 %v6595
    %v7492 = vcvt.s32.f32 %v6596
    %v7493 = vcvt.s32.f32 %v6597
    %v7494 = vcvt.s32.f32 %v6598
    %v7495 = vcvt.s32.f32 %v6599
    %v7496 = vcvt.s32.f32 %v6600
    %v7497 = vcvt.s32.f32 %v6601
    %v7498 = vcvt.s32.f32 %v6602
    %v7499 = vcvt.s32.f32 %v6603
    %v7500 = vcvt.s32.f32 %v6604
    %v7501 = vcvt.s32.f32 %v6605
    %v7502 = vcvt.s32.f32 %v6606
    %v7503 = vcvt.s32.f32 %v6607
    %v7504 = vcvt.s32.f32 %v6608
    %v7505 = vcvt.s32.f32 %v6609
    %v7506 = vcvt.s32.f32 %v6610
    %v7507 = vcvt.s32.f32 %v6611
    %v7508 = vcvt.s32.f32 %v6612
    %v7509 = vcvt.s32.f32 %v6613
    %v7510 = vcvt.s32.f32 %v6614
    %v7511 = vcvt.s32.f32 %v6615
    %v7512 = vcvt.s32.f32 %v6616
    %v7513 = vcvt.s32.f32 %v6617
    %v7514 = vcvt.s32.f32 %v6618
    %v7515 = vcvt.s32.f32 %v6619
    %v7516 = vcvt.s32.f32 %v6620
    %v7517 = vcvt.s32.f32 %v6621
    %v7518 = vcvt.s32.f32 %v6622
    %v7519 = vcvt.s32.f32 %v6623
    %v7520 = vcvt.s32.f32 %v6624
    %v7521 = vcvt.s32.f32 %v6625
    %v7522 = vcvt.s32.f32 %v6626
    %v7523 = vcvt.s32.f32 %v6627
    %v7524 = vcvt.s32.f32 %v6628
    %v7525 = vcvt.s32.f32 %v6629
    %v7526 = vcvt.s32.f32 %v6630
    %v7527 = vcvt.s32.f32 %v6631
    %v7528 = vcvt.s32.f32 %v6632
    %v7529 = vcvt.s32.f32 %v6633
    %v7530 = vcvt.s32.f32 %v6634
    %v7531 = vcvt.s32.f32 %v6635
    %v7532 = vcvt.s32.f32 %v6636
    %v7533 = vcvt.s32.f32 %v6637
    %v7534 = vcvt.s32.f32 %v6638
    %v7535 = vcvt.s32.f32 %v6639
    %v7536 = vcvt.s32.f32 %v6640
    %v7537 = vcvt.s32.f32 %v6641
    %v7538 = vcvt.s32.f32 %v6642
    %v7539 = vcvt.s32.f32 %v6643
    %v7540 = vcvt.s32.f32 %v6644
    %v7541 = vcvt.s32.f32 %v6645
    %v7542 = vcvt.s32.f32 %v6646
    %v7543 = vcvt.s32.f32 %v6647
    %v7544 = vcvt.s32.f32 %v6648
    %v7545 = vcvt.s32.f32 %v6649
    %v7546 = vcvt.s32.f32 %v6650
    %v7547 = vcvt.s32.f32 %v6651
    %v7548 = vcvt.s32.f32 %v6652
    %v7549 = vcvt.s32.f32 %v6653
    %v7550 = vcvt.s32.f32 %v6654
    %v7551 = vcvt.s32.f32 %v6655
    %v7552 = vcvt.s32.f32 %v6656
    %v7553 = vcvt.s32.f32 %v6657
    %v7554 = vcvt.s32.f32 %v6658
    %v7555 = vcvt.s32.f32 %v6659
    %v7556 = vcvt.s32.f32 %v6660
    %v7557 = vcvt.s32.f32 %v6661
    %v7558 = vcvt.s32.f32 %v6662
    %v7559 = vcvt.s32.f32 %v6663
    %v7560 = vcvt.s32.f32 %v6664
    %v7561 = vcvt.s32.f32 %v6665
    %v7562 = vcvt.s32.f32 %v6666
    %v7563 = vcvt.s32.f32 %v6667
    %v7564 = vcvt.s32.f32 %v6668
    %v7565 = vcvt.s32.f32 %v6669
    %v7566 = vcvt.s32.f32 %v6670
    %v7567 = vcvt.s32.f32 %v6671
    %v7568 = vcvt.s32.f32 %v6672
    %v7569 = vcvt.s32.f32 %v6673
    %v7570 = vcvt.s32.f32 %v6674
    %v7571 = vcvt.s32.f32 %v6675
    %v7572 = vcvt.s32.f32 %v6676
    %v7573 = vcvt.s32.f32 %v6677
    %v7574 = vcvt.s32.f32 %v6678
    %v7575 = vcvt.s32.f32 %v6679
    %v7576 = vcvt.s32.f32 %v6680
    %v7577 = vcvt.s32.f32 %v6681
    %v7578 = vcvt.s32.f32 %v6682
    %v7579 = vcvt.s32.f32 %v6683
    %v7580 = vcvt.s32.f32 %v6684
    %v7581 = vcvt.s32.f32 %v6685
    %v7582 = vcvt.s32.f32 %v6686
    %v7583 = vcvt.s32.f32 %v6687
    %v7584 = vcvt.s32.f32 %v6688
    %v7585 = vcvt.s32.f32 %v6689
    %v7586 = vcvt.s32.f32 %v6690
    %v7587 = vcvt.s32.f32 %v6691
    %v7588 = vcvt.s32.f32 %v6692
    %v7589 = vcvt.s32.f32 %v6693
    %v7590 = vcvt.s32.f32 %v6694
    %v7591 = vcvt.s32.f32 %v6695
    %v7592 = vcvt.s32.f32 %v6696
    %v7593 = vcvt.s32.f32 %v6697
    %v7594 = vcvt.s32.f32 %v6698
    %v7595 = vcvt.s32.f32 %v6699
    %v7596 = vcvt.s32.f32 %v6700
    %v7597 = vcvt.s32.f32 %v6701
    %v7598 = vcvt.s32.f32 %v6702
    %v7599 = vcvt.s32.f32 %v6703
    %v7600 = vcvt.s32.f32 %v6704
    %v7601 = vcvt.s32.f32 %v6705
    %v7602 = vcvt.s32.f32 %v6706
    %v7603 = vcvt.s32.f32 %v6707
    %v7604 = vcvt.s32.f32 %v6708
    %v7605 = vcvt.s32.f32 %v6709
    %v7606 = vcvt.s32.f32 %v6710
    %v7607 = vcvt.s32.f32 %v6711
    %v7608 = vcvt.s32.f32 %v6712
    %v7609 = vcvt.s32.f32 %v6713
    %v7610 = vcvt.s32.f32 %v6714
    %v7611 = vcvt.s32.f32 %v6715
    %v7612 = vcvt.s32.f32 %v6716
    %v7613 = vcvt.s32.f32 %v6717
    %v7614 = vcvt.s32.f32 %v6718
    %v7615 = vcvt.s32.f32 %v6719
    %v7616 = vcvt.s32.f32 %v6720
    %v7617 = vcvt.s32.f32 %v6721
    %v7618 = vcvt.s32.f32 %v6722
    %v7619 = vcvt.s32.f32 %v6723
    %v7620 = vcvt.s32.f32 %v6724
    %v7621 = vcvt.s32.f32 %v6725
    %v7622 = vcvt.s32.f32 %v6726
    %v7623 = vcvt.s32.f32 %v6727
    %v7624 = vcvt.s32.f32 %v6728
    %v7625 = vcvt.s32.f32 %v6729
    %v7626 = vcvt.s32.f32 %v6730
    %v7627 = vcvt.s32.f32 %v6731
    %v7628 = vcvt.s32.f32 %v6732
    %v7629 = vcvt.s32.f32 %v6733
    %v7630 = vcvt.s32.f32 %v6734
    %v7631 = vcvt.s32.f32 %v6735
    %v7632 = vcvt.s32.f32 %v6736
    %v7633 = vcvt.s32.f32 %v6737
    %v7634 = vcvt.s32.f32 %v6738
    %v7635 = vcvt.s32.f32 %v6739
    %v7636 = vcvt.s32.f32 %v6740
    %v7637 = vcvt.s32.f32 %v6741
    %v7638 = vcvt.s32.f32 %v6742
    %v7639 = vcvt.s32.f32 %v6743
    %v7640 = vcvt.s32.f32 %v6744
    %v7641 = vcvt.s32.f32 %v6745
    %v7642 = vcvt.s32.f32 %v6746
    %v7643 = vcvt.s32.f32 %v6747
    %v7644 = vcvt.s32.f32 %v6748
    %v7645 = vcvt.s32.f32 %v6749
    %v7646 = vcvt.s32.f32 %v6750
    %v7647 = vcvt.s32.f32 %v6751
    %v7648 = vcvt.s32.f32 %v6752
    %v7649 = vcvt.s32.f32 %v6753
    %v7650 = vcvt.s32.f32 %v6754
    %v7651 = vcvt.s32.f32 %v6755
    %v7652 = vcvt.s32.f32 %v6756
    %v7653 = vcvt.s32.f32 %v6757
    %v7654 = vcvt.s32.f32 %v6758
    %v7655 = vcvt.s32.f32 %v6759
    %v7656 = vcvt.s32.f32 %v6760
    %v7657 = vcvt.s32.f32 %v6761
    %v7658 = vcvt.s32.f32 %v6762
    %v7659 = vcvt.s32.f32 %v6763
    %v7660 = vcvt.s32.f32 %v6764
    %v7661 = vcvt.s32.f32 %v6765
    %v7662 = vcvt.s32.f32 %v6766
    %v7663 = vcvt.s32.f32 %v6767
    %v7664 = vcvt.s32.f32 %v6768
    %v7665 = vcvt.s32.f32 %v6769
    %v7666 = vcvt.s32.f32 %v6770
    %v7667 = vcvt.s32.f32 %v6771
    %v7668 = vcvt.s32.f32 %v6772
    %v7669 = vcvt.s32.f32 %v6773
    %v7670 = vcvt.s32.f32 %v6774
    %v7671 = vcvt.s32.f32 %v6775
    %v7672 = vcvt.s32.f32 %v6776
    %v7673 = vcvt.s32.f32 %v6777
    %v7674 = vcvt.s32.f32 %v6778
    %v7675 = vcvt.s32.f32 %v6779
    %v7676 = vcvt.s32.f32 %v6780
    %v7677 = vcvt.s32.f32 %v6781
    %v7678 = vcvt.s32.f32 %v6782
    %v7679 = vcvt.s32.f32 %v6783
    %v7680 = vcvt.s32.f32 %v6784
    %v7681 = vcvt.s32.f32 %v6785
    %v7682 = vcvt.s32.f32 %v6786
    %v7683 = vcvt.s32.f32 %v6787
    %v7684 = vcvt.s32.f32 %v6788
    %v7685 = vcvt.s32.f32 %v6789
    %v7686 = vcvt.s32.f32 %v6790
    %v7687 = vcvt.s32.f32 %v6791
    %v7688 = vcvt.s32.f32 %v6792
    %v7689 = vcvt.s32.f32 %v6793
    %v7690 = vcvt.s32.f32 %v6794
    %v7691 = vcvt.s32.f32 %v6795
    %v7692 = vcvt.s32.f32 %v6796
    %v7693 = vcvt.s32.f32 %v6797
    %v7694 = vcvt.s32.f32 %v6798
    %v7695 = vcvt.s32.f32 %v6799
    %v7696 = vcvt.s32.f32 %v6800
    %v7697 = vcvt.s32.f32 %v6801
    %v7698 = vcvt.s32.f32 %v6802
    %v7699 = vcvt.s32.f32 %v6803
    %v7700 = vcvt.s32.f32 %v6804
    %v7701 = vcvt.s32.f32 %v6805
    %v7702 = vcvt.s32.f32 %v6806
    %v7703 = vcvt.s32.f32 %v6807
    %v7704 = vcvt.s32.f32 %v6808
    %v7705 = vcvt.s32.f32 %v6809
    %v7706 = vcvt.s32.f32 %v6810
    %v7707 = vcvt.s32.f32 %v6811
    %v7708 = vcvt.s32.f32 %v6812
    %v7709 = vcvt.s32.f32 %v6813
    %v7710 = vcvt.s32.f32 %v6814
    %v7711 = vcvt.s32.f32 %v6815
    %v7712 = vcvt.s32.f32 %v6816
    %v7713 = vcvt.s32.f32 %v6817
    %v7714 = vcvt.s32.f32 %v6818
    %v7715 = vcvt.s32.f32 %v6819
    %v7716 = vcvt.s32.f32 %v6820
    %v7717 = vcvt.s32.f32 %v6821
    %v7718 = vcvt.s32.f32 %v6822
    %v7719 = vcvt.s32.f32 %v6823
    %v7720 = vcvt.s32.f32 %v6824
    %v7721 = vcvt.s32.f32 %v6825
    %v7722 = vcvt.s32.f32 %v6826
    %v7723 = vcvt.s32.f32 %v6827
    %v7724 = vcvt.s32.f32 %v6828
    %v7725 = vcvt.s32.f32 %v6829
    %v7726 = vcvt.s32.f32 %v6830
    %v7727 = vcvt.s32.f32 %v6831
    %v7728 = vcvt.s32.f32 %v6832
    %v7729 = vcvt.s32.f32 %v6833
    %v7730 = vcvt.s32.f32 %v6834
    %v7731 = vcvt.s32.f32 %v6835
    %v7732 = vcvt.s32.f32 %v6836
    %v7733 = vcvt.s32.f32 %v6837
    %v7734 = vcvt.s32.f32 %v6838
    %v7735 = vcvt.s32.f32 %v6839
    %v7736 = vcvt.s32.f32 %v6840
    %v7737 = vcvt.s32.f32 %v6841
    %v7738 = vcvt.s32.f32 %v6842
    %v7739 = vcvt.s32.f32 %v6843
    %v7740 = vcvt.s32.f32 %v6844
    %v7741 = vcvt.s32.f32 %v6845
    %v7742 = vcvt.s32.f32 %v6846
    %v7743 = vcvt.s32.f32 %v6847
    %v7744 = vcvt.s32.f32 %v6848
    %v7745 = vcvt.s32.f32 %v6849
    %v7746 = vcvt.s32.f32 %v6850
    %v7747 = vcvt.s32.f32 %v6851
    %v7748 = vcvt.s32.f32 %v6852
    %v7749 = vcvt.s32.f32 %v6853
    %v7750 = vcvt.s32.f32 %v6854
    %v7751 = vcvt.s32.f32 %v6855
    %v7752 = vcvt.s32.f32 %v6856
    %v7753 = vcvt.s32.f32 %v6857
    %v7754 = vcvt.s32.f32 %v6858
    %v7755 = vcvt.s32.f32 %v6859
    %v7756 = vcvt.s32.f32 %v6860
    %v7757 = vcvt.s32.f32 %v6861
    %v7758 = vcvt.s32.f32 %v6862
    %v7759 = vcvt.s32.f32 %v6863
    %v7760 = vcvt.s32.f32 %v6864
    %v7761 = vcvt.s32.f32 %v6865
    %v7762 = vcvt.s32.f32 %v6866
    %v7763 = vcvt.s32.f32 %v6867
    %v7764 = vcvt.s32.f32 %v6868
    %v7765 = vcvt.s32.f32 %v6869
    %v7766 = vcvt.s32.f32 %v6870
    %v7767 = vcvt.s32.f32 %v6871
    %v7768 = vcvt.s32.f32 %v6872
    %v7769 = vcvt.s32.f32 %v6873
    %v7770 = vcvt.s32.f32 %v6874
    %v7771 = vcvt.s32.f32 %v6875
    %v7772 = vcvt.s32.f32 %v6876
    %v7773 = vcvt.s32.f32 %v6877
    %v7774 = vcvt.s32.f32 %v6878
    %v7775 = vcvt.s32.f32 %v6879
    %v7776 = vcvt.s32.f32 %v6880
    %v7777 = vcvt.s32.f32 %v6881
    %v7778 = vcvt.s32.f32 %v6882
    %v7779 = vcvt.s32.f32 %v6883
    %v7780 = vcvt.s32.f32 %v6884
    %v7781 = vcvt.s32.f32 %v6885
    %v7782 = vcvt.s32.f32 %v6886
    %v7783 = vcvt.s32.f32 %v6887
    %v7784 = vcvt.s32.f32 %v6888
    %v7785 = vcvt.s32.f32 %v6889
    %v7786 = vcvt.s32.f32 %v6890
    %v7787 = vcvt.s32.f32 %v6891
    %v7788 = vcvt.s32.f32 %v6892
    %v7789 = vcvt.s32.f32 %v6893
    %v7790 = vcvt.s32.f32 %v6894
    %v7791 = vcvt.s32.f32 %v6895
    %v7792 = vcvt.s32.f32 %v6896
    %v7793 = vcvt.s32.f32 %v6897
    %v7794 = vcvt.s32.f32 %v6898
    %v7795 = vcvt.s32.f32 %v6899
    %v7796 = vcvt.s32.f32 %v6900
    %v7797 = vcvt.s32.f32 %v6901
    %v7798 = vcvt.s32.f32 %v6902
    %v7799 = vcvt.s32.f32 %v6903
    %v7800 = vcvt.s32.f32 %v6904
    %v7801 = vcvt.s32.f32 %v6905
    %v7802 = vcvt.s32.f32 %v6906
    %v7803 = vcvt.s32.f32 %v6907
    %v7804 = vcvt.s32.f32 %v6908
    %v7805 = vcvt.s32.f32 %v6909
    %v7806 = vcvt.s32.f32 %v6910
    %v7807 = vcvt.s32.f32 %v6911
    %v7808 = vcvt.s32.f32 %v6912
    %v7809 = vcvt.s32.f32 %v6913
    %v7810 = vcvt.s32.f32 %v6914
    %v7811 = vcvt.s32.f32 %v6915
    %v7812 = vcvt.s32.f32 %v6916
    %v7813 = vcvt.s32.f32 %v6917
    %v7814 = vcvt.s32.f32 %v6918
    %v7815 = vcvt.s32.f32 %v6919
    %v7816 = vcvt.s32.f32 %v6920
    %v7817 = vcvt.s32.f32 %v6921
    %v7818 = vcvt.s32.f32 %v6922
    %v7819 = vcvt.s32.f32 %v6923
    %v7820 = vcvt.s32.f32 %v6924
    %v7821 = vcvt.s32.f32 %v6925
    %v7822 = vcvt.s32.f32 %v6926
    %v7823 = vcvt.s32.f32 %v6927
    %v7824 = vcvt.s32.f32 %v6928
    %v7825 = vcvt.s32.f32 %v6929
    %v7826 = vcvt.s32.f32 %v6930
    %v7827 = vcvt.s32.f32 %v6931
    %v7828 = vcvt.s32.f32 %v6932
    %v7829 = vcvt.s32.f32 %v6933
    %v7830 = vcvt.s32.f32 %v6934
    %v7831 = vcvt.s32.f32 %v6935
    %v7832 = vcvt.s32.f32 %v6936
    %v7833 = vcvt.s32.f32 %v6937
    %v7834 = vcvt.s32.f32 %v6938
    %v7835 = vcvt.s32.f32 %v6939
    %v7836 = vcvt.s32.f32 %v6940
    %v7837 = vcvt.s32.f32 %v6941
    %v7838 = vcvt.s32.f32 %v6942
    %v7839 = vcvt.s32.f32 %v6943
    %v7840 = vcvt.s32.f32 %v6944
    %v7841 = vcvt.s32.f32 %v6945
    %v7842 = vcvt.s32.f32 %v6946
    %v7843 = vcvt.s32.f32 %v6947
    %v7844 = vcvt.s32.f32 %v6948
    %v7845 = vcvt.s32.f32 %v6949
    %v7846 = vcvt.s32.f32 %v6950
    %v7847 = vcvt.s32.f32 %v6951
    %v7848 = vcvt.s32.f32 %v6952
    %v7849 = vcvt.s32.f32 %v6953
    %v7850 = vcvt.s32.f32 %v6954
    %v7851 = vcvt.s32.f32 %v6955
    %v7852 = vcvt.s32.f32 %v6956
    %v7853 = vcvt.s32.f32 %v6957
    %v7854 = vcvt.s32.f32 %v6958
    %v7855 = vcvt.s32.f32 %v6959
    %v7856 = vcvt.s32.f32 %v6960
    %v7857 = vcvt.s32.f32 %v6961
    %v7858 = vcvt.s32.f32 %v6962
    %v7859 = vcvt.s32.f32 %v6963
    %v7860 = vcvt.s32.f32 %v6964
    %v7861 = vcvt.s32.f32 %v6965
    %v7862 = vcvt.s32.f32 %v6966
    %v7863 = vcvt.s32.f32 %v6967
    %v7864 = vcvt.s32.f32 %v6968
    %v7865 = vcvt.s32.f32 %v6969
    %v7866 = vcvt.s32.f32 %v6970
    %v7867 = vcvt.s32.f32 %v6971
    %v7868 = vcvt.s32.f32 %v6972
    %v7869 = vcvt.s32.f32 %v6973
    %v7870 = vcvt.s32.f32 %v6974
    %v7871 = vcvt.s32.f32 %v6975
    %v7872 = vcvt.s32.f32 %v6976
    %v7873 = vcvt.s32.f32 %v6977
    %v7874 = vcvt.s32.f32 %v6978
    %v7875 = vcvt.s32.f32 %v6979
    %v7876 = vcvt.s32.f32 %v6980
    %v7877 = vcvt.s32.f32 %v6981
    %v7878 = vcvt.s32.f32 %v6982
    %v7879 = vcvt.s32.f32 %v6983
    %v7880 = vcvt.s32.f32 %v6984
    %v7881 = vcvt.s32.f32 %v6985
    %v7882 = vcvt.s32.f32 %v6986
    %v7883 = vcvt.s32.f32 %v6987
    %v7884 = vcvt.s32.f32 %v6988
    %v7885 = vcvt.s32.f32 %v6989
    %v7886 = vcvt.s32.f32 %v6990
    %v7887 = vcvt.s32.f32 %v6991
    %v7888 = vcvt.s32.f32 %v6992
    %v7889 = vcvt.s32.f32 %v6993
    %v7890 = vcvt.s32.f32 %v6994
    %v7891 = vcvt.s32.f32 %v6995
    %v7892 = vcvt.s32.f32 %v6996
    %v7893 = vcvt.s32.f32 %v6997
    %v7894 = vcvt.s32.f32 %v6998
    %v7895 = vcvt.s32.f32 %v6999
    %v7896 = vcvt.s32.f32 %v7000
    %v7897 = vcvt.s32.f32 %v7001
    %v7898 = vcvt.s32.f32 %v7002
    %v7899 = vcvt.s32.f32 %v7003
    %v7900 = vcvt.s32.f32 %v7004
    %v7901 = vcvt.s32.f32 %v7005
    %v7902 = vcvt.s32.f32 %v7006
    %v7903 = vcvt.s32.f32 %v7007
    %v7904 = vcvt.s32.f32 %v7008
    %v7905 = vcvt.s32.f32 %v7009
    %v7906 = vcvt.s32.f32 %v7010
    %v7907 = vcvt.s32.f32 %v7011
    %v7908 = vcvt.s32.f32 %v7012
    %v7909 = vcvt.s32.f32 %v7013
    %v7910 = vcvt.s32.f32 %v7014
    %v7911 = vcvt.s32.f32 %v7015
    %v7912 = vcvt.s32.f32 %v7016
    %v7913 = vcvt.s32.f32 %v7017
    %v7914 = vcvt.s32.f32 %v7018
    %v7915 = vcvt.s32.f32 %v7019
    %v7916 = vcvt.s32.f32 %v7020
    %v7917 = vcvt.s32.f32 %v7021
    %v7918 = vcvt.s32.f32 %v7022
    %v7919 = vcvt.s32.f32 %v7023
    %v7920 = vcvt.s32.f32 %v7024
    %v7921 = vcvt.s32.f32 %v7025
    %v7922 = vcvt.s32.f32 %v7026
    %v7923 = vcvt.s32.f32 %v7027
    %v7924 = vcvt.s32.f32 %v7028
    %v7925 = vcvt.s32.f32 %v7029
    %v7926 = vcvt.s32.f32 %v7030
    %v7927 = vcvt.s32.f32 %v7031
    %v7928 = vcvt.s32.f32 %v7032
    %v7929 = vcvt.s32.f32 %v7033
    %v7930 = vcvt.s32.f32 %v7034
    %v7931 = vcvt.s32.f32 %v7035
    %v7932 = vcvt.s32.f32 %v7036
    %v7933 = vcvt.s32.f32 %v7037
    %v7934 = vcvt.s32.f32 %v7038
    %v7935 = vcvt.s32.f32 %v7039
    %v7936 = vcvt.s32.f32 %v7040
    %v7937 = vcvt.s32.f32 %v7041
    %v7938 = vcvt.s32.f32 %v7042
    %v7939 = vcvt.s32.f32 %v7043
    %v7940 = vcvt.s32.f32 %v7044
    %v7941 = vcvt.s32.f32 %v7045
    %v7942 = vcvt.s32.f32 %v7046
    %v7943 = vcvt.s32.f32 %v7047
    %v7944 = vcvt.s32.f32 %v7048
    %v7945 = vcvt.s32.f32 %v7049
    %v7946 = vcvt.s32.f32 %v7050
    %v7947 = vcvt.s32.f32 %v7051
    %v7948 = vcvt.s32.f32 %v7052
    %v7949 = vcvt.s32.f32 %v7053
    %v7950 = vcvt.s32.f32 %v7054
    %v7951 = vcvt.s32.f32 %v7055
    %v7952 = vcvt.s32.f32 %v7056
    %v7953 = vcvt.s32.f32 %v7057
    %v7954 = vcvt.s32.f32 %v7058
    %v7955 = vcvt.s32.f32 %v7059
    %v7956 = vcvt.s32.f32 %v7060
    %v7957 = vcvt.s32.f32 %v7061
    %v7958 = vcvt.s32.f32 %v7062
    %v7959 = vcvt.s32.f32 %v7063
    %v7960 = vcvt.s32.f32 %v7064
    %v7961 = vcvt.s32.f32 %v7065
    %v7962 = vcvt.s32.f32 %v7066
    %v7963 = vcvt.s32.f32 %v7067
    %v7964 = vcvt.s32.f32 %v7068
    %v7965 = vcvt.s32.f32 %v7069
    %v7966 = vcvt.s32.f32 %v7070
    %v7967 = vcvt.s32.f32 %v7071
    %v7968 = vcvt.s32.f32 %v7072
    %v7969 = vcvt.s32.f32 %v7073
    %v7970 = vcvt.s32.f32 %v7074
    %v7971 = vcvt.s32.f32 %v7075
    %v7972 = vcvt.s32.f32 %v7076
    %v7973 = vcvt.s32.f32 %v7077
    %v7974 = vcvt.s32.f32 %v7078
    %v7975 = vcvt.s32.f32 %v7079
    %v7976 = vcvt.s32.f32 %v7080
    %v7977 = vcvt.s32.f32 %v7081
    %v7978 = vcvt.s32.f32 %v7082
    %v7979 = vcvt.s32.f32 %v7083
    %v7980 = vcvt.s32.f32 %v7084
    %v7981 = vcvt.s32.f32 %v7085
    %v7982 = vcvt.s32.f32 %v7086
    %v7983 = vcvt.s32.f32 %v7087
    %v7984 = vcvt.s32.f32 %v7088
    %v7985 = vcvt.s32.f32 %v7089
    %v7986 = vcvt.s32.f32 %v7090
    %v7987 = vcvt.s32.f32 %v7091
    %v7988 = vcvt.s32.f32 %v7092
    %v7989 = vcvt.s32.f32 %v7093
    %v7990 = vcvt.s32.f32 %v7094
    %v7991 = vcvt.s32.f32 %v7095
    %v7992 = vcvt.s32.f32 %v7096
    %v7993 = vcvt.s32.f32 %v7097
    %v7994 = vcvt.s32.f32 %v7098
    %v7995 = vcvt.s32.f32 %v7099
    %v7996 = vcvt.s32.f32 %v7100
    %v7997 = vcvt.s32.f32 %v7101
    %v7998 = vcvt.s32.f32 %v7102
    %v7999 = vcvt.s32.f32 %v7103
    %v8000 = vcvt.s32.f32 %v7104
    %v8001 = vcvt.s32.f32 %v7105
    %v8002 = vcvt.s32.f32 %v7106
    %v8003 = vcvt.s32.f32 %v7107
    %v8004 = vcvt.s32.f32 %v7108
    %v8005 = vcvt.s32.f32 %v7109
    %v8006 = vcvt.s32.f32 %v7110
    %v8007 = vcvt.s32.f32 %v7111
    %v8008 = vcvt.s32.f32 %v7112
    %v8009 = vcvt.s32.f32 %v7113
    %v8010 = vcvt.s32.f32 %v7114
    %v8011 = vcvt.s32.f32 %v7115
    %v8012 = vcvt.s32.f32 %v7116
    %v8013 = vcvt.s32.f32 %v7117
    %v8014 = vcvt.s32.f32 %v7118
    %v8015 = vcvt.s32.f32 %v7119
    %v8016 = vcvt.s32.f32 %v7120
    %v8017 = vcvt.s32.f32 %v7121
    %v8018 = vcvt.s32.f32 %v7122
    %v8019 = vcvt.s32.f32 %v7123
    %v8020 = vcvt.s32.f32 %v7124
    %v8021 = vcvt.s32.f32 %v7125
    %v8022 = vcvt.s32.f32 %v7126
    %v8023 = vcvt.s32.f32 %v7127
    %v8024 = vcvt.s32.f32 %v7128
    %v8025 = vcvt.s32.f32 %v7129
    %v8026 = vcvt.s32.f32 %v7130
    %v8027 = vcvt.s32.f32 %v7131
    %v8028 = vcvt.s32.f32 %v7132
    %v8029 = vcvt.s32.f32 %v7133
    %v8030 = vcvt.s32.f32 %v7134
    %v8031 = vcvt.s32.f32 %v7135
    %v8032 = vcvt.s32.f32 %v7136
    %v8033 = vcvt.s32.f32 %v7137
    %v8034 = vcvt.s32.f32 %v7138
    %v8035 = vcvt.s32.f32 %v7139
    %v8036 = vcvt.s32.f32 %v7140
    %v8037 = vcvt.s32.f32 %v7141
    %v8038 = vcvt.s32.f32 %v7142
    %v8039 = vcvt.s32.f32 %v7143
    %v8040 = vcvt.s32.f32 %v7144
    %v8041 = vcvt.s32.f32 %v7145
    %v8042 = vcvt.s32.f32 %v7146
    %v8043 = vcvt.s32.f32 %v7147
    %v8044 = vcvt.s32.f32 %v7148
    %v8045 = vcvt.s32.f32 %v7149
    %v8046 = vcvt.s32.f32 %v7150
    %v8047 = vcvt.s32.f32 %v7151
    %v8048 = vcvt.s32.f32 %v7152
    %v8049 = vcvt.s32.f32 %v7153
    %v8050 = vcvt.s32.f32 %v7154
    %v8051 = vcvt.s32.f32 %v7155
    %v8052 = vcvt.s32.f32 %v7156
    %v8053 = vcvt.s32.f32 %v7157
    %v8054 = vcvt.s32.f32 %v7158
    %v8055 = vcvt.s32.f32 %v7159
    %v8056 = vcvt.s32.f32 %v7160
    %v8057 = vcvt.s32.f32 %v7161
    %v8058 = vcvt.s32.f32 %v7162
    %v8059 = vcvt.s32.f32 %v7163
    %v8060 = vcvt.s32.f32 %v7164
    %v8061 = vcvt.s32.f32 %v7165
    %v8062 = vcvt.s32.f32 %v7166
    %v8063 = vcvt.s32.f32 %v7167
    %v8064 = vcvt.s32.f32 %v7168
    %v8065 = vcvt.s32.f32 %v7169
    %v8066 = vcvt.s32.f32 %v7170
    %v8067 = vcvt.s32.f32 %v7171
    %v8068 = vcvt.s32.f32 %v7172
    %v8069 = vcvt.s32.f32 %v7173
    %v8070 = vcvt.s32.f32 %v7174
    %v8071 = vcvt.s32.f32 %v7175
    %v8072 = vcvt.s32.f32 %v7176
    %v8073 = vcvt.s32.f32 %v7177
    %v8074 = vcvt.s32.f32 %v7178
    %v8075 = vcvt.s32.f32 %v7179
    %v8076 = vcvt.s32.f32 %v7180
    %v8077 = vcvt.s32.f32 %v7181
    %v8078 = vcvt.s32.f32 %v7182
    %v8079 = vcvt.s32.f32 %v7183
    %v8080 = vcvt.s32.f32 %v7184
    %v8081 = vcvt.s32.f32 %v7185
    %v8082 = vcvt.s32.f32 %v7186
    %v8083 = vpack.c.bf16 %v7194, %v7187
    %v8084 = vpack.c.bf16 %v7195, %v7188
    %v8085 = vpack.c.bf16 %v7196, %v7189
    %v8086 = vpack.c.bf16 %v7197, %v7190
    %v8087 = vpack.c.bf16 %v7198, %v7191
    %v8088 = vpack.c.bf16 %v7199, %v7192
    %v8089 = vpack.c.bf16 %v7200, %v7193
    %v8090 = vpack.c.bf16 %v7208, %v7201
    %v8091 = vpack.c.bf16 %v7209, %v7202
    %v8092 = vpack.c.bf16 %v7210, %v7203
    %v8093 = vpack.c.bf16 %v7211, %v7204
    %v8094 = vpack.c.bf16 %v7212, %v7205
    %v8095 = vpack.c.bf16 %v7213, %v7206
    %v8096 = vpack.c.bf16 %v7214, %v7207
    %v8097 = vpack.c.bf16 %v7222, %v7215
    %v8098 = vpack.c.bf16 %v7223, %v7216
    %v8099 = vpack.c.bf16 %v7224, %v7217
    %v8100 = vpack.c.bf16 %v7225, %v7218
    %v8101 = vpack.c.bf16 %v7226, %v7219
    %v8102 = vpack.c.bf16 %v7227, %v7220
    %v8103 = vpack.c.bf16 %v7228, %v7221
    %v8104 = vpack.c.bf16 %v7236, %v7229
    %v8105 = vpack.c.bf16 %v7237, %v7230
    %v8106 = vpack.c.bf16 %v7238, %v7231
    %v8107 = vpack.c.bf16 %v7239, %v7232
    %v8108 = vpack.c.bf16 %v7240, %v7233
    %v8109 = vpack.c.bf16 %v7241, %v7234
    %v8110 = vpack.c.bf16 %v7242, %v7235
    %v8111 = vpack.c.bf16 %v7250, %v7243
    %v8112 = vpack.c.bf16 %v7251, %v7244
    %v8113 = vpack.c.bf16 %v7252, %v7245
    %v8114 = vpack.c.bf16 %v7253, %v7246
    %v8115 = vpack.c.bf16 %v7254, %v7247
    %v8116 = vpack.c.bf16 %v7255, %v7248
    %v8117 = vpack.c.bf16 %v7256, %v7249
    %v8118 = vpack.c.bf16 %v7264, %v7257
    %v8119 = vpack.c.bf16 %v7265, %v7258
    %v8120 = vpack.c.bf16 %v7266, %v7259
    %v8121 = vpack.c.bf16 %v7267, %v7260
    %v8122 = vpack.c.bf16 %v7268, %v7261
    %v8123 = vpack.c.bf16 %v7269, %v7262
    %v8124 = vpack.c.bf16 %v7270, %v7263
    %v8125 = vpack.c.bf16 %v7278, %v7271
    %v8126 = vpack.c.bf16 %v7279, %v7272
    %v8127 = vpack.c.bf16 %v7280, %v7273
    %v8128 = vpack.c.bf16 %v7281, %v7274
    %v8129 = vpack.c.bf16 %v7282, %v7275
    %v8130 = vpack.c.bf16 %v7283, %v7276
    %v8131 = vpack.c.bf16 %v7284, %v7277
    %v8132 = vpack.c.bf16 %v7292, %v7285
    %v8133 = vpack.c.bf16 %v7293, %v7286
    %v8134 = vpack.c.bf16 %v7294, %v7287
    %v8135 = vpack.c.bf16 %v7295, %v7288
    %v8136 = vpack.c.bf16 %v7296, %v7289
    %v8137 = vpack.c.bf16 %v7297, %v7290
    %v8138 = vpack.c.bf16 %v7298, %v7291
    %v8139 = vpack.c.bf16 %v7306, %v7299
    %v8140 = vpack.c.bf16 %v7307, %v7300
    %v8141 = vpack.c.bf16 %v7308, %v7301
    %v8142 = vpack.c.bf16 %v7309, %v7302
    %v8143 = vpack.c.bf16 %v7310, %v7303
    %v8144 = vpack.c.bf16 %v7311, %v7304
    %v8145 = vpack.c.bf16 %v7312, %v7305
    %v8146 = vpack.c.bf16 %v7320, %v7313
    %v8147 = vpack.c.bf16 %v7321, %v7314
    %v8148 = vpack.c.bf16 %v7322, %v7315
    %v8149 = vpack.c.bf16 %v7323, %v7316
    %v8150 = vpack.c.bf16 %v7324, %v7317
    %v8151 = vpack.c.bf16 %v7325, %v7318
    %v8152 = vpack.c.bf16 %v7326, %v7319
    %v8153 = vpack.c.bf16 %v7334, %v7327
    %v8154 = vpack.c.bf16 %v7335, %v7328
    %v8155 = vpack.c.bf16 %v7336, %v7329
    %v8156 = vpack.c.bf16 %v7337, %v7330
    %v8157 = vpack.c.bf16 %v7338, %v7331
    %v8158 = vpack.c.bf16 %v7339, %v7332
    %v8159 = vpack.c.bf16 %v7340, %v7333
    %v8160 = vpack.c.bf16 %v7348, %v7341
    %v8161 = vpack.c.bf16 %v7349, %v7342
    %v8162 = vpack.c.bf16 %v7350, %v7343
    %v8163 = vpack.c.bf16 %v7351, %v7344
    %v8164 = vpack.c.bf16 %v7352, %v7345
    %v8165 = vpack.c.bf16 %v7353, %v7346
    %v8166 = vpack.c.bf16 %v7354, %v7347
    %v8167 = vpack.c.bf16 %v7362, %v7355
    %v8168 = vpack.c.bf16 %v7363, %v7356
    %v8169 = vpack.c.bf16 %v7364, %v7357
    %v8170 = vpack.c.bf16 %v7365, %v7358
    %v8171 = vpack.c.bf16 %v7366, %v7359
    %v8172 = vpack.c.bf16 %v7367, %v7360
    %v8173 = vpack.c.bf16 %v7368, %v7361
    %v8174 = vpack.c.bf16 %v7376, %v7369
    %v8175 = vpack.c.bf16 %v7377, %v7370
    %v8176 = vpack.c.bf16 %v7378, %v7371
    %v8177 = vpack.c.bf16 %v7379, %v7372
    %v8178 = vpack.c.bf16 %v7380, %v7373
    %v8179 = vpack.c.bf16 %v7381, %v7374
    %v8180 = vpack.c.bf16 %v7382, %v7375
    %v8181 = vpack.c.bf16 %v7390, %v7383
    %v8182 = vpack.c.bf16 %v7391, %v7384
    %v8183 = vpack.c.bf16 %v7392, %v7385
    %v8184 = vpack.c.bf16 %v7393, %v7386
    %v8185 = vpack.c.bf16 %v7394, %v7387
    %v8186 = vpack.c.bf16 %v7395, %v7388
    %v8187 = vpack.c.bf16 %v7396, %v7389
    %v8188 = vpack.c.bf16 %v7404, %v7397
    %v8189 = vpack.c.bf16 %v7405, %v7398
    %v8190 = vpack.c.bf16 %v7406, %v7399
    %v8191 = vpack.c.bf16 %v7407, %v7400
    %v8192 = vpack.c.bf16 %v7408, %v7401
    %v8193 = vpack.c.bf16 %v7409, %v7402
    %v8194 = vpack.c.bf16 %v7410, %v7403
    %v8195 = vpack.c.bf16 %v7418, %v7411
    %v8196 = vpack.c.bf16 %v7419, %v7412
    %v8197 = vpack.c.bf16 %v7420, %v7413
    %v8198 = vpack.c.bf16 %v7421, %v7414
    %v8199 = vpack.c.bf16 %v7422, %v7415
    %v8200 = vpack.c.bf16 %v7423, %v7416
    %v8201 = vpack.c.bf16 %v7424, %v7417
    %v8202 = vpack.c.bf16 %v7432, %v7425
    %v8203 = vpack.c.bf16 %v7433, %v7426
    %v8204 = vpack.c.bf16 %v7434, %v7427
    %v8205 = vpack.c.bf16 %v7435, %v7428
    %v8206 = vpack.c.bf16 %v7436, %v7429
    %v8207 = vpack.c.bf16 %v7437, %v7430
    %v8208 = vpack.c.bf16 %v7438, %v7431
    %v8209 = vpack.c.bf16 %v7446, %v7439
    %v8210 = vpack.c.bf16 %v7447, %v7440
    %v8211 = vpack.c.bf16 %v7448, %v7441
    %v8212 = vpack.c.bf16 %v7449, %v7442
    %v8213 = vpack.c.bf16 %v7450, %v7443
    %v8214 = vpack.c.bf16 %v7451, %v7444
    %v8215 = vpack.c.bf16 %v7452, %v7445
    %v8216 = vpack.c.bf16 %v7460, %v7453
    %v8217 = vpack.c.bf16 %v7461, %v7454
    %v8218 = vpack.c.bf16 %v7462, %v7455
    %v8219 = vpack.c.bf16 %v7463, %v7456
    %v8220 = vpack.c.bf16 %v7464, %v7457
    %v8221 = vpack.c.bf16 %v7465, %v7458
    %v8222 = vpack.c.bf16 %v7466, %v7459
    %v8223 = vpack.c.bf16 %v7474, %v7467
    %v8224 = vpack.c.bf16 %v7475, %v7468
    %v8225 = vpack.c.bf16 %v7476, %v7469
    %v8226 = vpack.c.bf16 %v7477, %v7470
    %v8227 = vpack.c.bf16 %v7478, %v7471
    %v8228 = vpack.c.bf16 %v7479, %v7472
    %v8229 = vpack.c.bf16 %v7480, %v7473
    %v8230 = vpack.c.bf16 %v7488, %v7481
    %v8231 = vpack.c.bf16 %v7489, %v7482
    %v8232 = vpack.c.bf16 %v7490, %v7483
    %v8233 = vpack.c.bf16 %v7491, %v7484
    %v8234 = vpack.c.bf16 %v7492, %v7485
    %v8235 = vpack.c.bf16 %v7493, %v7486
    %v8236 = vpack.c.bf16 %v7494, %v7487
    %v8237 = vpack.c.bf16 %v7502, %v7495
    %v8238 = vpack.c.bf16 %v7503, %v7496
    %v8239 = vpack.c.bf16 %v7504, %v7497
    %v8240 = vpack.c.bf16 %v7505, %v7498
    %v8241 = vpack.c.bf16 %v7506, %v7499
    %v8242 = vpack.c.bf16 %v7507, %v7500
    %v8243 = vpack.c.bf16 %v7508, %v7501
    %v8244 = vpack.c.bf16 %v7516, %v7509
    %v8245 = vpack.c.bf16 %v7517, %v7510
    %v8246 = vpack.c.bf16 %v7518, %v7511
    %v8247 = vpack.c.bf16 %v7519, %v7512
    %v8248 = vpack.c.bf16 %v7520, %v7513
    %v8249 = vpack.c.bf16 %v7521, %v7514
    %v8250 = vpack.c.bf16 %v7522, %v7515
    %v8251 = vpack.c.bf16 %v7530, %v7523
    %v8252 = vpack.c.bf16 %v7531, %v7524
    %v8253 = vpack.c.bf16 %v7532, %v7525
    %v8254 = vpack.c.bf16 %v7533, %v7526
    %v8255 = vpack.c.bf16 %v7534, %v7527
    %v8256 = vpack.c.bf16 %v7535, %v7528
    %v8257 = vpack.c.bf16 %v7536, %v7529
    %v8258 = vpack.c.bf16 %v7544, %v7537
    %v8259 = vpack.c.bf16 %v7545, %v7538
    %v8260 = vpack.c.bf16 %v7546, %v7539
    %v8261 = vpack.c.bf16 %v7547, %v7540
    %v8262 = vpack.c.bf16 %v7548, %v7541
    %v8263 = vpack.c.bf16 %v7549, %v7542
    %v8264 = vpack.c.bf16 %v7550, %v7543
    %v8265 = vpack.c.bf16 %v7558, %v7551
    %v8266 = vpack.c.bf16 %v7559, %v7552
    %v8267 = vpack.c.bf16 %v7560, %v7553
    %v8268 = vpack.c.bf16 %v7561, %v7554
    %v8269 = vpack.c.bf16 %v7562, %v7555
    %v8270 = vpack.c.bf16 %v7563, %v7556
    %v8271 = vpack.c.bf16 %v7564, %v7557
    %v8272 = vpack.c.bf16 %v7572, %v7565
    %v8273 = vpack.c.bf16 %v7573, %v7566
    %v8274 = vpack.c.bf16 %v7574, %v7567
    %v8275 = vpack.c.bf16 %v7575, %v7568
    %v8276 = vpack.c.bf16 %v7576, %v7569
    %v8277 = vpack.c.bf16 %v7577, %v7570
    %v8278 = vpack.c.bf16 %v7578, %v7571
    %v8279 = vpack.c.bf16 %v7586, %v7579
    %v8280 = vpack.c.bf16 %v7587, %v7580
    %v8281 = vpack.c.bf16 %v7588, %v7581
    %v8282 = vpack.c.bf16 %v7589, %v7582
    %v8283 = vpack.c.bf16 %v7590, %v7583
    %v8284 = vpack.c.bf16 %v7591, %v7584
    %v8285 = vpack.c.bf16 %v7592, %v7585
    %v8286 = vpack.c.bf16 %v7600, %v7593
    %v8287 = vpack.c.bf16 %v7601, %v7594
    %v8288 = vpack.c.bf16 %v7602, %v7595
    %v8289 = vpack.c.bf16 %v7603, %v7596
    %v8290 = vpack.c.bf16 %v7604, %v7597
    %v8291 = vpack.c.bf16 %v7605, %v7598
    %v8292 = vpack.c.bf16 %v7606, %v7599
    %v8293 = vpack.c.bf16 %v7614, %v7607
    %v8294 = vpack.c.bf16 %v7615, %v7608
    %v8295 = vpack.c.bf16 %v7616, %v7609
    %v8296 = vpack.c.bf16 %v7617, %v7610
    %v8297 = vpack.c.bf16 %v7618, %v7611
    %v8298 = vpack.c.bf16 %v7619, %v7612
    %v8299 = vpack.c.bf16 %v7620, %v7613
    %v8300 = vpack.c.bf16 %v7628, %v7621
    %v8301 = vpack.c.bf16 %v7629, %v7622
    %v8302 = vpack.c.bf16 %v7630, %v7623
    %v8303 = vpack.c.bf16 %v7631, %v7624
    %v8304 = vpack.c.bf16 %v7632, %v7625
    %v8305 = vpack.c.bf16 %v7633, %v7626
    %v8306 = vpack.c.bf16 %v7634, %v7627
    %v8307 = vpack.c.bf16 %v7642, %v7635
    %v8308 = vpack.c.bf16 %v7643, %v7636
    %v8309 = vpack.c.bf16 %v7644, %v7637
    %v8310 = vpack.c.bf16 %v7645, %v7638
    %v8311 = vpack.c.bf16 %v7646, %v7639
    %v8312 = vpack.c.bf16 %v7647, %v7640
    %v8313 = vpack.c.bf16 %v7648, %v7641
    %v8314 = vpack.c.bf16 %v7656, %v7649
    %v8315 = vpack.c.bf16 %v7657, %v7650
    %v8316 = vpack.c.bf16 %v7658, %v7651
    %v8317 = vpack.c.bf16 %v7659, %v7652
    %v8318 = vpack.c.bf16 %v7660, %v7653
    %v8319 = vpack.c.bf16 %v7661, %v7654
    %v8320 = vpack.c.bf16 %v7662, %v7655
    %v8321 = vpack.c.bf16 %v7670, %v7663
    %v8322 = vpack.c.bf16 %v7671, %v7664
    %v8323 = vpack.c.bf16 %v7672, %v7665
    %v8324 = vpack.c.bf16 %v7673, %v7666
    %v8325 = vpack.c.bf16 %v7674, %v7667
    %v8326 = vpack.c.bf16 %v7675, %v7668
    %v8327 = vpack.c.bf16 %v7676, %v7669
    %v8328 = vpack.c.bf16 %v7684, %v7677
    %v8329 = vpack.c.bf16 %v7685, %v7678
    %v8330 = vpack.c.bf16 %v7686, %v7679
    %v8331 = vpack.c.bf16 %v7687, %v7680
    %v8332 = vpack.c.bf16 %v7688, %v7681
    %v8333 = vpack.c.bf16 %v7689, %v7682
    %v8334 = vpack.c.bf16 %v7690, %v7683
    %v8335 = vpack.c.bf16 %v7698, %v7691
    %v8336 = vpack.c.bf16 %v7699, %v7692
    %v8337 = vpack.c.bf16 %v7700, %v7693
    %v8338 = vpack.c.bf16 %v7701, %v7694
    %v8339 = vpack.c.bf16 %v7702, %v7695
    %v8340 = vpack.c.bf16 %v7703, %v7696
    %v8341 = vpack.c.bf16 %v7704, %v7697
    %v8342 = vpack.c.bf16 %v7712, %v7705
    %v8343 = vpack.c.bf16 %v7713, %v7706
    %v8344 = vpack.c.bf16 %v7714, %v7707
    %v8345 = vpack.c.bf16 %v7715, %v7708
    %v8346 = vpack.c.bf16 %v7716, %v7709
    %v8347 = vpack.c.bf16 %v7717, %v7710
    %v8348 = vpack.c.bf16 %v7718, %v7711
    %v8349 = vpack.c.bf16 %v7726, %v7719
    %v8350 = vpack.c.bf16 %v7727, %v7720
    %v8351 = vpack.c.bf16 %v7728, %v7721
    %v8352 = vpack.c.bf16 %v7729, %v7722
    %v8353 = vpack.c.bf16 %v7730, %v7723
    %v8354 = vpack.c.bf16 %v7731, %v7724
    %v8355 = vpack.c.bf16 %v7732, %v7725
    %v8356 = vpack.c.bf16 %v7740, %v7733
    %v8357 = vpack.c.bf16 %v7741, %v7734
    %v8358 = vpack.c.bf16 %v7742, %v7735
    %v8359 = vpack.c.bf16 %v7743, %v7736
    %v8360 = vpack.c.bf16 %v7744, %v7737
    %v8361 = vpack.c.bf16 %v7745, %v7738
    %v8362 = vpack.c.bf16 %v7746, %v7739
    %v8363 = vpack.c.bf16 %v7754, %v7747
    %v8364 = vpack.c.bf16 %v7755, %v7748
    %v8365 = vpack.c.bf16 %v7756, %v7749
    %v8366 = vpack.c.bf16 %v7757, %v7750
    %v8367 = vpack.c.bf16 %v7758, %v7751
    %v8368 = vpack.c.bf16 %v7759, %v7752
    %v8369 = vpack.c.bf16 %v7760, %v7753
    %v8370 = vpack.c.bf16 %v7768, %v7761
    %v8371 = vpack.c.bf16 %v7769, %v7762
    %v8372 = vpack.c.bf16 %v7770, %v7763
    %v8373 = vpack.c.bf16 %v7771, %v7764
    %v8374 = vpack.c.bf16 %v7772, %v7765
    %v8375 = vpack.c.bf16 %v7773, %v7766
    %v8376 = vpack.c.bf16 %v7774, %v7767
    %v8377 = vpack.c.bf16 %v7782, %v7775
    %v8378 = vpack.c.bf16 %v7783, %v7776
    %v8379 = vpack.c.bf16 %v7784, %v7777
    %v8380 = vpack.c.bf16 %v7785, %v7778
    %v8381 = vpack.c.bf16 %v7786, %v7779
    %v8382 = vpack.c.bf16 %v7787, %v7780
    %v8383 = vpack.c.bf16 %v7788, %v7781
    %v8384 = vpack.c.bf16 %v7796, %v7789
    %v8385 = vpack.c.bf16 %v7797, %v7790
    %v8386 = vpack.c.bf16 %v7798, %v7791
    %v8387 = vpack.c.bf16 %v7799, %v7792
    %v8388 = vpack.c.bf16 %v7800, %v7793
    %v8389 = vpack.c.bf16 %v7801, %v7794
    %v8390 = vpack.c.bf16 %v7802, %v7795
    %v8391 = vpack.c.bf16 %v7810, %v7803
    %v8392 = vpack.c.bf16 %v7811, %v7804
    %v8393 = vpack.c.bf16 %v7812, %v7805
    %v8394 = vpack.c.bf16 %v7813, %v7806
    %v8395 = vpack.c.bf16 %v7814, %v7807
    %v8396 = vpack.c.bf16 %v7815, %v7808
    %v8397 = vpack.c.bf16 %v7816, %v7809
    %v8398 = vpack.c.bf16 %v7824, %v7817
    %v8399 = vpack.c.bf16 %v7825, %v7818
    %v8400 = vpack.c.bf16 %v7826, %v7819
    %v8401 = vpack.c.bf16 %v7827, %v7820
    %v8402 = vpack.c.bf16 %v7828, %v7821
    %v8403 = vpack.c.bf16 %v7829, %v7822
    %v8404 = vpack.c.bf16 %v7830, %v7823
    %v8405 = vpack.c.bf16 %v7838, %v7831
    %v8406 = vpack.c.bf16 %v7839, %v7832
    %v8407 = vpack.c.bf16 %v7840, %v7833
    %v8408 = vpack.c.bf16 %v7841, %v7834
    %v8409 = vpack.c.bf16 %v7842, %v7835
    %v8410 = vpack.c.bf16 %v7843, %v7836
    %v8411 = vpack.c.bf16 %v7844, %v7837
    %v8412 = vpack.c.bf16 %v7852, %v7845
    %v8413 = vpack.c.bf16 %v7853, %v7846
    %v8414 = vpack.c.bf16 %v7854, %v7847
    %v8415 = vpack.c.bf16 %v7855, %v7848
    %v8416 = vpack.c.bf16 %v7856, %v7849
    %v8417 = vpack.c.bf16 %v7857, %v7850
    %v8418 = vpack.c.bf16 %v7858, %v7851
    %v8419 = vpack.c.bf16 %v7866, %v7859
    %v8420 = vpack.c.bf16 %v7867, %v7860
    %v8421 = vpack.c.bf16 %v7868, %v7861
    %v8422 = vpack.c.bf16 %v7869, %v7862
    %v8423 = vpack.c.bf16 %v7870, %v7863
    %v8424 = vpack.c.bf16 %v7871, %v7864
    %v8425 = vpack.c.bf16 %v7872, %v7865
    %v8426 = vpack.c.bf16 %v7880, %v7873
    %v8427 = vpack.c.bf16 %v7881, %v7874
    %v8428 = vpack.c.bf16 %v7882, %v7875
    %v8429 = vpack.c.bf16 %v7883, %v7876
    %v8430 = vpack.c.bf16 %v7884, %v7877
    %v8431 = vpack.c.bf16 %v7885, %v7878
    %v8432 = vpack.c.bf16 %v7886, %v7879
    %v8433 = vpack.c.bf16 %v7894, %v7887
    %v8434 = vpack.c.bf16 %v7895, %v7888
    %v8435 = vpack.c.bf16 %v7896, %v7889
    %v8436 = vpack.c.bf16 %v7897, %v7890
    %v8437 = vpack.c.bf16 %v7898, %v7891
    %v8438 = vpack.c.bf16 %v7899, %v7892
    %v8439 = vpack.c.bf16 %v7900, %v7893
    %v8440 = vpack.c.bf16 %v7908, %v7901
    %v8441 = vpack.c.bf16 %v7909, %v7902
    %v8442 = vpack.c.bf16 %v7910, %v7903
    %v8443 = vpack.c.bf16 %v7911, %v7904
    %v8444 = vpack.c.bf16 %v7912, %v7905
    %v8445 = vpack.c.bf16 %v7913, %v7906
    %v8446 = vpack.c.bf16 %v7914, %v7907
    %v8447 = vpack.c.bf16 %v7922, %v7915
    %v8448 = vpack.c.bf16 %v7923, %v7916
    %v8449 = vpack.c.bf16 %v7924, %v7917
    %v8450 = vpack.c.bf16 %v7925, %v7918
    %v8451 = vpack.c.bf16 %v7926, %v7919
    %v8452 = vpack.c.bf16 %v7927, %v7920
    %v8453 = vpack.c.bf16 %v7928, %v7921
    %v8454 = vpack.c.bf16 %v7936, %v7929
    %v8455 = vpack.c.bf16 %v7937, %v7930
    %v8456 = vpack.c.bf16 %v7938, %v7931
    %v8457 = vpack.c.bf16 %v7939, %v7932
    %v8458 = vpack.c.bf16 %v7940, %v7933
    %v8459 = vpack.c.bf16 %v7941, %v7934
    %v8460 = vpack.c.bf16 %v7942, %v7935
    %v8461 = vpack.c.bf16 %v7950, %v7943
    %v8462 = vpack.c.bf16 %v7951, %v7944
    %v8463 = vpack.c.bf16 %v7952, %v7945
    %v8464 = vpack.c.bf16 %v7953, %v7946
    %v8465 = vpack.c.bf16 %v7954, %v7947
    %v8466 = vpack.c.bf16 %v7955, %v7948
    %v8467 = vpack.c.bf16 %v7956, %v7949
    %v8468 = vpack.c.bf16 %v7964, %v7957
    %v8469 = vpack.c.bf16 %v7965, %v7958
    %v8470 = vpack.c.bf16 %v7966, %v7959
    %v8471 = vpack.c.bf16 %v7967, %v7960
    %v8472 = vpack.c.bf16 %v7968, %v7961
    %v8473 = vpack.c.bf16 %v7969, %v7962
    %v8474 = vpack.c.bf16 %v7970, %v7963
    %v8475 = vpack.c.bf16 %v7978, %v7971
    %v8476 = vpack.c.bf16 %v7979, %v7972
    %v8477 = vpack.c.bf16 %v7980, %v7973
    %v8478 = vpack.c.bf16 %v7981, %v7974
    %v8479 = vpack.c.bf16 %v7982, %v7975
    %v8480 = vpack.c.bf16 %v7983, %v7976
    %v8481 = vpack.c.bf16 %v7984, %v7977
    %v8482 = vpack.c.bf16 %v7992, %v7985
    %v8483 = vpack.c.bf16 %v7993, %v7986
    %v8484 = vpack.c.bf16 %v7994, %v7987
    %v8485 = vpack.c.bf16 %v7995, %v7988
    %v8486 = vpack.c.bf16 %v7996, %v7989
    %v8487 = vpack.c.bf16 %v7997, %v7990
    %v8488 = vpack.c.bf16 %v7998, %v7991
    %v8489 = vpack.c.bf16 %v8006, %v7999
    %v8490 = vpack.c.bf16 %v8007, %v8000
    %v8491 = vpack.c.bf16 %v8008, %v8001
    %v8492 = vpack.c.bf16 %v8009, %v8002
    %v8493 = vpack.c.bf16 %v8010, %v8003
    %v8494 = vpack.c.bf16 %v8011, %v8004
    %v8495 = vpack.c.bf16 %v8012, %v8005
    %v8496 = vpack.c.bf16 %v8020, %v8013
    %v8497 = vpack.c.bf16 %v8021, %v8014
    %v8498 = vpack.c.bf16 %v8022, %v8015
    %v8499 = vpack.c.bf16 %v8023, %v8016
    %v8500 = vpack.c.bf16 %v8024, %v8017
    %v8501 = vpack.c.bf16 %v8025, %v8018
    %v8502 = vpack.c.bf16 %v8026, %v8019
    %v8503 = vpack.c.bf16 %v8034, %v8027
    %v8504 = vpack.c.bf16 %v8035, %v8028
    %v8505 = vpack.c.bf16 %v8036, %v8029
    %v8506 = vpack.c.bf16 %v8037, %v8030
    %v8507 = vpack.c.bf16 %v8038, %v8031
    %v8508 = vpack.c.bf16 %v8039, %v8032
    %v8509 = vpack.c.bf16 %v8040, %v8033
    %v8510 = vpack.c.bf16 %v8048, %v8041
    %v8511 = vpack.c.bf16 %v8049, %v8042
    %v8512 = vpack.c.bf16 %v8050, %v8043
    %v8513 = vpack.c.bf16 %v8051, %v8044
    %v8514 = vpack.c.bf16 %v8052, %v8045
    %v8515 = vpack.c.bf16 %v8053, %v8046
    %v8516 = vpack.c.bf16 %v8054, %v8047
    %v8517 = vpack.c.bf16 %v8062, %v8055
    %v8518 = vpack.c.bf16 %v8063, %v8056
    %v8519 = vpack.c.bf16 %v8064, %v8057
    %v8520 = vpack.c.bf16 %v8065, %v8058
    %v8521 = vpack.c.bf16 %v8066, %v8059
    %v8522 = vpack.c.bf16 %v8067, %v8060
    %v8523 = vpack.c.bf16 %v8068, %v8061
    %v8524 = vpack.c.bf16 %v8076, %v8069
    %v8525 = vpack.c.bf16 %v8077, %v8070
    %v8526 = vpack.c.bf16 %v8078, %v8071
    %v8527 = vpack.c.bf16 %v8079, %v8072
    %v8528 = vpack.c.bf16 %v8080, %v8073
    %v8529 = vpack.c.bf16 %v8081, %v8074
    %v8530 = vpack.c.bf16 %v8082, %v8075
    %v8531 = vpack.c.bf16 %v6283, %v6275
    %v8532 = vpack.c.bf16 %v6284, %v6276
    %v8533 = vpack.c.bf16 %v6285, %v6277
    %v8534 = vpack.c.bf16 %v6286, %v6278
    %v8535 = vpack.c.bf16 %v6287, %v6279
    %v8536 = vpack.c.bf16 %v6288, %v6280
    %v8537 = vpack.c.bf16 %v6289, %v6281
    %v8538 = vpack.c.bf16 %v6290, %v6282
    %8539 = vmatpush.bf16.msra.mxu0 %v8132
    %8540 = vmatpush.bf16.msra.mxu0 %v8125
    %8541 = vmatpush.bf16.msra.mxu0 %v8118
    %8542 = vmatpush.bf16.msra.mxu0 %v8111
    %8543 = vmatpush.bf16.msra.mxu0 %v8104
    %8544 = vmatpush.bf16.msra.mxu0 %v8097
    %8545 = vmatpush.bf16.msra.mxu0 %v8090
    %8546 = vmatpush.bf16.msra.mxu0 %v8083
    %8547 = vmatmul.bf16.gmra.mxu0 %v8531
    %v8548 = vpop.f32.mrf.mxu0
    %v8549 = vadd.f32 0.0, %v8548
    %v8550 = vpop.f32.mrf.mxu0
    %v8551 = vadd.f32 0.0, %v8550
    %8552 = vdwg.mxu0
    %8553 = vmatpush.bf16.msra.mxu0 %v8188
    %8554 = vmatpush.bf16.msra.mxu0 %v8181
    %8555 = vmatpush.bf16.msra.mxu0 %v8174
    %8556 = vmatpush.bf16.msra.mxu0 %v8167
    %8557 = vmatpush.bf16.msra.mxu0 %v8160
    %8558 = vmatpush.bf16.msra.mxu0 %v8153
    %8559 = vmatpush.bf16.msra.mxu0 %v8146
    %8560 = vmatpush.bf16.msra.mxu0 %v8139
    %8561 = vmatmul.bf16.gmra.mxu0 %v8532
    %v8562 = vpop.f32.mrf.mxu0
    %v8563 = vadd.f32 %v8549, %v8562
    %v8564 = vpop.f32.mrf.mxu0
    %v8565 = vadd.f32 %v8551, %v8564
    %8566 = vdwg.mxu0
    %8567 = vmatpush.bf16.msra.mxu0 %v8244
    %8568 = vmatpush.bf16.msra.mxu0 %v8237
    %8569 = vmatpush.bf16.msra.mxu0 %v8230
    %8570 = vmatpush.bf16.msra.mxu0 %v8223
    %8571 = vmatpush.bf16.msra.mxu0 %v8216
    %8572 = vmatpush.bf16.msra.mxu0 %v8209
    %8573 = vmatpush.bf16.msra.mxu0 %v8202
    %8574 = vmatpush.bf16.msra.mxu0 %v8195
    %8575 = vmatmul.bf16.gmra.mxu0 %v8533
    %v8576 = vpop.f32.mrf.mxu0
    %v8577 = vadd.f32 %v8563, %v8576
    %v8578 = vpop.f32.mrf.mxu0
    %v8579 = vadd.f32 %v8565, %v8578
    %8580 = vdwg.mxu0
    %8581 = vmatpush.bf16.msra.mxu0 %v8300
    %8582 = vmatpush.bf16.msra.mxu0 %v8293
    %8583 = vmatpush.bf16.msra.mxu0 %v8286
    %8584 = vmatpush.bf16.msra.mxu0 %v8279
    %8585 = vmatpush.bf16.msra.mxu0 %v8272
    %8586 = vmatpush.bf16.msra.mxu0 %v8265
    %8587 = vmatpush.bf16.msra.mxu0 %v8258
    %8588 = vmatpush.bf16.msra.mxu0 %v8251
    %8589 = vmatmul.bf16.gmra.mxu0 %v8534
    %v8590 = vpop.f32.mrf.mxu0
    %v8591 = vadd.f32 %v8577, %v8590
    %v8592 = vpop.f32.mrf.mxu0
    %v8593 = vadd.f32 %v8579, %v8592
    %8594 = vdwg.mxu0
    %8595 = vmatpush.bf16.msra.mxu0 %v8356
    %8596 = vmatpush.bf16.msra.mxu0 %v8349
    %8597 = vmatpush.bf16.msra.mxu0 %v8342
    %8598 = vmatpush.bf16.msra.mxu0 %v8335
    %8599 = vmatpush.bf16.msra.mxu0 %v8328
    %8600 = vmatpush.bf16.msra.mxu0 %v8321
    %8601 = vmatpush.bf16.msra.mxu0 %v8314
    %8602 = vmatpush.bf16.msra.mxu0 %v8307
    %8603 = vmatmul.bf16.gmra.mxu0 %v8535
    %v8604 = vpop.f32.mrf.mxu0
    %v8605 = vadd.f32 %v8591, %v8604
    %v8606 = vpop.f32.mrf.mxu0
    %v8607 = vadd.f32 %v8593, %v8606
    %8608 = vdwg.mxu0
    %8609 = vmatpush.bf16.msra.mxu0 %v8412
    %8610 = vmatpush.bf16.msra.mxu0 %v8405
    %8611 = vmatpush.bf16.msra.mxu0 %v8398
    %8612 = vmatpush.bf16.msra.mxu0 %v8391
    %8613 = vmatpush.bf16.msra.mxu0 %v8384
    %8614 = vmatpush.bf16.msra.mxu0 %v8377
    %8615 = vmatpush.bf16.msra.mxu0 %v8370
    %8616 = vmatpush.bf16.msra.mxu0 %v8363
    %8617 = vmatmul.bf16.gmra.mxu0 %v8536
    %v8618 = vpop.f32.mrf.mxu0
    %v8619 = vadd.f32 %v8605, %v8618
    %v8620 = vpop.f32.mrf.mxu0
    %v8621 = vadd.f32 %v8607, %v8620
    %8622 = vdwg.mxu0
    %8623 = vmatpush.bf16.msra.mxu0 %v8468
    %8624 = vmatpush.bf16.msra.mxu0 %v8461
    %8625 = vmatpush.bf16.msra.mxu0 %v8454
    %8626 = vmatpush.bf16.msra.mxu0 %v8447
    %8627 = vmatpush.bf16.msra.mxu0 %v8440
    %8628 = vmatpush.bf16.msra.mxu0 %v8433
    %8629 = vmatpush.bf16.msra.mxu0 %v8426
    %8630 = vmatpush.bf16.msra.mxu0 %v8419
    %8631 = vmatmul.bf16.gmra.mxu0 %v8537
    %v8632 = vpop.f32.mrf.mxu0
    %v8633 = vadd.f32 %v8619, %v8632
    %v8634 = vpop.f32.mrf.mxu0
    %v8635 = vadd.f32 %v8621, %v8634
    %8636 = vdwg.mxu0
    %8637 = vmatpush.bf16.msra.mxu0 %v8524
    %8638 = vmatpush.bf16.msra.mxu0 %v8517
    %8639 = vmatpush.bf16.msra.mxu0 %v8510
    %8640 = vmatpush.bf16.msra.mxu0 %v8503
    %8641 = vmatpush.bf16.msra.mxu0 %v8496
    %8642 = vmatpush.bf16.msra.mxu0 %v8489
    %8643 = vmatpush.bf16.msra.mxu0 %v8482
    %8644 = vmatpush.bf16.msra.mxu0 %v8475
    %8645 = vmatmul.bf16.gmra.mxu0 %v8538
    %v8646 = vpop.f32.mrf.mxu0
    %v8647 = vadd.f32 %v8633, %v8646
    %v8648 = vpop.f32.mrf.mxu0
    %v8649 = vadd.f32 %v8635, %v8648
    %8650 = vdwg.mxu0
    %8651 = vmatpush.bf16.msra.mxu0 %v8133
    %8652 = vmatpush.bf16.msra.mxu0 %v8126
    %8653 = vmatpush.bf16.msra.mxu0 %v8119
    %8654 = vmatpush.bf16.msra.mxu0 %v8112
    %8655 = vmatpush.bf16.msra.mxu0 %v8105
    %8656 = vmatpush.bf16.msra.mxu0 %v8098
    %8657 = vmatpush.bf16.msra.mxu0 %v8091
    %8658 = vmatpush.bf16.msra.mxu0 %v8084
    %8659 = vmatmul.bf16.gmra.mxu0 %v8531
    %v8660 = vpop.f32.mrf.mxu0
    %v8661 = vadd.f32 0.0, %v8660
    %v8662 = vpop.f32.mrf.mxu0
    %v8663 = vadd.f32 0.0, %v8662
    %8664 = vdwg.mxu0
    %8665 = vmatpush.bf16.msra.mxu0 %v8189
    %8666 = vmatpush.bf16.msra.mxu0 %v8182
    %8667 = vmatpush.bf16.msra.mxu0 %v8175
    %8668 = vmatpush.bf16.msra.mxu0 %v8168
    %8669 = vmatpush.bf16.msra.mxu0 %v8161
    %8670 = vmatpush.bf16.msra.mxu0 %v8154
    %8671 = vmatpush.bf16.msra.mxu0 %v8147
    %8672 = vmatpush.bf16.msra.mxu0 %v8140
    %8673 = vmatmul.bf16.gmra.mxu0 %v8532
    %v8674 = vpop.f32.mrf.mxu0
    %v8675 = vadd.f32 %v8661, %v8674
    %v8676 = vpop.f32.mrf.mxu0
    %v8677 = vadd.f32 %v8663, %v8676
    %8678 = vdwg.mxu0
    %8679 = vmatpush.bf16.msra.mxu0 %v8245
    %8680 = vmatpush.bf16.msra.mxu0 %v8238
    %8681 = vmatpush.bf16.msra.mxu0 %v8231
    %8682 = vmatpush.bf16.msra.mxu0 %v8224
    %8683 = vmatpush.bf16.msra.mxu0 %v8217
    %8684 = vmatpush.bf16.msra.mxu0 %v8210
    %8685 = vmatpush.bf16.msra.mxu0 %v8203
    %8686 = vmatpush.bf16.msra.mxu0 %v8196
    %8687 = vmatmul.bf16.gmra.mxu0 %v8533
    %v8688 = vpop.f32.mrf.mxu0
    %v8689 = vadd.f32 %v8675, %v8688
    %v8690 = vpop.f32.mrf.mxu0
    %v8691 = vadd.f32 %v8677, %v8690
    %8692 = vdwg.mxu0
    %8693 = vmatpush.bf16.msra.mxu0 %v8301
    %8694 = vmatpush.bf16.msra.mxu0 %v8294
    %8695 = vmatpush.bf16.msra.mxu0 %v8287
    %8696 = vmatpush.bf16.msra.mxu0 %v8280
    %8697 = vmatpush.bf16.msra.mxu0 %v8273
    %8698 = vmatpush.bf16.msra.mxu0 %v8266
    %8699 = vmatpush.bf16.msra.mxu0 %v8259
    %8700 = vmatpush.bf16.msra.mxu0 %v8252
    %8701 = vmatmul.bf16.gmra.mxu0 %v8534
    %v8702 = vpop.f32.mrf.mxu0
    %v8703 = vadd.f32 %v8689, %v8702
    %v8704 = vpop.f32.mrf.mxu0
    %v8705 = vadd.f32 %v8691, %v8704
    %8706 = vdwg.mxu0
    %8707 = vmatpush.bf16.msra.mxu0 %v8357
    %8708 = vmatpush.bf16.msra.mxu0 %v8350
    %8709 = vmatpush.bf16.msra.mxu0 %v8343
    %8710 = vmatpush.bf16.msra.mxu0 %v8336
    %8711 = vmatpush.bf16.msra.mxu0 %v8329
    %8712 = vmatpush.bf16.msra.mxu0 %v8322
    %8713 = vmatpush.bf16.msra.mxu0 %v8315
    %8714 = vmatpush.bf16.msra.mxu0 %v8308
    %8715 = vmatmul.bf16.gmra.mxu0 %v8535
    %v8716 = vpop.f32.mrf.mxu0
    %v8717 = vadd.f32 %v8703, %v8716
    %v8718 = vpop.f32.mrf.mxu0
    %v8719 = vadd.f32 %v8705, %v8718
    %8720 = vdwg.mxu0
    %8721 = vmatpush.bf16.msra.mxu0 %v8413
    %8722 = vmatpush.bf16.msra.mxu0 %v8406
    %8723 = vmatpush.bf16.msra.mxu0 %v8399
    %8724 = vmatpush.bf16.msra.mxu0 %v8392
    %8725 = vmatpush.bf16.msra.mxu0 %v8385
    %8726 = vmatpush.bf16.msra.mxu0 %v8378
    %8727 = vmatpush.bf16.msra.mxu0 %v8371
    %8728 = vmatpush.bf16.msra.mxu0 %v8364
    %8729 = vmatmul.bf16.gmra.mxu0 %v8536
    %v8730 = vpop.f32.mrf.mxu0
    %v8731 = vadd.f32 %v8717, %v8730
    %v8732 = vpop.f32.mrf.mxu0
    %v8733 = vadd.f32 %v8719, %v8732
    %8734 = vdwg.mxu0
    %8735 = vmatpush.bf16.msra.mxu0 %v8469
    %8736 = vmatpush.bf16.msra.mxu0 %v8462
    %8737 = vmatpush.bf16.msra.mxu0 %v8455
    %8738 = vmatpush.bf16.msra.mxu0 %v8448
    %8739 = vmatpush.bf16.msra.mxu0 %v8441
    %8740 = vmatpush.bf16.msra.mxu0 %v8434
    %8741 = vmatpush.bf16.msra.mxu0 %v8427
    %8742 = vmatpush.bf16.msra.mxu0 %v8420
    %8743 = vmatmul.bf16.gmra.mxu0 %v8537
    %v8744 = vpop.f32.mrf.mxu0
    %v8745 = vadd.f32 %v8731, %v8744
    %v8746 = vpop.f32.mrf.mxu0
    %v8747 = vadd.f32 %v8733, %v8746
    %8748 = vdwg.mxu0
    %8749 = vmatpush.bf16.msra.mxu0 %v8525
    %8750 = vmatpush.bf16.msra.mxu0 %v8518
    %8751 = vmatpush.bf16.msra.mxu0 %v8511
    %8752 = vmatpush.bf16.msra.mxu0 %v8504
    %8753 = vmatpush.bf16.msra.mxu0 %v8497
    %8754 = vmatpush.bf16.msra.mxu0 %v8490
    %8755 = vmatpush.bf16.msra.mxu0 %v8483
    %8756 = vmatpush.bf16.msra.mxu0 %v8476
    %8757 = vmatmul.bf16.gmra.mxu0 %v8538
    %v8758 = vpop.f32.mrf.mxu0
    %v8759 = vadd.f32 %v8745, %v8758
    %v8760 = vpop.f32.mrf.mxu0
    %v8761 = vadd.f32 %v8747, %v8760
    %8762 = vdwg.mxu0
    %8763 = vmatpush.bf16.msra.mxu0 %v8134
    %8764 = vmatpush.bf16.msra.mxu0 %v8127
    %8765 = vmatpush.bf16.msra.mxu0 %v8120
    %8766 = vmatpush.bf16.msra.mxu0 %v8113
    %8767 = vmatpush.bf16.msra.mxu0 %v8106
    %8768 = vmatpush.bf16.msra.mxu0 %v8099
    %8769 = vmatpush.bf16.msra.mxu0 %v8092
    %8770 = vmatpush.bf16.msra.mxu0 %v8085
    %8771 = vmatmul.bf16.gmra.mxu0 %v8531
    %v8772 = vpop.f32.mrf.mxu0
    %v8773 = vadd.f32 0.0, %v8772
    %v8774 = vpop.f32.mrf.mxu0
    %v8775 = vadd.f32 0.0, %v8774
    %8776 = vdwg.mxu0
    %8777 = vmatpush.bf16.msra.mxu0 %v8190
    %8778 = vmatpush.bf16.msra.mxu0 %v8183
    %8779 = vmatpush.bf16.msra.mxu0 %v8176
    %8780 = vmatpush.bf16.msra.mxu0 %v8169
    %8781 = vmatpush.bf16.msra.mxu0 %v8162
    %8782 = vmatpush.bf16.msra.mxu0 %v8155
    %8783 = vmatpush.bf16.msra.mxu0 %v8148
    %8784 = vmatpush.bf16.msra.mxu0 %v8141
    %8785 = vmatmul.bf16.gmra.mxu0 %v8532
    %v8786 = vpop.f32.mrf.mxu0
    %v8787 = vadd.f32 %v8773, %v8786
    %v8788 = vpop.f32.mrf.mxu0
    %v8789 = vadd.f32 %v8775, %v8788
    %8790 = vdwg.mxu0
    %8791 = vmatpush.bf16.msra.mxu0 %v8246
    %8792 = vmatpush.bf16.msra.mxu0 %v8239
    %8793 = vmatpush.bf16.msra.mxu0 %v8232
    %8794 = vmatpush.bf16.msra.mxu0 %v8225
    %8795 = vmatpush.bf16.msra.mxu0 %v8218
    %8796 = vmatpush.bf16.msra.mxu0 %v8211
    %8797 = vmatpush.bf16.msra.mxu0 %v8204
    %8798 = vmatpush.bf16.msra.mxu0 %v8197
    %8799 = vmatmul.bf16.gmra.mxu0 %v8533
    %v8800 = vpop.f32.mrf.mxu0
    %v8801 = vadd.f32 %v8787, %v8800
    %v8802 = vpop.f32.mrf.mxu0
    %v8803 = vadd.f32 %v8789, %v8802
    %8804 = vdwg.mxu0
    %8805 = vmatpush.bf16.msra.mxu0 %v8302
    %8806 = vmatpush.bf16.msra.mxu0 %v8295
    %8807 = vmatpush.bf16.msra.mxu0 %v8288
    %8808 = vmatpush.bf16.msra.mxu0 %v8281
    %8809 = vmatpush.bf16.msra.mxu0 %v8274
    %8810 = vmatpush.bf16.msra.mxu0 %v8267
    %8811 = vmatpush.bf16.msra.mxu0 %v8260
    %8812 = vmatpush.bf16.msra.mxu0 %v8253
    %8813 = vmatmul.bf16.gmra.mxu0 %v8534
    %v8814 = vpop.f32.mrf.mxu0
    %v8815 = vadd.f32 %v8801, %v8814
    %v8816 = vpop.f32.mrf.mxu0
    %v8817 = vadd.f32 %v8803, %v8816
    %8818 = vdwg.mxu0
    %8819 = vmatpush.bf16.msra.mxu0 %v8358
    %8820 = vmatpush.bf16.msra.mxu0 %v8351
    %8821 = vmatpush.bf16.msra.mxu0 %v8344
    %8822 = vmatpush.bf16.msra.mxu0 %v8337
    %8823 = vmatpush.bf16.msra.mxu0 %v8330
    %8824 = vmatpush.bf16.msra.mxu0 %v8323
    %8825 = vmatpush.bf16.msra.mxu0 %v8316
    %8826 = vmatpush.bf16.msra.mxu0 %v8309
    %8827 = vmatmul.bf16.gmra.mxu0 %v8535
    %v8828 = vpop.f32.mrf.mxu0
    %v8829 = vadd.f32 %v8815, %v8828
    %v8830 = vpop.f32.mrf.mxu0
    %v8831 = vadd.f32 %v8817, %v8830
    %8832 = vdwg.mxu0
    %8833 = vmatpush.bf16.msra.mxu0 %v8414
    %8834 = vmatpush.bf16.msra.mxu0 %v8407
    %8835 = vmatpush.bf16.msra.mxu0 %v8400
    %8836 = vmatpush.bf16.msra.mxu0 %v8393
    %8837 = vmatpush.bf16.msra.mxu0 %v8386
    %8838 = vmatpush.bf16.msra.mxu0 %v8379
    %8839 = vmatpush.bf16.msra.mxu0 %v8372
    %8840 = vmatpush.bf16.msra.mxu0 %v8365
    %8841 = vmatmul.bf16.gmra.mxu0 %v8536
    %v8842 = vpop.f32.mrf.mxu0
    %v8843 = vadd.f32 %v8829, %v8842
    %v8844 = vpop.f32.mrf.mxu0
    %v8845 = vadd.f32 %v8831, %v8844
    %8846 = vdwg.mxu0
    %8847 = vmatpush.bf16.msra.mxu0 %v8470
    %8848 = vmatpush.bf16.msra.mxu0 %v8463
    %8849 = vmatpush.bf16.msra.mxu0 %v8456
    %8850 = vmatpush.bf16.msra.mxu0 %v8449
    %8851 = vmatpush.bf16.msra.mxu0 %v8442
    %8852 = vmatpush.bf16.msra.mxu0 %v8435
    %8853 = vmatpush.bf16.msra.mxu0 %v8428
    %8854 = vmatpush.bf16.msra.mxu0 %v8421
    %8855 = vmatmul.bf16.gmra.mxu0 %v8537
    %v8856 = vpop.f32.mrf.mxu0
    %v8857 = vadd.f32 %v8843, %v8856
    %v8858 = vpop.f32.mrf.mxu0
    %v8859 = vadd.f32 %v8845, %v8858
    %8860 = vdwg.mxu0
    %8861 = vmatpush.bf16.msra.mxu0 %v8526
    %8862 = vmatpush.bf16.msra.mxu0 %v8519
    %8863 = vmatpush.bf16.msra.mxu0 %v8512
    %8864 = vmatpush.bf16.msra.mxu0 %v8505
    %8865 = vmatpush.bf16.msra.mxu0 %v8498
    %8866 = vmatpush.bf16.msra.mxu0 %v8491
    %8867 = vmatpush.bf16.msra.mxu0 %v8484
    %8868 = vmatpush.bf16.msra.mxu0 %v8477
    %8869 = vmatmul.bf16.gmra.mxu0 %v8538
    %v8870 = vpop.f32.mrf.mxu0
    %v8871 = vadd.f32 %v8857, %v8870
    %v8872 = vpop.f32.mrf.mxu0
    %v8873 = vadd.f32 %v8859, %v8872
    %8874 = vdwg.mxu0
    %8875 = vmatpush.bf16.msra.mxu0 %v8135
    %8876 = vmatpush.bf16.msra.mxu0 %v8128
    %8877 = vmatpush.bf16.msra.mxu0 %v8121
    %8878 = vmatpush.bf16.msra.mxu0 %v8114
    %8879 = vmatpush.bf16.msra.mxu0 %v8107
    %8880 = vmatpush.bf16.msra.mxu0 %v8100
    %8881 = vmatpush.bf16.msra.mxu0 %v8093
    %8882 = vmatpush.bf16.msra.mxu0 %v8086
    %8883 = vmatmul.bf16.gmra.mxu0 %v8531
    %v8884 = vpop.f32.mrf.mxu0
    %v8885 = vadd.f32 0.0, %v8884
    %v8886 = vpop.f32.mrf.mxu0
    %v8887 = vadd.f32 0.0, %v8886
    %8888 = vdwg.mxu0
    %8889 = vmatpush.bf16.msra.mxu0 %v8191
    %8890 = vmatpush.bf16.msra.mxu0 %v8184
    %8891 = vmatpush.bf16.msra.mxu0 %v8177
    %8892 = vmatpush.bf16.msra.mxu0 %v8170
    %8893 = vmatpush.bf16.msra.mxu0 %v8163
    %8894 = vmatpush.bf16.msra.mxu0 %v8156
    %8895 = vmatpush.bf16.msra.mxu0 %v8149
    %8896 = vmatpush.bf16.msra.mxu0 %v8142
    %8897 = vmatmul.bf16.gmra.mxu0 %v8532
    %v8898 = vpop.f32.mrf.mxu0
    %v8899 = vadd.f32 %v8885, %v8898
    %v8900 = vpop.f32.mrf.mxu0
    %v8901 = vadd.f32 %v8887, %v8900
    %8902 = vdwg.mxu0
    %8903 = vmatpush.bf16.msra.mxu0 %v8247
    %8904 = vmatpush.bf16.msra.mxu0 %v8240
    %8905 = vmatpush.bf16.msra.mxu0 %v8233
    %8906 = vmatpush.bf16.msra.mxu0 %v8226
    %8907 = vmatpush.bf16.msra.mxu0 %v8219
    %8908 = vmatpush.bf16.msra.mxu0 %v8212
    %8909 = vmatpush.bf16.msra.mxu0 %v8205
    %8910 = vmatpush.bf16.msra.mxu0 %v8198
    %8911 = vmatmul.bf16.gmra.mxu0 %v8533
    %v8912 = vpop.f32.mrf.mxu0
    %v8913 = vadd.f32 %v8899, %v8912
    %v8914 = vpop.f32.mrf.mxu0
    %v8915 = vadd.f32 %v8901, %v8914
    %8916 = vdwg.mxu0
    %8917 = vmatpush.bf16.msra.mxu0 %v8303
    %8918 = vmatpush.bf16.msra.mxu0 %v8296
    %8919 = vmatpush.bf16.msra.mxu0 %v8289
    %8920 = vmatpush.bf16.msra.mxu0 %v8282
    %8921 = vmatpush.bf16.msra.mxu0 %v8275
    %8922 = vmatpush.bf16.msra.mxu0 %v8268
    %8923 = vmatpush.bf16.msra.mxu0 %v8261
    %8924 = vmatpush.bf16.msra.mxu0 %v8254
    %8925 = vmatmul.bf16.gmra.mxu0 %v8534
    %v8926 = vpop.f32.mrf.mxu0
    %v8927 = vadd.f32 %v8913, %v8926
    %v8928 = vpop.f32.mrf.mxu0
    %v8929 = vadd.f32 %v8915, %v8928
    %8930 = vdwg.mxu0
    %8931 = vmatpush.bf16.msra.mxu0 %v8359
    %8932 = vmatpush.bf16.msra.mxu0 %v8352
    %8933 = vmatpush.bf16.msra.mxu0 %v8345
    %8934 = vmatpush.bf16.msra.mxu0 %v8338
    %8935 = vmatpush.bf16.msra.mxu0 %v8331
    %8936 = vmatpush.bf16.msra.mxu0 %v8324
    %8937 = vmatpush.bf16.msra.mxu0 %v8317
    %8938 = vmatpush.bf16.msra.mxu0 %v8310
    %8939 = vmatmul.bf16.gmra.mxu0 %v8535
    %v8940 = vpop.f32.mrf.mxu0
    %v8941 = vadd.f32 %v8927, %v8940
    %v8942 = vpop.f32.mrf.mxu0
    %v8943 = vadd.f32 %v8929, %v8942
    %8944 = vdwg.mxu0
    %8945 = vmatpush.bf16.msra.mxu0 %v8415
    %8946 = vmatpush.bf16.msra.mxu0 %v8408
    %8947 = vmatpush.bf16.msra.mxu0 %v8401
    %8948 = vmatpush.bf16.msra.mxu0 %v8394
    %8949 = vmatpush.bf16.msra.mxu0 %v8387
    %8950 = vmatpush.bf16.msra.mxu0 %v8380
    %8951 = vmatpush.bf16.msra.mxu0 %v8373
    %8952 = vmatpush.bf16.msra.mxu0 %v8366
    %8953 = vmatmul.bf16.gmra.mxu0 %v8536
    %v8954 = vpop.f32.mrf.mxu0
    %v8955 = vadd.f32 %v8941, %v8954
    %v8956 = vpop.f32.mrf.mxu0
    %v8957 = vadd.f32 %v8943, %v8956
    %8958 = vdwg.mxu0
    %8959 = vmatpush.bf16.msra.mxu0 %v8471
    %8960 = vmatpush.bf16.msra.mxu0 %v8464
    %8961 = vmatpush.bf16.msra.mxu0 %v8457
    %8962 = vmatpush.bf16.msra.mxu0 %v8450
    %8963 = vmatpush.bf16.msra.mxu0 %v8443
    %8964 = vmatpush.bf16.msra.mxu0 %v8436
    %8965 = vmatpush.bf16.msra.mxu0 %v8429
    %8966 = vmatpush.bf16.msra.mxu0 %v8422
    %8967 = vmatmul.bf16.gmra.mxu0 %v8537
    %v8968 = vpop.f32.mrf.mxu0
    %v8969 = vadd.f32 %v8955, %v8968
    %v8970 = vpop.f32.mrf.mxu0
    %v8971 = vadd.f32 %v8957, %v8970
    %8972 = vdwg.mxu0
    %8973 = vmatpush.bf16.msra.mxu0 %v8527
    %8974 = vmatpush.bf16.msra.mxu0 %v8520
    %8975 = vmatpush.bf16.msra.mxu0 %v8513
    %8976 = vmatpush.bf16.msra.mxu0 %v8506
    %8977 = vmatpush.bf16.msra.mxu0 %v8499
    %8978 = vmatpush.bf16.msra.mxu0 %v8492
    %8979 = vmatpush.bf16.msra.mxu0 %v8485
    %8980 = vmatpush.bf16.msra.mxu0 %v8478
    %8981 = vmatmul.bf16.gmra.mxu0 %v8538
    %v8982 = vpop.f32.mrf.mxu0
    %v8983 = vadd.f32 %v8969, %v8982
    %v8984 = vpop.f32.mrf.mxu0
    %v8985 = vadd.f32 %v8971, %v8984
    %8986 = vdwg.mxu0
    %8987 = vmatpush.bf16.msra.mxu0 %v8136
    %8988 = vmatpush.bf16.msra.mxu0 %v8129
    %8989 = vmatpush.bf16.msra.mxu0 %v8122
    %8990 = vmatpush.bf16.msra.mxu0 %v8115
    %8991 = vmatpush.bf16.msra.mxu0 %v8108
    %8992 = vmatpush.bf16.msra.mxu0 %v8101
    %8993 = vmatpush.bf16.msra.mxu0 %v8094
    %8994 = vmatpush.bf16.msra.mxu0 %v8087
    %8995 = vmatmul.bf16.gmra.mxu0 %v8531
    %v8996 = vpop.f32.mrf.mxu0
    %v8997 = vadd.f32 0.0, %v8996
    %v8998 = vpop.f32.mrf.mxu0
    %v8999 = vadd.f32 0.0, %v8998
    %9000 = vdwg.mxu0
    %9001 = vmatpush.bf16.msra.mxu0 %v8192
    %9002 = vmatpush.bf16.msra.mxu0 %v8185
    %9003 = vmatpush.bf16.msra.mxu0 %v8178
    %9004 = vmatpush.bf16.msra.mxu0 %v8171
    %9005 = vmatpush.bf16.msra.mxu0 %v8164
    %9006 = vmatpush.bf16.msra.mxu0 %v8157
    %9007 = vmatpush.bf16.msra.mxu0 %v8150
    %9008 = vmatpush.bf16.msra.mxu0 %v8143
    %9009 = vmatmul.bf16.gmra.mxu0 %v8532
    %v9010 = vpop.f32.mrf.mxu0
    %v9011 = vadd.f32 %v8997, %v9010
    %v9012 = vpop.f32.mrf.mxu0
    %v9013 = vadd.f32 %v8999, %v9012
    %9014 = vdwg.mxu0
    %9015 = vmatpush.bf16.msra.mxu0 %v8248
    %9016 = vmatpush.bf16.msra.mxu0 %v8241
    %9017 = vmatpush.bf16.msra.mxu0 %v8234
    %9018 = vmatpush.bf16.msra.mxu0 %v8227
    %9019 = vmatpush.bf16.msra.mxu0 %v8220
    %9020 = vmatpush.bf16.msra.mxu0 %v8213
    %9021 = vmatpush.bf16.msra.mxu0 %v8206
    %9022 = vmatpush.bf16.msra.mxu0 %v8199
    %9023 = vmatmul.bf16.gmra.mxu0 %v8533
    %v9024 = vpop.f32.mrf.mxu0
    %v9025 = vadd.f32 %v9011, %v9024
    %v9026 = vpop.f32.mrf.mxu0
    %v9027 = vadd.f32 %v9013, %v9026
    %9028 = vdwg.mxu0
    %9029 = vmatpush.bf16.msra.mxu0 %v8304
    %9030 = vmatpush.bf16.msra.mxu0 %v8297
    %9031 = vmatpush.bf16.msra.mxu0 %v8290
    %9032 = vmatpush.bf16.msra.mxu0 %v8283
    %9033 = vmatpush.bf16.msra.mxu0 %v8276
    %9034 = vmatpush.bf16.msra.mxu0 %v8269
    %9035 = vmatpush.bf16.msra.mxu0 %v8262
    %9036 = vmatpush.bf16.msra.mxu0 %v8255
    %9037 = vmatmul.bf16.gmra.mxu0 %v8534
    %v9038 = vpop.f32.mrf.mxu0
    %v9039 = vadd.f32 %v9025, %v9038
    %v9040 = vpop.f32.mrf.mxu0
    %v9041 = vadd.f32 %v9027, %v9040
    %9042 = vdwg.mxu0
    %9043 = vmatpush.bf16.msra.mxu0 %v8360
    %9044 = vmatpush.bf16.msra.mxu0 %v8353
    %9045 = vmatpush.bf16.msra.mxu0 %v8346
    %9046 = vmatpush.bf16.msra.mxu0 %v8339
    %9047 = vmatpush.bf16.msra.mxu0 %v8332
    %9048 = vmatpush.bf16.msra.mxu0 %v8325
    %9049 = vmatpush.bf16.msra.mxu0 %v8318
    %9050 = vmatpush.bf16.msra.mxu0 %v8311
    %9051 = vmatmul.bf16.gmra.mxu0 %v8535
    %v9052 = vpop.f32.mrf.mxu0
    %v9053 = vadd.f32 %v9039, %v9052
    %v9054 = vpop.f32.mrf.mxu0
    %v9055 = vadd.f32 %v9041, %v9054
    %9056 = vdwg.mxu0
    %9057 = vmatpush.bf16.msra.mxu0 %v8416
    %9058 = vmatpush.bf16.msra.mxu0 %v8409
    %9059 = vmatpush.bf16.msra.mxu0 %v8402
    %9060 = vmatpush.bf16.msra.mxu0 %v8395
    %9061 = vmatpush.bf16.msra.mxu0 %v8388
    %9062 = vmatpush.bf16.msra.mxu0 %v8381
    %9063 = vmatpush.bf16.msra.mxu0 %v8374
    %9064 = vmatpush.bf16.msra.mxu0 %v8367
    %9065 = vmatmul.bf16.gmra.mxu0 %v8536
    %v9066 = vpop.f32.mrf.mxu0
    %v9067 = vadd.f32 %v9053, %v9066
    %v9068 = vpop.f32.mrf.mxu0
    %v9069 = vadd.f32 %v9055, %v9068
    %9070 = vdwg.mxu0
    %9071 = vmatpush.bf16.msra.mxu0 %v8472
    %9072 = vmatpush.bf16.msra.mxu0 %v8465
    %9073 = vmatpush.bf16.msra.mxu0 %v8458
    %9074 = vmatpush.bf16.msra.mxu0 %v8451
    %9075 = vmatpush.bf16.msra.mxu0 %v8444
    %9076 = vmatpush.bf16.msra.mxu0 %v8437
    %9077 = vmatpush.bf16.msra.mxu0 %v8430
    %9078 = vmatpush.bf16.msra.mxu0 %v8423
    %9079 = vmatmul.bf16.gmra.mxu0 %v8537
    %v9080 = vpop.f32.mrf.mxu0
    %v9081 = vadd.f32 %v9067, %v9080
    %v9082 = vpop.f32.mrf.mxu0
    %v9083 = vadd.f32 %v9069, %v9082
    %9084 = vdwg.mxu0
    %9085 = vmatpush.bf16.msra.mxu0 %v8528
    %9086 = vmatpush.bf16.msra.mxu0 %v8521
    %9087 = vmatpush.bf16.msra.mxu0 %v8514
    %9088 = vmatpush.bf16.msra.mxu0 %v8507
    %9089 = vmatpush.bf16.msra.mxu0 %v8500
    %9090 = vmatpush.bf16.msra.mxu0 %v8493
    %9091 = vmatpush.bf16.msra.mxu0 %v8486
    %9092 = vmatpush.bf16.msra.mxu0 %v8479
    %9093 = vmatmul.bf16.gmra.mxu0 %v8538
    %v9094 = vpop.f32.mrf.mxu0
    %v9095 = vadd.f32 %v9081, %v9094
    %v9096 = vpop.f32.mrf.mxu0
    %v9097 = vadd.f32 %v9083, %v9096
    %9098 = vdwg.mxu0
    %9099 = vmatpush.bf16.msra.mxu0 %v8137
    %9100 = vmatpush.bf16.msra.mxu0 %v8130
    %9101 = vmatpush.bf16.msra.mxu0 %v8123
    %9102 = vmatpush.bf16.msra.mxu0 %v8116
    %9103 = vmatpush.bf16.msra.mxu0 %v8109
    %9104 = vmatpush.bf16.msra.mxu0 %v8102
    %9105 = vmatpush.bf16.msra.mxu0 %v8095
    %9106 = vmatpush.bf16.msra.mxu0 %v8088
    %9107 = vmatmul.bf16.gmra.mxu0 %v8531
    %v9108 = vpop.f32.mrf.mxu0
    %v9109 = vadd.f32 0.0, %v9108
    %v9110 = vpop.f32.mrf.mxu0
    %v9111 = vadd.f32 0.0, %v9110
    %9112 = vdwg.mxu0
    %9113 = vmatpush.bf16.msra.mxu0 %v8193
    %9114 = vmatpush.bf16.msra.mxu0 %v8186
    %9115 = vmatpush.bf16.msra.mxu0 %v8179
    %9116 = vmatpush.bf16.msra.mxu0 %v8172
    %9117 = vmatpush.bf16.msra.mxu0 %v8165
    %9118 = vmatpush.bf16.msra.mxu0 %v8158
    %9119 = vmatpush.bf16.msra.mxu0 %v8151
    %9120 = vmatpush.bf16.msra.mxu0 %v8144
    %9121 = vmatmul.bf16.gmra.mxu0 %v8532
    %v9122 = vpop.f32.mrf.mxu0
    %v9123 = vadd.f32 %v9109, %v9122
    %v9124 = vpop.f32.mrf.mxu0
    %v9125 = vadd.f32 %v9111, %v9124
    %9126 = vdwg.mxu0
    %9127 = vmatpush.bf16.msra.mxu0 %v8249
    %9128 = vmatpush.bf16.msra.mxu0 %v8242
    %9129 = vmatpush.bf16.msra.mxu0 %v8235
    %9130 = vmatpush.bf16.msra.mxu0 %v8228
    %9131 = vmatpush.bf16.msra.mxu0 %v8221
    %9132 = vmatpush.bf16.msra.mxu0 %v8214
    %9133 = vmatpush.bf16.msra.mxu0 %v8207
    %9134 = vmatpush.bf16.msra.mxu0 %v8200
    %9135 = vmatmul.bf16.gmra.mxu0 %v8533
    %v9136 = vpop.f32.mrf.mxu0
    %v9137 = vadd.f32 %v9123, %v9136
    %v9138 = vpop.f32.mrf.mxu0
    %v9139 = vadd.f32 %v9125, %v9138
    %9140 = vdwg.mxu0
    %9141 = vmatpush.bf16.msra.mxu0 %v8305
    %9142 = vmatpush.bf16.msra.mxu0 %v8298
    %9143 = vmatpush.bf16.msra.mxu0 %v8291
    %9144 = vmatpush.bf16.msra.mxu0 %v8284
    %9145 = vmatpush.bf16.msra.mxu0 %v8277
    %9146 = vmatpush.bf16.msra.mxu0 %v8270
    %9147 = vmatpush.bf16.msra.mxu0 %v8263
    %9148 = vmatpush.bf16.msra.mxu0 %v8256
    %9149 = vmatmul.bf16.gmra.mxu0 %v8534
    %v9150 = vpop.f32.mrf.mxu0
    %v9151 = vadd.f32 %v9137, %v9150
    %v9152 = vpop.f32.mrf.mxu0
    %v9153 = vadd.f32 %v9139, %v9152
    %9154 = vdwg.mxu0
    %9155 = vmatpush.bf16.msra.mxu0 %v8361
    %9156 = vmatpush.bf16.msra.mxu0 %v8354
    %9157 = vmatpush.bf16.msra.mxu0 %v8347
    %9158 = vmatpush.bf16.msra.mxu0 %v8340
    %9159 = vmatpush.bf16.msra.mxu0 %v8333
    %9160 = vmatpush.bf16.msra.mxu0 %v8326
    %9161 = vmatpush.bf16.msra.mxu0 %v8319
    %9162 = vmatpush.bf16.msra.mxu0 %v8312
    %9163 = vmatmul.bf16.gmra.mxu0 %v8535
    %v9164 = vpop.f32.mrf.mxu0
    %v9165 = vadd.f32 %v9151, %v9164
    %v9166 = vpop.f32.mrf.mxu0
    %v9167 = vadd.f32 %v9153, %v9166
    %9168 = vdwg.mxu0
    %9169 = vmatpush.bf16.msra.mxu0 %v8417
    %9170 = vmatpush.bf16.msra.mxu0 %v8410
    %9171 = vmatpush.bf16.msra.mxu0 %v8403
    %9172 = vmatpush.bf16.msra.mxu0 %v8396
    %9173 = vmatpush.bf16.msra.mxu0 %v8389
    %9174 = vmatpush.bf16.msra.mxu0 %v8382
    %9175 = vmatpush.bf16.msra.mxu0 %v8375
    %9176 = vmatpush.bf16.msra.mxu0 %v8368
    %9177 = vmatmul.bf16.gmra.mxu0 %v8536
    %v9178 = vpop.f32.mrf.mxu0
    %v9179 = vadd.f32 %v9165, %v9178
    %v9180 = vpop.f32.mrf.mxu0
    %v9181 = vadd.f32 %v9167, %v9180
    %9182 = vdwg.mxu0
    %9183 = vmatpush.bf16.msra.mxu0 %v8473
    %9184 = vmatpush.bf16.msra.mxu0 %v8466
    %9185 = vmatpush.bf16.msra.mxu0 %v8459
    %9186 = vmatpush.bf16.msra.mxu0 %v8452
    %9187 = vmatpush.bf16.msra.mxu0 %v8445
    %9188 = vmatpush.bf16.msra.mxu0 %v8438
    %9189 = vmatpush.bf16.msra.mxu0 %v8431
    %9190 = vmatpush.bf16.msra.mxu0 %v8424
    %9191 = vmatmul.bf16.gmra.mxu0 %v8537
    %v9192 = vpop.f32.mrf.mxu0
    %v9193 = vadd.f32 %v9179, %v9192
    %v9194 = vpop.f32.mrf.mxu0
    %v9195 = vadd.f32 %v9181, %v9194
    %9196 = vdwg.mxu0
    %9197 = vmatpush.bf16.msra.mxu0 %v8529
    %9198 = vmatpush.bf16.msra.mxu0 %v8522
    %9199 = vmatpush.bf16.msra.mxu0 %v8515
    %9200 = vmatpush.bf16.msra.mxu0 %v8508
    %9201 = vmatpush.bf16.msra.mxu0 %v8501
    %9202 = vmatpush.bf16.msra.mxu0 %v8494
    %9203 = vmatpush.bf16.msra.mxu0 %v8487
    %9204 = vmatpush.bf16.msra.mxu0 %v8480
    %9205 = vmatmul.bf16.gmra.mxu0 %v8538
    %v9206 = vpop.f32.mrf.mxu0
    %v9207 = vadd.f32 %v9193, %v9206
    %v9208 = vpop.f32.mrf.mxu0
    %v9209 = vadd.f32 %v9195, %v9208
    %9210 = vdwg.mxu0
    %9211 = vmatpush.bf16.msra.mxu0 %v8138
    %9212 = vmatpush.bf16.msra.mxu0 %v8131
    %9213 = vmatpush.bf16.msra.mxu0 %v8124
    %9214 = vmatpush.bf16.msra.mxu0 %v8117
    %9215 = vmatpush.bf16.msra.mxu0 %v8110
    %9216 = vmatpush.bf16.msra.mxu0 %v8103
    %9217 = vmatpush.bf16.msra.mxu0 %v8096
    %9218 = vmatpush.bf16.msra.mxu0 %v8089
    %9219 = vmatmul.bf16.gmra.mxu0 %v8531
    %v9220 = vpop.f32.mrf.mxu0
    %v9221 = vadd.f32 0.0, %v9220
    %v9222 = vpop.f32.mrf.mxu0
    %v9223 = vadd.f32 0.0, %v9222
    %9224 = vdwg.mxu0
    %9225 = vmatpush.bf16.msra.mxu0 %v8194
    %9226 = vmatpush.bf16.msra.mxu0 %v8187
    %9227 = vmatpush.bf16.msra.mxu0 %v8180
    %9228 = vmatpush.bf16.msra.mxu0 %v8173
    %9229 = vmatpush.bf16.msra.mxu0 %v8166
    %9230 = vmatpush.bf16.msra.mxu0 %v8159
    %9231 = vmatpush.bf16.msra.mxu0 %v8152
    %9232 = vmatpush.bf16.msra.mxu0 %v8145
    %9233 = vmatmul.bf16.gmra.mxu0 %v8532
    %v9234 = vpop.f32.mrf.mxu0
    %v9235 = vadd.f32 %v9221, %v9234
    %v9236 = vpop.f32.mrf.mxu0
    %v9237 = vadd.f32 %v9223, %v9236
    %9238 = vdwg.mxu0
    %9239 = vmatpush.bf16.msra.mxu0 %v8250
    %9240 = vmatpush.bf16.msra.mxu0 %v8243
    %9241 = vmatpush.bf16.msra.mxu0 %v8236
    %9242 = vmatpush.bf16.msra.mxu0 %v8229
    %9243 = vmatpush.bf16.msra.mxu0 %v8222
    %9244 = vmatpush.bf16.msra.mxu0 %v8215
    %9245 = vmatpush.bf16.msra.mxu0 %v8208
    %9246 = vmatpush.bf16.msra.mxu0 %v8201
    %9247 = vmatmul.bf16.gmra.mxu0 %v8533
    %v9248 = vpop.f32.mrf.mxu0
    %v9249 = vadd.f32 %v9235, %v9248
    %v9250 = vpop.f32.mrf.mxu0
    %v9251 = vadd.f32 %v9237, %v9250
    %9252 = vdwg.mxu0
    %9253 = vmatpush.bf16.msra.mxu0 %v8306
    %9254 = vmatpush.bf16.msra.mxu0 %v8299
    %9255 = vmatpush.bf16.msra.mxu0 %v8292
    %9256 = vmatpush.bf16.msra.mxu0 %v8285
    %9257 = vmatpush.bf16.msra.mxu0 %v8278
    %9258 = vmatpush.bf16.msra.mxu0 %v8271
    %9259 = vmatpush.bf16.msra.mxu0 %v8264
    %9260 = vmatpush.bf16.msra.mxu0 %v8257
    %9261 = vmatmul.bf16.gmra.mxu0 %v8534
    %v9262 = vpop.f32.mrf.mxu0
    %v9263 = vadd.f32 %v9249, %v9262
    %v9264 = vpop.f32.mrf.mxu0
    %v9265 = vadd.f32 %v9251, %v9264
    %9266 = vdwg.mxu0
    %9267 = vmatpush.bf16.msra.mxu0 %v8362
    %9268 = vmatpush.bf16.msra.mxu0 %v8355
    %9269 = vmatpush.bf16.msra.mxu0 %v8348
    %9270 = vmatpush.bf16.msra.mxu0 %v8341
    %9271 = vmatpush.bf16.msra.mxu0 %v8334
    %9272 = vmatpush.bf16.msra.mxu0 %v8327
    %9273 = vmatpush.bf16.msra.mxu0 %v8320
    %9274 = vmatpush.bf16.msra.mxu0 %v8313
    %9275 = vmatmul.bf16.gmra.mxu0 %v8535
    %v9276 = vpop.f32.mrf.mxu0
    %v9277 = vadd.f32 %v9263, %v9276
    %v9278 = vpop.f32.mrf.mxu0
    %v9279 = vadd.f32 %v9265, %v9278
    %9280 = vdwg.mxu0
    %9281 = vmatpush.bf16.msra.mxu0 %v8418
    %9282 = vmatpush.bf16.msra.mxu0 %v8411
    %9283 = vmatpush.bf16.msra.mxu0 %v8404
    %9284 = vmatpush.bf16.msra.mxu0 %v8397
    %9285 = vmatpush.bf16.msra.mxu0 %v8390
    %9286 = vmatpush.bf16.msra.mxu0 %v8383
    %9287 = vmatpush.bf16.msra.mxu0 %v8376
    %9288 = vmatpush.bf16.msra.mxu0 %v8369
    %9289 = vmatmul.bf16.gmra.mxu0 %v8536
    %v9290 = vpop.f32.mrf.mxu0
    %v9291 = vadd.f32 %v9277, %v9290
    %v9292 = vpop.f32.mrf.mxu0
    %v9293 = vadd.f32 %v9279, %v9292
    %9294 = vdwg.mxu0
    %9295 = vmatpush.bf16.msra.mxu0 %v8474
    %9296 = vmatpush.bf16.msra.mxu0 %v8467
    %9297 = vmatpush.bf16.msra.mxu0 %v8460
    %9298 = vmatpush.bf16.msra.mxu0 %v8453
    %9299 = vmatpush.bf16.msra.mxu0 %v8446
    %9300 = vmatpush.bf16.msra.mxu0 %v8439
    %9301 = vmatpush.bf16.msra.mxu0 %v8432
    %9302 = vmatpush.bf16.msra.mxu0 %v8425
    %9303 = vmatmul.bf16.gmra.mxu0 %v8537
    %v9304 = vpop.f32.mrf.mxu0
    %v9305 = vadd.f32 %v9291, %v9304
    %v9306 = vpop.f32.mrf.mxu0
    %v9307 = vadd.f32 %v9293, %v9306
    %9308 = vdwg.mxu0
    %9309 = vmatpush.bf16.msra.mxu0 %v8530
    %9310 = vmatpush.bf16.msra.mxu0 %v8523
    %9311 = vmatpush.bf16.msra.mxu0 %v8516
    %9312 = vmatpush.bf16.msra.mxu0 %v8509
    %9313 = vmatpush.bf16.msra.mxu0 %v8502
    %9314 = vmatpush.bf16.msra.mxu0 %v8495
    %9315 = vmatpush.bf16.msra.mxu0 %v8488
    %9316 = vmatpush.bf16.msra.mxu0 %v8481
    %9317 = vmatmul.bf16.gmra.mxu0 %v8538
    %v9318 = vpop.f32.mrf.mxu0
    %v9319 = vadd.f32 %v9305, %v9318
    %v9320 = vpop.f32.mrf.mxu0
    %v9321 = vadd.f32 %v9307, %v9320
    %9322 = vdwg.mxu0
    %v9323 = vperm.slane %v861, 3
    %v9324 = vperm.slane %v862, 3
    %v9325 = vperm.slane %v863, 3
    %v9326 = vperm.slane %v864, 3
    %v9327 = vperm.slane %v865, 3
    %v9328 = vperm.slane %v866, 3
    %v9329 = vperm.slane %v867, 3
    %v9330 = vmul.f32 %v8647, %v9323
    %v9331 = vmul.f32 %v8759, %v9324
    %v9332 = vmul.f32 %v8871, %v9325
    %v9333 = vmul.f32 %v8983, %v9326
    %v9334 = vmul.f32 %v9095, %v9327
    %v9335 = vmul.f32 %v9207, %v9328
    %v9336 = vmul.f32 %v9319, %v9329
    %v9337 = vmul.f32 %v8649, %v9323
    %v9338 = vmul.f32 %v8761, %v9324
    %v9339 = vmul.f32 %v8873, %v9325
    %v9340 = vmul.f32 %v8985, %v9326
    %v9341 = vmul.f32 %v9097, %v9327
    %v9342 = vmul.f32 %v9209, %v9328
    %v9343 = vmul.f32 %v9321, %v9329
    %v9344 = vperm.slane %v861, 1
    %v9345 = vperm.slane %v862, 1
    %v9346 = vperm.slane %v863, 1
    %v9347 = vperm.slane %v864, 1
    %v9348 = vperm.slane %v865, 1
    %v9349 = vperm.slane %v866, 1
    %v9350 = vperm.slane %v867, 1
    %v9351 = vadd.f32 %v9330, %v9344
    %v9352 = vadd.f32 %v9331, %v9345
    %v9353 = vadd.f32 %v9332, %v9346
    %v9354 = vadd.f32 %v9333, %v9347
    %v9355 = vadd.f32 %v9334, %v9348
    %v9356 = vadd.f32 %v9335, %v9349
    %v9357 = vadd.f32 %v9336, %v9350
    %v9358 = vadd.f32 %v9337, %v9344
    %v9359 = vadd.f32 %v9338, %v9345
    %v9360 = vadd.f32 %v9339, %v9346
    %v9361 = vadd.f32 %v9340, %v9347
    %v9362 = vadd.f32 %v9341, %v9348
    %v9363 = vadd.f32 %v9342, %v9349
    %v9364 = vadd.f32 %v9343, %v9350
    %v9365 = vtanh.pop %v9351
    %v9366 = vtanh.pop %v9352
    %v9367 = vtanh.pop %v9353
    %v9368 = vtanh.pop %v9354
    %v9369 = vtanh.pop %v9355
    %v9370 = vtanh.pop %v9356
    %v9371 = vtanh.pop %v9357
    %v9372 = vtanh.pop %v9358
    %v9373 = vtanh.pop %v9359
    %v9374 = vtanh.pop %v9360
    %v9375 = vtanh.pop %v9361
    %v9376 = vtanh.pop %v9362
    %v9377 = vtanh.pop %v9363
    %v9378 = vtanh.pop %v9364
    %9379 = vst [vmem:[%s8] sm:$0xff] %v9365
    %9380 = vst [vmem:[%s8 + $0x8] sm:$0xff] %v9366
    %9381 = vst [vmem:[%s8 + $0x10] sm:$0xff] %v9367
    %9382 = vst [vmem:[%s8 + $0x18] sm:$0xff] %v9368
    %9383 = vst [vmem:[%s8 + $0x20] sm:$0xff] %v9369
    %9384 = vst [vmem:[%s8 + $0x28] sm:$0xff] %v9370
    %9385 = vst [vmem:[%s8 + $0x30] sm:$0xff] %v9371
    %9386 = vst [vmem:[%s8 + $0x38] sm:$0xff] %v9372
    %9387 = vst [vmem:[%s8 + $0x40] sm:$0xff] %v9373
    %9388 = vst [vmem:[%s8 + $0x48] sm:$0xff] %v9374
    %9389 = vst [vmem:[%s8 + $0x50] sm:$0xff] %v9375
    %9390 = vst [vmem:[%s8 + $0x58] sm:$0xff] %v9376
    %9391 = vst [vmem:[%s8 + $0x60] sm:$0xff] %v9377
    %9392 = vst [vmem:[%s8 + $0x68] sm:$0xff] %v9378
    // Predicated region
    $region66: #{generator_wgan_forward.1} parent=1 // pred_check
      _
    $region67: #{generator_wgan_forward.1} parent=1 // pred_check_branch
      %9394 = sbr.rel (0) target = $region69
    $region68: #{generator_wgan_forward.1} parent=1 // pred_region
      _
    $region69: #{generator_wgan_forward.1} parent=1 // pred_fallthru
      _
    // Predicated region
    $region70: #{generator_wgan_forward.1} parent=1 // pred_check
      _
    $region71: #{generator_wgan_forward.1} parent=1 // pred_check_branch
      %9396 = sbr.rel (0) target = $region73
    $region72: #{generator_wgan_forward.1} parent=1 // pred_region
      _
    $region73: #{generator_wgan_forward.1} parent=1 // pred_fallthru
      _
    %9397 = vsyncpa [#allocation3], 1
    %9398 = vsyncpa [#allocation5], 1
    %9399 = vsyncpa [#allocation8], 1
    %9400 = vsyncpa [#allocation11], 1
    %9401 = vsyncpa [#allocation14], 1

</llo_original>
